<compile_context>
chip_gen: v7x
topology: tpu7x:2x2x1
jax: 0.10.0
libtpu: 0.0.40
codegen_flags: <defaults>
</compile_context>

<pallas_src>
import functools

import jax
import jax.numpy as jnp
from jax.experimental import pallas as pl
from jax.experimental.pallas import tpu as pltpu

DIM1 = 1000          # logical feature sizes (match the torch module)
DIM2 = 1000
PAD = 1024           # lane-aligned physical width (multiple of 128)
DROP_P = 0.5         # nn.Dropout() default


def mlp_kernel(x_ref, w1_ref, b1_ref, w2_ref, b2_ref, w3_ref, b3_ref,
               mask_ref, o_ref):
    # Layer 1: Linear + Sigmoid (bf16 MXU inputs, f32 accumulation)
    h1 = jnp.dot(x_ref[...], w1_ref[...], preferred_element_type=jnp.float32)
    h1 = jax.nn.sigmoid(h1 + b1_ref[...])
    # Layer 2: Linear + ReLU
    h2 = jnp.dot(h1.astype(jnp.bfloat16), w2_ref[...],
                 preferred_element_type=jnp.float32)
    h2 = jnp.maximum(h2 + b2_ref[...], 0.0)
    # Layer 3: Linear
    h3 = jnp.dot(h2.astype(jnp.bfloat16), w3_ref[...],
                 preferred_element_type=jnp.float32)
    h3 = h3 + b3_ref[...]
    # Dropout: mask holds 0.0 or 1/(1-p) (exact in bf16) -> one VPU multiply.
    o_ref[...] = h3 * mask_ref[...].astype(jnp.float32)


@functools.partial(jax.jit, static_argnames=("training",))
def mlp_forward(x, params, key, training=True):
    (w1, b1), (w2, b2), (w3, b3) = params
    B = x.shape[0]
    Bp = max(8, ((B + 7) // 8) * 8)   # sublane-aligned batch

    # Zero-pad activations to the lane/sublane-aligned shape; padded weight
    # rows/cols and bias tails are zero, so the padding is inert.
    x_p = jnp.zeros((Bp, PAD), jnp.bfloat16).at[:B, :DIM1].set(
        x.astype(jnp.bfloat16))

    if training:
        # TODO(synk): dropout RNG stream differs from torch's; the semantics
        # (Bernoulli keep mask + 1/(1-p) rescale, training mode) are identical.
        keep = jax.random.bernoulli(key, 1.0 - DROP_P, (Bp, PAD))
        mask = keep.astype(jnp.bfloat16) * jnp.bfloat16(1.0 / (1.0 - DROP_P))
    else:
        mask = jnp.ones((Bp, PAD), jnp.bfloat16)

    vmem = pl.BlockSpec(memory_space=pltpu.VMEM)
    out_p = pl.pallas_call(
        mlp_kernel,
        out_shape=jax.ShapeDtypeStruct((Bp, PAD), jnp.float32),
        in_specs=[vmem] * 8,   # x, w1, b1, w2, b2, w3, b3, mask
        out_specs=vmem,
        compiler_params=pltpu.CompilerParams(
            vmem_limit_bytes=32 * 1024 * 1024),
    )(x_p, w1, b1, w2, b2, w3, b3, mask)
    return out_p[:B, :DIM2]


def init_params(key):
    # Torch-style uniform(-1/sqrt(fan_in), 1/sqrt(fan_in)) init.  Weights are
    # stored transposed (in_features, out_features), zero-padded to PAD and
    # cast to bf16 to halve the weight DMA.  Biases stay f32.
    def linear(k, fan_in, fan_out):
        kw, kb = jax.random.split(k)
        bound = 1.0 / float(fan_in) ** 0.5
        w = jax.random.uniform(kw, (fan_in, fan_out), jnp.float32, -bound, bound)
        b = jax.random.uniform(kb, (fan_out,), jnp.float32, -bound, bound)
        w_p = jnp.zeros((PAD, PAD), jnp.float32).at[:fan_in, :fan_out].set(w)
        b_p = jnp.zeros((1, PAD), jnp.float32).at[0, :fan_out].set(b)
        return w_p.astype(jnp.bfloat16), b_p

    k1, k2, k3 = jax.random.split(key, 3)
    return (linear(k1, DIM1, DIM2),
            linear(k2, DIM2, DIM1),
            linear(k3, DIM1, DIM2))


if __name__ == "__main__":
    key = jax.random.PRNGKey(0)
    kx, kp, kd = jax.random.split(key, 3)
    batch = 8
    x = jax.random.normal(kx, (batch, DIM1), dtype=jnp.float32)
    params = init_params(kp)

    out = mlp_forward(x, params, kd, training=True)
    out = jax.block_until_ready(out)

    assert out.shape == (batch, DIM2), out.shape
    assert out.dtype == jnp.float32
    assert bool(jnp.all(jnp.isfinite(out)))
    print("KERNEL_OK")
</pallas_src>

<mosaic_0001>
module attributes {stable_mosaic.version = 11 : i64} {
  func.func @mlp_kernel(%arg0: memref<8x1024xbf16, #tpu.memory_space<vmem>>, %arg1: memref<1024x1024xbf16, #tpu.memory_space<vmem>>, %arg2: memref<1x1024xf32, #tpu.memory_space<vmem>>, %arg3: memref<1024x1024xbf16, #tpu.memory_space<vmem>>, %arg4: memref<1x1024xf32, #tpu.memory_space<vmem>>, %arg5: memref<1024x1024xbf16, #tpu.memory_space<vmem>>, %arg6: memref<1x1024xf32, #tpu.memory_space<vmem>>, %arg7: memref<8x1024xbf16, #tpu.memory_space<vmem>>, %arg8: memref<8x1024xf32, #tpu.memory_space<vmem>>) attributes {dimension_semantics = [], scalar_prefetch = 0 : i64, scratch_operands = 0 : i64, tpu.core_type = #tpu.core_type<tc>} {
    %c0 = arith.constant 0 : index
    %c0_0 = arith.constant 0 : index
    %0 = vector.load %arg0[%c0, %c0_0] : memref<8x1024xbf16, #tpu.memory_space<vmem>>, vector<8x1024xbf16>
    %c0_1 = arith.constant 0 : index
    %c0_2 = arith.constant 0 : index
    %1 = vector.load %arg1[%c0_1, %c0_2] : memref<1024x1024xbf16, #tpu.memory_space<vmem>>, vector<1024x1024xbf16>
    %cst = arith.constant dense<0.000000e+00> : vector<8x1024xf32>
    %2 = tpu.matmul %0, %1, %cst {dimension_numbers = #tpu.dot_dimension_numbers<[1], [0], [0], [1], [0, 0, 1, 1], [], []>} : vector<8x1024xbf16>, vector<1024x1024xbf16>, vector<8x1024xf32> -> vector<8x1024xf32>
    %c0_3 = arith.constant 0 : index
    %c0_4 = arith.constant 0 : index
    %3 = vector.load %arg2[%c0_3, %c0_4] : memref<1x1024xf32, #tpu.memory_space<vmem>>, vector<1x1024xf32>
    %4 = vector.broadcast %3 : vector<1x1024xf32> to vector<8x1024xf32>
    %5 = arith.addf %2, %4 : vector<8x1024xf32>
    %6 = arith.negf %5 : vector<8x1024xf32>
    %7 = math.exp %6 : vector<8x1024xf32>
    %cst_5 = arith.constant 1.000000e+00 : f32
    %8 = vector.broadcast %cst_5 : f32 to vector<8x1024xf32>
    %9 = arith.addf %8, %7 : vector<8x1024xf32>
    %10 = arith.divf %8, %9 : vector<8x1024xf32>
    %11 = arith.truncf %10 : vector<8x1024xf32> to vector<8x1024xbf16>
    %c0_6 = arith.constant 0 : index
    %c0_7 = arith.constant 0 : index
    %12 = vector.load %arg3[%c0_6, %c0_7] : memref<1024x1024xbf16, #tpu.memory_space<vmem>>, vector<1024x1024xbf16>
    %cst_8 = arith.constant dense<0.000000e+00> : vector<8x1024xf32>
    %13 = tpu.matmul %11, %12, %cst_8 {dimension_numbers = #tpu.dot_dimension_numbers<[1], [0], [0], [1], [0, 0, 1, 1], [], []>} : vector<8x1024xbf16>, vector<1024x1024xbf16>, vector<8x1024xf32> -> vector<8x1024xf32>
    %c0_9 = arith.constant 0 : index
    %c0_10 = arith.constant 0 : index
    %14 = vector.load %arg4[%c0_9, %c0_10] : memref<1x1024xf32, #tpu.memory_space<vmem>>, vector<1x1024xf32>
    %15 = vector.broadcast %14 : vector<1x1024xf32> to vector<8x1024xf32>
    %16 = arith.addf %13, %15 : vector<8x1024xf32>
    %cst_11 = arith.constant 0.000000e+00 : f32
    %17 = vector.broadcast %cst_11 : f32 to vector<8x1024xf32>
    %18 = arith.maximumf %16, %17 : vector<8x1024xf32>
    %19 = arith.truncf %18 : vector<8x1024xf32> to vector<8x1024xbf16>
    %c0_12 = arith.constant 0 : index
    %c0_13 = arith.constant 0 : index
    %20 = vector.load %arg5[%c0_12, %c0_13] : memref<1024x1024xbf16, #tpu.memory_space<vmem>>, vector<1024x1024xbf16>
    %cst_14 = arith.constant dense<0.000000e+00> : vector<8x1024xf32>
    %21 = tpu.matmul %19, %20, %cst_14 {dimension_numbers = #tpu.dot_dimension_numbers<[1], [0], [0], [1], [0, 0, 1, 1], [], []>} : vector<8x1024xbf16>, vector<1024x1024xbf16>, vector<8x1024xf32> -> vector<8x1024xf32>
    %c0_15 = arith.constant 0 : index
    %c0_16 = arith.constant 0 : index
    %22 = vector.load %arg6[%c0_15, %c0_16] : memref<1x1024xf32, #tpu.memory_space<vmem>>, vector<1x1024xf32>
    %23 = vector.broadcast %22 : vector<1x1024xf32> to vector<8x1024xf32>
    %24 = arith.addf %21, %23 : vector<8x1024xf32>
    %c0_17 = arith.constant 0 : index
    %c0_18 = arith.constant 0 : index
    %25 = vector.load %arg7[%c0_17, %c0_18] : memref<8x1024xbf16, #tpu.memory_space<vmem>>, vector<8x1024xbf16>
    %26 = arith.extf %25 : vector<8x1024xbf16> to vector<8x1024xf32>
    %27 = arith.mulf %24, %26 : vector<8x1024xf32>
    %c0_19 = arith.constant 0 : index
    %c0_20 = arith.constant 0 : index
    %28 = vector.load %arg8[%c0_19, %c0_20] : memref<8x1024xf32, #tpu.memory_space<vmem>>, vector<8x1024xf32>
    tpu.vector_store %arg8[%c0_19, %c0_20], %27 {strides = array<i32>} : memref<8x1024xf32, #tpu.memory_space<vmem>>, vector<8x1024xf32>,
    return
  }
}

</mosaic_0001>

<llo_original>
// kernel: mlp_forward.1
$region0: #{mlp_forward.1}
  #allocation0 [shape = 'u32[]', space=smem, size = 0x4, offset = 0x4, fixed_abs, tag = 'smem constant byte address 0x4 - core index']
  #allocation1 [shape = 'u32[144,128]{1,0:T(1,128)}', space=vmem, size = 0x12000, scoped, tag = 'internal scratch']
  %s0 = inlined_call_operand.vmem [shape: bf16[8,1024], index: 0, kind: input, shape index: {}]
  %s1 = inlined_call_operand.hbm [shape: bf16[1024,1024], index: 1, kind: input, shape index: {}]
  %s2 = inlined_call_operand.hbm [shape: f32[1,1024], index: 2, kind: input, shape index: {}]
  %s3 = inlined_call_operand.hbm [shape: bf16[1024,1024], index: 3, kind: input, shape index: {}]
  %s4 = inlined_call_operand.hbm [shape: f32[1,1024], index: 4, kind: input, shape index: {}]
  %s5 = inlined_call_operand.hbm [shape: bf16[1024,1024], index: 5, kind: input, shape index: {}]
  %s6 = inlined_call_operand.hbm [shape: f32[1,1024], index: 6, kind: input, shape index: {}]
  %s7 = inlined_call_operand.vmem [shape: bf16[8,1024], index: 7, kind: input, shape index: {}]
  %s8 = inlined_call_operand.hbm [shape: f32[8,1024], index: 8, kind: output, shape index: {}]
  %s9 = sld [smem:[#allocation0]]
  $region66: #{mlp_forward.1} parent=0
    _
  %s11 = ssub.s32 1, %s9
  %s12 = scalar_select 0, %s11, %s9
  $region1: #{mlp_forward.1} parent=0
    #allocation2 [shape = 'u8[2097152]{0}', space=vmem, size = 0x200000, scoped, tag = 'input window, operand 1, single buffered']
    #allocation3 [shape = 's32[1]{0}', space=sflag, size = 0x4, scoped, tag = 'scoped memory for mlp_forward.1']
    #allocation4 [shape = 's32[1]{0}', space=sflag, size = 0x4, scoped, tag = 'scoped memory for mlp_forward.1']
    #allocation5 [shape = 'u8[4096]{0}', space=vmem, size = 0x1000, scoped, tag = 'input window, operand 2, single buffered']
    #allocation6 [shape = 's32[1]{0}', space=sflag, size = 0x4, scoped, tag = 'scoped memory for mlp_forward.1']
    #allocation7 [shape = 'u8[2097152]{0}', space=vmem, size = 0x200000, scoped, tag = 'input window, operand 3, single buffered']
    #allocation8 [shape = 'u8[4096]{0}', space=vmem, size = 0x1000, scoped, tag = 'input window, operand 4, single buffered']
    #allocation9 [shape = 's32[1]{0}', space=sflag, size = 0x4, scoped, tag = 'scoped memory for mlp_forward.1']
    #allocation10 [shape = 'u8[2097152]{0}', space=vmem, size = 0x200000, scoped, tag = 'input window, operand 5, single buffered']
    #allocation11 [shape = 'u8[4096]{0}', space=vmem, size = 0x1000, scoped, tag = 'input window, operand 6, single buffered']
    #allocation12 [shape = 's32[1]{0}', space=sflag, size = 0x4, scoped, tag = 'scoped memory for mlp_forward.1']
    #allocation13 [shape = 'u8[32768]{0}', space=vmem, size = 0x8000, scoped, tag = 'output window, operand 0, single buffered']
    %13 = vsyncpa [#allocation3], 0
    %14 = vsyncpa [#allocation6], 0
    %15 = vsyncpa [#allocation9], 0
    %16 = vsyncpa [#allocation12], 0
    %17 = vsyncpa [#allocation4], 0
    // Predicated region
    $region2: #{mlp_forward.1} parent=1 // pred_check
      _
    $region3: #{mlp_forward.1} parent=1 // pred_check_branch
      %19 = sbr.rel (0) target = $region5
    $region4: #{mlp_forward.1} parent=1 // pred_region
      _
    $region5: #{mlp_forward.1} parent=1 // pred_fallthru
      _
    // Predicated region
    $region6: #{mlp_forward.1} parent=1 // pred_check
      _
    $region7: #{mlp_forward.1} parent=1 // pred_check_branch
      %21 = sbr.rel (0) target = $region9
    $region8: #{mlp_forward.1} parent=1 // pred_region
      %s23 = ssub.s32 65536, 65536
      %24 = vsyncadd [#allocation3], %s23
      %s25 = sshll.u32 [#allocation2], 4
      %s26 = int_to_ptr.vmem [resolvable:$true] %s25
      %31 = dma.hbm_to_vmem [thread:$0]  %s1, 65536, %s26, [#allocation3], 512, 512, 32
    $region9: #{mlp_forward.1} parent=1 // pred_fallthru
      _
    // Predicated region
    $region10: #{mlp_forward.1} parent=1 // pred_check
      _
    $region11: #{mlp_forward.1} parent=1 // pred_check_branch
      %33 = sbr.rel (0) target = $region13
    $region12: #{mlp_forward.1} parent=1 // pred_region
      %s35 = ssub.s32 128, 128
      %36 = vsyncadd [#allocation6], %s35
      %s38 = sshll.u32 [#allocation5], 4
      %s39 = int_to_ptr.vmem [resolvable:$true] %s38
      %41 = dma.hbm_to_vmem [thread:$0]  %s2, 128, %s39, [#allocation6]
    $region13: #{mlp_forward.1} parent=1 // pred_fallthru
      _
    // Predicated region
    $region14: #{mlp_forward.1} parent=1 // pred_check
      _
    $region15: #{mlp_forward.1} parent=1 // pred_check_branch
      %43 = sbr.rel (0) target = $region17
    $region16: #{mlp_forward.1} parent=1 // pred_region
      %s45 = ssub.s32 65536, 65536
      %46 = vsyncadd [#allocation6], %s45
      %s47 = sshll.u32 [#allocation7], 4
      %s48 = int_to_ptr.vmem [resolvable:$true] %s47
      %53 = dma.hbm_to_vmem [thread:$0]  %s3, 65536, %s48, [#allocation6], 512, 512, 32
    $region17: #{mlp_forward.1} parent=1 // pred_fallthru
      _
    // Predicated region
    $region18: #{mlp_forward.1} parent=1 // pred_check
      _
    $region19: #{mlp_forward.1} parent=1 // pred_check_branch
      %55 = sbr.rel (0) target = $region21
    $region20: #{mlp_forward.1} parent=1 // pred_region
      %s57 = ssub.s32 128, 128
      %58 = vsyncadd [#allocation9], %s57
      %s60 = sshll.u32 [#allocation8], 4
      %s61 = int_to_ptr.vmem [resolvable:$true] %s60
      %63 = dma.hbm_to_vmem [thread:$0]  %s4, 128, %s61, [#allocation9]
    $region21: #{mlp_forward.1} parent=1 // pred_fallthru
      _
    // Predicated region
    $region22: #{mlp_forward.1} parent=1 // pred_check
      _
    $region23: #{mlp_forward.1} parent=1 // pred_check_branch
      %65 = sbr.rel (0) target = $region25
    $region24: #{mlp_forward.1} parent=1 // pred_region
      %s67 = ssub.s32 65536, 65536
      %68 = vsyncadd [#allocation9], %s67
      %s69 = sshll.u32 [#allocation10], 4
      %s70 = int_to_ptr.vmem [resolvable:$true] %s69
      %75 = dma.hbm_to_vmem [thread:$0]  %s5, 65536, %s70, [#allocation9], 512, 512, 32
    $region25: #{mlp_forward.1} parent=1 // pred_fallthru
      _
    // Predicated region
    $region26: #{mlp_forward.1} parent=1 // pred_check
      _
    $region27: #{mlp_forward.1} parent=1 // pred_check_branch
      %77 = sbr.rel (0) target = $region29
    $region28: #{mlp_forward.1} parent=1 // pred_region
      %s79 = ssub.s32 128, 128
      %80 = vsyncadd [#allocation12], %s79
      %s82 = sshll.u32 [#allocation11], 4
      %s83 = int_to_ptr.vmem [resolvable:$true] %s82
      %85 = dma.hbm_to_vmem [thread:$0]  %s6, 128, %s83, [#allocation12]
    $region29: #{mlp_forward.1} parent=1 // pred_fallthru
      _
    // Predicated region
    $region30: #{mlp_forward.1} parent=1 // pred_check
      _
    $region31: #{mlp_forward.1} parent=1 // pred_check_branch
      %87 = sbr.rel (0) target = $region33
    $region32: #{mlp_forward.1} parent=1 // pred_region
      _
    $region33: #{mlp_forward.1} parent=1 // pred_fallthru
      _
    // Predicated region
    $region34: #{mlp_forward.1} parent=1 // pred_check
      _
    $region35: #{mlp_forward.1} parent=1 // pred_check_branch
      %89 = sbr.rel (0) target = $region37
    $region36: #{mlp_forward.1} parent=1 // pred_region
      %90 = dma.done [#allocation3], 65536
    $region37: #{mlp_forward.1} parent=1 // pred_fallthru
      _
    // Predicated region
    $region38: #{mlp_forward.1} parent=1 // pred_check
      _
    $region39: #{mlp_forward.1} parent=1 // pred_check_branch
      %92 = sbr.rel (0) target = $region41
    $region40: #{mlp_forward.1} parent=1 // pred_region
      %93 = dma.done [#allocation6], 128
    $region41: #{mlp_forward.1} parent=1 // pred_fallthru
      _
    // Predicated region
    $region42: #{mlp_forward.1} parent=1 // pred_check
      _
    $region43: #{mlp_forward.1} parent=1 // pred_check_branch
      %95 = sbr.rel (0) target = $region45
    $region44: #{mlp_forward.1} parent=1 // pred_region
      %96 = dma.done [#allocation6], 65536
    $region45: #{mlp_forward.1} parent=1 // pred_fallthru
      _
    // Predicated region
    $region46: #{mlp_forward.1} parent=1 // pred_check
      _
    $region47: #{mlp_forward.1} parent=1 // pred_check_branch
      %98 = sbr.rel (0) target = $region49
    $region48: #{mlp_forward.1} parent=1 // pred_region
      %99 = dma.done [#allocation9], 128
    $region49: #{mlp_forward.1} parent=1 // pred_fallthru
      _
    // Predicated region
    $region50: #{mlp_forward.1} parent=1 // pred_check
      _
    $region51: #{mlp_forward.1} parent=1 // pred_check_branch
      %101 = sbr.rel (0) target = $region53
    $region52: #{mlp_forward.1} parent=1 // pred_region
      %102 = dma.done [#allocation9], 65536
    $region53: #{mlp_forward.1} parent=1 // pred_fallthru
      _
    // Predicated region
    $region54: #{mlp_forward.1} parent=1 // pred_check
      _
    $region55: #{mlp_forward.1} parent=1 // pred_check_branch
      %104 = sbr.rel (0) target = $region57
    $region56: #{mlp_forward.1} parent=1 // pred_region
      %105 = dma.done [#allocation12], 128
    $region57: #{mlp_forward.1} parent=1 // pred_fallthru
      _
    %v106 = vld [vmem:[%s0] sm:$0xff]
    %v107 = vld [vmem:[%s0 + $0x8] sm:$0xff]
    %v108 = vld [vmem:[%s0 + $0x10] sm:$0xff]
    %v109 = vld [vmem:[%s0 + $0x18] sm:$0xff]
    %v110 = vld [vmem:[#allocation2] sm:$0xff]
    %v111 = vld [vmem:[#allocation2 + $0x8] sm:$0xff]
    %v112 = vld [vmem:[#allocation2 + $0x10] sm:$0xff]
    %v113 = vld [vmem:[#allocation2 + $0x18] sm:$0xff]
    %v114 = vld [vmem:[#allocation2 + $0x20] sm:$0xff]
    %v115 = vld [vmem:[#allocation2 + $0x28] sm:$0xff]
    %v116 = vld [vmem:[#allocation2 + $0x30] sm:$0xff]
    %v117 = vld [vmem:[#allocation2 + $0x38] sm:$0xff]
    %v118 = vld [vmem:[#allocation2 + $0x40] sm:$0xff]
    %v119 = vld [vmem:[#allocation2 + $0x48] sm:$0xff]
    %v120 = vld [vmem:[#allocation2 + $0x50] sm:$0xff]
    %v121 = vld [vmem:[#allocation2 + $0x58] sm:$0xff]
    %v122 = vld [vmem:[#allocation2 + $0x60] sm:$0xff]
    %v123 = vld [vmem:[#allocation2 + $0x68] sm:$0xff]
    %v124 = vld [vmem:[#allocation2 + $0x70] sm:$0xff]
    %v125 = vld [vmem:[#allocation2 + $0x78] sm:$0xff]
    %v126 = vld [vmem:[#allocation2 + $0x80] sm:$0xff]
    %v127 = vld [vmem:[#allocation2 + $0x88] sm:$0xff]
    %v128 = vld [vmem:[#allocation2 + $0x90] sm:$0xff]
    %v129 = vld [vmem:[#allocation2 + $0x98] sm:$0xff]
    %v130 = vld [vmem:[#allocation2 + $0xa0] sm:$0xff]
    %v131 = vld [vmem:[#allocation2 + $0xa8] sm:$0xff]
    %v132 = vld [vmem:[#allocation2 + $0xb0] sm:$0xff]
    %v133 = vld [vmem:[#allocation2 + $0xb8] sm:$0xff]
    %v134 = vld [vmem:[#allocation2 + $0xc0] sm:$0xff]
    %v135 = vld [vmem:[#allocation2 + $0xc8] sm:$0xff]
    %v136 = vld [vmem:[#allocation2 + $0xd0] sm:$0xff]
    %v137 = vld [vmem:[#allocation2 + $0xd8] sm:$0xff]
    %v138 = vld [vmem:[#allocation2 + $0xe0] sm:$0xff]
    %v139 = vld [vmem:[#allocation2 + $0xe8] sm:$0xff]
    %v140 = vld [vmem:[#allocation2 + $0xf0] sm:$0xff]
    %v141 = vld [vmem:[#allocation2 + $0xf8] sm:$0xff]
    %v142 = vld [vmem:[#allocation2 + $0x100] sm:$0xff]
    %v143 = vld [vmem:[#allocation2 + $0x108] sm:$0xff]
    %v144 = vld [vmem:[#allocation2 + $0x110] sm:$0xff]
    %v145 = vld [vmem:[#allocation2 + $0x118] sm:$0xff]
    %v146 = vld [vmem:[#allocation2 + $0x120] sm:$0xff]
    %v147 = vld [vmem:[#allocation2 + $0x128] sm:$0xff]
    %v148 = vld [vmem:[#allocation2 + $0x130] sm:$0xff]
    %v149 = vld [vmem:[#allocation2 + $0x138] sm:$0xff]
    %v150 = vld [vmem:[#allocation2 + $0x140] sm:$0xff]
    %v151 = vld [vmem:[#allocation2 + $0x148] sm:$0xff]
    %v152 = vld [vmem:[#allocation2 + $0x150] sm:$0xff]
    %v153 = vld [vmem:[#allocation2 + $0x158] sm:$0xff]
    %v154 = vld [vmem:[#allocation2 + $0x160] sm:$0xff]
    %v155 = vld [vmem:[#allocation2 + $0x168] sm:$0xff]
    %v156 = vld [vmem:[#allocation2 + $0x170] sm:$0xff]
    %v157 = vld [vmem:[#allocation2 + $0x178] sm:$0xff]
    %v158 = vld [vmem:[#allocation2 + $0x180] sm:$0xff]
    %v159 = vld [vmem:[#allocation2 + $0x188] sm:$0xff]
    %v160 = vld [vmem:[#allocation2 + $0x190] sm:$0xff]
    %v161 = vld [vmem:[#allocation2 + $0x198] sm:$0xff]
    %v162 = vld [vmem:[#allocation2 + $0x1a0] sm:$0xff]
    %v163 = vld [vmem:[#allocation2 + $0x1a8] sm:$0xff]
    %v164 = vld [vmem:[#allocation2 + $0x1b0] sm:$0xff]
    %v165 = vld [vmem:[#allocation2 + $0x1b8] sm:$0xff]
    %v166 = vld [vmem:[#allocation2 + $0x1c0] sm:$0xff]
    %v167 = vld [vmem:[#allocation2 + $0x1c8] sm:$0xff]
    %v168 = vld [vmem:[#allocation2 + $0x1d0] sm:$0xff]
    %v169 = vld [vmem:[#allocation2 + $0x1d8] sm:$0xff]
    %v170 = vld [vmem:[#allocation2 + $0x1e0] sm:$0xff]
    %v171 = vld [vmem:[#allocation2 + $0x1e8] sm:$0xff]
    %v172 = vld [vmem:[#allocation2 + $0x1f0] sm:$0xff]
    %v173 = vld [vmem:[#allocation2 + $0x1f8] sm:$0xff]
    %v174 = vld [vmem:[#allocation2 + $0x200] sm:$0xff]
    %v175 = vld [vmem:[#allocation2 + $0x208] sm:$0xff]
    %v176 = vld [vmem:[#allocation2 + $0x210] sm:$0xff]
    %v177 = vld [vmem:[#allocation2 + $0x218] sm:$0xff]
    %v178 = vld [vmem:[#allocation2 + $0x220] sm:$0xff]
    %v179 = vld [vmem:[#allocation2 + $0x228] sm:$0xff]
    %v180 = vld [vmem:[#allocation2 + $0x230] sm:$0xff]
    %v181 = vld [vmem:[#allocation2 + $0x238] sm:$0xff]
    %v182 = vld [vmem:[#allocation2 + $0x240] sm:$0xff]
    %v183 = vld [vmem:[#allocation2 + $0x248] sm:$0xff]
    %v184 = vld [vmem:[#allocation2 + $0x250] sm:$0xff]
    %v185 = vld [vmem:[#allocation2 + $0x258] sm:$0xff]
    %v186 = vld [vmem:[#allocation2 + $0x260] sm:$0xff]
    %v187 = vld [vmem:[#allocation2 + $0x268] sm:$0xff]
    %v188 = vld [vmem:[#allocation2 + $0x270] sm:$0xff]
    %v189 = vld [vmem:[#allocation2 + $0x278] sm:$0xff]
    %v190 = vld [vmem:[#allocation2 + $0x280] sm:$0xff]
    %v191 = vld [vmem:[#allocation2 + $0x288] sm:$0xff]
    %v192 = vld [vmem:[#allocation2 + $0x290] sm:$0xff]
    %v193 = vld [vmem:[#allocation2 + $0x298] sm:$0xff]
    %v194 = vld [vmem:[#allocation2 + $0x2a0] sm:$0xff]
    %v195 = vld [vmem:[#allocation2 + $0x2a8] sm:$0xff]
    %v196 = vld [vmem:[#allocation2 + $0x2b0] sm:$0xff]
    %v197 = vld [vmem:[#allocation2 + $0x2b8] sm:$0xff]
    %v198 = vld [vmem:[#allocation2 + $0x2c0] sm:$0xff]
    %v199 = vld [vmem:[#allocation2 + $0x2c8] sm:$0xff]
    %v200 = vld [vmem:[#allocation2 + $0x2d0] sm:$0xff]
    %v201 = vld [vmem:[#allocation2 + $0x2d8] sm:$0xff]
    %v202 = vld [vmem:[#allocation2 + $0x2e0] sm:$0xff]
    %v203 = vld [vmem:[#allocation2 + $0x2e8] sm:$0xff]
    %v204 = vld [vmem:[#allocation2 + $0x2f0] sm:$0xff]
    %v205 = vld [vmem:[#allocation2 + $0x2f8] sm:$0xff]
    %v206 = vld [vmem:[#allocation2 + $0x300] sm:$0xff]
    %v207 = vld [vmem:[#allocation2 + $0x308] sm:$0xff]
    %v208 = vld [vmem:[#allocation2 + $0x310] sm:$0xff]
    %v209 = vld [vmem:[#allocation2 + $0x318] sm:$0xff]
    %v210 = vld [vmem:[#allocation2 + $0x320] sm:$0xff]
    %v211 = vld [vmem:[#allocation2 + $0x328] sm:$0xff]
    %v212 = vld [vmem:[#allocation2 + $0x330] sm:$0xff]
    %v213 = vld [vmem:[#allocation2 + $0x338] sm:$0xff]
    %v214 = vld [vmem:[#allocation2 + $0x340] sm:$0xff]
    %v215 = vld [vmem:[#allocation2 + $0x348] sm:$0xff]
    %v216 = vld [vmem:[#allocation2 + $0x350] sm:$0xff]
    %v217 = vld [vmem:[#allocation2 + $0x358] sm:$0xff]
    %v218 = vld [vmem:[#allocation2 + $0x360] sm:$0xff]
    %v219 = vld [vmem:[#allocation2 + $0x368] sm:$0xff]
    %v220 = vld [vmem:[#allocation2 + $0x370] sm:$0xff]
    %v221 = vld [vmem:[#allocation2 + $0x378] sm:$0xff]
    %v222 = vld [vmem:[#allocation2 + $0x380] sm:$0xff]
    %v223 = vld [vmem:[#allocation2 + $0x388] sm:$0xff]
    %v224 = vld [vmem:[#allocation2 + $0x390] sm:$0xff]
    %v225 = vld [vmem:[#allocation2 + $0x398] sm:$0xff]
    %v226 = vld [vmem:[#allocation2 + $0x3a0] sm:$0xff]
    %v227 = vld [vmem:[#allocation2 + $0x3a8] sm:$0xff]
    %v228 = vld [vmem:[#allocation2 + $0x3b0] sm:$0xff]
    %v229 = vld [vmem:[#allocation2 + $0x3b8] sm:$0xff]
    %v230 = vld [vmem:[#allocation2 + $0x3c0] sm:$0xff]
    %v231 = vld [vmem:[#allocation2 + $0x3c8] sm:$0xff]
    %v232 = vld [vmem:[#allocation2 + $0x3d0] sm:$0xff]
    %v233 = vld [vmem:[#allocation2 + $0x3d8] sm:$0xff]
    %v234 = vld [vmem:[#allocation2 + $0x3e0] sm:$0xff]
    %v235 = vld [vmem:[#allocation2 + $0x3e8] sm:$0xff]
    %v236 = vld [vmem:[#allocation2 + $0x3f0] sm:$0xff]
    %v237 = vld [vmem:[#allocation2 + $0x3f8] sm:$0xff]
    %v238 = vld [vmem:[#allocation2 + $0x400] sm:$0xff]
    %v239 = vld [vmem:[#allocation2 + $0x408] sm:$0xff]
    %v240 = vld [vmem:[#allocation2 + $0x410] sm:$0xff]
    %v241 = vld [vmem:[#allocation2 + $0x418] sm:$0xff]
    %v242 = vld [vmem:[#allocation2 + $0x420] sm:$0xff]
    %v243 = vld [vmem:[#allocation2 + $0x428] sm:$0xff]
    %v244 = vld [vmem:[#allocation2 + $0x430] sm:$0xff]
    %v245 = vld [vmem:[#allocation2 + $0x438] sm:$0xff]
    %v246 = vld [vmem:[#allocation2 + $0x440] sm:$0xff]
    %v247 = vld [vmem:[#allocation2 + $0x448] sm:$0xff]
    %v248 = vld [vmem:[#allocation2 + $0x450] sm:$0xff]
    %v249 = vld [vmem:[#allocation2 + $0x458] sm:$0xff]
    %v250 = vld [vmem:[#allocation2 + $0x460] sm:$0xff]
    %v251 = vld [vmem:[#allocation2 + $0x468] sm:$0xff]
    %v252 = vld [vmem:[#allocation2 + $0x470] sm:$0xff]
    %v253 = vld [vmem:[#allocation2 + $0x478] sm:$0xff]
    %v254 = vld [vmem:[#allocation2 + $0x480] sm:$0xff]
    %v255 = vld [vmem:[#allocation2 + $0x488] sm:$0xff]
    %v256 = vld [vmem:[#allocation2 + $0x490] sm:$0xff]
    %v257 = vld [vmem:[#allocation2 + $0x498] sm:$0xff]
    %v258 = vld [vmem:[#allocation2 + $0x4a0] sm:$0xff]
    %v259 = vld [vmem:[#allocation2 + $0x4a8] sm:$0xff]
    %v260 = vld [vmem:[#allocation2 + $0x4b0] sm:$0xff]
    %v261 = vld [vmem:[#allocation2 + $0x4b8] sm:$0xff]
    %v262 = vld [vmem:[#allocation2 + $0x4c0] sm:$0xff]
    %v263 = vld [vmem:[#allocation2 + $0x4c8] sm:$0xff]
    %v264 = vld [vmem:[#allocation2 + $0x4d0] sm:$0xff]
    %v265 = vld [vmem:[#allocation2 + $0x4d8] sm:$0xff]
    %v266 = vld [vmem:[#allocation2 + $0x4e0] sm:$0xff]
    %v267 = vld [vmem:[#allocation2 + $0x4e8] sm:$0xff]
    %v268 = vld [vmem:[#allocation2 + $0x4f0] sm:$0xff]
    %v269 = vld [vmem:[#allocation2 + $0x4f8] sm:$0xff]
    %v270 = vld [vmem:[#allocation2 + $0x500] sm:$0xff]
    %v271 = vld [vmem:[#allocation2 + $0x508] sm:$0xff]
    %v272 = vld [vmem:[#allocation2 + $0x510] sm:$0xff]
    %v273 = vld [vmem:[#allocation2 + $0x518] sm:$0xff]
    %v274 = vld [vmem:[#allocation2 + $0x520] sm:$0xff]
    %v275 = vld [vmem:[#allocation2 + $0x528] sm:$0xff]
    %v276 = vld [vmem:[#allocation2 + $0x530] sm:$0xff]
    %v277 = vld [vmem:[#allocation2 + $0x538] sm:$0xff]
    %v278 = vld [vmem:[#allocation2 + $0x540] sm:$0xff]
    %v279 = vld [vmem:[#allocation2 + $0x548] sm:$0xff]
    %v280 = vld [vmem:[#allocation2 + $0x550] sm:$0xff]
    %v281 = vld [vmem:[#allocation2 + $0x558] sm:$0xff]
    %v282 = vld [vmem:[#allocation2 + $0x560] sm:$0xff]
    %v283 = vld [vmem:[#allocation2 + $0x568] sm:$0xff]
    %v284 = vld [vmem:[#allocation2 + $0x570] sm:$0xff]
    %v285 = vld [vmem:[#allocation2 + $0x578] sm:$0xff]
    %v286 = vld [vmem:[#allocation2 + $0x580] sm:$0xff]
    %v287 = vld [vmem:[#allocation2 + $0x588] sm:$0xff]
    %v288 = vld [vmem:[#allocation2 + $0x590] sm:$0xff]
    %v289 = vld [vmem:[#allocation2 + $0x598] sm:$0xff]
    %v290 = vld [vmem:[#allocation2 + $0x5a0] sm:$0xff]
    %v291 = vld [vmem:[#allocation2 + $0x5a8] sm:$0xff]
    %v292 = vld [vmem:[#allocation2 + $0x5b0] sm:$0xff]
    %v293 = vld [vmem:[#allocation2 + $0x5b8] sm:$0xff]
    %v294 = vld [vmem:[#allocation2 + $0x5c0] sm:$0xff]
    %v295 = vld [vmem:[#allocation2 + $0x5c8] sm:$0xff]
    %v296 = vld [vmem:[#allocation2 + $0x5d0] sm:$0xff]
    %v297 = vld [vmem:[#allocation2 + $0x5d8] sm:$0xff]
    %v298 = vld [vmem:[#allocation2 + $0x5e0] sm:$0xff]
    %v299 = vld [vmem:[#allocation2 + $0x5e8] sm:$0xff]
    %v300 = vld [vmem:[#allocation2 + $0x5f0] sm:$0xff]
    %v301 = vld [vmem:[#allocation2 + $0x5f8] sm:$0xff]
    %v302 = vld [vmem:[#allocation2 + $0x600] sm:$0xff]
    %v303 = vld [vmem:[#allocation2 + $0x608] sm:$0xff]
    %v304 = vld [vmem:[#allocation2 + $0x610] sm:$0xff]
    %v305 = vld [vmem:[#allocation2 + $0x618] sm:$0xff]
    %v306 = vld [vmem:[#allocation2 + $0x620] sm:$0xff]
    %v307 = vld [vmem:[#allocation2 + $0x628] sm:$0xff]
    %v308 = vld [vmem:[#allocation2 + $0x630] sm:$0xff]
    %v309 = vld [vmem:[#allocation2 + $0x638] sm:$0xff]
    %v310 = vld [vmem:[#allocation2 + $0x640] sm:$0xff]
    %v311 = vld [vmem:[#allocation2 + $0x648] sm:$0xff]
    %v312 = vld [vmem:[#allocation2 + $0x650] sm:$0xff]
    %v313 = vld [vmem:[#allocation2 + $0x658] sm:$0xff]
    %v314 = vld [vmem:[#allocation2 + $0x660] sm:$0xff]
    %v315 = vld [vmem:[#allocation2 + $0x668] sm:$0xff]
    %v316 = vld [vmem:[#allocation2 + $0x670] sm:$0xff]
    %v317 = vld [vmem:[#allocation2 + $0x678] sm:$0xff]
    %v318 = vld [vmem:[#allocation2 + $0x680] sm:$0xff]
    %v319 = vld [vmem:[#allocation2 + $0x688] sm:$0xff]
    %v320 = vld [vmem:[#allocation2 + $0x690] sm:$0xff]
    %v321 = vld [vmem:[#allocation2 + $0x698] sm:$0xff]
    %v322 = vld [vmem:[#allocation2 + $0x6a0] sm:$0xff]
    %v323 = vld [vmem:[#allocation2 + $0x6a8] sm:$0xff]
    %v324 = vld [vmem:[#allocation2 + $0x6b0] sm:$0xff]
    %v325 = vld [vmem:[#allocation2 + $0x6b8] sm:$0xff]
    %v326 = vld [vmem:[#allocation2 + $0x6c0] sm:$0xff]
    %v327 = vld [vmem:[#allocation2 + $0x6c8] sm:$0xff]
    %v328 = vld [vmem:[#allocation2 + $0x6d0] sm:$0xff]
    %v329 = vld [vmem:[#allocation2 + $0x6d8] sm:$0xff]
    %v330 = vld [vmem:[#allocation2 + $0x6e0] sm:$0xff]
    %v331 = vld [vmem:[#allocation2 + $0x6e8] sm:$0xff]
    %v332 = vld [vmem:[#allocation2 + $0x6f0] sm:$0xff]
    %v333 = vld [vmem:[#allocation2 + $0x6f8] sm:$0xff]
    %v334 = vld [vmem:[#allocation2 + $0x700] sm:$0xff]
    %v335 = vld [vmem:[#allocation2 + $0x708] sm:$0xff]
    %v336 = vld [vmem:[#allocation2 + $0x710] sm:$0xff]
    %v337 = vld [vmem:[#allocation2 + $0x718] sm:$0xff]
    %v338 = vld [vmem:[#allocation2 + $0x720] sm:$0xff]
    %v339 = vld [vmem:[#allocation2 + $0x728] sm:$0xff]
    %v340 = vld [vmem:[#allocation2 + $0x730] sm:$0xff]
    %v341 = vld [vmem:[#allocation2 + $0x738] sm:$0xff]
    %v342 = vld [vmem:[#allocation2 + $0x740] sm:$0xff]
    %v343 = vld [vmem:[#allocation2 + $0x748] sm:$0xff]
    %v344 = vld [vmem:[#allocation2 + $0x750] sm:$0xff]
    %v345 = vld [vmem:[#allocation2 + $0x758] sm:$0xff]
    %v346 = vld [vmem:[#allocation2 + $0x760] sm:$0xff]
    %v347 = vld [vmem:[#allocation2 + $0x768] sm:$0xff]
    %v348 = vld [vmem:[#allocation2 + $0x770] sm:$0xff]
    %v349 = vld [vmem:[#allocation2 + $0x778] sm:$0xff]
    %v350 = vld [vmem:[#allocation2 + $0x780] sm:$0xff]
    %v351 = vld [vmem:[#allocation2 + $0x788] sm:$0xff]
    %v352 = vld [vmem:[#allocation2 + $0x790] sm:$0xff]
    %v353 = vld [vmem:[#allocation2 + $0x798] sm:$0xff]
    %v354 = vld [vmem:[#allocation2 + $0x7a0] sm:$0xff]
    %v355 = vld [vmem:[#allocation2 + $0x7a8] sm:$0xff]
    %v356 = vld [vmem:[#allocation2 + $0x7b0] sm:$0xff]
    %v357 = vld [vmem:[#allocation2 + $0x7b8] sm:$0xff]
    %v358 = vld [vmem:[#allocation2 + $0x7c0] sm:$0xff]
    %v359 = vld [vmem:[#allocation2 + $0x7c8] sm:$0xff]
    %v360 = vld [vmem:[#allocation2 + $0x7d0] sm:$0xff]
    %v361 = vld [vmem:[#allocation2 + $0x7d8] sm:$0xff]
    %v362 = vld [vmem:[#allocation2 + $0x7e0] sm:$0xff]
    %v363 = vld [vmem:[#allocation2 + $0x7e8] sm:$0xff]
    %v364 = vld [vmem:[#allocation2 + $0x7f0] sm:$0xff]
    %v365 = vld [vmem:[#allocation2 + $0x7f8] sm:$0xff]
    %v366 = vld [vmem:[#allocation2 + $0x800] sm:$0xff]
    %v367 = vld [vmem:[#allocation2 + $0x808] sm:$0xff]
    %v368 = vld [vmem:[#allocation2 + $0x810] sm:$0xff]
    %v369 = vld [vmem:[#allocation2 + $0x818] sm:$0xff]
    %v370 = vld [vmem:[#allocation2 + $0x820] sm:$0xff]
    %v371 = vld [vmem:[#allocation2 + $0x828] sm:$0xff]
    %v372 = vld [vmem:[#allocation2 + $0x830] sm:$0xff]
    %v373 = vld [vmem:[#allocation2 + $0x838] sm:$0xff]
    %v374 = vld [vmem:[#allocation2 + $0x840] sm:$0xff]
    %v375 = vld [vmem:[#allocation2 + $0x848] sm:$0xff]
    %v376 = vld [vmem:[#allocation2 + $0x850] sm:$0xff]
    %v377 = vld [vmem:[#allocation2 + $0x858] sm:$0xff]
    %v378 = vld [vmem:[#allocation2 + $0x860] sm:$0xff]
    %v379 = vld [vmem:[#allocation2 + $0x868] sm:$0xff]
    %v380 = vld [vmem:[#allocation2 + $0x870] sm:$0xff]
    %v381 = vld [vmem:[#allocation2 + $0x878] sm:$0xff]
    %v382 = vld [vmem:[#allocation2 + $0x880] sm:$0xff]
    %v383 = vld [vmem:[#allocation2 + $0x888] sm:$0xff]
    %v384 = vld [vmem:[#allocation2 + $0x890] sm:$0xff]
    %v385 = vld [vmem:[#allocation2 + $0x898] sm:$0xff]
    %v386 = vld [vmem:[#allocation2 + $0x8a0] sm:$0xff]
    %v387 = vld [vmem:[#allocation2 + $0x8a8] sm:$0xff]
    %v388 = vld [vmem:[#allocation2 + $0x8b0] sm:$0xff]
    %v389 = vld [vmem:[#allocation2 + $0x8b8] sm:$0xff]
    %v390 = vld [vmem:[#allocation2 + $0x8c0] sm:$0xff]
    %v391 = vld [vmem:[#allocation2 + $0x8c8] sm:$0xff]
    %v392 = vld [vmem:[#allocation2 + $0x8d0] sm:$0xff]
    %v393 = vld [vmem:[#allocation2 + $0x8d8] sm:$0xff]
    %v394 = vld [vmem:[#allocation2 + $0x8e0] sm:$0xff]
    %v395 = vld [vmem:[#allocation2 + $0x8e8] sm:$0xff]
    %v396 = vld [vmem:[#allocation2 + $0x8f0] sm:$0xff]
    %v397 = vld [vmem:[#allocation2 + $0x8f8] sm:$0xff]
    %v398 = vld [vmem:[#allocation2 + $0x900] sm:$0xff]
    %v399 = vld [vmem:[#allocation2 + $0x908] sm:$0xff]
    %v400 = vld [vmem:[#allocation2 + $0x910] sm:$0xff]
    %v401 = vld [vmem:[#allocation2 + $0x918] sm:$0xff]
    %v402 = vld [vmem:[#allocation2 + $0x920] sm:$0xff]
    %v403 = vld [vmem:[#allocation2 + $0x928] sm:$0xff]
    %v404 = vld [vmem:[#allocation2 + $0x930] sm:$0xff]
    %v405 = vld [vmem:[#allocation2 + $0x938] sm:$0xff]
    %v406 = vld [vmem:[#allocation2 + $0x940] sm:$0xff]
    %v407 = vld [vmem:[#allocation2 + $0x948] sm:$0xff]
    %v408 = vld [vmem:[#allocation2 + $0x950] sm:$0xff]
    %v409 = vld [vmem:[#allocation2 + $0x958] sm:$0xff]
    %v410 = vld [vmem:[#allocation2 + $0x960] sm:$0xff]
    %v411 = vld [vmem:[#allocation2 + $0x968] sm:$0xff]
    %v412 = vld [vmem:[#allocation2 + $0x970] sm:$0xff]
    %v413 = vld [vmem:[#allocation2 + $0x978] sm:$0xff]
    %v414 = vld [vmem:[#allocation2 + $0x980] sm:$0xff]
    %v415 = vld [vmem:[#allocation2 + $0x988] sm:$0xff]
    %v416 = vld [vmem:[#allocation2 + $0x990] sm:$0xff]
    %v417 = vld [vmem:[#allocation2 + $0x998] sm:$0xff]
    %v418 = vld [vmem:[#allocation2 + $0x9a0] sm:$0xff]
    %v419 = vld [vmem:[#allocation2 + $0x9a8] sm:$0xff]
    %v420 = vld [vmem:[#allocation2 + $0x9b0] sm:$0xff]
    %v421 = vld [vmem:[#allocation2 + $0x9b8] sm:$0xff]
    %v422 = vld [vmem:[#allocation2 + $0x9c0] sm:$0xff]
    %v423 = vld [vmem:[#allocation2 + $0x9c8] sm:$0xff]
    %v424 = vld [vmem:[#allocation2 + $0x9d0] sm:$0xff]
    %v425 = vld [vmem:[#allocation2 + $0x9d8] sm:$0xff]
    %v426 = vld [vmem:[#allocation2 + $0x9e0] sm:$0xff]
    %v427 = vld [vmem:[#allocation2 + $0x9e8] sm:$0xff]
    %v428 = vld [vmem:[#allocation2 + $0x9f0] sm:$0xff]
    %v429 = vld [vmem:[#allocation2 + $0x9f8] sm:$0xff]
    %v430 = vld [vmem:[#allocation2 + $0xa00] sm:$0xff]
    %v431 = vld [vmem:[#allocation2 + $0xa08] sm:$0xff]
    %v432 = vld [vmem:[#allocation2 + $0xa10] sm:$0xff]
    %v433 = vld [vmem:[#allocation2 + $0xa18] sm:$0xff]
    %v434 = vld [vmem:[#allocation2 + $0xa20] sm:$0xff]
    %v435 = vld [vmem:[#allocation2 + $0xa28] sm:$0xff]
    %v436 = vld [vmem:[#allocation2 + $0xa30] sm:$0xff]
    %v437 = vld [vmem:[#allocation2 + $0xa38] sm:$0xff]
    %v438 = vld [vmem:[#allocation2 + $0xa40] sm:$0xff]
    %v439 = vld [vmem:[#allocation2 + $0xa48] sm:$0xff]
    %v440 = vld [vmem:[#allocation2 + $0xa50] sm:$0xff]
    %v441 = vld [vmem:[#allocation2 + $0xa58] sm:$0xff]
    %v442 = vld [vmem:[#allocation2 + $0xa60] sm:$0xff]
    %v443 = vld [vmem:[#allocation2 + $0xa68] sm:$0xff]
    %v444 = vld [vmem:[#allocation2 + $0xa70] sm:$0xff]
    %v445 = vld [vmem:[#allocation2 + $0xa78] sm:$0xff]
    %v446 = vld [vmem:[#allocation2 + $0xa80] sm:$0xff]
    %v447 = vld [vmem:[#allocation2 + $0xa88] sm:$0xff]
    %v448 = vld [vmem:[#allocation2 + $0xa90] sm:$0xff]
    %v449 = vld [vmem:[#allocation2 + $0xa98] sm:$0xff]
    %v450 = vld [vmem:[#allocation2 + $0xaa0] sm:$0xff]
    %v451 = vld [vmem:[#allocation2 + $0xaa8] sm:$0xff]
    %v452 = vld [vmem:[#allocation2 + $0xab0] sm:$0xff]
    %v453 = vld [vmem:[#allocation2 + $0xab8] sm:$0xff]
    %v454 = vld [vmem:[#allocation2 + $0xac0] sm:$0xff]
    %v455 = vld [vmem:[#allocation2 + $0xac8] sm:$0xff]
    %v456 = vld [vmem:[#allocation2 + $0xad0] sm:$0xff]
    %v457 = vld [vmem:[#allocation2 + $0xad8] sm:$0xff]
    %v458 = vld [vmem:[#allocation2 + $0xae0] sm:$0xff]
    %v459 = vld [vmem:[#allocation2 + $0xae8] sm:$0xff]
    %v460 = vld [vmem:[#allocation2 + $0xaf0] sm:$0xff]
    %v461 = vld [vmem:[#allocation2 + $0xaf8] sm:$0xff]
    %v462 = vld [vmem:[#allocation2 + $0xb00] sm:$0xff]
    %v463 = vld [vmem:[#allocation2 + $0xb08] sm:$0xff]
    %v464 = vld [vmem:[#allocation2 + $0xb10] sm:$0xff]
    %v465 = vld [vmem:[#allocation2 + $0xb18] sm:$0xff]
    %v466 = vld [vmem:[#allocation2 + $0xb20] sm:$0xff]
    %v467 = vld [vmem:[#allocation2 + $0xb28] sm:$0xff]
    %v468 = vld [vmem:[#allocation2 + $0xb30] sm:$0xff]
    %v469 = vld [vmem:[#allocation2 + $0xb38] sm:$0xff]
    %v470 = vld [vmem:[#allocation2 + $0xb40] sm:$0xff]
    %v471 = vld [vmem:[#allocation2 + $0xb48] sm:$0xff]
    %v472 = vld [vmem:[#allocation2 + $0xb50] sm:$0xff]
    %v473 = vld [vmem:[#allocation2 + $0xb58] sm:$0xff]
    %v474 = vld [vmem:[#allocation2 + $0xb60] sm:$0xff]
    %v475 = vld [vmem:[#allocation2 + $0xb68] sm:$0xff]
    %v476 = vld [vmem:[#allocation2 + $0xb70] sm:$0xff]
    %v477 = vld [vmem:[#allocation2 + $0xb78] sm:$0xff]
    %v478 = vld [vmem:[#allocation2 + $0xb80] sm:$0xff]
    %v479 = vld [vmem:[#allocation2 + $0xb88] sm:$0xff]
    %v480 = vld [vmem:[#allocation2 + $0xb90] sm:$0xff]
    %v481 = vld [vmem:[#allocation2 + $0xb98] sm:$0xff]
    %v482 = vld [vmem:[#allocation2 + $0xba0] sm:$0xff]
    %v483 = vld [vmem:[#allocation2 + $0xba8] sm:$0xff]
    %v484 = vld [vmem:[#allocation2 + $0xbb0] sm:$0xff]
    %v485 = vld [vmem:[#allocation2 + $0xbb8] sm:$0xff]
    %v486 = vld [vmem:[#allocation2 + $0xbc0] sm:$0xff]
    %v487 = vld [vmem:[#allocation2 + $0xbc8] sm:$0xff]
    %v488 = vld [vmem:[#allocation2 + $0xbd0] sm:$0xff]
    %v489 = vld [vmem:[#allocation2 + $0xbd8] sm:$0xff]
    %v490 = vld [vmem:[#allocation2 + $0xbe0] sm:$0xff]
    %v491 = vld [vmem:[#allocation2 + $0xbe8] sm:$0xff]
    %v492 = vld [vmem:[#allocation2 + $0xbf0] sm:$0xff]
    %v493 = vld [vmem:[#allocation2 + $0xbf8] sm:$0xff]
    %v494 = vld [vmem:[#allocation2 + $0xc00] sm:$0xff]
    %v495 = vld [vmem:[#allocation2 + $0xc08] sm:$0xff]
    %v496 = vld [vmem:[#allocation2 + $0xc10] sm:$0xff]
    %v497 = vld [vmem:[#allocation2 + $0xc18] sm:$0xff]
    %v498 = vld [vmem:[#allocation2 + $0xc20] sm:$0xff]
    %v499 = vld [vmem:[#allocation2 + $0xc28] sm:$0xff]
    %v500 = vld [vmem:[#allocation2 + $0xc30] sm:$0xff]
    %v501 = vld [vmem:[#allocation2 + $0xc38] sm:$0xff]
    %v502 = vld [vmem:[#allocation2 + $0xc40] sm:$0xff]
    %v503 = vld [vmem:[#allocation2 + $0xc48] sm:$0xff]
    %v504 = vld [vmem:[#allocation2 + $0xc50] sm:$0xff]
    %v505 = vld [vmem:[#allocation2 + $0xc58] sm:$0xff]
    %v506 = vld [vmem:[#allocation2 + $0xc60] sm:$0xff]
    %v507 = vld [vmem:[#allocation2 + $0xc68] sm:$0xff]
    %v508 = vld [vmem:[#allocation2 + $0xc70] sm:$0xff]
    %v509 = vld [vmem:[#allocation2 + $0xc78] sm:$0xff]
    %v510 = vld [vmem:[#allocation2 + $0xc80] sm:$0xff]
    %v511 = vld [vmem:[#allocation2 + $0xc88] sm:$0xff]
    %v512 = vld [vmem:[#allocation2 + $0xc90] sm:$0xff]
    %v513 = vld [vmem:[#allocation2 + $0xc98] sm:$0xff]
    %v514 = vld [vmem:[#allocation2 + $0xca0] sm:$0xff]
    %v515 = vld [vmem:[#allocation2 + $0xca8] sm:$0xff]
    %v516 = vld [vmem:[#allocation2 + $0xcb0] sm:$0xff]
    %v517 = vld [vmem:[#allocation2 + $0xcb8] sm:$0xff]
    %v518 = vld [vmem:[#allocation2 + $0xcc0] sm:$0xff]
    %v519 = vld [vmem:[#allocation2 + $0xcc8] sm:$0xff]
    %v520 = vld [vmem:[#allocation2 + $0xcd0] sm:$0xff]
    %v521 = vld [vmem:[#allocation2 + $0xcd8] sm:$0xff]
    %v522 = vld [vmem:[#allocation2 + $0xce0] sm:$0xff]
    %v523 = vld [vmem:[#allocation2 + $0xce8] sm:$0xff]
    %v524 = vld [vmem:[#allocation2 + $0xcf0] sm:$0xff]
    %v525 = vld [vmem:[#allocation2 + $0xcf8] sm:$0xff]
    %v526 = vld [vmem:[#allocation2 + $0xd00] sm:$0xff]
    %v527 = vld [vmem:[#allocation2 + $0xd08] sm:$0xff]
    %v528 = vld [vmem:[#allocation2 + $0xd10] sm:$0xff]
    %v529 = vld [vmem:[#allocation2 + $0xd18] sm:$0xff]
    %v530 = vld [vmem:[#allocation2 + $0xd20] sm:$0xff]
    %v531 = vld [vmem:[#allocation2 + $0xd28] sm:$0xff]
    %v532 = vld [vmem:[#allocation2 + $0xd30] sm:$0xff]
    %v533 = vld [vmem:[#allocation2 + $0xd38] sm:$0xff]
    %v534 = vld [vmem:[#allocation2 + $0xd40] sm:$0xff]
    %v535 = vld [vmem:[#allocation2 + $0xd48] sm:$0xff]
    %v536 = vld [vmem:[#allocation2 + $0xd50] sm:$0xff]
    %v537 = vld [vmem:[#allocation2 + $0xd58] sm:$0xff]
    %v538 = vld [vmem:[#allocation2 + $0xd60] sm:$0xff]
    %v539 = vld [vmem:[#allocation2 + $0xd68] sm:$0xff]
    %v540 = vld [vmem:[#allocation2 + $0xd70] sm:$0xff]
    %v541 = vld [vmem:[#allocation2 + $0xd78] sm:$0xff]
    %v542 = vld [vmem:[#allocation2 + $0xd80] sm:$0xff]
    %v543 = vld [vmem:[#allocation2 + $0xd88] sm:$0xff]
    %v544 = vld [vmem:[#allocation2 + $0xd90] sm:$0xff]
    %v545 = vld [vmem:[#allocation2 + $0xd98] sm:$0xff]
    %v546 = vld [vmem:[#allocation2 + $0xda0] sm:$0xff]
    %v547 = vld [vmem:[#allocation2 + $0xda8] sm:$0xff]
    %v548 = vld [vmem:[#allocation2 + $0xdb0] sm:$0xff]
    %v549 = vld [vmem:[#allocation2 + $0xdb8] sm:$0xff]
    %v550 = vld [vmem:[#allocation2 + $0xdc0] sm:$0xff]
    %v551 = vld [vmem:[#allocation2 + $0xdc8] sm:$0xff]
    %v552 = vld [vmem:[#allocation2 + $0xdd0] sm:$0xff]
    %v553 = vld [vmem:[#allocation2 + $0xdd8] sm:$0xff]
    %v554 = vld [vmem:[#allocation2 + $0xde0] sm:$0xff]
    %v555 = vld [vmem:[#allocation2 + $0xde8] sm:$0xff]
    %v556 = vld [vmem:[#allocation2 + $0xdf0] sm:$0xff]
    %v557 = vld [vmem:[#allocation2 + $0xdf8] sm:$0xff]
    %v558 = vld [vmem:[#allocation2 + $0xe00] sm:$0xff]
    %v559 = vld [vmem:[#allocation2 + $0xe08] sm:$0xff]
    %v560 = vld [vmem:[#allocation2 + $0xe10] sm:$0xff]
    %v561 = vld [vmem:[#allocation2 + $0xe18] sm:$0xff]
    %v562 = vld [vmem:[#allocation2 + $0xe20] sm:$0xff]
    %v563 = vld [vmem:[#allocation2 + $0xe28] sm:$0xff]
    %v564 = vld [vmem:[#allocation2 + $0xe30] sm:$0xff]
    %v565 = vld [vmem:[#allocation2 + $0xe38] sm:$0xff]
    %v566 = vld [vmem:[#allocation2 + $0xe40] sm:$0xff]
    %v567 = vld [vmem:[#allocation2 + $0xe48] sm:$0xff]
    %v568 = vld [vmem:[#allocation2 + $0xe50] sm:$0xff]
    %v569 = vld [vmem:[#allocation2 + $0xe58] sm:$0xff]
    %v570 = vld [vmem:[#allocation2 + $0xe60] sm:$0xff]
    %v571 = vld [vmem:[#allocation2 + $0xe68] sm:$0xff]
    %v572 = vld [vmem:[#allocation2 + $0xe70] sm:$0xff]
    %v573 = vld [vmem:[#allocation2 + $0xe78] sm:$0xff]
    %v574 = vld [vmem:[#allocation2 + $0xe80] sm:$0xff]
    %v575 = vld [vmem:[#allocation2 + $0xe88] sm:$0xff]
    %v576 = vld [vmem:[#allocation2 + $0xe90] sm:$0xff]
    %v577 = vld [vmem:[#allocation2 + $0xe98] sm:$0xff]
    %v578 = vld [vmem:[#allocation2 + $0xea0] sm:$0xff]
    %v579 = vld [vmem:[#allocation2 + $0xea8] sm:$0xff]
    %v580 = vld [vmem:[#allocation2 + $0xeb0] sm:$0xff]
    %v581 = vld [vmem:[#allocation2 + $0xeb8] sm:$0xff]
    %v582 = vld [vmem:[#allocation2 + $0xec0] sm:$0xff]
    %v583 = vld [vmem:[#allocation2 + $0xec8] sm:$0xff]
    %v584 = vld [vmem:[#allocation2 + $0xed0] sm:$0xff]
    %v585 = vld [vmem:[#allocation2 + $0xed8] sm:$0xff]
    %v586 = vld [vmem:[#allocation2 + $0xee0] sm:$0xff]
    %v587 = vld [vmem:[#allocation2 + $0xee8] sm:$0xff]
    %v588 = vld [vmem:[#allocation2 + $0xef0] sm:$0xff]
    %v589 = vld [vmem:[#allocation2 + $0xef8] sm:$0xff]
    %v590 = vld [vmem:[#allocation2 + $0xf00] sm:$0xff]
    %v591 = vld [vmem:[#allocation2 + $0xf08] sm:$0xff]
    %v592 = vld [vmem:[#allocation2 + $0xf10] sm:$0xff]
    %v593 = vld [vmem:[#allocation2 + $0xf18] sm:$0xff]
    %v594 = vld [vmem:[#allocation2 + $0xf20] sm:$0xff]
    %v595 = vld [vmem:[#allocation2 + $0xf28] sm:$0xff]
    %v596 = vld [vmem:[#allocation2 + $0xf30] sm:$0xff]
    %v597 = vld [vmem:[#allocation2 + $0xf38] sm:$0xff]
    %v598 = vld [vmem:[#allocation2 + $0xf40] sm:$0xff]
    %v599 = vld [vmem:[#allocation2 + $0xf48] sm:$0xff]
    %v600 = vld [vmem:[#allocation2 + $0xf50] sm:$0xff]
    %v601 = vld [vmem:[#allocation2 + $0xf58] sm:$0xff]
    %v602 = vld [vmem:[#allocation2 + $0xf60] sm:$0xff]
    %v603 = vld [vmem:[#allocation2 + $0xf68] sm:$0xff]
    %v604 = vld [vmem:[#allocation2 + $0xf70] sm:$0xff]
    %v605 = vld [vmem:[#allocation2 + $0xf78] sm:$0xff]
    %v606 = vld [vmem:[#allocation2 + $0xf80] sm:$0xff]
    %v607 = vld [vmem:[#allocation2 + $0xf88] sm:$0xff]
    %v608 = vld [vmem:[#allocation2 + $0xf90] sm:$0xff]
    %v609 = vld [vmem:[#allocation2 + $0xf98] sm:$0xff]
    %v610 = vld [vmem:[#allocation2 + $0xfa0] sm:$0xff]
    %v611 = vld [vmem:[#allocation2 + $0xfa8] sm:$0xff]
    %v612 = vld [vmem:[#allocation2 + $0xfb0] sm:$0xff]
    %v613 = vld [vmem:[#allocation2 + $0xfb8] sm:$0xff]
    %v614 = vld [vmem:[#allocation2 + $0xfc0] sm:$0xff]
    %v615 = vld [vmem:[#allocation2 + $0xfc8] sm:$0xff]
    %v616 = vld [vmem:[#allocation2 + $0xfd0] sm:$0xff]
    %v617 = vld [vmem:[#allocation2 + $0xfd8] sm:$0xff]
    %v618 = vld [vmem:[#allocation2 + $0xfe0] sm:$0xff]
    %v619 = vld [vmem:[#allocation2 + $0xfe8] sm:$0xff]
    %v620 = vld [vmem:[#allocation2 + $0xff0] sm:$0xff]
    %v621 = vld [vmem:[#allocation2 + $0xff8] sm:$0xff]
    %v622 = vld [vmem:[#allocation5] sm:$0xff]
    %v624 = vlaneseq
    %v625 = vshrl.u32 %v624, 7
    %v626 = vsub.s32 0, %v625
    %v627 = vrot.slane %v622, %v626
    %v628 = vlaneseq
    %v629 = vshrl.u32 %v628, 7
    %v630 = vsub.s32 1, %v629
    %v631 = vrot.slane %v622, %v630
    %v632 = vlaneseq
    %v633 = vshrl.u32 %v632, 7
    %v634 = vsub.s32 2, %v633
    %v635 = vrot.slane %v622, %v634
    %v636 = vlaneseq
    %v637 = vshrl.u32 %v636, 7
    %v638 = vsub.s32 3, %v637
    %v639 = vrot.slane %v622, %v638
    %v640 = vlaneseq
    %v641 = vshrl.u32 %v640, 7
    %v642 = vsub.s32 4, %v641
    %v643 = vrot.slane %v622, %v642
    %v644 = vlaneseq
    %v645 = vshrl.u32 %v644, 7
    %v646 = vsub.s32 5, %v645
    %v647 = vrot.slane %v622, %v646
    %v648 = vlaneseq
    %v649 = vshrl.u32 %v648, 7
    %v650 = vsub.s32 6, %v649
    %v651 = vrot.slane %v622, %v650
    %v652 = vlaneseq
    %v653 = vshrl.u32 %v652, 7
    %v654 = vsub.s32 7, %v653
    %v655 = vrot.slane %v622, %v654
    %v668 = vunpack.c.l.b16 %v106
    %v669 = vunpack.c.h.b16 %v106
    %v670 = vunpack.c.l.b16 %v107
    %v671 = vunpack.c.h.b16 %v107
    %v672 = vunpack.c.l.b16 %v108
    %v673 = vunpack.c.h.b16 %v108
    %v674 = vunpack.c.l.b16 %v109
    %v675 = vunpack.c.h.b16 %v109
    %v676 = vpack.c.b16 %v668, %v668
    %v677 = vpack.c.b16 %v669, %v669
    %v678 = vpack.c.b16 %v670, %v670
    %v679 = vpack.c.b16 %v671, %v671
    %v680 = vpack.c.b16 %v672, %v672
    %v681 = vpack.c.b16 %v673, %v673
    %v682 = vpack.c.b16 %v674, %v674
    %v683 = vpack.c.b16 %v675, %v675
    %v1204 = vunpack.c.l.b16 %v110
    %v1205 = vunpack.c.h.b16 %v110
    %v1206 = vunpack.c.l.b16 %v111
    %v1207 = vunpack.c.h.b16 %v111
    %v1208 = vunpack.c.l.b16 %v112
    %v1209 = vunpack.c.h.b16 %v112
    %v1210 = vunpack.c.l.b16 %v113
    %v1211 = vunpack.c.h.b16 %v113
    %v1212 = vunpack.c.l.b16 %v114
    %v1213 = vunpack.c.h.b16 %v114
    %v1214 = vunpack.c.l.b16 %v115
    %v1215 = vunpack.c.h.b16 %v115
    %v1216 = vunpack.c.l.b16 %v116
    %v1217 = vunpack.c.h.b16 %v116
    %v1218 = vunpack.c.l.b16 %v117
    %v1219 = vunpack.c.h.b16 %v117
    %v1220 = vunpack.c.l.b16 %v118
    %v1221 = vunpack.c.h.b16 %v118
    %v1222 = vunpack.c.l.b16 %v119
    %v1223 = vunpack.c.h.b16 %v119
    %v1224 = vunpack.c.l.b16 %v120
    %v1225 = vunpack.c.h.b16 %v120
    %v1226 = vunpack.c.l.b16 %v121
    %v1227 = vunpack.c.h.b16 %v121
    %v1228 = vunpack.c.l.b16 %v122
    %v1229 = vunpack.c.h.b16 %v122
    %v1230 = vunpack.c.l.b16 %v123
    %v1231 = vunpack.c.h.b16 %v123
    %v1232 = vunpack.c.l.b16 %v124
    %v1233 = vunpack.c.h.b16 %v124
    %v1234 = vunpack.c.l.b16 %v125
    %v1235 = vunpack.c.h.b16 %v125
    %v1236 = vunpack.c.l.b16 %v126
    %v1237 = vunpack.c.h.b16 %v126
    %v1238 = vunpack.c.l.b16 %v127
    %v1239 = vunpack.c.h.b16 %v127
    %v1240 = vunpack.c.l.b16 %v128
    %v1241 = vunpack.c.h.b16 %v128
    %v1242 = vunpack.c.l.b16 %v129
    %v1243 = vunpack.c.h.b16 %v129
    %v1244 = vunpack.c.l.b16 %v130
    %v1245 = vunpack.c.h.b16 %v130
    %v1246 = vunpack.c.l.b16 %v131
    %v1247 = vunpack.c.h.b16 %v131
    %v1248 = vunpack.c.l.b16 %v132
    %v1249 = vunpack.c.h.b16 %v132
    %v1250 = vunpack.c.l.b16 %v133
    %v1251 = vunpack.c.h.b16 %v133
    %v1252 = vunpack.c.l.b16 %v134
    %v1253 = vunpack.c.h.b16 %v134
    %v1254 = vunpack.c.l.b16 %v135
    %v1255 = vunpack.c.h.b16 %v135
    %v1256 = vunpack.c.l.b16 %v136
    %v1257 = vunpack.c.h.b16 %v136
    %v1258 = vunpack.c.l.b16 %v137
    %v1259 = vunpack.c.h.b16 %v137
    %v1260 = vunpack.c.l.b16 %v138
    %v1261 = vunpack.c.h.b16 %v138
    %v1262 = vunpack.c.l.b16 %v139
    %v1263 = vunpack.c.h.b16 %v139
    %v1264 = vunpack.c.l.b16 %v140
    %v1265 = vunpack.c.h.b16 %v140
    %v1266 = vunpack.c.l.b16 %v141
    %v1267 = vunpack.c.h.b16 %v141
    %v1268 = vunpack.c.l.b16 %v142
    %v1269 = vunpack.c.h.b16 %v142
    %v1270 = vunpack.c.l.b16 %v143
    %v1271 = vunpack.c.h.b16 %v143
    %v1272 = vunpack.c.l.b16 %v144
    %v1273 = vunpack.c.h.b16 %v144
    %v1274 = vunpack.c.l.b16 %v145
    %v1275 = vunpack.c.h.b16 %v145
    %v1276 = vunpack.c.l.b16 %v146
    %v1277 = vunpack.c.h.b16 %v146
    %v1278 = vunpack.c.l.b16 %v147
    %v1279 = vunpack.c.h.b16 %v147
    %v1280 = vunpack.c.l.b16 %v148
    %v1281 = vunpack.c.h.b16 %v148
    %v1282 = vunpack.c.l.b16 %v149
    %v1283 = vunpack.c.h.b16 %v149
    %v1284 = vunpack.c.l.b16 %v150
    %v1285 = vunpack.c.h.b16 %v150
    %v1286 = vunpack.c.l.b16 %v151
    %v1287 = vunpack.c.h.b16 %v151
    %v1288 = vunpack.c.l.b16 %v152
    %v1289 = vunpack.c.h.b16 %v152
    %v1290 = vunpack.c.l.b16 %v153
    %v1291 = vunpack.c.h.b16 %v153
    %v1292 = vunpack.c.l.b16 %v154
    %v1293 = vunpack.c.h.b16 %v154
    %v1294 = vunpack.c.l.b16 %v155
    %v1295 = vunpack.c.h.b16 %v155
    %v1296 = vunpack.c.l.b16 %v156
    %v1297 = vunpack.c.h.b16 %v156
    %v1298 = vunpack.c.l.b16 %v157
    %v1299 = vunpack.c.h.b16 %v157
    %v1300 = vunpack.c.l.b16 %v158
    %v1301 = vunpack.c.h.b16 %v158
    %v1302 = vunpack.c.l.b16 %v159
    %v1303 = vunpack.c.h.b16 %v159
    %v1304 = vunpack.c.l.b16 %v160
    %v1305 = vunpack.c.h.b16 %v160
    %v1306 = vunpack.c.l.b16 %v161
    %v1307 = vunpack.c.h.b16 %v161
    %v1308 = vunpack.c.l.b16 %v162
    %v1309 = vunpack.c.h.b16 %v162
    %v1310 = vunpack.c.l.b16 %v163
    %v1311 = vunpack.c.h.b16 %v163
    %v1312 = vunpack.c.l.b16 %v164
    %v1313 = vunpack.c.h.b16 %v164
    %v1314 = vunpack.c.l.b16 %v165
    %v1315 = vunpack.c.h.b16 %v165
    %v1316 = vunpack.c.l.b16 %v166
    %v1317 = vunpack.c.h.b16 %v166
    %v1318 = vunpack.c.l.b16 %v167
    %v1319 = vunpack.c.h.b16 %v167
    %v1320 = vunpack.c.l.b16 %v168
    %v1321 = vunpack.c.h.b16 %v168
    %v1322 = vunpack.c.l.b16 %v169
    %v1323 = vunpack.c.h.b16 %v169
    %v1324 = vunpack.c.l.b16 %v170
    %v1325 = vunpack.c.h.b16 %v170
    %v1326 = vunpack.c.l.b16 %v171
    %v1327 = vunpack.c.h.b16 %v171
    %v1328 = vunpack.c.l.b16 %v172
    %v1329 = vunpack.c.h.b16 %v172
    %v1330 = vunpack.c.l.b16 %v173
    %v1331 = vunpack.c.h.b16 %v173
    %v1332 = vunpack.c.l.b16 %v174
    %v1333 = vunpack.c.h.b16 %v174
    %v1334 = vunpack.c.l.b16 %v175
    %v1335 = vunpack.c.h.b16 %v175
    %v1336 = vunpack.c.l.b16 %v176
    %v1337 = vunpack.c.h.b16 %v176
    %v1338 = vunpack.c.l.b16 %v177
    %v1339 = vunpack.c.h.b16 %v177
    %v1340 = vunpack.c.l.b16 %v178
    %v1341 = vunpack.c.h.b16 %v178
    %v1342 = vunpack.c.l.b16 %v179
    %v1343 = vunpack.c.h.b16 %v179
    %v1344 = vunpack.c.l.b16 %v180
    %v1345 = vunpack.c.h.b16 %v180
    %v1346 = vunpack.c.l.b16 %v181
    %v1347 = vunpack.c.h.b16 %v181
    %v1348 = vunpack.c.l.b16 %v182
    %v1349 = vunpack.c.h.b16 %v182
    %v1350 = vunpack.c.l.b16 %v183
    %v1351 = vunpack.c.h.b16 %v183
    %v1352 = vunpack.c.l.b16 %v184
    %v1353 = vunpack.c.h.b16 %v184
    %v1354 = vunpack.c.l.b16 %v185
    %v1355 = vunpack.c.h.b16 %v185
    %v1356 = vunpack.c.l.b16 %v186
    %v1357 = vunpack.c.h.b16 %v186
    %v1358 = vunpack.c.l.b16 %v187
    %v1359 = vunpack.c.h.b16 %v187
    %v1360 = vunpack.c.l.b16 %v188
    %v1361 = vunpack.c.h.b16 %v188
    %v1362 = vunpack.c.l.b16 %v189
    %v1363 = vunpack.c.h.b16 %v189
    %v1364 = vunpack.c.l.b16 %v190
    %v1365 = vunpack.c.h.b16 %v190
    %v1366 = vunpack.c.l.b16 %v191
    %v1367 = vunpack.c.h.b16 %v191
    %v1368 = vunpack.c.l.b16 %v192
    %v1369 = vunpack.c.h.b16 %v192
    %v1370 = vunpack.c.l.b16 %v193
    %v1371 = vunpack.c.h.b16 %v193
    %v1372 = vunpack.c.l.b16 %v194
    %v1373 = vunpack.c.h.b16 %v194
    %v1374 = vunpack.c.l.b16 %v195
    %v1375 = vunpack.c.h.b16 %v195
    %v1376 = vunpack.c.l.b16 %v196
    %v1377 = vunpack.c.h.b16 %v196
    %v1378 = vunpack.c.l.b16 %v197
    %v1379 = vunpack.c.h.b16 %v197
    %v1380 = vunpack.c.l.b16 %v198
    %v1381 = vunpack.c.h.b16 %v198
    %v1382 = vunpack.c.l.b16 %v199
    %v1383 = vunpack.c.h.b16 %v199
    %v1384 = vunpack.c.l.b16 %v200
    %v1385 = vunpack.c.h.b16 %v200
    %v1386 = vunpack.c.l.b16 %v201
    %v1387 = vunpack.c.h.b16 %v201
    %v1388 = vunpack.c.l.b16 %v202
    %v1389 = vunpack.c.h.b16 %v202
    %v1390 = vunpack.c.l.b16 %v203
    %v1391 = vunpack.c.h.b16 %v203
    %v1392 = vunpack.c.l.b16 %v204
    %v1393 = vunpack.c.h.b16 %v204
    %v1394 = vunpack.c.l.b16 %v205
    %v1395 = vunpack.c.h.b16 %v205
    %v1396 = vunpack.c.l.b16 %v206
    %v1397 = vunpack.c.h.b16 %v206
    %v1398 = vunpack.c.l.b16 %v207
    %v1399 = vunpack.c.h.b16 %v207
    %v1400 = vunpack.c.l.b16 %v208
    %v1401 = vunpack.c.h.b16 %v208
    %v1402 = vunpack.c.l.b16 %v209
    %v1403 = vunpack.c.h.b16 %v209
    %v1404 = vunpack.c.l.b16 %v210
    %v1405 = vunpack.c.h.b16 %v210
    %v1406 = vunpack.c.l.b16 %v211
    %v1407 = vunpack.c.h.b16 %v211
    %v1408 = vunpack.c.l.b16 %v212
    %v1409 = vunpack.c.h.b16 %v212
    %v1410 = vunpack.c.l.b16 %v213
    %v1411 = vunpack.c.h.b16 %v213
    %v1412 = vunpack.c.l.b16 %v214
    %v1413 = vunpack.c.h.b16 %v214
    %v1414 = vunpack.c.l.b16 %v215
    %v1415 = vunpack.c.h.b16 %v215
    %v1416 = vunpack.c.l.b16 %v216
    %v1417 = vunpack.c.h.b16 %v216
    %v1418 = vunpack.c.l.b16 %v217
    %v1419 = vunpack.c.h.b16 %v217
    %v1420 = vunpack.c.l.b16 %v218
    %v1421 = vunpack.c.h.b16 %v218
    %v1422 = vunpack.c.l.b16 %v219
    %v1423 = vunpack.c.h.b16 %v219
    %v1424 = vunpack.c.l.b16 %v220
    %v1425 = vunpack.c.h.b16 %v220
    %v1426 = vunpack.c.l.b16 %v221
    %v1427 = vunpack.c.h.b16 %v221
    %v1428 = vunpack.c.l.b16 %v222
    %v1429 = vunpack.c.h.b16 %v222
    %v1430 = vunpack.c.l.b16 %v223
    %v1431 = vunpack.c.h.b16 %v223
    %v1432 = vunpack.c.l.b16 %v224
    %v1433 = vunpack.c.h.b16 %v224
    %v1434 = vunpack.c.l.b16 %v225
    %v1435 = vunpack.c.h.b16 %v225
    %v1436 = vunpack.c.l.b16 %v226
    %v1437 = vunpack.c.h.b16 %v226
    %v1438 = vunpack.c.l.b16 %v227
    %v1439 = vunpack.c.h.b16 %v227
    %v1440 = vunpack.c.l.b16 %v228
    %v1441 = vunpack.c.h.b16 %v228
    %v1442 = vunpack.c.l.b16 %v229
    %v1443 = vunpack.c.h.b16 %v229
    %v1444 = vunpack.c.l.b16 %v230
    %v1445 = vunpack.c.h.b16 %v230
    %v1446 = vunpack.c.l.b16 %v231
    %v1447 = vunpack.c.h.b16 %v231
    %v1448 = vunpack.c.l.b16 %v232
    %v1449 = vunpack.c.h.b16 %v232
    %v1450 = vunpack.c.l.b16 %v233
    %v1451 = vunpack.c.h.b16 %v233
    %v1452 = vunpack.c.l.b16 %v234
    %v1453 = vunpack.c.h.b16 %v234
    %v1454 = vunpack.c.l.b16 %v235
    %v1455 = vunpack.c.h.b16 %v235
    %v1456 = vunpack.c.l.b16 %v236
    %v1457 = vunpack.c.h.b16 %v236
    %v1458 = vunpack.c.l.b16 %v237
    %v1459 = vunpack.c.h.b16 %v237
    %v1460 = vunpack.c.l.b16 %v238
    %v1461 = vunpack.c.h.b16 %v238
    %v1462 = vunpack.c.l.b16 %v239
    %v1463 = vunpack.c.h.b16 %v239
    %v1464 = vunpack.c.l.b16 %v240
    %v1465 = vunpack.c.h.b16 %v240
    %v1466 = vunpack.c.l.b16 %v241
    %v1467 = vunpack.c.h.b16 %v241
    %v1468 = vunpack.c.l.b16 %v242
    %v1469 = vunpack.c.h.b16 %v242
    %v1470 = vunpack.c.l.b16 %v243
    %v1471 = vunpack.c.h.b16 %v243
    %v1472 = vunpack.c.l.b16 %v244
    %v1473 = vunpack.c.h.b16 %v244
    %v1474 = vunpack.c.l.b16 %v245
    %v1475 = vunpack.c.h.b16 %v245
    %v1476 = vunpack.c.l.b16 %v246
    %v1477 = vunpack.c.h.b16 %v246
    %v1478 = vunpack.c.l.b16 %v247
    %v1479 = vunpack.c.h.b16 %v247
    %v1480 = vunpack.c.l.b16 %v248
    %v1481 = vunpack.c.h.b16 %v248
    %v1482 = vunpack.c.l.b16 %v249
    %v1483 = vunpack.c.h.b16 %v249
    %v1484 = vunpack.c.l.b16 %v250
    %v1485 = vunpack.c.h.b16 %v250
    %v1486 = vunpack.c.l.b16 %v251
    %v1487 = vunpack.c.h.b16 %v251
    %v1488 = vunpack.c.l.b16 %v252
    %v1489 = vunpack.c.h.b16 %v252
    %v1490 = vunpack.c.l.b16 %v253
    %v1491 = vunpack.c.h.b16 %v253
    %v1492 = vunpack.c.l.b16 %v254
    %v1493 = vunpack.c.h.b16 %v254
    %v1494 = vunpack.c.l.b16 %v255
    %v1495 = vunpack.c.h.b16 %v255
    %v1496 = vunpack.c.l.b16 %v256
    %v1497 = vunpack.c.h.b16 %v256
    %v1498 = vunpack.c.l.b16 %v257
    %v1499 = vunpack.c.h.b16 %v257
    %v1500 = vunpack.c.l.b16 %v258
    %v1501 = vunpack.c.h.b16 %v258
    %v1502 = vunpack.c.l.b16 %v259
    %v1503 = vunpack.c.h.b16 %v259
    %v1504 = vunpack.c.l.b16 %v260
    %v1505 = vunpack.c.h.b16 %v260
    %v1506 = vunpack.c.l.b16 %v261
    %v1507 = vunpack.c.h.b16 %v261
    %v1508 = vunpack.c.l.b16 %v262
    %v1509 = vunpack.c.h.b16 %v262
    %v1510 = vunpack.c.l.b16 %v263
    %v1511 = vunpack.c.h.b16 %v263
    %v1512 = vunpack.c.l.b16 %v264
    %v1513 = vunpack.c.h.b16 %v264
    %v1514 = vunpack.c.l.b16 %v265
    %v1515 = vunpack.c.h.b16 %v265
    %v1516 = vunpack.c.l.b16 %v266
    %v1517 = vunpack.c.h.b16 %v266
    %v1518 = vunpack.c.l.b16 %v267
    %v1519 = vunpack.c.h.b16 %v267
    %v1520 = vunpack.c.l.b16 %v268
    %v1521 = vunpack.c.h.b16 %v268
    %v1522 = vunpack.c.l.b16 %v269
    %v1523 = vunpack.c.h.b16 %v269
    %v1524 = vunpack.c.l.b16 %v270
    %v1525 = vunpack.c.h.b16 %v270
    %v1526 = vunpack.c.l.b16 %v271
    %v1527 = vunpack.c.h.b16 %v271
    %v1528 = vunpack.c.l.b16 %v272
    %v1529 = vunpack.c.h.b16 %v272
    %v1530 = vunpack.c.l.b16 %v273
    %v1531 = vunpack.c.h.b16 %v273
    %v1532 = vunpack.c.l.b16 %v274
    %v1533 = vunpack.c.h.b16 %v274
    %v1534 = vunpack.c.l.b16 %v275
    %v1535 = vunpack.c.h.b16 %v275
    %v1536 = vunpack.c.l.b16 %v276
    %v1537 = vunpack.c.h.b16 %v276
    %v1538 = vunpack.c.l.b16 %v277
    %v1539 = vunpack.c.h.b16 %v277
    %v1540 = vunpack.c.l.b16 %v278
    %v1541 = vunpack.c.h.b16 %v278
    %v1542 = vunpack.c.l.b16 %v279
    %v1543 = vunpack.c.h.b16 %v279
    %v1544 = vunpack.c.l.b16 %v280
    %v1545 = vunpack.c.h.b16 %v280
    %v1546 = vunpack.c.l.b16 %v281
    %v1547 = vunpack.c.h.b16 %v281
    %v1548 = vunpack.c.l.b16 %v282
    %v1549 = vunpack.c.h.b16 %v282
    %v1550 = vunpack.c.l.b16 %v283
    %v1551 = vunpack.c.h.b16 %v283
    %v1552 = vunpack.c.l.b16 %v284
    %v1553 = vunpack.c.h.b16 %v284
    %v1554 = vunpack.c.l.b16 %v285
    %v1555 = vunpack.c.h.b16 %v285
    %v1556 = vunpack.c.l.b16 %v286
    %v1557 = vunpack.c.h.b16 %v286
    %v1558 = vunpack.c.l.b16 %v287
    %v1559 = vunpack.c.h.b16 %v287
    %v1560 = vunpack.c.l.b16 %v288
    %v1561 = vunpack.c.h.b16 %v288
    %v1562 = vunpack.c.l.b16 %v289
    %v1563 = vunpack.c.h.b16 %v289
    %v1564 = vunpack.c.l.b16 %v290
    %v1565 = vunpack.c.h.b16 %v290
    %v1566 = vunpack.c.l.b16 %v291
    %v1567 = vunpack.c.h.b16 %v291
    %v1568 = vunpack.c.l.b16 %v292
    %v1569 = vunpack.c.h.b16 %v292
    %v1570 = vunpack.c.l.b16 %v293
    %v1571 = vunpack.c.h.b16 %v293
    %v1572 = vunpack.c.l.b16 %v294
    %v1573 = vunpack.c.h.b16 %v294
    %v1574 = vunpack.c.l.b16 %v295
    %v1575 = vunpack.c.h.b16 %v295
    %v1576 = vunpack.c.l.b16 %v296
    %v1577 = vunpack.c.h.b16 %v296
    %v1578 = vunpack.c.l.b16 %v297
    %v1579 = vunpack.c.h.b16 %v297
    %v1580 = vunpack.c.l.b16 %v298
    %v1581 = vunpack.c.h.b16 %v298
    %v1582 = vunpack.c.l.b16 %v299
    %v1583 = vunpack.c.h.b16 %v299
    %v1584 = vunpack.c.l.b16 %v300
    %v1585 = vunpack.c.h.b16 %v300
    %v1586 = vunpack.c.l.b16 %v301
    %v1587 = vunpack.c.h.b16 %v301
    %v1588 = vunpack.c.l.b16 %v302
    %v1589 = vunpack.c.h.b16 %v302
    %v1590 = vunpack.c.l.b16 %v303
    %v1591 = vunpack.c.h.b16 %v303
    %v1592 = vunpack.c.l.b16 %v304
    %v1593 = vunpack.c.h.b16 %v304
    %v1594 = vunpack.c.l.b16 %v305
    %v1595 = vunpack.c.h.b16 %v305
    %v1596 = vunpack.c.l.b16 %v306
    %v1597 = vunpack.c.h.b16 %v306
    %v1598 = vunpack.c.l.b16 %v307
    %v1599 = vunpack.c.h.b16 %v307
    %v1600 = vunpack.c.l.b16 %v308
    %v1601 = vunpack.c.h.b16 %v308
    %v1602 = vunpack.c.l.b16 %v309
    %v1603 = vunpack.c.h.b16 %v309
    %v1604 = vunpack.c.l.b16 %v310
    %v1605 = vunpack.c.h.b16 %v310
    %v1606 = vunpack.c.l.b16 %v311
    %v1607 = vunpack.c.h.b16 %v311
    %v1608 = vunpack.c.l.b16 %v312
    %v1609 = vunpack.c.h.b16 %v312
    %v1610 = vunpack.c.l.b16 %v313
    %v1611 = vunpack.c.h.b16 %v313
    %v1612 = vunpack.c.l.b16 %v314
    %v1613 = vunpack.c.h.b16 %v314
    %v1614 = vunpack.c.l.b16 %v315
    %v1615 = vunpack.c.h.b16 %v315
    %v1616 = vunpack.c.l.b16 %v316
    %v1617 = vunpack.c.h.b16 %v316
    %v1618 = vunpack.c.l.b16 %v317
    %v1619 = vunpack.c.h.b16 %v317
    %v1620 = vunpack.c.l.b16 %v318
    %v1621 = vunpack.c.h.b16 %v318
    %v1622 = vunpack.c.l.b16 %v319
    %v1623 = vunpack.c.h.b16 %v319
    %v1624 = vunpack.c.l.b16 %v320
    %v1625 = vunpack.c.h.b16 %v320
    %v1626 = vunpack.c.l.b16 %v321
    %v1627 = vunpack.c.h.b16 %v321
    %v1628 = vunpack.c.l.b16 %v322
    %v1629 = vunpack.c.h.b16 %v322
    %v1630 = vunpack.c.l.b16 %v323
    %v1631 = vunpack.c.h.b16 %v323
    %v1632 = vunpack.c.l.b16 %v324
    %v1633 = vunpack.c.h.b16 %v324
    %v1634 = vunpack.c.l.b16 %v325
    %v1635 = vunpack.c.h.b16 %v325
    %v1636 = vunpack.c.l.b16 %v326
    %v1637 = vunpack.c.h.b16 %v326
    %v1638 = vunpack.c.l.b16 %v327
    %v1639 = vunpack.c.h.b16 %v327
    %v1640 = vunpack.c.l.b16 %v328
    %v1641 = vunpack.c.h.b16 %v328
    %v1642 = vunpack.c.l.b16 %v329
    %v1643 = vunpack.c.h.b16 %v329
    %v1644 = vunpack.c.l.b16 %v330
    %v1645 = vunpack.c.h.b16 %v330
    %v1646 = vunpack.c.l.b16 %v331
    %v1647 = vunpack.c.h.b16 %v331
    %v1648 = vunpack.c.l.b16 %v332
    %v1649 = vunpack.c.h.b16 %v332
    %v1650 = vunpack.c.l.b16 %v333
    %v1651 = vunpack.c.h.b16 %v333
    %v1652 = vunpack.c.l.b16 %v334
    %v1653 = vunpack.c.h.b16 %v334
    %v1654 = vunpack.c.l.b16 %v335
    %v1655 = vunpack.c.h.b16 %v335
    %v1656 = vunpack.c.l.b16 %v336
    %v1657 = vunpack.c.h.b16 %v336
    %v1658 = vunpack.c.l.b16 %v337
    %v1659 = vunpack.c.h.b16 %v337
    %v1660 = vunpack.c.l.b16 %v338
    %v1661 = vunpack.c.h.b16 %v338
    %v1662 = vunpack.c.l.b16 %v339
    %v1663 = vunpack.c.h.b16 %v339
    %v1664 = vunpack.c.l.b16 %v340
    %v1665 = vunpack.c.h.b16 %v340
    %v1666 = vunpack.c.l.b16 %v341
    %v1667 = vunpack.c.h.b16 %v341
    %v1668 = vunpack.c.l.b16 %v342
    %v1669 = vunpack.c.h.b16 %v342
    %v1670 = vunpack.c.l.b16 %v343
    %v1671 = vunpack.c.h.b16 %v343
    %v1672 = vunpack.c.l.b16 %v344
    %v1673 = vunpack.c.h.b16 %v344
    %v1674 = vunpack.c.l.b16 %v345
    %v1675 = vunpack.c.h.b16 %v345
    %v1676 = vunpack.c.l.b16 %v346
    %v1677 = vunpack.c.h.b16 %v346
    %v1678 = vunpack.c.l.b16 %v347
    %v1679 = vunpack.c.h.b16 %v347
    %v1680 = vunpack.c.l.b16 %v348
    %v1681 = vunpack.c.h.b16 %v348
    %v1682 = vunpack.c.l.b16 %v349
    %v1683 = vunpack.c.h.b16 %v349
    %v1684 = vunpack.c.l.b16 %v350
    %v1685 = vunpack.c.h.b16 %v350
    %v1686 = vunpack.c.l.b16 %v351
    %v1687 = vunpack.c.h.b16 %v351
    %v1688 = vunpack.c.l.b16 %v352
    %v1689 = vunpack.c.h.b16 %v352
    %v1690 = vunpack.c.l.b16 %v353
    %v1691 = vunpack.c.h.b16 %v353
    %v1692 = vunpack.c.l.b16 %v354
    %v1693 = vunpack.c.h.b16 %v354
    %v1694 = vunpack.c.l.b16 %v355
    %v1695 = vunpack.c.h.b16 %v355
    %v1696 = vunpack.c.l.b16 %v356
    %v1697 = vunpack.c.h.b16 %v356
    %v1698 = vunpack.c.l.b16 %v357
    %v1699 = vunpack.c.h.b16 %v357
    %v1700 = vunpack.c.l.b16 %v358
    %v1701 = vunpack.c.h.b16 %v358
    %v1702 = vunpack.c.l.b16 %v359
    %v1703 = vunpack.c.h.b16 %v359
    %v1704 = vunpack.c.l.b16 %v360
    %v1705 = vunpack.c.h.b16 %v360
    %v1706 = vunpack.c.l.b16 %v361
    %v1707 = vunpack.c.h.b16 %v361
    %v1708 = vunpack.c.l.b16 %v362
    %v1709 = vunpack.c.h.b16 %v362
    %v1710 = vunpack.c.l.b16 %v363
    %v1711 = vunpack.c.h.b16 %v363
    %v1712 = vunpack.c.l.b16 %v364
    %v1713 = vunpack.c.h.b16 %v364
    %v1714 = vunpack.c.l.b16 %v365
    %v1715 = vunpack.c.h.b16 %v365
    %v1716 = vunpack.c.l.b16 %v366
    %v1717 = vunpack.c.h.b16 %v366
    %v1718 = vunpack.c.l.b16 %v367
    %v1719 = vunpack.c.h.b16 %v367
    %v1720 = vunpack.c.l.b16 %v368
    %v1721 = vunpack.c.h.b16 %v368
    %v1722 = vunpack.c.l.b16 %v369
    %v1723 = vunpack.c.h.b16 %v369
    %v1724 = vunpack.c.l.b16 %v370
    %v1725 = vunpack.c.h.b16 %v370
    %v1726 = vunpack.c.l.b16 %v371
    %v1727 = vunpack.c.h.b16 %v371
    %v1728 = vunpack.c.l.b16 %v372
    %v1729 = vunpack.c.h.b16 %v372
    %v1730 = vunpack.c.l.b16 %v373
    %v1731 = vunpack.c.h.b16 %v373
    %v1732 = vunpack.c.l.b16 %v374
    %v1733 = vunpack.c.h.b16 %v374
    %v1734 = vunpack.c.l.b16 %v375
    %v1735 = vunpack.c.h.b16 %v375
    %v1736 = vunpack.c.l.b16 %v376
    %v1737 = vunpack.c.h.b16 %v376
    %v1738 = vunpack.c.l.b16 %v377
    %v1739 = vunpack.c.h.b16 %v377
    %v1740 = vunpack.c.l.b16 %v378
    %v1741 = vunpack.c.h.b16 %v378
    %v1742 = vunpack.c.l.b16 %v379
    %v1743 = vunpack.c.h.b16 %v379
    %v1744 = vunpack.c.l.b16 %v380
    %v1745 = vunpack.c.h.b16 %v380
    %v1746 = vunpack.c.l.b16 %v381
    %v1747 = vunpack.c.h.b16 %v381
    %v1748 = vunpack.c.l.b16 %v382
    %v1749 = vunpack.c.h.b16 %v382
    %v1750 = vunpack.c.l.b16 %v383
    %v1751 = vunpack.c.h.b16 %v383
    %v1752 = vunpack.c.l.b16 %v384
    %v1753 = vunpack.c.h.b16 %v384
    %v1754 = vunpack.c.l.b16 %v385
    %v1755 = vunpack.c.h.b16 %v385
    %v1756 = vunpack.c.l.b16 %v386
    %v1757 = vunpack.c.h.b16 %v386
    %v1758 = vunpack.c.l.b16 %v387
    %v1759 = vunpack.c.h.b16 %v387
    %v1760 = vunpack.c.l.b16 %v388
    %v1761 = vunpack.c.h.b16 %v388
    %v1762 = vunpack.c.l.b16 %v389
    %v1763 = vunpack.c.h.b16 %v389
    %v1764 = vunpack.c.l.b16 %v390
    %v1765 = vunpack.c.h.b16 %v390
    %v1766 = vunpack.c.l.b16 %v391
    %v1767 = vunpack.c.h.b16 %v391
    %v1768 = vunpack.c.l.b16 %v392
    %v1769 = vunpack.c.h.b16 %v392
    %v1770 = vunpack.c.l.b16 %v393
    %v1771 = vunpack.c.h.b16 %v393
    %v1772 = vunpack.c.l.b16 %v394
    %v1773 = vunpack.c.h.b16 %v394
    %v1774 = vunpack.c.l.b16 %v395
    %v1775 = vunpack.c.h.b16 %v395
    %v1776 = vunpack.c.l.b16 %v396
    %v1777 = vunpack.c.h.b16 %v396
    %v1778 = vunpack.c.l.b16 %v397
    %v1779 = vunpack.c.h.b16 %v397
    %v1780 = vunpack.c.l.b16 %v398
    %v1781 = vunpack.c.h.b16 %v398
    %v1782 = vunpack.c.l.b16 %v399
    %v1783 = vunpack.c.h.b16 %v399
    %v1784 = vunpack.c.l.b16 %v400
    %v1785 = vunpack.c.h.b16 %v400
    %v1786 = vunpack.c.l.b16 %v401
    %v1787 = vunpack.c.h.b16 %v401
    %v1788 = vunpack.c.l.b16 %v402
    %v1789 = vunpack.c.h.b16 %v402
    %v1790 = vunpack.c.l.b16 %v403
    %v1791 = vunpack.c.h.b16 %v403
    %v1792 = vunpack.c.l.b16 %v404
    %v1793 = vunpack.c.h.b16 %v404
    %v1794 = vunpack.c.l.b16 %v405
    %v1795 = vunpack.c.h.b16 %v405
    %v1796 = vunpack.c.l.b16 %v406
    %v1797 = vunpack.c.h.b16 %v406
    %v1798 = vunpack.c.l.b16 %v407
    %v1799 = vunpack.c.h.b16 %v407
    %v1800 = vunpack.c.l.b16 %v408
    %v1801 = vunpack.c.h.b16 %v408
    %v1802 = vunpack.c.l.b16 %v409
    %v1803 = vunpack.c.h.b16 %v409
    %v1804 = vunpack.c.l.b16 %v410
    %v1805 = vunpack.c.h.b16 %v410
    %v1806 = vunpack.c.l.b16 %v411
    %v1807 = vunpack.c.h.b16 %v411
    %v1808 = vunpack.c.l.b16 %v412
    %v1809 = vunpack.c.h.b16 %v412
    %v1810 = vunpack.c.l.b16 %v413
    %v1811 = vunpack.c.h.b16 %v413
    %v1812 = vunpack.c.l.b16 %v414
    %v1813 = vunpack.c.h.b16 %v414
    %v1814 = vunpack.c.l.b16 %v415
    %v1815 = vunpack.c.h.b16 %v415
    %v1816 = vunpack.c.l.b16 %v416
    %v1817 = vunpack.c.h.b16 %v416
    %v1818 = vunpack.c.l.b16 %v417
    %v1819 = vunpack.c.h.b16 %v417
    %v1820 = vunpack.c.l.b16 %v418
    %v1821 = vunpack.c.h.b16 %v418
    %v1822 = vunpack.c.l.b16 %v419
    %v1823 = vunpack.c.h.b16 %v419
    %v1824 = vunpack.c.l.b16 %v420
    %v1825 = vunpack.c.h.b16 %v420
    %v1826 = vunpack.c.l.b16 %v421
    %v1827 = vunpack.c.h.b16 %v421
    %v1828 = vunpack.c.l.b16 %v422
    %v1829 = vunpack.c.h.b16 %v422
    %v1830 = vunpack.c.l.b16 %v423
    %v1831 = vunpack.c.h.b16 %v423
    %v1832 = vunpack.c.l.b16 %v424
    %v1833 = vunpack.c.h.b16 %v424
    %v1834 = vunpack.c.l.b16 %v425
    %v1835 = vunpack.c.h.b16 %v425
    %v1836 = vunpack.c.l.b16 %v426
    %v1837 = vunpack.c.h.b16 %v426
    %v1838 = vunpack.c.l.b16 %v427
    %v1839 = vunpack.c.h.b16 %v427
    %v1840 = vunpack.c.l.b16 %v428
    %v1841 = vunpack.c.h.b16 %v428
    %v1842 = vunpack.c.l.b16 %v429
    %v1843 = vunpack.c.h.b16 %v429
    %v1844 = vunpack.c.l.b16 %v430
    %v1845 = vunpack.c.h.b16 %v430
    %v1846 = vunpack.c.l.b16 %v431
    %v1847 = vunpack.c.h.b16 %v431
    %v1848 = vunpack.c.l.b16 %v432
    %v1849 = vunpack.c.h.b16 %v432
    %v1850 = vunpack.c.l.b16 %v433
    %v1851 = vunpack.c.h.b16 %v433
    %v1852 = vunpack.c.l.b16 %v434
    %v1853 = vunpack.c.h.b16 %v434
    %v1854 = vunpack.c.l.b16 %v435
    %v1855 = vunpack.c.h.b16 %v435
    %v1856 = vunpack.c.l.b16 %v436
    %v1857 = vunpack.c.h.b16 %v436
    %v1858 = vunpack.c.l.b16 %v437
    %v1859 = vunpack.c.h.b16 %v437
    %v1860 = vunpack.c.l.b16 %v438
    %v1861 = vunpack.c.h.b16 %v438
    %v1862 = vunpack.c.l.b16 %v439
    %v1863 = vunpack.c.h.b16 %v439
    %v1864 = vunpack.c.l.b16 %v440
    %v1865 = vunpack.c.h.b16 %v440
    %v1866 = vunpack.c.l.b16 %v441
    %v1867 = vunpack.c.h.b16 %v441
    %v1868 = vunpack.c.l.b16 %v442
    %v1869 = vunpack.c.h.b16 %v442
    %v1870 = vunpack.c.l.b16 %v443
    %v1871 = vunpack.c.h.b16 %v443
    %v1872 = vunpack.c.l.b16 %v444
    %v1873 = vunpack.c.h.b16 %v444
    %v1874 = vunpack.c.l.b16 %v445
    %v1875 = vunpack.c.h.b16 %v445
    %v1876 = vunpack.c.l.b16 %v446
    %v1877 = vunpack.c.h.b16 %v446
    %v1878 = vunpack.c.l.b16 %v447
    %v1879 = vunpack.c.h.b16 %v447
    %v1880 = vunpack.c.l.b16 %v448
    %v1881 = vunpack.c.h.b16 %v448
    %v1882 = vunpack.c.l.b16 %v449
    %v1883 = vunpack.c.h.b16 %v449
    %v1884 = vunpack.c.l.b16 %v450
    %v1885 = vunpack.c.h.b16 %v450
    %v1886 = vunpack.c.l.b16 %v451
    %v1887 = vunpack.c.h.b16 %v451
    %v1888 = vunpack.c.l.b16 %v452
    %v1889 = vunpack.c.h.b16 %v452
    %v1890 = vunpack.c.l.b16 %v453
    %v1891 = vunpack.c.h.b16 %v453
    %v1892 = vunpack.c.l.b16 %v454
    %v1893 = vunpack.c.h.b16 %v454
    %v1894 = vunpack.c.l.b16 %v455
    %v1895 = vunpack.c.h.b16 %v455
    %v1896 = vunpack.c.l.b16 %v456
    %v1897 = vunpack.c.h.b16 %v456
    %v1898 = vunpack.c.l.b16 %v457
    %v1899 = vunpack.c.h.b16 %v457
    %v1900 = vunpack.c.l.b16 %v458
    %v1901 = vunpack.c.h.b16 %v458
    %v1902 = vunpack.c.l.b16 %v459
    %v1903 = vunpack.c.h.b16 %v459
    %v1904 = vunpack.c.l.b16 %v460
    %v1905 = vunpack.c.h.b16 %v460
    %v1906 = vunpack.c.l.b16 %v461
    %v1907 = vunpack.c.h.b16 %v461
    %v1908 = vunpack.c.l.b16 %v462
    %v1909 = vunpack.c.h.b16 %v462
    %v1910 = vunpack.c.l.b16 %v463
    %v1911 = vunpack.c.h.b16 %v463
    %v1912 = vunpack.c.l.b16 %v464
    %v1913 = vunpack.c.h.b16 %v464
    %v1914 = vunpack.c.l.b16 %v465
    %v1915 = vunpack.c.h.b16 %v465
    %v1916 = vunpack.c.l.b16 %v466
    %v1917 = vunpack.c.h.b16 %v466
    %v1918 = vunpack.c.l.b16 %v467
    %v1919 = vunpack.c.h.b16 %v467
    %v1920 = vunpack.c.l.b16 %v468
    %v1921 = vunpack.c.h.b16 %v468
    %v1922 = vunpack.c.l.b16 %v469
    %v1923 = vunpack.c.h.b16 %v469
    %v1924 = vunpack.c.l.b16 %v470
    %v1925 = vunpack.c.h.b16 %v470
    %v1926 = vunpack.c.l.b16 %v471
    %v1927 = vunpack.c.h.b16 %v471
    %v1928 = vunpack.c.l.b16 %v472
    %v1929 = vunpack.c.h.b16 %v472
    %v1930 = vunpack.c.l.b16 %v473
    %v1931 = vunpack.c.h.b16 %v473
    %v1932 = vunpack.c.l.b16 %v474
    %v1933 = vunpack.c.h.b16 %v474
    %v1934 = vunpack.c.l.b16 %v475
    %v1935 = vunpack.c.h.b16 %v475
    %v1936 = vunpack.c.l.b16 %v476
    %v1937 = vunpack.c.h.b16 %v476
    %v1938 = vunpack.c.l.b16 %v477
    %v1939 = vunpack.c.h.b16 %v477
    %v1940 = vunpack.c.l.b16 %v478
    %v1941 = vunpack.c.h.b16 %v478
    %v1942 = vunpack.c.l.b16 %v479
    %v1943 = vunpack.c.h.b16 %v479
    %v1944 = vunpack.c.l.b16 %v480
    %v1945 = vunpack.c.h.b16 %v480
    %v1946 = vunpack.c.l.b16 %v481
    %v1947 = vunpack.c.h.b16 %v481
    %v1948 = vunpack.c.l.b16 %v482
    %v1949 = vunpack.c.h.b16 %v482
    %v1950 = vunpack.c.l.b16 %v483
    %v1951 = vunpack.c.h.b16 %v483
    %v1952 = vunpack.c.l.b16 %v484
    %v1953 = vunpack.c.h.b16 %v484
    %v1954 = vunpack.c.l.b16 %v485
    %v1955 = vunpack.c.h.b16 %v485
    %v1956 = vunpack.c.l.b16 %v486
    %v1957 = vunpack.c.h.b16 %v486
    %v1958 = vunpack.c.l.b16 %v487
    %v1959 = vunpack.c.h.b16 %v487
    %v1960 = vunpack.c.l.b16 %v488
    %v1961 = vunpack.c.h.b16 %v488
    %v1962 = vunpack.c.l.b16 %v489
    %v1963 = vunpack.c.h.b16 %v489
    %v1964 = vunpack.c.l.b16 %v490
    %v1965 = vunpack.c.h.b16 %v490
    %v1966 = vunpack.c.l.b16 %v491
    %v1967 = vunpack.c.h.b16 %v491
    %v1968 = vunpack.c.l.b16 %v492
    %v1969 = vunpack.c.h.b16 %v492
    %v1970 = vunpack.c.l.b16 %v493
    %v1971 = vunpack.c.h.b16 %v493
    %v1972 = vunpack.c.l.b16 %v494
    %v1973 = vunpack.c.h.b16 %v494
    %v1974 = vunpack.c.l.b16 %v495
    %v1975 = vunpack.c.h.b16 %v495
    %v1976 = vunpack.c.l.b16 %v496
    %v1977 = vunpack.c.h.b16 %v496
    %v1978 = vunpack.c.l.b16 %v497
    %v1979 = vunpack.c.h.b16 %v497
    %v1980 = vunpack.c.l.b16 %v498
    %v1981 = vunpack.c.h.b16 %v498
    %v1982 = vunpack.c.l.b16 %v499
    %v1983 = vunpack.c.h.b16 %v499
    %v1984 = vunpack.c.l.b16 %v500
    %v1985 = vunpack.c.h.b16 %v500
    %v1986 = vunpack.c.l.b16 %v501
    %v1987 = vunpack.c.h.b16 %v501
    %v1988 = vunpack.c.l.b16 %v502
    %v1989 = vunpack.c.h.b16 %v502
    %v1990 = vunpack.c.l.b16 %v503
    %v1991 = vunpack.c.h.b16 %v503
    %v1992 = vunpack.c.l.b16 %v504
    %v1993 = vunpack.c.h.b16 %v504
    %v1994 = vunpack.c.l.b16 %v505
    %v1995 = vunpack.c.h.b16 %v505
    %v1996 = vunpack.c.l.b16 %v506
    %v1997 = vunpack.c.h.b16 %v506
    %v1998 = vunpack.c.l.b16 %v507
    %v1999 = vunpack.c.h.b16 %v507
    %v2000 = vunpack.c.l.b16 %v508
    %v2001 = vunpack.c.h.b16 %v508
    %v2002 = vunpack.c.l.b16 %v509
    %v2003 = vunpack.c.h.b16 %v509
    %v2004 = vunpack.c.l.b16 %v510
    %v2005 = vunpack.c.h.b16 %v510
    %v2006 = vunpack.c.l.b16 %v511
    %v2007 = vunpack.c.h.b16 %v511
    %v2008 = vunpack.c.l.b16 %v512
    %v2009 = vunpack.c.h.b16 %v512
    %v2010 = vunpack.c.l.b16 %v513
    %v2011 = vunpack.c.h.b16 %v513
    %v2012 = vunpack.c.l.b16 %v514
    %v2013 = vunpack.c.h.b16 %v514
    %v2014 = vunpack.c.l.b16 %v515
    %v2015 = vunpack.c.h.b16 %v515
    %v2016 = vunpack.c.l.b16 %v516
    %v2017 = vunpack.c.h.b16 %v516
    %v2018 = vunpack.c.l.b16 %v517
    %v2019 = vunpack.c.h.b16 %v517
    %v2020 = vunpack.c.l.b16 %v518
    %v2021 = vunpack.c.h.b16 %v518
    %v2022 = vunpack.c.l.b16 %v519
    %v2023 = vunpack.c.h.b16 %v519
    %v2024 = vunpack.c.l.b16 %v520
    %v2025 = vunpack.c.h.b16 %v520
    %v2026 = vunpack.c.l.b16 %v521
    %v2027 = vunpack.c.h.b16 %v521
    %v2028 = vunpack.c.l.b16 %v522
    %v2029 = vunpack.c.h.b16 %v522
    %v2030 = vunpack.c.l.b16 %v523
    %v2031 = vunpack.c.h.b16 %v523
    %v2032 = vunpack.c.l.b16 %v524
    %v2033 = vunpack.c.h.b16 %v524
    %v2034 = vunpack.c.l.b16 %v525
    %v2035 = vunpack.c.h.b16 %v525
    %v2036 = vunpack.c.l.b16 %v526
    %v2037 = vunpack.c.h.b16 %v526
    %v2038 = vunpack.c.l.b16 %v527
    %v2039 = vunpack.c.h.b16 %v527
    %v2040 = vunpack.c.l.b16 %v528
    %v2041 = vunpack.c.h.b16 %v528
    %v2042 = vunpack.c.l.b16 %v529
    %v2043 = vunpack.c.h.b16 %v529
    %v2044 = vunpack.c.l.b16 %v530
    %v2045 = vunpack.c.h.b16 %v530
    %v2046 = vunpack.c.l.b16 %v531
    %v2047 = vunpack.c.h.b16 %v531
    %v2048 = vunpack.c.l.b16 %v532
    %v2049 = vunpack.c.h.b16 %v532
    %v2050 = vunpack.c.l.b16 %v533
    %v2051 = vunpack.c.h.b16 %v533
    %v2052 = vunpack.c.l.b16 %v534
    %v2053 = vunpack.c.h.b16 %v534
    %v2054 = vunpack.c.l.b16 %v535
    %v2055 = vunpack.c.h.b16 %v535
    %v2056 = vunpack.c.l.b16 %v536
    %v2057 = vunpack.c.h.b16 %v536
    %v2058 = vunpack.c.l.b16 %v537
    %v2059 = vunpack.c.h.b16 %v537
    %v2060 = vunpack.c.l.b16 %v538
    %v2061 = vunpack.c.h.b16 %v538
    %v2062 = vunpack.c.l.b16 %v539
    %v2063 = vunpack.c.h.b16 %v539
    %v2064 = vunpack.c.l.b16 %v540
    %v2065 = vunpack.c.h.b16 %v540
    %v2066 = vunpack.c.l.b16 %v541
    %v2067 = vunpack.c.h.b16 %v541
    %v2068 = vunpack.c.l.b16 %v542
    %v2069 = vunpack.c.h.b16 %v542
    %v2070 = vunpack.c.l.b16 %v543
    %v2071 = vunpack.c.h.b16 %v543
    %v2072 = vunpack.c.l.b16 %v544
    %v2073 = vunpack.c.h.b16 %v544
    %v2074 = vunpack.c.l.b16 %v545
    %v2075 = vunpack.c.h.b16 %v545
    %v2076 = vunpack.c.l.b16 %v546
    %v2077 = vunpack.c.h.b16 %v546
    %v2078 = vunpack.c.l.b16 %v547
    %v2079 = vunpack.c.h.b16 %v547
    %v2080 = vunpack.c.l.b16 %v548
    %v2081 = vunpack.c.h.b16 %v548
    %v2082 = vunpack.c.l.b16 %v549
    %v2083 = vunpack.c.h.b16 %v549
    %v2084 = vunpack.c.l.b16 %v550
    %v2085 = vunpack.c.h.b16 %v550
    %v2086 = vunpack.c.l.b16 %v551
    %v2087 = vunpack.c.h.b16 %v551
    %v2088 = vunpack.c.l.b16 %v552
    %v2089 = vunpack.c.h.b16 %v552
    %v2090 = vunpack.c.l.b16 %v553
    %v2091 = vunpack.c.h.b16 %v553
    %v2092 = vunpack.c.l.b16 %v554
    %v2093 = vunpack.c.h.b16 %v554
    %v2094 = vunpack.c.l.b16 %v555
    %v2095 = vunpack.c.h.b16 %v555
    %v2096 = vunpack.c.l.b16 %v556
    %v2097 = vunpack.c.h.b16 %v556
    %v2098 = vunpack.c.l.b16 %v557
    %v2099 = vunpack.c.h.b16 %v557
    %v2100 = vunpack.c.l.b16 %v558
    %v2101 = vunpack.c.h.b16 %v558
    %v2102 = vunpack.c.l.b16 %v559
    %v2103 = vunpack.c.h.b16 %v559
    %v2104 = vunpack.c.l.b16 %v560
    %v2105 = vunpack.c.h.b16 %v560
    %v2106 = vunpack.c.l.b16 %v561
    %v2107 = vunpack.c.h.b16 %v561
    %v2108 = vunpack.c.l.b16 %v562
    %v2109 = vunpack.c.h.b16 %v562
    %v2110 = vunpack.c.l.b16 %v563
    %v2111 = vunpack.c.h.b16 %v563
    %v2112 = vunpack.c.l.b16 %v564
    %v2113 = vunpack.c.h.b16 %v564
    %v2114 = vunpack.c.l.b16 %v565
    %v2115 = vunpack.c.h.b16 %v565
    %v2116 = vunpack.c.l.b16 %v566
    %v2117 = vunpack.c.h.b16 %v566
    %v2118 = vunpack.c.l.b16 %v567
    %v2119 = vunpack.c.h.b16 %v567
    %v2120 = vunpack.c.l.b16 %v568
    %v2121 = vunpack.c.h.b16 %v568
    %v2122 = vunpack.c.l.b16 %v569
    %v2123 = vunpack.c.h.b16 %v569
    %v2124 = vunpack.c.l.b16 %v570
    %v2125 = vunpack.c.h.b16 %v570
    %v2126 = vunpack.c.l.b16 %v571
    %v2127 = vunpack.c.h.b16 %v571
    %v2128 = vunpack.c.l.b16 %v572
    %v2129 = vunpack.c.h.b16 %v572
    %v2130 = vunpack.c.l.b16 %v573
    %v2131 = vunpack.c.h.b16 %v573
    %v2132 = vunpack.c.l.b16 %v574
    %v2133 = vunpack.c.h.b16 %v574
    %v2134 = vunpack.c.l.b16 %v575
    %v2135 = vunpack.c.h.b16 %v575
    %v2136 = vunpack.c.l.b16 %v576
    %v2137 = vunpack.c.h.b16 %v576
    %v2138 = vunpack.c.l.b16 %v577
    %v2139 = vunpack.c.h.b16 %v577
    %v2140 = vunpack.c.l.b16 %v578
    %v2141 = vunpack.c.h.b16 %v578
    %v2142 = vunpack.c.l.b16 %v579
    %v2143 = vunpack.c.h.b16 %v579
    %v2144 = vunpack.c.l.b16 %v580
    %v2145 = vunpack.c.h.b16 %v580
    %v2146 = vunpack.c.l.b16 %v581
    %v2147 = vunpack.c.h.b16 %v581
    %v2148 = vunpack.c.l.b16 %v582
    %v2149 = vunpack.c.h.b16 %v582
    %v2150 = vunpack.c.l.b16 %v583
    %v2151 = vunpack.c.h.b16 %v583
    %v2152 = vunpack.c.l.b16 %v584
    %v2153 = vunpack.c.h.b16 %v584
    %v2154 = vunpack.c.l.b16 %v585
    %v2155 = vunpack.c.h.b16 %v585
    %v2156 = vunpack.c.l.b16 %v586
    %v2157 = vunpack.c.h.b16 %v586
    %v2158 = vunpack.c.l.b16 %v587
    %v2159 = vunpack.c.h.b16 %v587
    %v2160 = vunpack.c.l.b16 %v588
    %v2161 = vunpack.c.h.b16 %v588
    %v2162 = vunpack.c.l.b16 %v589
    %v2163 = vunpack.c.h.b16 %v589
    %v2164 = vunpack.c.l.b16 %v590
    %v2165 = vunpack.c.h.b16 %v590
    %v2166 = vunpack.c.l.b16 %v591
    %v2167 = vunpack.c.h.b16 %v591
    %v2168 = vunpack.c.l.b16 %v592
    %v2169 = vunpack.c.h.b16 %v592
    %v2170 = vunpack.c.l.b16 %v593
    %v2171 = vunpack.c.h.b16 %v593
    %v2172 = vunpack.c.l.b16 %v594
    %v2173 = vunpack.c.h.b16 %v594
    %v2174 = vunpack.c.l.b16 %v595
    %v2175 = vunpack.c.h.b16 %v595
    %v2176 = vunpack.c.l.b16 %v596
    %v2177 = vunpack.c.h.b16 %v596
    %v2178 = vunpack.c.l.b16 %v597
    %v2179 = vunpack.c.h.b16 %v597
    %v2180 = vunpack.c.l.b16 %v598
    %v2181 = vunpack.c.h.b16 %v598
    %v2182 = vunpack.c.l.b16 %v599
    %v2183 = vunpack.c.h.b16 %v599
    %v2184 = vunpack.c.l.b16 %v600
    %v2185 = vunpack.c.h.b16 %v600
    %v2186 = vunpack.c.l.b16 %v601
    %v2187 = vunpack.c.h.b16 %v601
    %v2188 = vunpack.c.l.b16 %v602
    %v2189 = vunpack.c.h.b16 %v602
    %v2190 = vunpack.c.l.b16 %v603
    %v2191 = vunpack.c.h.b16 %v603
    %v2192 = vunpack.c.l.b16 %v604
    %v2193 = vunpack.c.h.b16 %v604
    %v2194 = vunpack.c.l.b16 %v605
    %v2195 = vunpack.c.h.b16 %v605
    %v2196 = vunpack.c.l.b16 %v606
    %v2197 = vunpack.c.h.b16 %v606
    %v2198 = vunpack.c.l.b16 %v607
    %v2199 = vunpack.c.h.b16 %v607
    %v2200 = vunpack.c.l.b16 %v608
    %v2201 = vunpack.c.h.b16 %v608
    %v2202 = vunpack.c.l.b16 %v609
    %v2203 = vunpack.c.h.b16 %v609
    %v2204 = vunpack.c.l.b16 %v610
    %v2205 = vunpack.c.h.b16 %v610
    %v2206 = vunpack.c.l.b16 %v611
    %v2207 = vunpack.c.h.b16 %v611
    %v2208 = vunpack.c.l.b16 %v612
    %v2209 = vunpack.c.h.b16 %v612
    %v2210 = vunpack.c.l.b16 %v613
    %v2211 = vunpack.c.h.b16 %v613
    %v2212 = vunpack.c.l.b16 %v614
    %v2213 = vunpack.c.h.b16 %v614
    %v2214 = vunpack.c.l.b16 %v615
    %v2215 = vunpack.c.h.b16 %v615
    %v2216 = vunpack.c.l.b16 %v616
    %v2217 = vunpack.c.h.b16 %v616
    %v2218 = vunpack.c.l.b16 %v617
    %v2219 = vunpack.c.h.b16 %v617
    %v2220 = vunpack.c.l.b16 %v618
    %v2221 = vunpack.c.h.b16 %v618
    %v2222 = vunpack.c.l.b16 %v619
    %v2223 = vunpack.c.h.b16 %v619
    %v2224 = vunpack.c.l.b16 %v620
    %v2225 = vunpack.c.h.b16 %v620
    %v2226 = vunpack.c.l.b16 %v621
    %v2227 = vunpack.c.h.b16 %v621
    %v2228 = vpack.c.b16 %v1212, %v1204
    %v2229 = vpack.c.b16 %v1213, %v1205
    %v2230 = vpack.c.b16 %v1214, %v1206
    %v2231 = vpack.c.b16 %v1215, %v1207
    %v2232 = vpack.c.b16 %v1216, %v1208
    %v2233 = vpack.c.b16 %v1217, %v1209
    %v2234 = vpack.c.b16 %v1218, %v1210
    %v2235 = vpack.c.b16 %v1219, %v1211
    %v2236 = vpack.c.b16 %v1228, %v1220
    %v2237 = vpack.c.b16 %v1229, %v1221
    %v2238 = vpack.c.b16 %v1230, %v1222
    %v2239 = vpack.c.b16 %v1231, %v1223
    %v2240 = vpack.c.b16 %v1232, %v1224
    %v2241 = vpack.c.b16 %v1233, %v1225
    %v2242 = vpack.c.b16 %v1234, %v1226
    %v2243 = vpack.c.b16 %v1235, %v1227
    %v2244 = vpack.c.b16 %v1244, %v1236
    %v2245 = vpack.c.b16 %v1245, %v1237
    %v2246 = vpack.c.b16 %v1246, %v1238
    %v2247 = vpack.c.b16 %v1247, %v1239
    %v2248 = vpack.c.b16 %v1248, %v1240
    %v2249 = vpack.c.b16 %v1249, %v1241
    %v2250 = vpack.c.b16 %v1250, %v1242
    %v2251 = vpack.c.b16 %v1251, %v1243
    %v2252 = vpack.c.b16 %v1260, %v1252
    %v2253 = vpack.c.b16 %v1261, %v1253
    %v2254 = vpack.c.b16 %v1262, %v1254
    %v2255 = vpack.c.b16 %v1263, %v1255
    %v2256 = vpack.c.b16 %v1264, %v1256
    %v2257 = vpack.c.b16 %v1265, %v1257
    %v2258 = vpack.c.b16 %v1266, %v1258
    %v2259 = vpack.c.b16 %v1267, %v1259
    %v2260 = vpack.c.b16 %v1276, %v1268
    %v2261 = vpack.c.b16 %v1277, %v1269
    %v2262 = vpack.c.b16 %v1278, %v1270
    %v2263 = vpack.c.b16 %v1279, %v1271
    %v2264 = vpack.c.b16 %v1280, %v1272
    %v2265 = vpack.c.b16 %v1281, %v1273
    %v2266 = vpack.c.b16 %v1282, %v1274
    %v2267 = vpack.c.b16 %v1283, %v1275
    %v2268 = vpack.c.b16 %v1292, %v1284
    %v2269 = vpack.c.b16 %v1293, %v1285
    %v2270 = vpack.c.b16 %v1294, %v1286
    %v2271 = vpack.c.b16 %v1295, %v1287
    %v2272 = vpack.c.b16 %v1296, %v1288
    %v2273 = vpack.c.b16 %v1297, %v1289
    %v2274 = vpack.c.b16 %v1298, %v1290
    %v2275 = vpack.c.b16 %v1299, %v1291
    %v2276 = vpack.c.b16 %v1308, %v1300
    %v2277 = vpack.c.b16 %v1309, %v1301
    %v2278 = vpack.c.b16 %v1310, %v1302
    %v2279 = vpack.c.b16 %v1311, %v1303
    %v2280 = vpack.c.b16 %v1312, %v1304
    %v2281 = vpack.c.b16 %v1313, %v1305
    %v2282 = vpack.c.b16 %v1314, %v1306
    %v2283 = vpack.c.b16 %v1315, %v1307
    %v2284 = vpack.c.b16 %v1324, %v1316
    %v2285 = vpack.c.b16 %v1325, %v1317
    %v2286 = vpack.c.b16 %v1326, %v1318
    %v2287 = vpack.c.b16 %v1327, %v1319
    %v2288 = vpack.c.b16 %v1328, %v1320
    %v2289 = vpack.c.b16 %v1329, %v1321
    %v2290 = vpack.c.b16 %v1330, %v1322
    %v2291 = vpack.c.b16 %v1331, %v1323
    %v2292 = vpack.c.b16 %v1340, %v1332
    %v2293 = vpack.c.b16 %v1341, %v1333
    %v2294 = vpack.c.b16 %v1342, %v1334
    %v2295 = vpack.c.b16 %v1343, %v1335
    %v2296 = vpack.c.b16 %v1344, %v1336
    %v2297 = vpack.c.b16 %v1345, %v1337
    %v2298 = vpack.c.b16 %v1346, %v1338
    %v2299 = vpack.c.b16 %v1347, %v1339
    %v2300 = vpack.c.b16 %v1356, %v1348
    %v2301 = vpack.c.b16 %v1357, %v1349
    %v2302 = vpack.c.b16 %v1358, %v1350
    %v2303 = vpack.c.b16 %v1359, %v1351
    %v2304 = vpack.c.b16 %v1360, %v1352
    %v2305 = vpack.c.b16 %v1361, %v1353
    %v2306 = vpack.c.b16 %v1362, %v1354
    %v2307 = vpack.c.b16 %v1363, %v1355
    %v2308 = vpack.c.b16 %v1372, %v1364
    %v2309 = vpack.c.b16 %v1373, %v1365
    %v2310 = vpack.c.b16 %v1374, %v1366
    %v2311 = vpack.c.b16 %v1375, %v1367
    %v2312 = vpack.c.b16 %v1376, %v1368
    %v2313 = vpack.c.b16 %v1377, %v1369
    %v2314 = vpack.c.b16 %v1378, %v1370
    %v2315 = vpack.c.b16 %v1379, %v1371
    %v2316 = vpack.c.b16 %v1388, %v1380
    %v2317 = vpack.c.b16 %v1389, %v1381
    %v2318 = vpack.c.b16 %v1390, %v1382
    %v2319 = vpack.c.b16 %v1391, %v1383
    %v2320 = vpack.c.b16 %v1392, %v1384
    %v2321 = vpack.c.b16 %v1393, %v1385
    %v2322 = vpack.c.b16 %v1394, %v1386
    %v2323 = vpack.c.b16 %v1395, %v1387
    %v2324 = vpack.c.b16 %v1404, %v1396
    %v2325 = vpack.c.b16 %v1405, %v1397
    %v2326 = vpack.c.b16 %v1406, %v1398
    %v2327 = vpack.c.b16 %v1407, %v1399
    %v2328 = vpack.c.b16 %v1408, %v1400
    %v2329 = vpack.c.b16 %v1409, %v1401
    %v2330 = vpack.c.b16 %v1410, %v1402
    %v2331 = vpack.c.b16 %v1411, %v1403
    %v2332 = vpack.c.b16 %v1420, %v1412
    %v2333 = vpack.c.b16 %v1421, %v1413
    %v2334 = vpack.c.b16 %v1422, %v1414
    %v2335 = vpack.c.b16 %v1423, %v1415
    %v2336 = vpack.c.b16 %v1424, %v1416
    %v2337 = vpack.c.b16 %v1425, %v1417
    %v2338 = vpack.c.b16 %v1426, %v1418
    %v2339 = vpack.c.b16 %v1427, %v1419
    %v2340 = vpack.c.b16 %v1436, %v1428
    %v2341 = vpack.c.b16 %v1437, %v1429
    %v2342 = vpack.c.b16 %v1438, %v1430
    %v2343 = vpack.c.b16 %v1439, %v1431
    %v2344 = vpack.c.b16 %v1440, %v1432
    %v2345 = vpack.c.b16 %v1441, %v1433
    %v2346 = vpack.c.b16 %v1442, %v1434
    %v2347 = vpack.c.b16 %v1443, %v1435
    %v2348 = vpack.c.b16 %v1452, %v1444
    %v2349 = vpack.c.b16 %v1453, %v1445
    %v2350 = vpack.c.b16 %v1454, %v1446
    %v2351 = vpack.c.b16 %v1455, %v1447
    %v2352 = vpack.c.b16 %v1456, %v1448
    %v2353 = vpack.c.b16 %v1457, %v1449
    %v2354 = vpack.c.b16 %v1458, %v1450
    %v2355 = vpack.c.b16 %v1459, %v1451
    %v2356 = vpack.c.b16 %v1468, %v1460
    %v2357 = vpack.c.b16 %v1469, %v1461
    %v2358 = vpack.c.b16 %v1470, %v1462
    %v2359 = vpack.c.b16 %v1471, %v1463
    %v2360 = vpack.c.b16 %v1472, %v1464
    %v2361 = vpack.c.b16 %v1473, %v1465
    %v2362 = vpack.c.b16 %v1474, %v1466
    %v2363 = vpack.c.b16 %v1475, %v1467
    %v2364 = vpack.c.b16 %v1484, %v1476
    %v2365 = vpack.c.b16 %v1485, %v1477
    %v2366 = vpack.c.b16 %v1486, %v1478
    %v2367 = vpack.c.b16 %v1487, %v1479
    %v2368 = vpack.c.b16 %v1488, %v1480
    %v2369 = vpack.c.b16 %v1489, %v1481
    %v2370 = vpack.c.b16 %v1490, %v1482
    %v2371 = vpack.c.b16 %v1491, %v1483
    %v2372 = vpack.c.b16 %v1500, %v1492
    %v2373 = vpack.c.b16 %v1501, %v1493
    %v2374 = vpack.c.b16 %v1502, %v1494
    %v2375 = vpack.c.b16 %v1503, %v1495
    %v2376 = vpack.c.b16 %v1504, %v1496
    %v2377 = vpack.c.b16 %v1505, %v1497
    %v2378 = vpack.c.b16 %v1506, %v1498
    %v2379 = vpack.c.b16 %v1507, %v1499
    %v2380 = vpack.c.b16 %v1516, %v1508
    %v2381 = vpack.c.b16 %v1517, %v1509
    %v2382 = vpack.c.b16 %v1518, %v1510
    %v2383 = vpack.c.b16 %v1519, %v1511
    %v2384 = vpack.c.b16 %v1520, %v1512
    %v2385 = vpack.c.b16 %v1521, %v1513
    %v2386 = vpack.c.b16 %v1522, %v1514
    %v2387 = vpack.c.b16 %v1523, %v1515
    %v2388 = vpack.c.b16 %v1532, %v1524
    %v2389 = vpack.c.b16 %v1533, %v1525
    %v2390 = vpack.c.b16 %v1534, %v1526
    %v2391 = vpack.c.b16 %v1535, %v1527
    %v2392 = vpack.c.b16 %v1536, %v1528
    %v2393 = vpack.c.b16 %v1537, %v1529
    %v2394 = vpack.c.b16 %v1538, %v1530
    %v2395 = vpack.c.b16 %v1539, %v1531
    %v2396 = vpack.c.b16 %v1548, %v1540
    %v2397 = vpack.c.b16 %v1549, %v1541
    %v2398 = vpack.c.b16 %v1550, %v1542
    %v2399 = vpack.c.b16 %v1551, %v1543
    %v2400 = vpack.c.b16 %v1552, %v1544
    %v2401 = vpack.c.b16 %v1553, %v1545
    %v2402 = vpack.c.b16 %v1554, %v1546
    %v2403 = vpack.c.b16 %v1555, %v1547
    %v2404 = vpack.c.b16 %v1564, %v1556
    %v2405 = vpack.c.b16 %v1565, %v1557
    %v2406 = vpack.c.b16 %v1566, %v1558
    %v2407 = vpack.c.b16 %v1567, %v1559
    %v2408 = vpack.c.b16 %v1568, %v1560
    %v2409 = vpack.c.b16 %v1569, %v1561
    %v2410 = vpack.c.b16 %v1570, %v1562
    %v2411 = vpack.c.b16 %v1571, %v1563
    %v2412 = vpack.c.b16 %v1580, %v1572
    %v2413 = vpack.c.b16 %v1581, %v1573
    %v2414 = vpack.c.b16 %v1582, %v1574
    %v2415 = vpack.c.b16 %v1583, %v1575
    %v2416 = vpack.c.b16 %v1584, %v1576
    %v2417 = vpack.c.b16 %v1585, %v1577
    %v2418 = vpack.c.b16 %v1586, %v1578
    %v2419 = vpack.c.b16 %v1587, %v1579
    %v2420 = vpack.c.b16 %v1596, %v1588
    %v2421 = vpack.c.b16 %v1597, %v1589
    %v2422 = vpack.c.b16 %v1598, %v1590
    %v2423 = vpack.c.b16 %v1599, %v1591
    %v2424 = vpack.c.b16 %v1600, %v1592
    %v2425 = vpack.c.b16 %v1601, %v1593
    %v2426 = vpack.c.b16 %v1602, %v1594
    %v2427 = vpack.c.b16 %v1603, %v1595
    %v2428 = vpack.c.b16 %v1612, %v1604
    %v2429 = vpack.c.b16 %v1613, %v1605
    %v2430 = vpack.c.b16 %v1614, %v1606
    %v2431 = vpack.c.b16 %v1615, %v1607
    %v2432 = vpack.c.b16 %v1616, %v1608
    %v2433 = vpack.c.b16 %v1617, %v1609
    %v2434 = vpack.c.b16 %v1618, %v1610
    %v2435 = vpack.c.b16 %v1619, %v1611
    %v2436 = vpack.c.b16 %v1628, %v1620
    %v2437 = vpack.c.b16 %v1629, %v1621
    %v2438 = vpack.c.b16 %v1630, %v1622
    %v2439 = vpack.c.b16 %v1631, %v1623
    %v2440 = vpack.c.b16 %v1632, %v1624
    %v2441 = vpack.c.b16 %v1633, %v1625
    %v2442 = vpack.c.b16 %v1634, %v1626
    %v2443 = vpack.c.b16 %v1635, %v1627
    %v2444 = vpack.c.b16 %v1644, %v1636
    %v2445 = vpack.c.b16 %v1645, %v1637
    %v2446 = vpack.c.b16 %v1646, %v1638
    %v2447 = vpack.c.b16 %v1647, %v1639
    %v2448 = vpack.c.b16 %v1648, %v1640
    %v2449 = vpack.c.b16 %v1649, %v1641
    %v2450 = vpack.c.b16 %v1650, %v1642
    %v2451 = vpack.c.b16 %v1651, %v1643
    %v2452 = vpack.c.b16 %v1660, %v1652
    %v2453 = vpack.c.b16 %v1661, %v1653
    %v2454 = vpack.c.b16 %v1662, %v1654
    %v2455 = vpack.c.b16 %v1663, %v1655
    %v2456 = vpack.c.b16 %v1664, %v1656
    %v2457 = vpack.c.b16 %v1665, %v1657
    %v2458 = vpack.c.b16 %v1666, %v1658
    %v2459 = vpack.c.b16 %v1667, %v1659
    %v2460 = vpack.c.b16 %v1676, %v1668
    %v2461 = vpack.c.b16 %v1677, %v1669
    %v2462 = vpack.c.b16 %v1678, %v1670
    %v2463 = vpack.c.b16 %v1679, %v1671
    %v2464 = vpack.c.b16 %v1680, %v1672
    %v2465 = vpack.c.b16 %v1681, %v1673
    %v2466 = vpack.c.b16 %v1682, %v1674
    %v2467 = vpack.c.b16 %v1683, %v1675
    %v2468 = vpack.c.b16 %v1692, %v1684
    %v2469 = vpack.c.b16 %v1693, %v1685
    %v2470 = vpack.c.b16 %v1694, %v1686
    %v2471 = vpack.c.b16 %v1695, %v1687
    %v2472 = vpack.c.b16 %v1696, %v1688
    %v2473 = vpack.c.b16 %v1697, %v1689
    %v2474 = vpack.c.b16 %v1698, %v1690
    %v2475 = vpack.c.b16 %v1699, %v1691
    %v2476 = vpack.c.b16 %v1708, %v1700
    %v2477 = vpack.c.b16 %v1709, %v1701
    %v2478 = vpack.c.b16 %v1710, %v1702
    %v2479 = vpack.c.b16 %v1711, %v1703
    %v2480 = vpack.c.b16 %v1712, %v1704
    %v2481 = vpack.c.b16 %v1713, %v1705
    %v2482 = vpack.c.b16 %v1714, %v1706
    %v2483 = vpack.c.b16 %v1715, %v1707
    %v2484 = vpack.c.b16 %v1724, %v1716
    %v2485 = vpack.c.b16 %v1725, %v1717
    %v2486 = vpack.c.b16 %v1726, %v1718
    %v2487 = vpack.c.b16 %v1727, %v1719
    %v2488 = vpack.c.b16 %v1728, %v1720
    %v2489 = vpack.c.b16 %v1729, %v1721
    %v2490 = vpack.c.b16 %v1730, %v1722
    %v2491 = vpack.c.b16 %v1731, %v1723
    %v2492 = vpack.c.b16 %v1740, %v1732
    %v2493 = vpack.c.b16 %v1741, %v1733
    %v2494 = vpack.c.b16 %v1742, %v1734
    %v2495 = vpack.c.b16 %v1743, %v1735
    %v2496 = vpack.c.b16 %v1744, %v1736
    %v2497 = vpack.c.b16 %v1745, %v1737
    %v2498 = vpack.c.b16 %v1746, %v1738
    %v2499 = vpack.c.b16 %v1747, %v1739
    %v2500 = vpack.c.b16 %v1756, %v1748
    %v2501 = vpack.c.b16 %v1757, %v1749
    %v2502 = vpack.c.b16 %v1758, %v1750
    %v2503 = vpack.c.b16 %v1759, %v1751
    %v2504 = vpack.c.b16 %v1760, %v1752
    %v2505 = vpack.c.b16 %v1761, %v1753
    %v2506 = vpack.c.b16 %v1762, %v1754
    %v2507 = vpack.c.b16 %v1763, %v1755
    %v2508 = vpack.c.b16 %v1772, %v1764
    %v2509 = vpack.c.b16 %v1773, %v1765
    %v2510 = vpack.c.b16 %v1774, %v1766
    %v2511 = vpack.c.b16 %v1775, %v1767
    %v2512 = vpack.c.b16 %v1776, %v1768
    %v2513 = vpack.c.b16 %v1777, %v1769
    %v2514 = vpack.c.b16 %v1778, %v1770
    %v2515 = vpack.c.b16 %v1779, %v1771
    %v2516 = vpack.c.b16 %v1788, %v1780
    %v2517 = vpack.c.b16 %v1789, %v1781
    %v2518 = vpack.c.b16 %v1790, %v1782
    %v2519 = vpack.c.b16 %v1791, %v1783
    %v2520 = vpack.c.b16 %v1792, %v1784
    %v2521 = vpack.c.b16 %v1793, %v1785
    %v2522 = vpack.c.b16 %v1794, %v1786
    %v2523 = vpack.c.b16 %v1795, %v1787
    %v2524 = vpack.c.b16 %v1804, %v1796
    %v2525 = vpack.c.b16 %v1805, %v1797
    %v2526 = vpack.c.b16 %v1806, %v1798
    %v2527 = vpack.c.b16 %v1807, %v1799
    %v2528 = vpack.c.b16 %v1808, %v1800
    %v2529 = vpack.c.b16 %v1809, %v1801
    %v2530 = vpack.c.b16 %v1810, %v1802
    %v2531 = vpack.c.b16 %v1811, %v1803
    %v2532 = vpack.c.b16 %v1820, %v1812
    %v2533 = vpack.c.b16 %v1821, %v1813
    %v2534 = vpack.c.b16 %v1822, %v1814
    %v2535 = vpack.c.b16 %v1823, %v1815
    %v2536 = vpack.c.b16 %v1824, %v1816
    %v2537 = vpack.c.b16 %v1825, %v1817
    %v2538 = vpack.c.b16 %v1826, %v1818
    %v2539 = vpack.c.b16 %v1827, %v1819
    %v2540 = vpack.c.b16 %v1836, %v1828
    %v2541 = vpack.c.b16 %v1837, %v1829
    %v2542 = vpack.c.b16 %v1838, %v1830
    %v2543 = vpack.c.b16 %v1839, %v1831
    %v2544 = vpack.c.b16 %v1840, %v1832
    %v2545 = vpack.c.b16 %v1841, %v1833
    %v2546 = vpack.c.b16 %v1842, %v1834
    %v2547 = vpack.c.b16 %v1843, %v1835
    %v2548 = vpack.c.b16 %v1852, %v1844
    %v2549 = vpack.c.b16 %v1853, %v1845
    %v2550 = vpack.c.b16 %v1854, %v1846
    %v2551 = vpack.c.b16 %v1855, %v1847
    %v2552 = vpack.c.b16 %v1856, %v1848
    %v2553 = vpack.c.b16 %v1857, %v1849
    %v2554 = vpack.c.b16 %v1858, %v1850
    %v2555 = vpack.c.b16 %v1859, %v1851
    %v2556 = vpack.c.b16 %v1868, %v1860
    %v2557 = vpack.c.b16 %v1869, %v1861
    %v2558 = vpack.c.b16 %v1870, %v1862
    %v2559 = vpack.c.b16 %v1871, %v1863
    %v2560 = vpack.c.b16 %v1872, %v1864
    %v2561 = vpack.c.b16 %v1873, %v1865
    %v2562 = vpack.c.b16 %v1874, %v1866
    %v2563 = vpack.c.b16 %v1875, %v1867
    %v2564 = vpack.c.b16 %v1884, %v1876
    %v2565 = vpack.c.b16 %v1885, %v1877
    %v2566 = vpack.c.b16 %v1886, %v1878
    %v2567 = vpack.c.b16 %v1887, %v1879
    %v2568 = vpack.c.b16 %v1888, %v1880
    %v2569 = vpack.c.b16 %v1889, %v1881
    %v2570 = vpack.c.b16 %v1890, %v1882
    %v2571 = vpack.c.b16 %v1891, %v1883
    %v2572 = vpack.c.b16 %v1900, %v1892
    %v2573 = vpack.c.b16 %v1901, %v1893
    %v2574 = vpack.c.b16 %v1902, %v1894
    %v2575 = vpack.c.b16 %v1903, %v1895
    %v2576 = vpack.c.b16 %v1904, %v1896
    %v2577 = vpack.c.b16 %v1905, %v1897
    %v2578 = vpack.c.b16 %v1906, %v1898
    %v2579 = vpack.c.b16 %v1907, %v1899
    %v2580 = vpack.c.b16 %v1916, %v1908
    %v2581 = vpack.c.b16 %v1917, %v1909
    %v2582 = vpack.c.b16 %v1918, %v1910
    %v2583 = vpack.c.b16 %v1919, %v1911
    %v2584 = vpack.c.b16 %v1920, %v1912
    %v2585 = vpack.c.b16 %v1921, %v1913
    %v2586 = vpack.c.b16 %v1922, %v1914
    %v2587 = vpack.c.b16 %v1923, %v1915
    %v2588 = vpack.c.b16 %v1932, %v1924
    %v2589 = vpack.c.b16 %v1933, %v1925
    %v2590 = vpack.c.b16 %v1934, %v1926
    %v2591 = vpack.c.b16 %v1935, %v1927
    %v2592 = vpack.c.b16 %v1936, %v1928
    %v2593 = vpack.c.b16 %v1937, %v1929
    %v2594 = vpack.c.b16 %v1938, %v1930
    %v2595 = vpack.c.b16 %v1939, %v1931
    %v2596 = vpack.c.b16 %v1948, %v1940
    %v2597 = vpack.c.b16 %v1949, %v1941
    %v2598 = vpack.c.b16 %v1950, %v1942
    %v2599 = vpack.c.b16 %v1951, %v1943
    %v2600 = vpack.c.b16 %v1952, %v1944
    %v2601 = vpack.c.b16 %v1953, %v1945
    %v2602 = vpack.c.b16 %v1954, %v1946
    %v2603 = vpack.c.b16 %v1955, %v1947
    %v2604 = vpack.c.b16 %v1964, %v1956
    %v2605 = vpack.c.b16 %v1965, %v1957
    %v2606 = vpack.c.b16 %v1966, %v1958
    %v2607 = vpack.c.b16 %v1967, %v1959
    %v2608 = vpack.c.b16 %v1968, %v1960
    %v2609 = vpack.c.b16 %v1969, %v1961
    %v2610 = vpack.c.b16 %v1970, %v1962
    %v2611 = vpack.c.b16 %v1971, %v1963
    %v2612 = vpack.c.b16 %v1980, %v1972
    %v2613 = vpack.c.b16 %v1981, %v1973
    %v2614 = vpack.c.b16 %v1982, %v1974
    %v2615 = vpack.c.b16 %v1983, %v1975
    %v2616 = vpack.c.b16 %v1984, %v1976
    %v2617 = vpack.c.b16 %v1985, %v1977
    %v2618 = vpack.c.b16 %v1986, %v1978
    %v2619 = vpack.c.b16 %v1987, %v1979
    %v2620 = vpack.c.b16 %v1996, %v1988
    %v2621 = vpack.c.b16 %v1997, %v1989
    %v2622 = vpack.c.b16 %v1998, %v1990
    %v2623 = vpack.c.b16 %v1999, %v1991
    %v2624 = vpack.c.b16 %v2000, %v1992
    %v2625 = vpack.c.b16 %v2001, %v1993
    %v2626 = vpack.c.b16 %v2002, %v1994
    %v2627 = vpack.c.b16 %v2003, %v1995
    %v2628 = vpack.c.b16 %v2012, %v2004
    %v2629 = vpack.c.b16 %v2013, %v2005
    %v2630 = vpack.c.b16 %v2014, %v2006
    %v2631 = vpack.c.b16 %v2015, %v2007
    %v2632 = vpack.c.b16 %v2016, %v2008
    %v2633 = vpack.c.b16 %v2017, %v2009
    %v2634 = vpack.c.b16 %v2018, %v2010
    %v2635 = vpack.c.b16 %v2019, %v2011
    %v2636 = vpack.c.b16 %v2028, %v2020
    %v2637 = vpack.c.b16 %v2029, %v2021
    %v2638 = vpack.c.b16 %v2030, %v2022
    %v2639 = vpack.c.b16 %v2031, %v2023
    %v2640 = vpack.c.b16 %v2032, %v2024
    %v2641 = vpack.c.b16 %v2033, %v2025
    %v2642 = vpack.c.b16 %v2034, %v2026
    %v2643 = vpack.c.b16 %v2035, %v2027
    %v2644 = vpack.c.b16 %v2044, %v2036
    %v2645 = vpack.c.b16 %v2045, %v2037
    %v2646 = vpack.c.b16 %v2046, %v2038
    %v2647 = vpack.c.b16 %v2047, %v2039
    %v2648 = vpack.c.b16 %v2048, %v2040
    %v2649 = vpack.c.b16 %v2049, %v2041
    %v2650 = vpack.c.b16 %v2050, %v2042
    %v2651 = vpack.c.b16 %v2051, %v2043
    %v2652 = vpack.c.b16 %v2060, %v2052
    %v2653 = vpack.c.b16 %v2061, %v2053
    %v2654 = vpack.c.b16 %v2062, %v2054
    %v2655 = vpack.c.b16 %v2063, %v2055
    %v2656 = vpack.c.b16 %v2064, %v2056
    %v2657 = vpack.c.b16 %v2065, %v2057
    %v2658 = vpack.c.b16 %v2066, %v2058
    %v2659 = vpack.c.b16 %v2067, %v2059
    %v2660 = vpack.c.b16 %v2076, %v2068
    %v2661 = vpack.c.b16 %v2077, %v2069
    %v2662 = vpack.c.b16 %v2078, %v2070
    %v2663 = vpack.c.b16 %v2079, %v2071
    %v2664 = vpack.c.b16 %v2080, %v2072
    %v2665 = vpack.c.b16 %v2081, %v2073
    %v2666 = vpack.c.b16 %v2082, %v2074
    %v2667 = vpack.c.b16 %v2083, %v2075
    %v2668 = vpack.c.b16 %v2092, %v2084
    %v2669 = vpack.c.b16 %v2093, %v2085
    %v2670 = vpack.c.b16 %v2094, %v2086
    %v2671 = vpack.c.b16 %v2095, %v2087
    %v2672 = vpack.c.b16 %v2096, %v2088
    %v2673 = vpack.c.b16 %v2097, %v2089
    %v2674 = vpack.c.b16 %v2098, %v2090
    %v2675 = vpack.c.b16 %v2099, %v2091
    %v2676 = vpack.c.b16 %v2108, %v2100
    %v2677 = vpack.c.b16 %v2109, %v2101
    %v2678 = vpack.c.b16 %v2110, %v2102
    %v2679 = vpack.c.b16 %v2111, %v2103
    %v2680 = vpack.c.b16 %v2112, %v2104
    %v2681 = vpack.c.b16 %v2113, %v2105
    %v2682 = vpack.c.b16 %v2114, %v2106
    %v2683 = vpack.c.b16 %v2115, %v2107
    %v2684 = vpack.c.b16 %v2124, %v2116
    %v2685 = vpack.c.b16 %v2125, %v2117
    %v2686 = vpack.c.b16 %v2126, %v2118
    %v2687 = vpack.c.b16 %v2127, %v2119
    %v2688 = vpack.c.b16 %v2128, %v2120
    %v2689 = vpack.c.b16 %v2129, %v2121
    %v2690 = vpack.c.b16 %v2130, %v2122
    %v2691 = vpack.c.b16 %v2131, %v2123
    %v2692 = vpack.c.b16 %v2140, %v2132
    %v2693 = vpack.c.b16 %v2141, %v2133
    %v2694 = vpack.c.b16 %v2142, %v2134
    %v2695 = vpack.c.b16 %v2143, %v2135
    %v2696 = vpack.c.b16 %v2144, %v2136
    %v2697 = vpack.c.b16 %v2145, %v2137
    %v2698 = vpack.c.b16 %v2146, %v2138
    %v2699 = vpack.c.b16 %v2147, %v2139
    %v2700 = vpack.c.b16 %v2156, %v2148
    %v2701 = vpack.c.b16 %v2157, %v2149
    %v2702 = vpack.c.b16 %v2158, %v2150
    %v2703 = vpack.c.b16 %v2159, %v2151
    %v2704 = vpack.c.b16 %v2160, %v2152
    %v2705 = vpack.c.b16 %v2161, %v2153
    %v2706 = vpack.c.b16 %v2162, %v2154
    %v2707 = vpack.c.b16 %v2163, %v2155
    %v2708 = vpack.c.b16 %v2172, %v2164
    %v2709 = vpack.c.b16 %v2173, %v2165
    %v2710 = vpack.c.b16 %v2174, %v2166
    %v2711 = vpack.c.b16 %v2175, %v2167
    %v2712 = vpack.c.b16 %v2176, %v2168
    %v2713 = vpack.c.b16 %v2177, %v2169
    %v2714 = vpack.c.b16 %v2178, %v2170
    %v2715 = vpack.c.b16 %v2179, %v2171
    %v2716 = vpack.c.b16 %v2188, %v2180
    %v2717 = vpack.c.b16 %v2189, %v2181
    %v2718 = vpack.c.b16 %v2190, %v2182
    %v2719 = vpack.c.b16 %v2191, %v2183
    %v2720 = vpack.c.b16 %v2192, %v2184
    %v2721 = vpack.c.b16 %v2193, %v2185
    %v2722 = vpack.c.b16 %v2194, %v2186
    %v2723 = vpack.c.b16 %v2195, %v2187
    %v2724 = vpack.c.b16 %v2204, %v2196
    %v2725 = vpack.c.b16 %v2205, %v2197
    %v2726 = vpack.c.b16 %v2206, %v2198
    %v2727 = vpack.c.b16 %v2207, %v2199
    %v2728 = vpack.c.b16 %v2208, %v2200
    %v2729 = vpack.c.b16 %v2209, %v2201
    %v2730 = vpack.c.b16 %v2210, %v2202
    %v2731 = vpack.c.b16 %v2211, %v2203
    %v2732 = vpack.c.b16 %v2220, %v2212
    %v2733 = vpack.c.b16 %v2221, %v2213
    %v2734 = vpack.c.b16 %v2222, %v2214
    %v2735 = vpack.c.b16 %v2223, %v2215
    %v2736 = vpack.c.b16 %v2224, %v2216
    %v2737 = vpack.c.b16 %v2225, %v2217
    %v2738 = vpack.c.b16 %v2226, %v2218
    %v2739 = vpack.c.b16 %v2227, %v2219
    %3252 = vmatprep.subr.bf16.mxu0 %v2229
    %3253 = vmatpush1.bf16.msra.mxu0 %v2228
    %3254 = vmatprep.subr.bf16.mxu0 %v2237
    %3255 = vmatpush1.bf16.msra.mxu0 %v2236
    %3256 = vmatprep.subr.bf16.mxu0 %v2245
    %3257 = vmatpush1.bf16.msra.mxu0 %v2244
    %3258 = vmatprep.subr.bf16.mxu0 %v2253
    %3259 = vmatpush1.bf16.msra.mxu0 %v2252
    %3260 = vmatprep.subr.bf16.mxu0 %v2261
    %3261 = vmatpush1.bf16.msra.mxu0 %v2260
    %3262 = vmatprep.subr.bf16.mxu0 %v2269
    %3263 = vmatpush1.bf16.msra.mxu0 %v2268
    %3264 = vmatprep.subr.bf16.mxu0 %v2277
    %3265 = vmatpush1.bf16.msra.mxu0 %v2276
    %3266 = vmatprep.subr.bf16.mxu0 %v2285
    %3267 = vmatpush1.bf16.msra.mxu0 %v2284
    %3268 = vmatprep.subr.bf16.mxu0 %v2293
    %3269 = vmatpush1.bf16.msra.mxu0 %v2292
    %3270 = vmatprep.subr.bf16.mxu0 %v2301
    %3271 = vmatpush1.bf16.msra.mxu0 %v2300
    %3272 = vmatprep.subr.bf16.mxu0 %v2309
    %3273 = vmatpush1.bf16.msra.mxu0 %v2308
    %3274 = vmatprep.subr.bf16.mxu0 %v2317
    %3275 = vmatpush1.bf16.msra.mxu0 %v2316
    %3276 = vmatprep.subr.bf16.mxu0 %v2325
    %3277 = vmatpush1.bf16.msra.mxu0 %v2324
    %3278 = vmatprep.subr.bf16.mxu0 %v2333
    %3279 = vmatpush1.bf16.msra.mxu0 %v2332
    %3280 = vmatprep.subr.bf16.mxu0 %v2341
    %3281 = vmatpush1.bf16.msra.mxu0 %v2340
    %3282 = vmatprep.subr.bf16.mxu0 %v2349
    %3283 = vmatpush1.bf16.msra.mxu0 %v2348
    %3284 = vmatprep.mubr.bf16.mxu0 %v677
    %3285 = vmatmul.mubr.bf16.gmra.mrb[0].mxu0 %v676
    %v3286 = vpop.f32.mrb[0].mxu0
    %v3287 = vadd.f32 %v627, %v3286
    %v3288 = vpop.f32.mrb[0].mxu0
    %v3289 = vadd.f32 %v631, %v3288
    %v3290 = vpop.f32.mrb[0].mxu0
    %v3291 = vpop.f32.mrb[0].mxu0
    %3292 = vdwg.mxu0
    %3293 = vmatprep.subr.bf16.mxu0 %v2357
    %3294 = vmatpush1.bf16.msra.mxu0 %v2356
    %3295 = vmatprep.subr.bf16.mxu0 %v2365
    %3296 = vmatpush1.bf16.msra.mxu0 %v2364
    %3297 = vmatprep.subr.bf16.mxu0 %v2373
    %3298 = vmatpush1.bf16.msra.mxu0 %v2372
    %3299 = vmatprep.subr.bf16.mxu0 %v2381
    %3300 = vmatpush1.bf16.msra.mxu0 %v2380
    %3301 = vmatprep.subr.bf16.mxu0 %v2389
    %3302 = vmatpush1.bf16.msra.mxu0 %v2388
    %3303 = vmatprep.subr.bf16.mxu0 %v2397
    %3304 = vmatpush1.bf16.msra.mxu0 %v2396
    %3305 = vmatprep.subr.bf16.mxu0 %v2405
    %3306 = vmatpush1.bf16.msra.mxu0 %v2404
    %3307 = vmatprep.subr.bf16.mxu0 %v2413
    %3308 = vmatpush1.bf16.msra.mxu0 %v2412
    %3309 = vmatprep.subr.bf16.mxu0 %v2421
    %3310 = vmatpush1.bf16.msra.mxu0 %v2420
    %3311 = vmatprep.subr.bf16.mxu0 %v2429
    %3312 = vmatpush1.bf16.msra.mxu0 %v2428
    %3313 = vmatprep.subr.bf16.mxu0 %v2437
    %3314 = vmatpush1.bf16.msra.mxu0 %v2436
    %3315 = vmatprep.subr.bf16.mxu0 %v2445
    %3316 = vmatpush1.bf16.msra.mxu0 %v2444
    %3317 = vmatprep.subr.bf16.mxu0 %v2453
    %3318 = vmatpush1.bf16.msra.mxu0 %v2452
    %3319 = vmatprep.subr.bf16.mxu0 %v2461
    %3320 = vmatpush1.bf16.msra.mxu0 %v2460
    %3321 = vmatprep.subr.bf16.mxu0 %v2469
    %3322 = vmatpush1.bf16.msra.mxu0 %v2468
    %3323 = vmatprep.subr.bf16.mxu0 %v2477
    %3324 = vmatpush1.bf16.msra.mxu0 %v2476
    %3325 = vmatprep.mubr.bf16.mxu0 %v679
    %3326 = vmatmul.mubr.bf16.gmra.mrb[0].mxu0 %v678
    %v3327 = vpop.f32.mrb[0].mxu0
    %v3328 = vadd.f32 %v3287, %v3327
    %v3329 = vpop.f32.mrb[0].mxu0
    %v3330 = vadd.f32 %v3289, %v3329
    %v3331 = vpop.f32.mrb[0].mxu0
    %v3332 = vpop.f32.mrb[0].mxu0
    %3333 = vdwg.mxu0
    %3334 = vmatprep.subr.bf16.mxu0 %v2485
    %3335 = vmatpush1.bf16.msra.mxu0 %v2484
    %3336 = vmatprep.subr.bf16.mxu0 %v2493
    %3337 = vmatpush1.bf16.msra.mxu0 %v2492
    %3338 = vmatprep.subr.bf16.mxu0 %v2501
    %3339 = vmatpush1.bf16.msra.mxu0 %v2500
    %3340 = vmatprep.subr.bf16.mxu0 %v2509
    %3341 = vmatpush1.bf16.msra.mxu0 %v2508
    %3342 = vmatprep.subr.bf16.mxu0 %v2517
    %3343 = vmatpush1.bf16.msra.mxu0 %v2516
    %3344 = vmatprep.subr.bf16.mxu0 %v2525
    %3345 = vmatpush1.bf16.msra.mxu0 %v2524
    %3346 = vmatprep.subr.bf16.mxu0 %v2533
    %3347 = vmatpush1.bf16.msra.mxu0 %v2532
    %3348 = vmatprep.subr.bf16.mxu0 %v2541
    %3349 = vmatpush1.bf16.msra.mxu0 %v2540
    %3350 = vmatprep.subr.bf16.mxu0 %v2549
    %3351 = vmatpush1.bf16.msra.mxu0 %v2548
    %3352 = vmatprep.subr.bf16.mxu0 %v2557
    %3353 = vmatpush1.bf16.msra.mxu0 %v2556
    %3354 = vmatprep.subr.bf16.mxu0 %v2565
    %3355 = vmatpush1.bf16.msra.mxu0 %v2564
    %3356 = vmatprep.subr.bf16.mxu0 %v2573
    %3357 = vmatpush1.bf16.msra.mxu0 %v2572
    %3358 = vmatprep.subr.bf16.mxu0 %v2581
    %3359 = vmatpush1.bf16.msra.mxu0 %v2580
    %3360 = vmatprep.subr.bf16.mxu0 %v2589
    %3361 = vmatpush1.bf16.msra.mxu0 %v2588
    %3362 = vmatprep.subr.bf16.mxu0 %v2597
    %3363 = vmatpush1.bf16.msra.mxu0 %v2596
    %3364 = vmatprep.subr.bf16.mxu0 %v2605
    %3365 = vmatpush1.bf16.msra.mxu0 %v2604
    %3366 = vmatprep.mubr.bf16.mxu0 %v681
    %3367 = vmatmul.mubr.bf16.gmra.mrb[0].mxu0 %v680
    %v3368 = vpop.f32.mrb[0].mxu0
    %v3369 = vadd.f32 %v3328, %v3368
    %v3370 = vpop.f32.mrb[0].mxu0
    %v3371 = vadd.f32 %v3330, %v3370
    %v3372 = vpop.f32.mrb[0].mxu0
    %v3373 = vpop.f32.mrb[0].mxu0
    %3374 = vdwg.mxu0
    %3375 = vmatprep.subr.bf16.mxu0 %v2613
    %3376 = vmatpush1.bf16.msra.mxu0 %v2612
    %3377 = vmatprep.subr.bf16.mxu0 %v2621
    %3378 = vmatpush1.bf16.msra.mxu0 %v2620
    %3379 = vmatprep.subr.bf16.mxu0 %v2629
    %3380 = vmatpush1.bf16.msra.mxu0 %v2628
    %3381 = vmatprep.subr.bf16.mxu0 %v2637
    %3382 = vmatpush1.bf16.msra.mxu0 %v2636
    %3383 = vmatprep.subr.bf16.mxu0 %v2645
    %3384 = vmatpush1.bf16.msra.mxu0 %v2644
    %3385 = vmatprep.subr.bf16.mxu0 %v2653
    %3386 = vmatpush1.bf16.msra.mxu0 %v2652
    %3387 = vmatprep.subr.bf16.mxu0 %v2661
    %3388 = vmatpush1.bf16.msra.mxu0 %v2660
    %3389 = vmatprep.subr.bf16.mxu0 %v2669
    %3390 = vmatpush1.bf16.msra.mxu0 %v2668
    %3391 = vmatprep.subr.bf16.mxu0 %v2677
    %3392 = vmatpush1.bf16.msra.mxu0 %v2676
    %3393 = vmatprep.subr.bf16.mxu0 %v2685
    %3394 = vmatpush1.bf16.msra.mxu0 %v2684
    %3395 = vmatprep.subr.bf16.mxu0 %v2693
    %3396 = vmatpush1.bf16.msra.mxu0 %v2692
    %3397 = vmatprep.subr.bf16.mxu0 %v2701
    %3398 = vmatpush1.bf16.msra.mxu0 %v2700
    %3399 = vmatprep.subr.bf16.mxu0 %v2709
    %3400 = vmatpush1.bf16.msra.mxu0 %v2708
    %3401 = vmatprep.subr.bf16.mxu0 %v2717
    %3402 = vmatpush1.bf16.msra.mxu0 %v2716
    %3403 = vmatprep.subr.bf16.mxu0 %v2725
    %3404 = vmatpush1.bf16.msra.mxu0 %v2724
    %3405 = vmatprep.subr.bf16.mxu0 %v2733
    %3406 = vmatpush1.bf16.msra.mxu0 %v2732
    %3407 = vmatprep.mubr.bf16.mxu0 %v683
    %3408 = vmatmul.mubr.bf16.gmra.mrb[0].mxu0 %v682
    %v3409 = vpop.f32.mrb[0].mxu0
    %v3410 = vadd.f32 %v3369, %v3409
    %v3411 = vpop.f32.mrb[0].mxu0
    %v3412 = vadd.f32 %v3371, %v3411
    %v3413 = vpop.f32.mrb[0].mxu0
    %v3414 = vpop.f32.mrb[0].mxu0
    %3415 = vdwg.mxu0
    %3416 = vmatprep.subr.bf16.mxu0 %v2231
    %3417 = vmatpush1.bf16.msra.mxu0 %v2230
    %3418 = vmatprep.subr.bf16.mxu0 %v2239
    %3419 = vmatpush1.bf16.msra.mxu0 %v2238
    %3420 = vmatprep.subr.bf16.mxu0 %v2247
    %3421 = vmatpush1.bf16.msra.mxu0 %v2246
    %3422 = vmatprep.subr.bf16.mxu0 %v2255
    %3423 = vmatpush1.bf16.msra.mxu0 %v2254
    %3424 = vmatprep.subr.bf16.mxu0 %v2263
    %3425 = vmatpush1.bf16.msra.mxu0 %v2262
    %3426 = vmatprep.subr.bf16.mxu0 %v2271
    %3427 = vmatpush1.bf16.msra.mxu0 %v2270
    %3428 = vmatprep.subr.bf16.mxu0 %v2279
    %3429 = vmatpush1.bf16.msra.mxu0 %v2278
    %3430 = vmatprep.subr.bf16.mxu0 %v2287
    %3431 = vmatpush1.bf16.msra.mxu0 %v2286
    %3432 = vmatprep.subr.bf16.mxu0 %v2295
    %3433 = vmatpush1.bf16.msra.mxu0 %v2294
    %3434 = vmatprep.subr.bf16.mxu0 %v2303
    %3435 = vmatpush1.bf16.msra.mxu0 %v2302
    %3436 = vmatprep.subr.bf16.mxu0 %v2311
    %3437 = vmatpush1.bf16.msra.mxu0 %v2310
    %3438 = vmatprep.subr.bf16.mxu0 %v2319
    %3439 = vmatpush1.bf16.msra.mxu0 %v2318
    %3440 = vmatprep.subr.bf16.mxu0 %v2327
    %3441 = vmatpush1.bf16.msra.mxu0 %v2326
    %3442 = vmatprep.subr.bf16.mxu0 %v2335
    %3443 = vmatpush1.bf16.msra.mxu0 %v2334
    %3444 = vmatprep.subr.bf16.mxu0 %v2343
    %3445 = vmatpush1.bf16.msra.mxu0 %v2342
    %3446 = vmatprep.subr.bf16.mxu0 %v2351
    %3447 = vmatpush1.bf16.msra.mxu0 %v2350
    %3448 = vmatprep.mubr.bf16.mxu0 %v677
    %3449 = vmatmul.mubr.bf16.gmra.mrb[0].mxu0 %v676
    %v3450 = vpop.f32.mrb[0].mxu0
    %v3451 = vadd.f32 %v635, %v3450
    %v3452 = vpop.f32.mrb[0].mxu0
    %v3453 = vadd.f32 %v639, %v3452
    %v3454 = vpop.f32.mrb[0].mxu0
    %v3455 = vpop.f32.mrb[0].mxu0
    %3456 = vdwg.mxu0
    %3457 = vmatprep.subr.bf16.mxu0 %v2359
    %3458 = vmatpush1.bf16.msra.mxu0 %v2358
    %3459 = vmatprep.subr.bf16.mxu0 %v2367
    %3460 = vmatpush1.bf16.msra.mxu0 %v2366
    %3461 = vmatprep.subr.bf16.mxu0 %v2375
    %3462 = vmatpush1.bf16.msra.mxu0 %v2374
    %3463 = vmatprep.subr.bf16.mxu0 %v2383
    %3464 = vmatpush1.bf16.msra.mxu0 %v2382
    %3465 = vmatprep.subr.bf16.mxu0 %v2391
    %3466 = vmatpush1.bf16.msra.mxu0 %v2390
    %3467 = vmatprep.subr.bf16.mxu0 %v2399
    %3468 = vmatpush1.bf16.msra.mxu0 %v2398
    %3469 = vmatprep.subr.bf16.mxu0 %v2407
    %3470 = vmatpush1.bf16.msra.mxu0 %v2406
    %3471 = vmatprep.subr.bf16.mxu0 %v2415
    %3472 = vmatpush1.bf16.msra.mxu0 %v2414
    %3473 = vmatprep.subr.bf16.mxu0 %v2423
    %3474 = vmatpush1.bf16.msra.mxu0 %v2422
    %3475 = vmatprep.subr.bf16.mxu0 %v2431
    %3476 = vmatpush1.bf16.msra.mxu0 %v2430
    %3477 = vmatprep.subr.bf16.mxu0 %v2439
    %3478 = vmatpush1.bf16.msra.mxu0 %v2438
    %3479 = vmatprep.subr.bf16.mxu0 %v2447
    %3480 = vmatpush1.bf16.msra.mxu0 %v2446
    %3481 = vmatprep.subr.bf16.mxu0 %v2455
    %3482 = vmatpush1.bf16.msra.mxu0 %v2454
    %3483 = vmatprep.subr.bf16.mxu0 %v2463
    %3484 = vmatpush1.bf16.msra.mxu0 %v2462
    %3485 = vmatprep.subr.bf16.mxu0 %v2471
    %3486 = vmatpush1.bf16.msra.mxu0 %v2470
    %3487 = vmatprep.subr.bf16.mxu0 %v2479
    %3488 = vmatpush1.bf16.msra.mxu0 %v2478
    %3489 = vmatprep.mubr.bf16.mxu0 %v679
    %3490 = vmatmul.mubr.bf16.gmra.mrb[0].mxu0 %v678
    %v3491 = vpop.f32.mrb[0].mxu0
    %v3492 = vadd.f32 %v3451, %v3491
    %v3493 = vpop.f32.mrb[0].mxu0
    %v3494 = vadd.f32 %v3453, %v3493
    %v3495 = vpop.f32.mrb[0].mxu0
    %v3496 = vpop.f32.mrb[0].mxu0
    %3497 = vdwg.mxu0
    %3498 = vmatprep.subr.bf16.mxu0 %v2487
    %3499 = vmatpush1.bf16.msra.mxu0 %v2486
    %3500 = vmatprep.subr.bf16.mxu0 %v2495
    %3501 = vmatpush1.bf16.msra.mxu0 %v2494
    %3502 = vmatprep.subr.bf16.mxu0 %v2503
    %3503 = vmatpush1.bf16.msra.mxu0 %v2502
    %3504 = vmatprep.subr.bf16.mxu0 %v2511
    %3505 = vmatpush1.bf16.msra.mxu0 %v2510
    %3506 = vmatprep.subr.bf16.mxu0 %v2519
    %3507 = vmatpush1.bf16.msra.mxu0 %v2518
    %3508 = vmatprep.subr.bf16.mxu0 %v2527
    %3509 = vmatpush1.bf16.msra.mxu0 %v2526
    %3510 = vmatprep.subr.bf16.mxu0 %v2535
    %3511 = vmatpush1.bf16.msra.mxu0 %v2534
    %3512 = vmatprep.subr.bf16.mxu0 %v2543
    %3513 = vmatpush1.bf16.msra.mxu0 %v2542
    %3514 = vmatprep.subr.bf16.mxu0 %v2551
    %3515 = vmatpush1.bf16.msra.mxu0 %v2550
    %3516 = vmatprep.subr.bf16.mxu0 %v2559
    %3517 = vmatpush1.bf16.msra.mxu0 %v2558
    %3518 = vmatprep.subr.bf16.mxu0 %v2567
    %3519 = vmatpush1.bf16.msra.mxu0 %v2566
    %3520 = vmatprep.subr.bf16.mxu0 %v2575
    %3521 = vmatpush1.bf16.msra.mxu0 %v2574
    %3522 = vmatprep.subr.bf16.mxu0 %v2583
    %3523 = vmatpush1.bf16.msra.mxu0 %v2582
    %3524 = vmatprep.subr.bf16.mxu0 %v2591
    %3525 = vmatpush1.bf16.msra.mxu0 %v2590
    %3526 = vmatprep.subr.bf16.mxu0 %v2599
    %3527 = vmatpush1.bf16.msra.mxu0 %v2598
    %3528 = vmatprep.subr.bf16.mxu0 %v2607
    %3529 = vmatpush1.bf16.msra.mxu0 %v2606
    %3530 = vmatprep.mubr.bf16.mxu0 %v681
    %3531 = vmatmul.mubr.bf16.gmra.mrb[0].mxu0 %v680
    %v3532 = vpop.f32.mrb[0].mxu0
    %v3533 = vadd.f32 %v3492, %v3532
    %v3534 = vpop.f32.mrb[0].mxu0
    %v3535 = vadd.f32 %v3494, %v3534
    %v3536 = vpop.f32.mrb[0].mxu0
    %v3537 = vpop.f32.mrb[0].mxu0
    %3538 = vdwg.mxu0
    %3539 = vmatprep.subr.bf16.mxu0 %v2615
    %3540 = vmatpush1.bf16.msra.mxu0 %v2614
    %3541 = vmatprep.subr.bf16.mxu0 %v2623
    %3542 = vmatpush1.bf16.msra.mxu0 %v2622
    %3543 = vmatprep.subr.bf16.mxu0 %v2631
    %3544 = vmatpush1.bf16.msra.mxu0 %v2630
    %3545 = vmatprep.subr.bf16.mxu0 %v2639
    %3546 = vmatpush1.bf16.msra.mxu0 %v2638
    %3547 = vmatprep.subr.bf16.mxu0 %v2647
    %3548 = vmatpush1.bf16.msra.mxu0 %v2646
    %3549 = vmatprep.subr.bf16.mxu0 %v2655
    %3550 = vmatpush1.bf16.msra.mxu0 %v2654
    %3551 = vmatprep.subr.bf16.mxu0 %v2663
    %3552 = vmatpush1.bf16.msra.mxu0 %v2662
    %3553 = vmatprep.subr.bf16.mxu0 %v2671
    %3554 = vmatpush1.bf16.msra.mxu0 %v2670
    %3555 = vmatprep.subr.bf16.mxu0 %v2679
    %3556 = vmatpush1.bf16.msra.mxu0 %v2678
    %3557 = vmatprep.subr.bf16.mxu0 %v2687
    %3558 = vmatpush1.bf16.msra.mxu0 %v2686
    %3559 = vmatprep.subr.bf16.mxu0 %v2695
    %3560 = vmatpush1.bf16.msra.mxu0 %v2694
    %3561 = vmatprep.subr.bf16.mxu0 %v2703
    %3562 = vmatpush1.bf16.msra.mxu0 %v2702
    %3563 = vmatprep.subr.bf16.mxu0 %v2711
    %3564 = vmatpush1.bf16.msra.mxu0 %v2710
    %3565 = vmatprep.subr.bf16.mxu0 %v2719
    %3566 = vmatpush1.bf16.msra.mxu0 %v2718
    %3567 = vmatprep.subr.bf16.mxu0 %v2727
    %3568 = vmatpush1.bf16.msra.mxu0 %v2726
    %3569 = vmatprep.subr.bf16.mxu0 %v2735
    %3570 = vmatpush1.bf16.msra.mxu0 %v2734
    %3571 = vmatprep.mubr.bf16.mxu0 %v683
    %3572 = vmatmul.mubr.bf16.gmra.mrb[0].mxu0 %v682
    %v3573 = vpop.f32.mrb[0].mxu0
    %v3574 = vadd.f32 %v3533, %v3573
    %v3575 = vpop.f32.mrb[0].mxu0
    %v3576 = vadd.f32 %v3535, %v3575
    %v3577 = vpop.f32.mrb[0].mxu0
    %v3578 = vpop.f32.mrb[0].mxu0
    %3579 = vdwg.mxu0
    %3580 = vmatprep.subr.bf16.mxu0 %v2233
    %3581 = vmatpush1.bf16.msra.mxu0 %v2232
    %3582 = vmatprep.subr.bf16.mxu0 %v2241
    %3583 = vmatpush1.bf16.msra.mxu0 %v2240
    %3584 = vmatprep.subr.bf16.mxu0 %v2249
    %3585 = vmatpush1.bf16.msra.mxu0 %v2248
    %3586 = vmatprep.subr.bf16.mxu0 %v2257
    %3587 = vmatpush1.bf16.msra.mxu0 %v2256
    %3588 = vmatprep.subr.bf16.mxu0 %v2265
    %3589 = vmatpush1.bf16.msra.mxu0 %v2264
    %3590 = vmatprep.subr.bf16.mxu0 %v2273
    %3591 = vmatpush1.bf16.msra.mxu0 %v2272
    %3592 = vmatprep.subr.bf16.mxu0 %v2281
    %3593 = vmatpush1.bf16.msra.mxu0 %v2280
    %3594 = vmatprep.subr.bf16.mxu0 %v2289
    %3595 = vmatpush1.bf16.msra.mxu0 %v2288
    %3596 = vmatprep.subr.bf16.mxu0 %v2297
    %3597 = vmatpush1.bf16.msra.mxu0 %v2296
    %3598 = vmatprep.subr.bf16.mxu0 %v2305
    %3599 = vmatpush1.bf16.msra.mxu0 %v2304
    %3600 = vmatprep.subr.bf16.mxu0 %v2313
    %3601 = vmatpush1.bf16.msra.mxu0 %v2312
    %3602 = vmatprep.subr.bf16.mxu0 %v2321
    %3603 = vmatpush1.bf16.msra.mxu0 %v2320
    %3604 = vmatprep.subr.bf16.mxu0 %v2329
    %3605 = vmatpush1.bf16.msra.mxu0 %v2328
    %3606 = vmatprep.subr.bf16.mxu0 %v2337
    %3607 = vmatpush1.bf16.msra.mxu0 %v2336
    %3608 = vmatprep.subr.bf16.mxu0 %v2345
    %3609 = vmatpush1.bf16.msra.mxu0 %v2344
    %3610 = vmatprep.subr.bf16.mxu0 %v2353
    %3611 = vmatpush1.bf16.msra.mxu0 %v2352
    %3612 = vmatprep.mubr.bf16.mxu0 %v677
    %3613 = vmatmul.mubr.bf16.gmra.mrb[0].mxu0 %v676
    %v3614 = vpop.f32.mrb[0].mxu0
    %v3615 = vadd.f32 %v643, %v3614
    %v3616 = vpop.f32.mrb[0].mxu0
    %v3617 = vadd.f32 %v647, %v3616
    %v3618 = vpop.f32.mrb[0].mxu0
    %v3619 = vpop.f32.mrb[0].mxu0
    %3620 = vdwg.mxu0
    %3621 = vmatprep.subr.bf16.mxu0 %v2361
    %3622 = vmatpush1.bf16.msra.mxu0 %v2360
    %3623 = vmatprep.subr.bf16.mxu0 %v2369
    %3624 = vmatpush1.bf16.msra.mxu0 %v2368
    %3625 = vmatprep.subr.bf16.mxu0 %v2377
    %3626 = vmatpush1.bf16.msra.mxu0 %v2376
    %3627 = vmatprep.subr.bf16.mxu0 %v2385
    %3628 = vmatpush1.bf16.msra.mxu0 %v2384
    %3629 = vmatprep.subr.bf16.mxu0 %v2393
    %3630 = vmatpush1.bf16.msra.mxu0 %v2392
    %3631 = vmatprep.subr.bf16.mxu0 %v2401
    %3632 = vmatpush1.bf16.msra.mxu0 %v2400
    %3633 = vmatprep.subr.bf16.mxu0 %v2409
    %3634 = vmatpush1.bf16.msra.mxu0 %v2408
    %3635 = vmatprep.subr.bf16.mxu0 %v2417
    %3636 = vmatpush1.bf16.msra.mxu0 %v2416
    %3637 = vmatprep.subr.bf16.mxu0 %v2425
    %3638 = vmatpush1.bf16.msra.mxu0 %v2424
    %3639 = vmatprep.subr.bf16.mxu0 %v2433
    %3640 = vmatpush1.bf16.msra.mxu0 %v2432
    %3641 = vmatprep.subr.bf16.mxu0 %v2441
    %3642 = vmatpush1.bf16.msra.mxu0 %v2440
    %3643 = vmatprep.subr.bf16.mxu0 %v2449
    %3644 = vmatpush1.bf16.msra.mxu0 %v2448
    %3645 = vmatprep.subr.bf16.mxu0 %v2457
    %3646 = vmatpush1.bf16.msra.mxu0 %v2456
    %3647 = vmatprep.subr.bf16.mxu0 %v2465
    %3648 = vmatpush1.bf16.msra.mxu0 %v2464
    %3649 = vmatprep.subr.bf16.mxu0 %v2473
    %3650 = vmatpush1.bf16.msra.mxu0 %v2472
    %3651 = vmatprep.subr.bf16.mxu0 %v2481
    %3652 = vmatpush1.bf16.msra.mxu0 %v2480
    %3653 = vmatprep.mubr.bf16.mxu0 %v679
    %3654 = vmatmul.mubr.bf16.gmra.mrb[0].mxu0 %v678
    %v3655 = vpop.f32.mrb[0].mxu0
    %v3656 = vadd.f32 %v3615, %v3655
    %v3657 = vpop.f32.mrb[0].mxu0
    %v3658 = vadd.f32 %v3617, %v3657
    %v3659 = vpop.f32.mrb[0].mxu0
    %v3660 = vpop.f32.mrb[0].mxu0
    %3661 = vdwg.mxu0
    %3662 = vmatprep.subr.bf16.mxu0 %v2489
    %3663 = vmatpush1.bf16.msra.mxu0 %v2488
    %3664 = vmatprep.subr.bf16.mxu0 %v2497
    %3665 = vmatpush1.bf16.msra.mxu0 %v2496
    %3666 = vmatprep.subr.bf16.mxu0 %v2505
    %3667 = vmatpush1.bf16.msra.mxu0 %v2504
    %3668 = vmatprep.subr.bf16.mxu0 %v2513
    %3669 = vmatpush1.bf16.msra.mxu0 %v2512
    %3670 = vmatprep.subr.bf16.mxu0 %v2521
    %3671 = vmatpush1.bf16.msra.mxu0 %v2520
    %3672 = vmatprep.subr.bf16.mxu0 %v2529
    %3673 = vmatpush1.bf16.msra.mxu0 %v2528
    %3674 = vmatprep.subr.bf16.mxu0 %v2537
    %3675 = vmatpush1.bf16.msra.mxu0 %v2536
    %3676 = vmatprep.subr.bf16.mxu0 %v2545
    %3677 = vmatpush1.bf16.msra.mxu0 %v2544
    %3678 = vmatprep.subr.bf16.mxu0 %v2553
    %3679 = vmatpush1.bf16.msra.mxu0 %v2552
    %3680 = vmatprep.subr.bf16.mxu0 %v2561
    %3681 = vmatpush1.bf16.msra.mxu0 %v2560
    %3682 = vmatprep.subr.bf16.mxu0 %v2569
    %3683 = vmatpush1.bf16.msra.mxu0 %v2568
    %3684 = vmatprep.subr.bf16.mxu0 %v2577
    %3685 = vmatpush1.bf16.msra.mxu0 %v2576
    %3686 = vmatprep.subr.bf16.mxu0 %v2585
    %3687 = vmatpush1.bf16.msra.mxu0 %v2584
    %3688 = vmatprep.subr.bf16.mxu0 %v2593
    %3689 = vmatpush1.bf16.msra.mxu0 %v2592
    %3690 = vmatprep.subr.bf16.mxu0 %v2601
    %3691 = vmatpush1.bf16.msra.mxu0 %v2600
    %3692 = vmatprep.subr.bf16.mxu0 %v2609
    %3693 = vmatpush1.bf16.msra.mxu0 %v2608
    %3694 = vmatprep.mubr.bf16.mxu0 %v681
    %3695 = vmatmul.mubr.bf16.gmra.mrb[0].mxu0 %v680
    %v3696 = vpop.f32.mrb[0].mxu0
    %v3697 = vadd.f32 %v3656, %v3696
    %v3698 = vpop.f32.mrb[0].mxu0
    %v3699 = vadd.f32 %v3658, %v3698
    %v3700 = vpop.f32.mrb[0].mxu0
    %v3701 = vpop.f32.mrb[0].mxu0
    %3702 = vdwg.mxu0
    %3703 = vmatprep.subr.bf16.mxu0 %v2617
    %3704 = vmatpush1.bf16.msra.mxu0 %v2616
    %3705 = vmatprep.subr.bf16.mxu0 %v2625
    %3706 = vmatpush1.bf16.msra.mxu0 %v2624
    %3707 = vmatprep.subr.bf16.mxu0 %v2633
    %3708 = vmatpush1.bf16.msra.mxu0 %v2632
    %3709 = vmatprep.subr.bf16.mxu0 %v2641
    %3710 = vmatpush1.bf16.msra.mxu0 %v2640
    %3711 = vmatprep.subr.bf16.mxu0 %v2649
    %3712 = vmatpush1.bf16.msra.mxu0 %v2648
    %3713 = vmatprep.subr.bf16.mxu0 %v2657
    %3714 = vmatpush1.bf16.msra.mxu0 %v2656
    %3715 = vmatprep.subr.bf16.mxu0 %v2665
    %3716 = vmatpush1.bf16.msra.mxu0 %v2664
    %3717 = vmatprep.subr.bf16.mxu0 %v2673
    %3718 = vmatpush1.bf16.msra.mxu0 %v2672
    %3719 = vmatprep.subr.bf16.mxu0 %v2681
    %3720 = vmatpush1.bf16.msra.mxu0 %v2680
    %3721 = vmatprep.subr.bf16.mxu0 %v2689
    %3722 = vmatpush1.bf16.msra.mxu0 %v2688
    %3723 = vmatprep.subr.bf16.mxu0 %v2697
    %3724 = vmatpush1.bf16.msra.mxu0 %v2696
    %3725 = vmatprep.subr.bf16.mxu0 %v2705
    %3726 = vmatpush1.bf16.msra.mxu0 %v2704
    %3727 = vmatprep.subr.bf16.mxu0 %v2713
    %3728 = vmatpush1.bf16.msra.mxu0 %v2712
    %3729 = vmatprep.subr.bf16.mxu0 %v2721
    %3730 = vmatpush1.bf16.msra.mxu0 %v2720
    %3731 = vmatprep.subr.bf16.mxu0 %v2729
    %3732 = vmatpush1.bf16.msra.mxu0 %v2728
    %3733 = vmatprep.subr.bf16.mxu0 %v2737
    %3734 = vmatpush1.bf16.msra.mxu0 %v2736
    %3735 = vmatprep.mubr.bf16.mxu0 %v683
    %3736 = vmatmul.mubr.bf16.gmra.mrb[0].mxu0 %v682
    %v3737 = vpop.f32.mrb[0].mxu0
    %v3738 = vadd.f32 %v3697, %v3737
    %v3739 = vpop.f32.mrb[0].mxu0
    %v3740 = vadd.f32 %v3699, %v3739
    %v3741 = vpop.f32.mrb[0].mxu0
    %v3742 = vpop.f32.mrb[0].mxu0
    %3743 = vdwg.mxu0
    %3744 = vmatprep.subr.bf16.mxu0 %v2235
    %3745 = vmatpush1.bf16.msra.mxu0 %v2234
    %3746 = vmatprep.subr.bf16.mxu0 %v2243
    %3747 = vmatpush1.bf16.msra.mxu0 %v2242
    %3748 = vmatprep.subr.bf16.mxu0 %v2251
    %3749 = vmatpush1.bf16.msra.mxu0 %v2250
    %3750 = vmatprep.subr.bf16.mxu0 %v2259
    %3751 = vmatpush1.bf16.msra.mxu0 %v2258
    %3752 = vmatprep.subr.bf16.mxu0 %v2267
    %3753 = vmatpush1.bf16.msra.mxu0 %v2266
    %3754 = vmatprep.subr.bf16.mxu0 %v2275
    %3755 = vmatpush1.bf16.msra.mxu0 %v2274
    %3756 = vmatprep.subr.bf16.mxu0 %v2283
    %3757 = vmatpush1.bf16.msra.mxu0 %v2282
    %3758 = vmatprep.subr.bf16.mxu0 %v2291
    %3759 = vmatpush1.bf16.msra.mxu0 %v2290
    %3760 = vmatprep.subr.bf16.mxu0 %v2299
    %3761 = vmatpush1.bf16.msra.mxu0 %v2298
    %3762 = vmatprep.subr.bf16.mxu0 %v2307
    %3763 = vmatpush1.bf16.msra.mxu0 %v2306
    %3764 = vmatprep.subr.bf16.mxu0 %v2315
    %3765 = vmatpush1.bf16.msra.mxu0 %v2314
    %3766 = vmatprep.subr.bf16.mxu0 %v2323
    %3767 = vmatpush1.bf16.msra.mxu0 %v2322
    %3768 = vmatprep.subr.bf16.mxu0 %v2331
    %3769 = vmatpush1.bf16.msra.mxu0 %v2330
    %3770 = vmatprep.subr.bf16.mxu0 %v2339
    %3771 = vmatpush1.bf16.msra.mxu0 %v2338
    %3772 = vmatprep.subr.bf16.mxu0 %v2347
    %3773 = vmatpush1.bf16.msra.mxu0 %v2346
    %3774 = vmatprep.subr.bf16.mxu0 %v2355
    %3775 = vmatpush1.bf16.msra.mxu0 %v2354
    %3776 = vmatprep.mubr.bf16.mxu0 %v677
    %3777 = vmatmul.mubr.bf16.gmra.mrb[0].mxu0 %v676
    %v3778 = vpop.f32.mrb[0].mxu0
    %v3779 = vadd.f32 %v651, %v3778
    %v3780 = vpop.f32.mrb[0].mxu0
    %v3781 = vadd.f32 %v655, %v3780
    %v3782 = vpop.f32.mrb[0].mxu0
    %v3783 = vpop.f32.mrb[0].mxu0
    %3784 = vdwg.mxu0
    %3785 = vmatprep.subr.bf16.mxu0 %v2363
    %3786 = vmatpush1.bf16.msra.mxu0 %v2362
    %3787 = vmatprep.subr.bf16.mxu0 %v2371
    %3788 = vmatpush1.bf16.msra.mxu0 %v2370
    %3789 = vmatprep.subr.bf16.mxu0 %v2379
    %3790 = vmatpush1.bf16.msra.mxu0 %v2378
    %3791 = vmatprep.subr.bf16.mxu0 %v2387
    %3792 = vmatpush1.bf16.msra.mxu0 %v2386
    %3793 = vmatprep.subr.bf16.mxu0 %v2395
    %3794 = vmatpush1.bf16.msra.mxu0 %v2394
    %3795 = vmatprep.subr.bf16.mxu0 %v2403
    %3796 = vmatpush1.bf16.msra.mxu0 %v2402
    %3797 = vmatprep.subr.bf16.mxu0 %v2411
    %3798 = vmatpush1.bf16.msra.mxu0 %v2410
    %3799 = vmatprep.subr.bf16.mxu0 %v2419
    %3800 = vmatpush1.bf16.msra.mxu0 %v2418
    %3801 = vmatprep.subr.bf16.mxu0 %v2427
    %3802 = vmatpush1.bf16.msra.mxu0 %v2426
    %3803 = vmatprep.subr.bf16.mxu0 %v2435
    %3804 = vmatpush1.bf16.msra.mxu0 %v2434
    %3805 = vmatprep.subr.bf16.mxu0 %v2443
    %3806 = vmatpush1.bf16.msra.mxu0 %v2442
    %3807 = vmatprep.subr.bf16.mxu0 %v2451
    %3808 = vmatpush1.bf16.msra.mxu0 %v2450
    %3809 = vmatprep.subr.bf16.mxu0 %v2459
    %3810 = vmatpush1.bf16.msra.mxu0 %v2458
    %3811 = vmatprep.subr.bf16.mxu0 %v2467
    %3812 = vmatpush1.bf16.msra.mxu0 %v2466
    %3813 = vmatprep.subr.bf16.mxu0 %v2475
    %3814 = vmatpush1.bf16.msra.mxu0 %v2474
    %3815 = vmatprep.subr.bf16.mxu0 %v2483
    %3816 = vmatpush1.bf16.msra.mxu0 %v2482
    %3817 = vmatprep.mubr.bf16.mxu0 %v679
    %3818 = vmatmul.mubr.bf16.gmra.mrb[0].mxu0 %v678
    %v3819 = vpop.f32.mrb[0].mxu0
    %v3820 = vadd.f32 %v3779, %v3819
    %v3821 = vpop.f32.mrb[0].mxu0
    %v3822 = vadd.f32 %v3781, %v3821
    %v3823 = vpop.f32.mrb[0].mxu0
    %v3824 = vpop.f32.mrb[0].mxu0
    %3825 = vdwg.mxu0
    %3826 = vmatprep.subr.bf16.mxu0 %v2491
    %3827 = vmatpush1.bf16.msra.mxu0 %v2490
    %3828 = vmatprep.subr.bf16.mxu0 %v2499
    %3829 = vmatpush1.bf16.msra.mxu0 %v2498
    %3830 = vmatprep.subr.bf16.mxu0 %v2507
    %3831 = vmatpush1.bf16.msra.mxu0 %v2506
    %3832 = vmatprep.subr.bf16.mxu0 %v2515
    %3833 = vmatpush1.bf16.msra.mxu0 %v2514
    %3834 = vmatprep.subr.bf16.mxu0 %v2523
    %3835 = vmatpush1.bf16.msra.mxu0 %v2522
    %3836 = vmatprep.subr.bf16.mxu0 %v2531
    %3837 = vmatpush1.bf16.msra.mxu0 %v2530
    %3838 = vmatprep.subr.bf16.mxu0 %v2539
    %3839 = vmatpush1.bf16.msra.mxu0 %v2538
    %3840 = vmatprep.subr.bf16.mxu0 %v2547
    %3841 = vmatpush1.bf16.msra.mxu0 %v2546
    %3842 = vmatprep.subr.bf16.mxu0 %v2555
    %3843 = vmatpush1.bf16.msra.mxu0 %v2554
    %3844 = vmatprep.subr.bf16.mxu0 %v2563
    %3845 = vmatpush1.bf16.msra.mxu0 %v2562
    %3846 = vmatprep.subr.bf16.mxu0 %v2571
    %3847 = vmatpush1.bf16.msra.mxu0 %v2570
    %3848 = vmatprep.subr.bf16.mxu0 %v2579
    %3849 = vmatpush1.bf16.msra.mxu0 %v2578
    %3850 = vmatprep.subr.bf16.mxu0 %v2587
    %3851 = vmatpush1.bf16.msra.mxu0 %v2586
    %3852 = vmatprep.subr.bf16.mxu0 %v2595
    %3853 = vmatpush1.bf16.msra.mxu0 %v2594
    %3854 = vmatprep.subr.bf16.mxu0 %v2603
    %3855 = vmatpush1.bf16.msra.mxu0 %v2602
    %3856 = vmatprep.subr.bf16.mxu0 %v2611
    %3857 = vmatpush1.bf16.msra.mxu0 %v2610
    %3858 = vmatprep.mubr.bf16.mxu0 %v681
    %3859 = vmatmul.mubr.bf16.gmra.mrb[0].mxu0 %v680
    %v3860 = vpop.f32.mrb[0].mxu0
    %v3861 = vadd.f32 %v3820, %v3860
    %v3862 = vpop.f32.mrb[0].mxu0
    %v3863 = vadd.f32 %v3822, %v3862
    %v3864 = vpop.f32.mrb[0].mxu0
    %v3865 = vpop.f32.mrb[0].mxu0
    %3866 = vdwg.mxu0
    %3867 = vmatprep.subr.bf16.mxu0 %v2619
    %3868 = vmatpush1.bf16.msra.mxu0 %v2618
    %3869 = vmatprep.subr.bf16.mxu0 %v2627
    %3870 = vmatpush1.bf16.msra.mxu0 %v2626
    %3871 = vmatprep.subr.bf16.mxu0 %v2635
    %3872 = vmatpush1.bf16.msra.mxu0 %v2634
    %3873 = vmatprep.subr.bf16.mxu0 %v2643
    %3874 = vmatpush1.bf16.msra.mxu0 %v2642
    %3875 = vmatprep.subr.bf16.mxu0 %v2651
    %3876 = vmatpush1.bf16.msra.mxu0 %v2650
    %3877 = vmatprep.subr.bf16.mxu0 %v2659
    %3878 = vmatpush1.bf16.msra.mxu0 %v2658
    %3879 = vmatprep.subr.bf16.mxu0 %v2667
    %3880 = vmatpush1.bf16.msra.mxu0 %v2666
    %3881 = vmatprep.subr.bf16.mxu0 %v2675
    %3882 = vmatpush1.bf16.msra.mxu0 %v2674
    %3883 = vmatprep.subr.bf16.mxu0 %v2683
    %3884 = vmatpush1.bf16.msra.mxu0 %v2682
    %3885 = vmatprep.subr.bf16.mxu0 %v2691
    %3886 = vmatpush1.bf16.msra.mxu0 %v2690
    %3887 = vmatprep.subr.bf16.mxu0 %v2699
    %3888 = vmatpush1.bf16.msra.mxu0 %v2698
    %3889 = vmatprep.subr.bf16.mxu0 %v2707
    %3890 = vmatpush1.bf16.msra.mxu0 %v2706
    %3891 = vmatprep.subr.bf16.mxu0 %v2715
    %3892 = vmatpush1.bf16.msra.mxu0 %v2714
    %3893 = vmatprep.subr.bf16.mxu0 %v2723
    %3894 = vmatpush1.bf16.msra.mxu0 %v2722
    %3895 = vmatprep.subr.bf16.mxu0 %v2731
    %3896 = vmatpush1.bf16.msra.mxu0 %v2730
    %3897 = vmatprep.subr.bf16.mxu0 %v2739
    %3898 = vmatpush1.bf16.msra.mxu0 %v2738
    %3899 = vmatprep.mubr.bf16.mxu0 %v683
    %3900 = vmatmul.mubr.bf16.gmra.mrb[0].mxu0 %v682
    %v3901 = vpop.f32.mrb[0].mxu0
    %v3902 = vadd.f32 %v3861, %v3901
    %v3903 = vpop.f32.mrb[0].mxu0
    %v3904 = vadd.f32 %v3863, %v3903
    %v3905 = vpop.f32.mrb[0].mxu0
    %v3906 = vpop.f32.mrb[0].mxu0
    %3907 = vdwg.mxu0
    %v3908 = vxor.u32 %v3410, 2147483648
    %v3909 = vxor.u32 %v3412, 2147483648
    %v3910 = vxor.u32 %v3574, 2147483648
    %v3911 = vxor.u32 %v3576, 2147483648
    %v3912 = vxor.u32 %v3738, 2147483648
    %v3913 = vxor.u32 %v3740, 2147483648
    %v3914 = vxor.u32 %v3902, 2147483648
    %v3915 = vxor.u32 %v3904, 2147483648
    %v3916 = vmul.f32 %v3908, 1.442695
    %v3917 = vpow.pop %v3916
    %v3918 = vmul.f32 %v3909, 1.442695
    %v3919 = vpow.pop %v3918
    %v3920 = vmul.f32 %v3910, 1.442695
    %v3921 = vpow.pop %v3920
    %v3922 = vmul.f32 %v3911, 1.442695
    %v3923 = vpow.pop %v3922
    %v3924 = vmul.f32 %v3912, 1.442695
    %v3925 = vpow.pop %v3924
    %v3926 = vmul.f32 %v3913, 1.442695
    %v3927 = vpow.pop %v3926
    %v3928 = vmul.f32 %v3914, 1.442695
    %v3929 = vpow.pop %v3928
    %v3930 = vmul.f32 %v3915, 1.442695
    %v3931 = vpow.pop %v3930
    %v3932 = vadd.f32 %v3917, 1.0
    %v3933 = vadd.f32 %v3919, 1.0
    %v3934 = vadd.f32 %v3921, 1.0
    %v3935 = vadd.f32 %v3923, 1.0
    %v3936 = vadd.f32 %v3925, 1.0
    %v3937 = vadd.f32 %v3927, 1.0
    %v3938 = vadd.f32 %v3929, 1.0
    %v3939 = vadd.f32 %v3931, 1.0
    %v3940 = vrcp.pop %v3932
    %v3941 = vmul.f32 1.0, %v3940
    %v3942 = vrcp.pop %v3933
    %v3943 = vmul.f32 1.0, %v3942
    %v3944 = vrcp.pop %v3934
    %v3945 = vmul.f32 1.0, %v3944
    %v3946 = vrcp.pop %v3935
    %v3947 = vmul.f32 1.0, %v3946
    %v3948 = vrcp.pop %v3936
    %v3949 = vmul.f32 1.0, %v3948
    %v3950 = vrcp.pop %v3937
    %v3951 = vmul.f32 1.0, %v3950
    %v3952 = vrcp.pop %v3938
    %v3953 = vmul.f32 1.0, %v3952
    %v3954 = vrcp.pop %v3939
    %v3955 = vmul.f32 1.0, %v3954
    %v3956 = vpack.c.bf16 %v3941, %v3941
    %v3957 = vpack.c.bf16 %v3943, %v3943
    %v3958 = vpack.c.bf16 %v3945, %v3945
    %v3959 = vpack.c.bf16 %v3947, %v3947
    %v3960 = vpack.c.bf16 %v3949, %v3949
    %v3961 = vpack.c.bf16 %v3951, %v3951
    %v3962 = vpack.c.bf16 %v3953, %v3953
    %v3963 = vpack.c.bf16 %v3955, %v3955
    %v3964 = vld [vmem:[#allocation7] sm:$0xff]
    %v3965 = vld [vmem:[#allocation7 + $0x8] sm:$0xff]
    %v3966 = vld [vmem:[#allocation7 + $0x10] sm:$0xff]
    %v3967 = vld [vmem:[#allocation7 + $0x18] sm:$0xff]
    %v3968 = vld [vmem:[#allocation7 + $0x20] sm:$0xff]
    %v3969 = vld [vmem:[#allocation7 + $0x28] sm:$0xff]
    %v3970 = vld [vmem:[#allocation7 + $0x30] sm:$0xff]
    %v3971 = vld [vmem:[#allocation7 + $0x38] sm:$0xff]
    %v3972 = vld [vmem:[#allocation7 + $0x40] sm:$0xff]
    %v3973 = vld [vmem:[#allocation7 + $0x48] sm:$0xff]
    %v3974 = vld [vmem:[#allocation7 + $0x50] sm:$0xff]
    %v3975 = vld [vmem:[#allocation7 + $0x58] sm:$0xff]
    %v3976 = vld [vmem:[#allocation7 + $0x60] sm:$0xff]
    %v3977 = vld [vmem:[#allocation7 + $0x68] sm:$0xff]
    %v3978 = vld [vmem:[#allocation7 + $0x70] sm:$0xff]
    %v3979 = vld [vmem:[#allocation7 + $0x78] sm:$0xff]
    %v3980 = vld [vmem:[#allocation7 + $0x80] sm:$0xff]
    %v3981 = vld [vmem:[#allocation7 + $0x88] sm:$0xff]
    %v3982 = vld [vmem:[#allocation7 + $0x90] sm:$0xff]
    %v3983 = vld [vmem:[#allocation7 + $0x98] sm:$0xff]
    %v3984 = vld [vmem:[#allocation7 + $0xa0] sm:$0xff]
    %v3985 = vld [vmem:[#allocation7 + $0xa8] sm:$0xff]
    %v3986 = vld [vmem:[#allocation7 + $0xb0] sm:$0xff]
    %v3987 = vld [vmem:[#allocation7 + $0xb8] sm:$0xff]
    %v3988 = vld [vmem:[#allocation7 + $0xc0] sm:$0xff]
    %v3989 = vld [vmem:[#allocation7 + $0xc8] sm:$0xff]
    %v3990 = vld [vmem:[#allocation7 + $0xd0] sm:$0xff]
    %v3991 = vld [vmem:[#allocation7 + $0xd8] sm:$0xff]
    %v3992 = vld [vmem:[#allocation7 + $0xe0] sm:$0xff]
    %v3993 = vld [vmem:[#allocation7 + $0xe8] sm:$0xff]
    %v3994 = vld [vmem:[#allocation7 + $0xf0] sm:$0xff]
    %v3995 = vld [vmem:[#allocation7 + $0xf8] sm:$0xff]
    %v3996 = vld [vmem:[#allocation7 + $0x100] sm:$0xff]
    %v3997 = vld [vmem:[#allocation7 + $0x108] sm:$0xff]
    %v3998 = vld [vmem:[#allocation7 + $0x110] sm:$0xff]
    %v3999 = vld [vmem:[#allocation7 + $0x118] sm:$0xff]
    %v4000 = vld [vmem:[#allocation7 + $0x120] sm:$0xff]
    %v4001 = vld [vmem:[#allocation7 + $0x128] sm:$0xff]
    %v4002 = vld [vmem:[#allocation7 + $0x130] sm:$0xff]
    %v4003 = vld [vmem:[#allocation7 + $0x138] sm:$0xff]
    %v4004 = vld [vmem:[#allocation7 + $0x140] sm:$0xff]
    %v4005 = vld [vmem:[#allocation7 + $0x148] sm:$0xff]
    %v4006 = vld [vmem:[#allocation7 + $0x150] sm:$0xff]
    %v4007 = vld [vmem:[#allocation7 + $0x158] sm:$0xff]
    %v4008 = vld [vmem:[#allocation7 + $0x160] sm:$0xff]
    %v4009 = vld [vmem:[#allocation7 + $0x168] sm:$0xff]
    %v4010 = vld [vmem:[#allocation7 + $0x170] sm:$0xff]
    %v4011 = vld [vmem:[#allocation7 + $0x178] sm:$0xff]
    %v4012 = vld [vmem:[#allocation7 + $0x180] sm:$0xff]
    %v4013 = vld [vmem:[#allocation7 + $0x188] sm:$0xff]
    %v4014 = vld [vmem:[#allocation7 + $0x190] sm:$0xff]
    %v4015 = vld [vmem:[#allocation7 + $0x198] sm:$0xff]
    %v4016 = vld [vmem:[#allocation7 + $0x1a0] sm:$0xff]
    %v4017 = vld [vmem:[#allocation7 + $0x1a8] sm:$0xff]
    %v4018 = vld [vmem:[#allocation7 + $0x1b0] sm:$0xff]
    %v4019 = vld [vmem:[#allocation7 + $0x1b8] sm:$0xff]
    %v4020 = vld [vmem:[#allocation7 + $0x1c0] sm:$0xff]
    %v4021 = vld [vmem:[#allocation7 + $0x1c8] sm:$0xff]
    %v4022 = vld [vmem:[#allocation7 + $0x1d0] sm:$0xff]
    %v4023 = vld [vmem:[#allocation7 + $0x1d8] sm:$0xff]
    %v4024 = vld [vmem:[#allocation7 + $0x1e0] sm:$0xff]
    %v4025 = vld [vmem:[#allocation7 + $0x1e8] sm:$0xff]
    %v4026 = vld [vmem:[#allocation7 + $0x1f0] sm:$0xff]
    %v4027 = vld [vmem:[#allocation7 + $0x1f8] sm:$0xff]
    %v4028 = vld [vmem:[#allocation7 + $0x200] sm:$0xff]
    %v4029 = vld [vmem:[#allocation7 + $0x208] sm:$0xff]
    %v4030 = vld [vmem:[#allocation7 + $0x210] sm:$0xff]
    %v4031 = vld [vmem:[#allocation7 + $0x218] sm:$0xff]
    %v4032 = vld [vmem:[#allocation7 + $0x220] sm:$0xff]
    %v4033 = vld [vmem:[#allocation7 + $0x228] sm:$0xff]
    %v4034 = vld [vmem:[#allocation7 + $0x230] sm:$0xff]
    %v4035 = vld [vmem:[#allocation7 + $0x238] sm:$0xff]
    %v4036 = vld [vmem:[#allocation7 + $0x240] sm:$0xff]
    %v4037 = vld [vmem:[#allocation7 + $0x248] sm:$0xff]
    %v4038 = vld [vmem:[#allocation7 + $0x250] sm:$0xff]
    %v4039 = vld [vmem:[#allocation7 + $0x258] sm:$0xff]
    %v4040 = vld [vmem:[#allocation7 + $0x260] sm:$0xff]
    %v4041 = vld [vmem:[#allocation7 + $0x268] sm:$0xff]
    %v4042 = vld [vmem:[#allocation7 + $0x270] sm:$0xff]
    %v4043 = vld [vmem:[#allocation7 + $0x278] sm:$0xff]
    %v4044 = vld [vmem:[#allocation7 + $0x280] sm:$0xff]
    %v4045 = vld [vmem:[#allocation7 + $0x288] sm:$0xff]
    %v4046 = vld [vmem:[#allocation7 + $0x290] sm:$0xff]
    %v4047 = vld [vmem:[#allocation7 + $0x298] sm:$0xff]
    %v4048 = vld [vmem:[#allocation7 + $0x2a0] sm:$0xff]
    %v4049 = vld [vmem:[#allocation7 + $0x2a8] sm:$0xff]
    %v4050 = vld [vmem:[#allocation7 + $0x2b0] sm:$0xff]
    %v4051 = vld [vmem:[#allocation7 + $0x2b8] sm:$0xff]
    %v4052 = vld [vmem:[#allocation7 + $0x2c0] sm:$0xff]
    %v4053 = vld [vmem:[#allocation7 + $0x2c8] sm:$0xff]
    %v4054 = vld [vmem:[#allocation7 + $0x2d0] sm:$0xff]
    %v4055 = vld [vmem:[#allocation7 + $0x2d8] sm:$0xff]
    %v4056 = vld [vmem:[#allocation7 + $0x2e0] sm:$0xff]
    %v4057 = vld [vmem:[#allocation7 + $0x2e8] sm:$0xff]
    %v4058 = vld [vmem:[#allocation7 + $0x2f0] sm:$0xff]
    %v4059 = vld [vmem:[#allocation7 + $0x2f8] sm:$0xff]
    %v4060 = vld [vmem:[#allocation7 + $0x300] sm:$0xff]
    %v4061 = vld [vmem:[#allocation7 + $0x308] sm:$0xff]
    %v4062 = vld [vmem:[#allocation7 + $0x310] sm:$0xff]
    %v4063 = vld [vmem:[#allocation7 + $0x318] sm:$0xff]
    %v4064 = vld [vmem:[#allocation7 + $0x320] sm:$0xff]
    %v4065 = vld [vmem:[#allocation7 + $0x328] sm:$0xff]
    %v4066 = vld [vmem:[#allocation7 + $0x330] sm:$0xff]
    %v4067 = vld [vmem:[#allocation7 + $0x338] sm:$0xff]
    %v4068 = vld [vmem:[#allocation7 + $0x340] sm:$0xff]
    %v4069 = vld [vmem:[#allocation7 + $0x348] sm:$0xff]
    %v4070 = vld [vmem:[#allocation7 + $0x350] sm:$0xff]
    %v4071 = vld [vmem:[#allocation7 + $0x358] sm:$0xff]
    %v4072 = vld [vmem:[#allocation7 + $0x360] sm:$0xff]
    %v4073 = vld [vmem:[#allocation7 + $0x368] sm:$0xff]
    %v4074 = vld [vmem:[#allocation7 + $0x370] sm:$0xff]
    %v4075 = vld [vmem:[#allocation7 + $0x378] sm:$0xff]
    %v4076 = vld [vmem:[#allocation7 + $0x380] sm:$0xff]
    %v4077 = vld [vmem:[#allocation7 + $0x388] sm:$0xff]
    %v4078 = vld [vmem:[#allocation7 + $0x390] sm:$0xff]
    %v4079 = vld [vmem:[#allocation7 + $0x398] sm:$0xff]
    %v4080 = vld [vmem:[#allocation7 + $0x3a0] sm:$0xff]
    %v4081 = vld [vmem:[#allocation7 + $0x3a8] sm:$0xff]
    %v4082 = vld [vmem:[#allocation7 + $0x3b0] sm:$0xff]
    %v4083 = vld [vmem:[#allocation7 + $0x3b8] sm:$0xff]
    %v4084 = vld [vmem:[#allocation7 + $0x3c0] sm:$0xff]
    %v4085 = vld [vmem:[#allocation7 + $0x3c8] sm:$0xff]
    %v4086 = vld [vmem:[#allocation7 + $0x3d0] sm:$0xff]
    %v4087 = vld [vmem:[#allocation7 + $0x3d8] sm:$0xff]
    %v4088 = vld [vmem:[#allocation7 + $0x3e0] sm:$0xff]
    %v4089 = vld [vmem:[#allocation7 + $0x3e8] sm:$0xff]
    %v4090 = vld [vmem:[#allocation7 + $0x3f0] sm:$0xff]
    %v4091 = vld [vmem:[#allocation7 + $0x3f8] sm:$0xff]
    %v4092 = vld [vmem:[#allocation7 + $0x400] sm:$0xff]
    %v4093 = vld [vmem:[#allocation7 + $0x408] sm:$0xff]
    %v4094 = vld [vmem:[#allocation7 + $0x410] sm:$0xff]
    %v4095 = vld [vmem:[#allocation7 + $0x418] sm:$0xff]
    %v4096 = vld [vmem:[#allocation7 + $0x420] sm:$0xff]
    %v4097 = vld [vmem:[#allocation7 + $0x428] sm:$0xff]
    %v4098 = vld [vmem:[#allocation7 + $0x430] sm:$0xff]
    %v4099 = vld [vmem:[#allocation7 + $0x438] sm:$0xff]
    %v4100 = vld [vmem:[#allocation7 + $0x440] sm:$0xff]
    %v4101 = vld [vmem:[#allocation7 + $0x448] sm:$0xff]
    %v4102 = vld [vmem:[#allocation7 + $0x450] sm:$0xff]
    %v4103 = vld [vmem:[#allocation7 + $0x458] sm:$0xff]
    %v4104 = vld [vmem:[#allocation7 + $0x460] sm:$0xff]
    %v4105 = vld [vmem:[#allocation7 + $0x468] sm:$0xff]
    %v4106 = vld [vmem:[#allocation7 + $0x470] sm:$0xff]
    %v4107 = vld [vmem:[#allocation7 + $0x478] sm:$0xff]
    %v4108 = vld [vmem:[#allocation7 + $0x480] sm:$0xff]
    %v4109 = vld [vmem:[#allocation7 + $0x488] sm:$0xff]
    %v4110 = vld [vmem:[#allocation7 + $0x490] sm:$0xff]
    %v4111 = vld [vmem:[#allocation7 + $0x498] sm:$0xff]
    %v4112 = vld [vmem:[#allocation7 + $0x4a0] sm:$0xff]
    %v4113 = vld [vmem:[#allocation7 + $0x4a8] sm:$0xff]
    %v4114 = vld [vmem:[#allocation7 + $0x4b0] sm:$0xff]
    %v4115 = vld [vmem:[#allocation7 + $0x4b8] sm:$0xff]
    %v4116 = vld [vmem:[#allocation7 + $0x4c0] sm:$0xff]
    %v4117 = vld [vmem:[#allocation7 + $0x4c8] sm:$0xff]
    %v4118 = vld [vmem:[#allocation7 + $0x4d0] sm:$0xff]
    %v4119 = vld [vmem:[#allocation7 + $0x4d8] sm:$0xff]
    %v4120 = vld [vmem:[#allocation7 + $0x4e0] sm:$0xff]
    %v4121 = vld [vmem:[#allocation7 + $0x4e8] sm:$0xff]
    %v4122 = vld [vmem:[#allocation7 + $0x4f0] sm:$0xff]
    %v4123 = vld [vmem:[#allocation7 + $0x4f8] sm:$0xff]
    %v4124 = vld [vmem:[#allocation7 + $0x500] sm:$0xff]
    %v4125 = vld [vmem:[#allocation7 + $0x508] sm:$0xff]
    %v4126 = vld [vmem:[#allocation7 + $0x510] sm:$0xff]
    %v4127 = vld [vmem:[#allocation7 + $0x518] sm:$0xff]
    %v4128 = vld [vmem:[#allocation7 + $0x520] sm:$0xff]
    %v4129 = vld [vmem:[#allocation7 + $0x528] sm:$0xff]
    %v4130 = vld [vmem:[#allocation7 + $0x530] sm:$0xff]
    %v4131 = vld [vmem:[#allocation7 + $0x538] sm:$0xff]
    %v4132 = vld [vmem:[#allocation7 + $0x540] sm:$0xff]
    %v4133 = vld [vmem:[#allocation7 + $0x548] sm:$0xff]
    %v4134 = vld [vmem:[#allocation7 + $0x550] sm:$0xff]
    %v4135 = vld [vmem:[#allocation7 + $0x558] sm:$0xff]
    %v4136 = vld [vmem:[#allocation7 + $0x560] sm:$0xff]
    %v4137 = vld [vmem:[#allocation7 + $0x568] sm:$0xff]
    %v4138 = vld [vmem:[#allocation7 + $0x570] sm:$0xff]
    %v4139 = vld [vmem:[#allocation7 + $0x578] sm:$0xff]
    %v4140 = vld [vmem:[#allocation7 + $0x580] sm:$0xff]
    %v4141 = vld [vmem:[#allocation7 + $0x588] sm:$0xff]
    %v4142 = vld [vmem:[#allocation7 + $0x590] sm:$0xff]
    %v4143 = vld [vmem:[#allocation7 + $0x598] sm:$0xff]
    %v4144 = vld [vmem:[#allocation7 + $0x5a0] sm:$0xff]
    %v4145 = vld [vmem:[#allocation7 + $0x5a8] sm:$0xff]
    %v4146 = vld [vmem:[#allocation7 + $0x5b0] sm:$0xff]
    %v4147 = vld [vmem:[#allocation7 + $0x5b8] sm:$0xff]
    %v4148 = vld [vmem:[#allocation7 + $0x5c0] sm:$0xff]
    %v4149 = vld [vmem:[#allocation7 + $0x5c8] sm:$0xff]
    %v4150 = vld [vmem:[#allocation7 + $0x5d0] sm:$0xff]
    %v4151 = vld [vmem:[#allocation7 + $0x5d8] sm:$0xff]
    %v4152 = vld [vmem:[#allocation7 + $0x5e0] sm:$0xff]
    %v4153 = vld [vmem:[#allocation7 + $0x5e8] sm:$0xff]
    %v4154 = vld [vmem:[#allocation7 + $0x5f0] sm:$0xff]
    %v4155 = vld [vmem:[#allocation7 + $0x5f8] sm:$0xff]
    %v4156 = vld [vmem:[#allocation7 + $0x600] sm:$0xff]
    %v4157 = vld [vmem:[#allocation7 + $0x608] sm:$0xff]
    %v4158 = vld [vmem:[#allocation7 + $0x610] sm:$0xff]
    %v4159 = vld [vmem:[#allocation7 + $0x618] sm:$0xff]
    %v4160 = vld [vmem:[#allocation7 + $0x620] sm:$0xff]
    %v4161 = vld [vmem:[#allocation7 + $0x628] sm:$0xff]
    %v4162 = vld [vmem:[#allocation7 + $0x630] sm:$0xff]
    %v4163 = vld [vmem:[#allocation7 + $0x638] sm:$0xff]
    %v4164 = vld [vmem:[#allocation7 + $0x640] sm:$0xff]
    %v4165 = vld [vmem:[#allocation7 + $0x648] sm:$0xff]
    %v4166 = vld [vmem:[#allocation7 + $0x650] sm:$0xff]
    %v4167 = vld [vmem:[#allocation7 + $0x658] sm:$0xff]
    %v4168 = vld [vmem:[#allocation7 + $0x660] sm:$0xff]
    %v4169 = vld [vmem:[#allocation7 + $0x668] sm:$0xff]
    %v4170 = vld [vmem:[#allocation7 + $0x670] sm:$0xff]
    %v4171 = vld [vmem:[#allocation7 + $0x678] sm:$0xff]
    %v4172 = vld [vmem:[#allocation7 + $0x680] sm:$0xff]
    %v4173 = vld [vmem:[#allocation7 + $0x688] sm:$0xff]
    %v4174 = vld [vmem:[#allocation7 + $0x690] sm:$0xff]
    %v4175 = vld [vmem:[#allocation7 + $0x698] sm:$0xff]
    %v4176 = vld [vmem:[#allocation7 + $0x6a0] sm:$0xff]
    %v4177 = vld [vmem:[#allocation7 + $0x6a8] sm:$0xff]
    %v4178 = vld [vmem:[#allocation7 + $0x6b0] sm:$0xff]
    %v4179 = vld [vmem:[#allocation7 + $0x6b8] sm:$0xff]
    %v4180 = vld [vmem:[#allocation7 + $0x6c0] sm:$0xff]
    %v4181 = vld [vmem:[#allocation7 + $0x6c8] sm:$0xff]
    %v4182 = vld [vmem:[#allocation7 + $0x6d0] sm:$0xff]
    %v4183 = vld [vmem:[#allocation7 + $0x6d8] sm:$0xff]
    %v4184 = vld [vmem:[#allocation7 + $0x6e0] sm:$0xff]
    %v4185 = vld [vmem:[#allocation7 + $0x6e8] sm:$0xff]
    %v4186 = vld [vmem:[#allocation7 + $0x6f0] sm:$0xff]
    %v4187 = vld [vmem:[#allocation7 + $0x6f8] sm:$0xff]
    %v4188 = vld [vmem:[#allocation7 + $0x700] sm:$0xff]
    %v4189 = vld [vmem:[#allocation7 + $0x708] sm:$0xff]
    %v4190 = vld [vmem:[#allocation7 + $0x710] sm:$0xff]
    %v4191 = vld [vmem:[#allocation7 + $0x718] sm:$0xff]
    %v4192 = vld [vmem:[#allocation7 + $0x720] sm:$0xff]
    %v4193 = vld [vmem:[#allocation7 + $0x728] sm:$0xff]
    %v4194 = vld [vmem:[#allocation7 + $0x730] sm:$0xff]
    %v4195 = vld [vmem:[#allocation7 + $0x738] sm:$0xff]
    %v4196 = vld [vmem:[#allocation7 + $0x740] sm:$0xff]
    %v4197 = vld [vmem:[#allocation7 + $0x748] sm:$0xff]
    %v4198 = vld [vmem:[#allocation7 + $0x750] sm:$0xff]
    %v4199 = vld [vmem:[#allocation7 + $0x758] sm:$0xff]
    %v4200 = vld [vmem:[#allocation7 + $0x760] sm:$0xff]
    %v4201 = vld [vmem:[#allocation7 + $0x768] sm:$0xff]
    %v4202 = vld [vmem:[#allocation7 + $0x770] sm:$0xff]
    %v4203 = vld [vmem:[#allocation7 + $0x778] sm:$0xff]
    %v4204 = vld [vmem:[#allocation7 + $0x780] sm:$0xff]
    %v4205 = vld [vmem:[#allocation7 + $0x788] sm:$0xff]
    %v4206 = vld [vmem:[#allocation7 + $0x790] sm:$0xff]
    %v4207 = vld [vmem:[#allocation7 + $0x798] sm:$0xff]
    %v4208 = vld [vmem:[#allocation7 + $0x7a0] sm:$0xff]
    %v4209 = vld [vmem:[#allocation7 + $0x7a8] sm:$0xff]
    %v4210 = vld [vmem:[#allocation7 + $0x7b0] sm:$0xff]
    %v4211 = vld [vmem:[#allocation7 + $0x7b8] sm:$0xff]
    %v4212 = vld [vmem:[#allocation7 + $0x7c0] sm:$0xff]
    %v4213 = vld [vmem:[#allocation7 + $0x7c8] sm:$0xff]
    %v4214 = vld [vmem:[#allocation7 + $0x7d0] sm:$0xff]
    %v4215 = vld [vmem:[#allocation7 + $0x7d8] sm:$0xff]
    %v4216 = vld [vmem:[#allocation7 + $0x7e0] sm:$0xff]
    %v4217 = vld [vmem:[#allocation7 + $0x7e8] sm:$0xff]
    %v4218 = vld [vmem:[#allocation7 + $0x7f0] sm:$0xff]
    %v4219 = vld [vmem:[#allocation7 + $0x7f8] sm:$0xff]
    %v4220 = vld [vmem:[#allocation7 + $0x800] sm:$0xff]
    %v4221 = vld [vmem:[#allocation7 + $0x808] sm:$0xff]
    %v4222 = vld [vmem:[#allocation7 + $0x810] sm:$0xff]
    %v4223 = vld [vmem:[#allocation7 + $0x818] sm:$0xff]
    %v4224 = vld [vmem:[#allocation7 + $0x820] sm:$0xff]
    %v4225 = vld [vmem:[#allocation7 + $0x828] sm:$0xff]
    %v4226 = vld [vmem:[#allocation7 + $0x830] sm:$0xff]
    %v4227 = vld [vmem:[#allocation7 + $0x838] sm:$0xff]
    %v4228 = vld [vmem:[#allocation7 + $0x840] sm:$0xff]
    %v4229 = vld [vmem:[#allocation7 + $0x848] sm:$0xff]
    %v4230 = vld [vmem:[#allocation7 + $0x850] sm:$0xff]
    %v4231 = vld [vmem:[#allocation7 + $0x858] sm:$0xff]
    %v4232 = vld [vmem:[#allocation7 + $0x860] sm:$0xff]
    %v4233 = vld [vmem:[#allocation7 + $0x868] sm:$0xff]
    %v4234 = vld [vmem:[#allocation7 + $0x870] sm:$0xff]
    %v4235 = vld [vmem:[#allocation7 + $0x878] sm:$0xff]
    %v4236 = vld [vmem:[#allocation7 + $0x880] sm:$0xff]
    %v4237 = vld [vmem:[#allocation7 + $0x888] sm:$0xff]
    %v4238 = vld [vmem:[#allocation7 + $0x890] sm:$0xff]
    %v4239 = vld [vmem:[#allocation7 + $0x898] sm:$0xff]
    %v4240 = vld [vmem:[#allocation7 + $0x8a0] sm:$0xff]
    %v4241 = vld [vmem:[#allocation7 + $0x8a8] sm:$0xff]
    %v4242 = vld [vmem:[#allocation7 + $0x8b0] sm:$0xff]
    %v4243 = vld [vmem:[#allocation7 + $0x8b8] sm:$0xff]
    %v4244 = vld [vmem:[#allocation7 + $0x8c0] sm:$0xff]
    %v4245 = vld [vmem:[#allocation7 + $0x8c8] sm:$0xff]
    %v4246 = vld [vmem:[#allocation7 + $0x8d0] sm:$0xff]
    %v4247 = vld [vmem:[#allocation7 + $0x8d8] sm:$0xff]
    %v4248 = vld [vmem:[#allocation7 + $0x8e0] sm:$0xff]
    %v4249 = vld [vmem:[#allocation7 + $0x8e8] sm:$0xff]
    %v4250 = vld [vmem:[#allocation7 + $0x8f0] sm:$0xff]
    %v4251 = vld [vmem:[#allocation7 + $0x8f8] sm:$0xff]
    %v4252 = vld [vmem:[#allocation7 + $0x900] sm:$0xff]
    %v4253 = vld [vmem:[#allocation7 + $0x908] sm:$0xff]
    %v4254 = vld [vmem:[#allocation7 + $0x910] sm:$0xff]
    %v4255 = vld [vmem:[#allocation7 + $0x918] sm:$0xff]
    %v4256 = vld [vmem:[#allocation7 + $0x920] sm:$0xff]
    %v4257 = vld [vmem:[#allocation7 + $0x928] sm:$0xff]
    %v4258 = vld [vmem:[#allocation7 + $0x930] sm:$0xff]
    %v4259 = vld [vmem:[#allocation7 + $0x938] sm:$0xff]
    %v4260 = vld [vmem:[#allocation7 + $0x940] sm:$0xff]
    %v4261 = vld [vmem:[#allocation7 + $0x948] sm:$0xff]
    %v4262 = vld [vmem:[#allocation7 + $0x950] sm:$0xff]
    %v4263 = vld [vmem:[#allocation7 + $0x958] sm:$0xff]
    %v4264 = vld [vmem:[#allocation7 + $0x960] sm:$0xff]
    %v4265 = vld [vmem:[#allocation7 + $0x968] sm:$0xff]
    %v4266 = vld [vmem:[#allocation7 + $0x970] sm:$0xff]
    %v4267 = vld [vmem:[#allocation7 + $0x978] sm:$0xff]
    %v4268 = vld [vmem:[#allocation7 + $0x980] sm:$0xff]
    %v4269 = vld [vmem:[#allocation7 + $0x988] sm:$0xff]
    %v4270 = vld [vmem:[#allocation7 + $0x990] sm:$0xff]
    %v4271 = vld [vmem:[#allocation7 + $0x998] sm:$0xff]
    %v4272 = vld [vmem:[#allocation7 + $0x9a0] sm:$0xff]
    %v4273 = vld [vmem:[#allocation7 + $0x9a8] sm:$0xff]
    %v4274 = vld [vmem:[#allocation7 + $0x9b0] sm:$0xff]
    %v4275 = vld [vmem:[#allocation7 + $0x9b8] sm:$0xff]
    %v4276 = vld [vmem:[#allocation7 + $0x9c0] sm:$0xff]
    %v4277 = vld [vmem:[#allocation7 + $0x9c8] sm:$0xff]
    %v4278 = vld [vmem:[#allocation7 + $0x9d0] sm:$0xff]
    %v4279 = vld [vmem:[#allocation7 + $0x9d8] sm:$0xff]
    %v4280 = vld [vmem:[#allocation7 + $0x9e0] sm:$0xff]
    %v4281 = vld [vmem:[#allocation7 + $0x9e8] sm:$0xff]
    %v4282 = vld [vmem:[#allocation7 + $0x9f0] sm:$0xff]
    %v4283 = vld [vmem:[#allocation7 + $0x9f8] sm:$0xff]
    %v4284 = vld [vmem:[#allocation7 + $0xa00] sm:$0xff]
    %v4285 = vld [vmem:[#allocation7 + $0xa08] sm:$0xff]
    %v4286 = vld [vmem:[#allocation7 + $0xa10] sm:$0xff]
    %v4287 = vld [vmem:[#allocation7 + $0xa18] sm:$0xff]
    %v4288 = vld [vmem:[#allocation7 + $0xa20] sm:$0xff]
    %v4289 = vld [vmem:[#allocation7 + $0xa28] sm:$0xff]
    %v4290 = vld [vmem:[#allocation7 + $0xa30] sm:$0xff]
    %v4291 = vld [vmem:[#allocation7 + $0xa38] sm:$0xff]
    %v4292 = vld [vmem:[#allocation7 + $0xa40] sm:$0xff]
    %v4293 = vld [vmem:[#allocation7 + $0xa48] sm:$0xff]
    %v4294 = vld [vmem:[#allocation7 + $0xa50] sm:$0xff]
    %v4295 = vld [vmem:[#allocation7 + $0xa58] sm:$0xff]
    %v4296 = vld [vmem:[#allocation7 + $0xa60] sm:$0xff]
    %v4297 = vld [vmem:[#allocation7 + $0xa68] sm:$0xff]
    %v4298 = vld [vmem:[#allocation7 + $0xa70] sm:$0xff]
    %v4299 = vld [vmem:[#allocation7 + $0xa78] sm:$0xff]
    %v4300 = vld [vmem:[#allocation7 + $0xa80] sm:$0xff]
    %v4301 = vld [vmem:[#allocation7 + $0xa88] sm:$0xff]
    %v4302 = vld [vmem:[#allocation7 + $0xa90] sm:$0xff]
    %v4303 = vld [vmem:[#allocation7 + $0xa98] sm:$0xff]
    %v4304 = vld [vmem:[#allocation7 + $0xaa0] sm:$0xff]
    %v4305 = vld [vmem:[#allocation7 + $0xaa8] sm:$0xff]
    %v4306 = vld [vmem:[#allocation7 + $0xab0] sm:$0xff]
    %v4307 = vld [vmem:[#allocation7 + $0xab8] sm:$0xff]
    %v4308 = vld [vmem:[#allocation7 + $0xac0] sm:$0xff]
    %v4309 = vld [vmem:[#allocation7 + $0xac8] sm:$0xff]
    %v4310 = vld [vmem:[#allocation7 + $0xad0] sm:$0xff]
    %v4311 = vld [vmem:[#allocation7 + $0xad8] sm:$0xff]
    %v4312 = vld [vmem:[#allocation7 + $0xae0] sm:$0xff]
    %v4313 = vld [vmem:[#allocation7 + $0xae8] sm:$0xff]
    %v4314 = vld [vmem:[#allocation7 + $0xaf0] sm:$0xff]
    %v4315 = vld [vmem:[#allocation7 + $0xaf8] sm:$0xff]
    %v4316 = vld [vmem:[#allocation7 + $0xb00] sm:$0xff]
    %v4317 = vld [vmem:[#allocation7 + $0xb08] sm:$0xff]
    %v4318 = vld [vmem:[#allocation7 + $0xb10] sm:$0xff]
    %v4319 = vld [vmem:[#allocation7 + $0xb18] sm:$0xff]
    %v4320 = vld [vmem:[#allocation7 + $0xb20] sm:$0xff]
    %v4321 = vld [vmem:[#allocation7 + $0xb28] sm:$0xff]
    %v4322 = vld [vmem:[#allocation7 + $0xb30] sm:$0xff]
    %v4323 = vld [vmem:[#allocation7 + $0xb38] sm:$0xff]
    %v4324 = vld [vmem:[#allocation7 + $0xb40] sm:$0xff]
    %v4325 = vld [vmem:[#allocation7 + $0xb48] sm:$0xff]
    %v4326 = vld [vmem:[#allocation7 + $0xb50] sm:$0xff]
    %v4327 = vld [vmem:[#allocation7 + $0xb58] sm:$0xff]
    %v4328 = vld [vmem:[#allocation7 + $0xb60] sm:$0xff]
    %v4329 = vld [vmem:[#allocation7 + $0xb68] sm:$0xff]
    %v4330 = vld [vmem:[#allocation7 + $0xb70] sm:$0xff]
    %v4331 = vld [vmem:[#allocation7 + $0xb78] sm:$0xff]
    %v4332 = vld [vmem:[#allocation7 + $0xb80] sm:$0xff]
    %v4333 = vld [vmem:[#allocation7 + $0xb88] sm:$0xff]
    %v4334 = vld [vmem:[#allocation7 + $0xb90] sm:$0xff]
    %v4335 = vld [vmem:[#allocation7 + $0xb98] sm:$0xff]
    %v4336 = vld [vmem:[#allocation7 + $0xba0] sm:$0xff]
    %v4337 = vld [vmem:[#allocation7 + $0xba8] sm:$0xff]
    %v4338 = vld [vmem:[#allocation7 + $0xbb0] sm:$0xff]
    %v4339 = vld [vmem:[#allocation7 + $0xbb8] sm:$0xff]
    %v4340 = vld [vmem:[#allocation7 + $0xbc0] sm:$0xff]
    %v4341 = vld [vmem:[#allocation7 + $0xbc8] sm:$0xff]
    %v4342 = vld [vmem:[#allocation7 + $0xbd0] sm:$0xff]
    %v4343 = vld [vmem:[#allocation7 + $0xbd8] sm:$0xff]
    %v4344 = vld [vmem:[#allocation7 + $0xbe0] sm:$0xff]
    %v4345 = vld [vmem:[#allocation7 + $0xbe8] sm:$0xff]
    %v4346 = vld [vmem:[#allocation7 + $0xbf0] sm:$0xff]
    %v4347 = vld [vmem:[#allocation7 + $0xbf8] sm:$0xff]
    %v4348 = vld [vmem:[#allocation7 + $0xc00] sm:$0xff]
    %v4349 = vld [vmem:[#allocation7 + $0xc08] sm:$0xff]
    %v4350 = vld [vmem:[#allocation7 + $0xc10] sm:$0xff]
    %v4351 = vld [vmem:[#allocation7 + $0xc18] sm:$0xff]
    %v4352 = vld [vmem:[#allocation7 + $0xc20] sm:$0xff]
    %v4353 = vld [vmem:[#allocation7 + $0xc28] sm:$0xff]
    %v4354 = vld [vmem:[#allocation7 + $0xc30] sm:$0xff]
    %v4355 = vld [vmem:[#allocation7 + $0xc38] sm:$0xff]
    %v4356 = vld [vmem:[#allocation7 + $0xc40] sm:$0xff]
    %v4357 = vld [vmem:[#allocation7 + $0xc48] sm:$0xff]
    %v4358 = vld [vmem:[#allocation7 + $0xc50] sm:$0xff]
    %v4359 = vld [vmem:[#allocation7 + $0xc58] sm:$0xff]
    %v4360 = vld [vmem:[#allocation7 + $0xc60] sm:$0xff]
    %v4361 = vld [vmem:[#allocation7 + $0xc68] sm:$0xff]
    %v4362 = vld [vmem:[#allocation7 + $0xc70] sm:$0xff]
    %v4363 = vld [vmem:[#allocation7 + $0xc78] sm:$0xff]
    %v4364 = vld [vmem:[#allocation7 + $0xc80] sm:$0xff]
    %v4365 = vld [vmem:[#allocation7 + $0xc88] sm:$0xff]
    %v4366 = vld [vmem:[#allocation7 + $0xc90] sm:$0xff]
    %v4367 = vld [vmem:[#allocation7 + $0xc98] sm:$0xff]
    %v4368 = vld [vmem:[#allocation7 + $0xca0] sm:$0xff]
    %v4369 = vld [vmem:[#allocation7 + $0xca8] sm:$0xff]
    %v4370 = vld [vmem:[#allocation7 + $0xcb0] sm:$0xff]
    %v4371 = vld [vmem:[#allocation7 + $0xcb8] sm:$0xff]
    %v4372 = vld [vmem:[#allocation7 + $0xcc0] sm:$0xff]
    %v4373 = vld [vmem:[#allocation7 + $0xcc8] sm:$0xff]
    %v4374 = vld [vmem:[#allocation7 + $0xcd0] sm:$0xff]
    %v4375 = vld [vmem:[#allocation7 + $0xcd8] sm:$0xff]
    %v4376 = vld [vmem:[#allocation7 + $0xce0] sm:$0xff]
    %v4377 = vld [vmem:[#allocation7 + $0xce8] sm:$0xff]
    %v4378 = vld [vmem:[#allocation7 + $0xcf0] sm:$0xff]
    %v4379 = vld [vmem:[#allocation7 + $0xcf8] sm:$0xff]
    %v4380 = vld [vmem:[#allocation7 + $0xd00] sm:$0xff]
    %v4381 = vld [vmem:[#allocation7 + $0xd08] sm:$0xff]
    %v4382 = vld [vmem:[#allocation7 + $0xd10] sm:$0xff]
    %v4383 = vld [vmem:[#allocation7 + $0xd18] sm:$0xff]
    %v4384 = vld [vmem:[#allocation7 + $0xd20] sm:$0xff]
    %v4385 = vld [vmem:[#allocation7 + $0xd28] sm:$0xff]
    %v4386 = vld [vmem:[#allocation7 + $0xd30] sm:$0xff]
    %v4387 = vld [vmem:[#allocation7 + $0xd38] sm:$0xff]
    %v4388 = vld [vmem:[#allocation7 + $0xd40] sm:$0xff]
    %v4389 = vld [vmem:[#allocation7 + $0xd48] sm:$0xff]
    %v4390 = vld [vmem:[#allocation7 + $0xd50] sm:$0xff]
    %v4391 = vld [vmem:[#allocation7 + $0xd58] sm:$0xff]
    %v4392 = vld [vmem:[#allocation7 + $0xd60] sm:$0xff]
    %v4393 = vld [vmem:[#allocation7 + $0xd68] sm:$0xff]
    %v4394 = vld [vmem:[#allocation7 + $0xd70] sm:$0xff]
    %v4395 = vld [vmem:[#allocation7 + $0xd78] sm:$0xff]
    %v4396 = vld [vmem:[#allocation7 + $0xd80] sm:$0xff]
    %v4397 = vld [vmem:[#allocation7 + $0xd88] sm:$0xff]
    %v4398 = vld [vmem:[#allocation7 + $0xd90] sm:$0xff]
    %v4399 = vld [vmem:[#allocation7 + $0xd98] sm:$0xff]
    %v4400 = vld [vmem:[#allocation7 + $0xda0] sm:$0xff]
    %v4401 = vld [vmem:[#allocation7 + $0xda8] sm:$0xff]
    %v4402 = vld [vmem:[#allocation7 + $0xdb0] sm:$0xff]
    %v4403 = vld [vmem:[#allocation7 + $0xdb8] sm:$0xff]
    %v4404 = vld [vmem:[#allocation7 + $0xdc0] sm:$0xff]
    %v4405 = vld [vmem:[#allocation7 + $0xdc8] sm:$0xff]
    %v4406 = vld [vmem:[#allocation7 + $0xdd0] sm:$0xff]
    %v4407 = vld [vmem:[#allocation7 + $0xdd8] sm:$0xff]
    %v4408 = vld [vmem:[#allocation7 + $0xde0] sm:$0xff]
    %v4409 = vld [vmem:[#allocation7 + $0xde8] sm:$0xff]
    %v4410 = vld [vmem:[#allocation7 + $0xdf0] sm:$0xff]
    %v4411 = vld [vmem:[#allocation7 + $0xdf8] sm:$0xff]
    %v4412 = vld [vmem:[#allocation7 + $0xe00] sm:$0xff]
    %v4413 = vld [vmem:[#allocation7 + $0xe08] sm:$0xff]
    %v4414 = vld [vmem:[#allocation7 + $0xe10] sm:$0xff]
    %v4415 = vld [vmem:[#allocation7 + $0xe18] sm:$0xff]
    %v4416 = vld [vmem:[#allocation7 + $0xe20] sm:$0xff]
    %v4417 = vld [vmem:[#allocation7 + $0xe28] sm:$0xff]
    %v4418 = vld [vmem:[#allocation7 + $0xe30] sm:$0xff]
    %v4419 = vld [vmem:[#allocation7 + $0xe38] sm:$0xff]
    %v4420 = vld [vmem:[#allocation7 + $0xe40] sm:$0xff]
    %v4421 = vld [vmem:[#allocation7 + $0xe48] sm:$0xff]
    %v4422 = vld [vmem:[#allocation7 + $0xe50] sm:$0xff]
    %v4423 = vld [vmem:[#allocation7 + $0xe58] sm:$0xff]
    %v4424 = vld [vmem:[#allocation7 + $0xe60] sm:$0xff]
    %v4425 = vld [vmem:[#allocation7 + $0xe68] sm:$0xff]
    %v4426 = vld [vmem:[#allocation7 + $0xe70] sm:$0xff]
    %v4427 = vld [vmem:[#allocation7 + $0xe78] sm:$0xff]
    %v4428 = vld [vmem:[#allocation7 + $0xe80] sm:$0xff]
    %v4429 = vld [vmem:[#allocation7 + $0xe88] sm:$0xff]
    %v4430 = vld [vmem:[#allocation7 + $0xe90] sm:$0xff]
    %v4431 = vld [vmem:[#allocation7 + $0xe98] sm:$0xff]
    %v4432 = vld [vmem:[#allocation7 + $0xea0] sm:$0xff]
    %v4433 = vld [vmem:[#allocation7 + $0xea8] sm:$0xff]
    %v4434 = vld [vmem:[#allocation7 + $0xeb0] sm:$0xff]
    %v4435 = vld [vmem:[#allocation7 + $0xeb8] sm:$0xff]
    %v4436 = vld [vmem:[#allocation7 + $0xec0] sm:$0xff]
    %v4437 = vld [vmem:[#allocation7 + $0xec8] sm:$0xff]
    %v4438 = vld [vmem:[#allocation7 + $0xed0] sm:$0xff]
    %v4439 = vld [vmem:[#allocation7 + $0xed8] sm:$0xff]
    %v4440 = vld [vmem:[#allocation7 + $0xee0] sm:$0xff]
    %v4441 = vld [vmem:[#allocation7 + $0xee8] sm:$0xff]
    %v4442 = vld [vmem:[#allocation7 + $0xef0] sm:$0xff]
    %v4443 = vld [vmem:[#allocation7 + $0xef8] sm:$0xff]
    %v4444 = vld [vmem:[#allocation7 + $0xf00] sm:$0xff]
    %v4445 = vld [vmem:[#allocation7 + $0xf08] sm:$0xff]
    %v4446 = vld [vmem:[#allocation7 + $0xf10] sm:$0xff]
    %v4447 = vld [vmem:[#allocation7 + $0xf18] sm:$0xff]
    %v4448 = vld [vmem:[#allocation7 + $0xf20] sm:$0xff]
    %v4449 = vld [vmem:[#allocation7 + $0xf28] sm:$0xff]
    %v4450 = vld [vmem:[#allocation7 + $0xf30] sm:$0xff]
    %v4451 = vld [vmem:[#allocation7 + $0xf38] sm:$0xff]
    %v4452 = vld [vmem:[#allocation7 + $0xf40] sm:$0xff]
    %v4453 = vld [vmem:[#allocation7 + $0xf48] sm:$0xff]
    %v4454 = vld [vmem:[#allocation7 + $0xf50] sm:$0xff]
    %v4455 = vld [vmem:[#allocation7 + $0xf58] sm:$0xff]
    %v4456 = vld [vmem:[#allocation7 + $0xf60] sm:$0xff]
    %v4457 = vld [vmem:[#allocation7 + $0xf68] sm:$0xff]
    %v4458 = vld [vmem:[#allocation7 + $0xf70] sm:$0xff]
    %v4459 = vld [vmem:[#allocation7 + $0xf78] sm:$0xff]
    %v4460 = vld [vmem:[#allocation7 + $0xf80] sm:$0xff]
    %v4461 = vld [vmem:[#allocation7 + $0xf88] sm:$0xff]
    %v4462 = vld [vmem:[#allocation7 + $0xf90] sm:$0xff]
    %v4463 = vld [vmem:[#allocation7 + $0xf98] sm:$0xff]
    %v4464 = vld [vmem:[#allocation7 + $0xfa0] sm:$0xff]
    %v4465 = vld [vmem:[#allocation7 + $0xfa8] sm:$0xff]
    %v4466 = vld [vmem:[#allocation7 + $0xfb0] sm:$0xff]
    %v4467 = vld [vmem:[#allocation7 + $0xfb8] sm:$0xff]
    %v4468 = vld [vmem:[#allocation7 + $0xfc0] sm:$0xff]
    %v4469 = vld [vmem:[#allocation7 + $0xfc8] sm:$0xff]
    %v4470 = vld [vmem:[#allocation7 + $0xfd0] sm:$0xff]
    %v4471 = vld [vmem:[#allocation7 + $0xfd8] sm:$0xff]
    %v4472 = vld [vmem:[#allocation7 + $0xfe0] sm:$0xff]
    %v4473 = vld [vmem:[#allocation7 + $0xfe8] sm:$0xff]
    %v4474 = vld [vmem:[#allocation7 + $0xff0] sm:$0xff]
    %v4475 = vld [vmem:[#allocation7 + $0xff8] sm:$0xff]
    %v4476 = vld [vmem:[#allocation8] sm:$0xff]
    %v4478 = vlaneseq
    %v4479 = vshrl.u32 %v4478, 7
    %v4480 = vsub.s32 0, %v4479
    %v4481 = vrot.slane %v4476, %v4480
    %v4482 = vlaneseq
    %v4483 = vshrl.u32 %v4482, 7
    %v4484 = vsub.s32 1, %v4483
    %v4485 = vrot.slane %v4476, %v4484
    %v4486 = vlaneseq
    %v4487 = vshrl.u32 %v4486, 7
    %v4488 = vsub.s32 2, %v4487
    %v4489 = vrot.slane %v4476, %v4488
    %v4490 = vlaneseq
    %v4491 = vshrl.u32 %v4490, 7
    %v4492 = vsub.s32 3, %v4491
    %v4493 = vrot.slane %v4476, %v4492
    %v4494 = vlaneseq
    %v4495 = vshrl.u32 %v4494, 7
    %v4496 = vsub.s32 4, %v4495
    %v4497 = vrot.slane %v4476, %v4496
    %v4498 = vlaneseq
    %v4499 = vshrl.u32 %v4498, 7
    %v4500 = vsub.s32 5, %v4499
    %v4501 = vrot.slane %v4476, %v4500
    %v4502 = vlaneseq
    %v4503 = vshrl.u32 %v4502, 7
    %v4504 = vsub.s32 6, %v4503
    %v4505 = vrot.slane %v4476, %v4504
    %v4506 = vlaneseq
    %v4507 = vshrl.u32 %v4506, 7
    %v4508 = vsub.s32 7, %v4507
    %v4509 = vrot.slane %v4476, %v4508
    %v5030 = vunpack.c.l.b16 %v3964
    %v5031 = vunpack.c.h.b16 %v3964
    %v5032 = vunpack.c.l.b16 %v3965
    %v5033 = vunpack.c.h.b16 %v3965
    %v5034 = vunpack.c.l.b16 %v3966
    %v5035 = vunpack.c.h.b16 %v3966
    %v5036 = vunpack.c.l.b16 %v3967
    %v5037 = vunpack.c.h.b16 %v3967
    %v5038 = vunpack.c.l.b16 %v3968
    %v5039 = vunpack.c.h.b16 %v3968
    %v5040 = vunpack.c.l.b16 %v3969
    %v5041 = vunpack.c.h.b16 %v3969
    %v5042 = vunpack.c.l.b16 %v3970
    %v5043 = vunpack.c.h.b16 %v3970
    %v5044 = vunpack.c.l.b16 %v3971
    %v5045 = vunpack.c.h.b16 %v3971
    %v5046 = vunpack.c.l.b16 %v3972
    %v5047 = vunpack.c.h.b16 %v3972
    %v5048 = vunpack.c.l.b16 %v3973
    %v5049 = vunpack.c.h.b16 %v3973
    %v5050 = vunpack.c.l.b16 %v3974
    %v5051 = vunpack.c.h.b16 %v3974
    %v5052 = vunpack.c.l.b16 %v3975
    %v5053 = vunpack.c.h.b16 %v3975
    %v5054 = vunpack.c.l.b16 %v3976
    %v5055 = vunpack.c.h.b16 %v3976
    %v5056 = vunpack.c.l.b16 %v3977
    %v5057 = vunpack.c.h.b16 %v3977
    %v5058 = vunpack.c.l.b16 %v3978
    %v5059 = vunpack.c.h.b16 %v3978
    %v5060 = vunpack.c.l.b16 %v3979
    %v5061 = vunpack.c.h.b16 %v3979
    %v5062 = vunpack.c.l.b16 %v3980
    %v5063 = vunpack.c.h.b16 %v3980
    %v5064 = vunpack.c.l.b16 %v3981
    %v5065 = vunpack.c.h.b16 %v3981
    %v5066 = vunpack.c.l.b16 %v3982
    %v5067 = vunpack.c.h.b16 %v3982
    %v5068 = vunpack.c.l.b16 %v3983
    %v5069 = vunpack.c.h.b16 %v3983
    %v5070 = vunpack.c.l.b16 %v3984
    %v5071 = vunpack.c.h.b16 %v3984
    %v5072 = vunpack.c.l.b16 %v3985
    %v5073 = vunpack.c.h.b16 %v3985
    %v5074 = vunpack.c.l.b16 %v3986
    %v5075 = vunpack.c.h.b16 %v3986
    %v5076 = vunpack.c.l.b16 %v3987
    %v5077 = vunpack.c.h.b16 %v3987
    %v5078 = vunpack.c.l.b16 %v3988
    %v5079 = vunpack.c.h.b16 %v3988
    %v5080 = vunpack.c.l.b16 %v3989
    %v5081 = vunpack.c.h.b16 %v3989
    %v5082 = vunpack.c.l.b16 %v3990
    %v5083 = vunpack.c.h.b16 %v3990
    %v5084 = vunpack.c.l.b16 %v3991
    %v5085 = vunpack.c.h.b16 %v3991
    %v5086 = vunpack.c.l.b16 %v3992
    %v5087 = vunpack.c.h.b16 %v3992
    %v5088 = vunpack.c.l.b16 %v3993
    %v5089 = vunpack.c.h.b16 %v3993
    %v5090 = vunpack.c.l.b16 %v3994
    %v5091 = vunpack.c.h.b16 %v3994
    %v5092 = vunpack.c.l.b16 %v3995
    %v5093 = vunpack.c.h.b16 %v3995
    %v5094 = vunpack.c.l.b16 %v3996
    %v5095 = vunpack.c.h.b16 %v3996
    %v5096 = vunpack.c.l.b16 %v3997
    %v5097 = vunpack.c.h.b16 %v3997
    %v5098 = vunpack.c.l.b16 %v3998
    %v5099 = vunpack.c.h.b16 %v3998
    %v5100 = vunpack.c.l.b16 %v3999
    %v5101 = vunpack.c.h.b16 %v3999
    %v5102 = vunpack.c.l.b16 %v4000
    %v5103 = vunpack.c.h.b16 %v4000
    %v5104 = vunpack.c.l.b16 %v4001
    %v5105 = vunpack.c.h.b16 %v4001
    %v5106 = vunpack.c.l.b16 %v4002
    %v5107 = vunpack.c.h.b16 %v4002
    %v5108 = vunpack.c.l.b16 %v4003
    %v5109 = vunpack.c.h.b16 %v4003
    %v5110 = vunpack.c.l.b16 %v4004
    %v5111 = vunpack.c.h.b16 %v4004
    %v5112 = vunpack.c.l.b16 %v4005
    %v5113 = vunpack.c.h.b16 %v4005
    %v5114 = vunpack.c.l.b16 %v4006
    %v5115 = vunpack.c.h.b16 %v4006
    %v5116 = vunpack.c.l.b16 %v4007
    %v5117 = vunpack.c.h.b16 %v4007
    %v5118 = vunpack.c.l.b16 %v4008
    %v5119 = vunpack.c.h.b16 %v4008
    %v5120 = vunpack.c.l.b16 %v4009
    %v5121 = vunpack.c.h.b16 %v4009
    %v5122 = vunpack.c.l.b16 %v4010
    %v5123 = vunpack.c.h.b16 %v4010
    %v5124 = vunpack.c.l.b16 %v4011
    %v5125 = vunpack.c.h.b16 %v4011
    %v5126 = vunpack.c.l.b16 %v4012
    %v5127 = vunpack.c.h.b16 %v4012
    %v5128 = vunpack.c.l.b16 %v4013
    %v5129 = vunpack.c.h.b16 %v4013
    %v5130 = vunpack.c.l.b16 %v4014
    %v5131 = vunpack.c.h.b16 %v4014
    %v5132 = vunpack.c.l.b16 %v4015
    %v5133 = vunpack.c.h.b16 %v4015
    %v5134 = vunpack.c.l.b16 %v4016
    %v5135 = vunpack.c.h.b16 %v4016
    %v5136 = vunpack.c.l.b16 %v4017
    %v5137 = vunpack.c.h.b16 %v4017
    %v5138 = vunpack.c.l.b16 %v4018
    %v5139 = vunpack.c.h.b16 %v4018
    %v5140 = vunpack.c.l.b16 %v4019
    %v5141 = vunpack.c.h.b16 %v4019
    %v5142 = vunpack.c.l.b16 %v4020
    %v5143 = vunpack.c.h.b16 %v4020
    %v5144 = vunpack.c.l.b16 %v4021
    %v5145 = vunpack.c.h.b16 %v4021
    %v5146 = vunpack.c.l.b16 %v4022
    %v5147 = vunpack.c.h.b16 %v4022
    %v5148 = vunpack.c.l.b16 %v4023
    %v5149 = vunpack.c.h.b16 %v4023
    %v5150 = vunpack.c.l.b16 %v4024
    %v5151 = vunpack.c.h.b16 %v4024
    %v5152 = vunpack.c.l.b16 %v4025
    %v5153 = vunpack.c.h.b16 %v4025
    %v5154 = vunpack.c.l.b16 %v4026
    %v5155 = vunpack.c.h.b16 %v4026
    %v5156 = vunpack.c.l.b16 %v4027
    %v5157 = vunpack.c.h.b16 %v4027
    %v5158 = vunpack.c.l.b16 %v4028
    %v5159 = vunpack.c.h.b16 %v4028
    %v5160 = vunpack.c.l.b16 %v4029
    %v5161 = vunpack.c.h.b16 %v4029
    %v5162 = vunpack.c.l.b16 %v4030
    %v5163 = vunpack.c.h.b16 %v4030
    %v5164 = vunpack.c.l.b16 %v4031
    %v5165 = vunpack.c.h.b16 %v4031
    %v5166 = vunpack.c.l.b16 %v4032
    %v5167 = vunpack.c.h.b16 %v4032
    %v5168 = vunpack.c.l.b16 %v4033
    %v5169 = vunpack.c.h.b16 %v4033
    %v5170 = vunpack.c.l.b16 %v4034
    %v5171 = vunpack.c.h.b16 %v4034
    %v5172 = vunpack.c.l.b16 %v4035
    %v5173 = vunpack.c.h.b16 %v4035
    %v5174 = vunpack.c.l.b16 %v4036
    %v5175 = vunpack.c.h.b16 %v4036
    %v5176 = vunpack.c.l.b16 %v4037
    %v5177 = vunpack.c.h.b16 %v4037
    %v5178 = vunpack.c.l.b16 %v4038
    %v5179 = vunpack.c.h.b16 %v4038
    %v5180 = vunpack.c.l.b16 %v4039
    %v5181 = vunpack.c.h.b16 %v4039
    %v5182 = vunpack.c.l.b16 %v4040
    %v5183 = vunpack.c.h.b16 %v4040
    %v5184 = vunpack.c.l.b16 %v4041
    %v5185 = vunpack.c.h.b16 %v4041
    %v5186 = vunpack.c.l.b16 %v4042
    %v5187 = vunpack.c.h.b16 %v4042
    %v5188 = vunpack.c.l.b16 %v4043
    %v5189 = vunpack.c.h.b16 %v4043
    %v5190 = vunpack.c.l.b16 %v4044
    %v5191 = vunpack.c.h.b16 %v4044
    %v5192 = vunpack.c.l.b16 %v4045
    %v5193 = vunpack.c.h.b16 %v4045
    %v5194 = vunpack.c.l.b16 %v4046
    %v5195 = vunpack.c.h.b16 %v4046
    %v5196 = vunpack.c.l.b16 %v4047
    %v5197 = vunpack.c.h.b16 %v4047
    %v5198 = vunpack.c.l.b16 %v4048
    %v5199 = vunpack.c.h.b16 %v4048
    %v5200 = vunpack.c.l.b16 %v4049
    %v5201 = vunpack.c.h.b16 %v4049
    %v5202 = vunpack.c.l.b16 %v4050
    %v5203 = vunpack.c.h.b16 %v4050
    %v5204 = vunpack.c.l.b16 %v4051
    %v5205 = vunpack.c.h.b16 %v4051
    %v5206 = vunpack.c.l.b16 %v4052
    %v5207 = vunpack.c.h.b16 %v4052
    %v5208 = vunpack.c.l.b16 %v4053
    %v5209 = vunpack.c.h.b16 %v4053
    %v5210 = vunpack.c.l.b16 %v4054
    %v5211 = vunpack.c.h.b16 %v4054
    %v5212 = vunpack.c.l.b16 %v4055
    %v5213 = vunpack.c.h.b16 %v4055
    %v5214 = vunpack.c.l.b16 %v4056
    %v5215 = vunpack.c.h.b16 %v4056
    %v5216 = vunpack.c.l.b16 %v4057
    %v5217 = vunpack.c.h.b16 %v4057
    %v5218 = vunpack.c.l.b16 %v4058
    %v5219 = vunpack.c.h.b16 %v4058
    %v5220 = vunpack.c.l.b16 %v4059
    %v5221 = vunpack.c.h.b16 %v4059
    %v5222 = vunpack.c.l.b16 %v4060
    %v5223 = vunpack.c.h.b16 %v4060
    %v5224 = vunpack.c.l.b16 %v4061
    %v5225 = vunpack.c.h.b16 %v4061
    %v5226 = vunpack.c.l.b16 %v4062
    %v5227 = vunpack.c.h.b16 %v4062
    %v5228 = vunpack.c.l.b16 %v4063
    %v5229 = vunpack.c.h.b16 %v4063
    %v5230 = vunpack.c.l.b16 %v4064
    %v5231 = vunpack.c.h.b16 %v4064
    %v5232 = vunpack.c.l.b16 %v4065
    %v5233 = vunpack.c.h.b16 %v4065
    %v5234 = vunpack.c.l.b16 %v4066
    %v5235 = vunpack.c.h.b16 %v4066
    %v5236 = vunpack.c.l.b16 %v4067
    %v5237 = vunpack.c.h.b16 %v4067
    %v5238 = vunpack.c.l.b16 %v4068
    %v5239 = vunpack.c.h.b16 %v4068
    %v5240 = vunpack.c.l.b16 %v4069
    %v5241 = vunpack.c.h.b16 %v4069
    %v5242 = vunpack.c.l.b16 %v4070
    %v5243 = vunpack.c.h.b16 %v4070
    %v5244 = vunpack.c.l.b16 %v4071
    %v5245 = vunpack.c.h.b16 %v4071
    %v5246 = vunpack.c.l.b16 %v4072
    %v5247 = vunpack.c.h.b16 %v4072
    %v5248 = vunpack.c.l.b16 %v4073
    %v5249 = vunpack.c.h.b16 %v4073
    %v5250 = vunpack.c.l.b16 %v4074
    %v5251 = vunpack.c.h.b16 %v4074
    %v5252 = vunpack.c.l.b16 %v4075
    %v5253 = vunpack.c.h.b16 %v4075
    %v5254 = vunpack.c.l.b16 %v4076
    %v5255 = vunpack.c.h.b16 %v4076
    %v5256 = vunpack.c.l.b16 %v4077
    %v5257 = vunpack.c.h.b16 %v4077
    %v5258 = vunpack.c.l.b16 %v4078
    %v5259 = vunpack.c.h.b16 %v4078
    %v5260 = vunpack.c.l.b16 %v4079
    %v5261 = vunpack.c.h.b16 %v4079
    %v5262 = vunpack.c.l.b16 %v4080
    %v5263 = vunpack.c.h.b16 %v4080
    %v5264 = vunpack.c.l.b16 %v4081
    %v5265 = vunpack.c.h.b16 %v4081
    %v5266 = vunpack.c.l.b16 %v4082
    %v5267 = vunpack.c.h.b16 %v4082
    %v5268 = vunpack.c.l.b16 %v4083
    %v5269 = vunpack.c.h.b16 %v4083
    %v5270 = vunpack.c.l.b16 %v4084
    %v5271 = vunpack.c.h.b16 %v4084
    %v5272 = vunpack.c.l.b16 %v4085
    %v5273 = vunpack.c.h.b16 %v4085
    %v5274 = vunpack.c.l.b16 %v4086
    %v5275 = vunpack.c.h.b16 %v4086
    %v5276 = vunpack.c.l.b16 %v4087
    %v5277 = vunpack.c.h.b16 %v4087
    %v5278 = vunpack.c.l.b16 %v4088
    %v5279 = vunpack.c.h.b16 %v4088
    %v5280 = vunpack.c.l.b16 %v4089
    %v5281 = vunpack.c.h.b16 %v4089
    %v5282 = vunpack.c.l.b16 %v4090
    %v5283 = vunpack.c.h.b16 %v4090
    %v5284 = vunpack.c.l.b16 %v4091
    %v5285 = vunpack.c.h.b16 %v4091
    %v5286 = vunpack.c.l.b16 %v4092
    %v5287 = vunpack.c.h.b16 %v4092
    %v5288 = vunpack.c.l.b16 %v4093
    %v5289 = vunpack.c.h.b16 %v4093
    %v5290 = vunpack.c.l.b16 %v4094
    %v5291 = vunpack.c.h.b16 %v4094
    %v5292 = vunpack.c.l.b16 %v4095
    %v5293 = vunpack.c.h.b16 %v4095
    %v5294 = vunpack.c.l.b16 %v4096
    %v5295 = vunpack.c.h.b16 %v4096
    %v5296 = vunpack.c.l.b16 %v4097
    %v5297 = vunpack.c.h.b16 %v4097
    %v5298 = vunpack.c.l.b16 %v4098
    %v5299 = vunpack.c.h.b16 %v4098
    %v5300 = vunpack.c.l.b16 %v4099
    %v5301 = vunpack.c.h.b16 %v4099
    %v5302 = vunpack.c.l.b16 %v4100
    %v5303 = vunpack.c.h.b16 %v4100
    %v5304 = vunpack.c.l.b16 %v4101
    %v5305 = vunpack.c.h.b16 %v4101
    %v5306 = vunpack.c.l.b16 %v4102
    %v5307 = vunpack.c.h.b16 %v4102
    %v5308 = vunpack.c.l.b16 %v4103
    %v5309 = vunpack.c.h.b16 %v4103
    %v5310 = vunpack.c.l.b16 %v4104
    %v5311 = vunpack.c.h.b16 %v4104
    %v5312 = vunpack.c.l.b16 %v4105
    %v5313 = vunpack.c.h.b16 %v4105
    %v5314 = vunpack.c.l.b16 %v4106
    %v5315 = vunpack.c.h.b16 %v4106
    %v5316 = vunpack.c.l.b16 %v4107
    %v5317 = vunpack.c.h.b16 %v4107
    %v5318 = vunpack.c.l.b16 %v4108
    %v5319 = vunpack.c.h.b16 %v4108
    %v5320 = vunpack.c.l.b16 %v4109
    %v5321 = vunpack.c.h.b16 %v4109
    %v5322 = vunpack.c.l.b16 %v4110
    %v5323 = vunpack.c.h.b16 %v4110
    %v5324 = vunpack.c.l.b16 %v4111
    %v5325 = vunpack.c.h.b16 %v4111
    %v5326 = vunpack.c.l.b16 %v4112
    %v5327 = vunpack.c.h.b16 %v4112
    %v5328 = vunpack.c.l.b16 %v4113
    %v5329 = vunpack.c.h.b16 %v4113
    %v5330 = vunpack.c.l.b16 %v4114
    %v5331 = vunpack.c.h.b16 %v4114
    %v5332 = vunpack.c.l.b16 %v4115
    %v5333 = vunpack.c.h.b16 %v4115
    %v5334 = vunpack.c.l.b16 %v4116
    %v5335 = vunpack.c.h.b16 %v4116
    %v5336 = vunpack.c.l.b16 %v4117
    %v5337 = vunpack.c.h.b16 %v4117
    %v5338 = vunpack.c.l.b16 %v4118
    %v5339 = vunpack.c.h.b16 %v4118
    %v5340 = vunpack.c.l.b16 %v4119
    %v5341 = vunpack.c.h.b16 %v4119
    %v5342 = vunpack.c.l.b16 %v4120
    %v5343 = vunpack.c.h.b16 %v4120
    %v5344 = vunpack.c.l.b16 %v4121
    %v5345 = vunpack.c.h.b16 %v4121
    %v5346 = vunpack.c.l.b16 %v4122
    %v5347 = vunpack.c.h.b16 %v4122
    %v5348 = vunpack.c.l.b16 %v4123
    %v5349 = vunpack.c.h.b16 %v4123
    %v5350 = vunpack.c.l.b16 %v4124
    %v5351 = vunpack.c.h.b16 %v4124
    %v5352 = vunpack.c.l.b16 %v4125
    %v5353 = vunpack.c.h.b16 %v4125
    %v5354 = vunpack.c.l.b16 %v4126
    %v5355 = vunpack.c.h.b16 %v4126
    %v5356 = vunpack.c.l.b16 %v4127
    %v5357 = vunpack.c.h.b16 %v4127
    %v5358 = vunpack.c.l.b16 %v4128
    %v5359 = vunpack.c.h.b16 %v4128
    %v5360 = vunpack.c.l.b16 %v4129
    %v5361 = vunpack.c.h.b16 %v4129
    %v5362 = vunpack.c.l.b16 %v4130
    %v5363 = vunpack.c.h.b16 %v4130
    %v5364 = vunpack.c.l.b16 %v4131
    %v5365 = vunpack.c.h.b16 %v4131
    %v5366 = vunpack.c.l.b16 %v4132
    %v5367 = vunpack.c.h.b16 %v4132
    %v5368 = vunpack.c.l.b16 %v4133
    %v5369 = vunpack.c.h.b16 %v4133
    %v5370 = vunpack.c.l.b16 %v4134
    %v5371 = vunpack.c.h.b16 %v4134
    %v5372 = vunpack.c.l.b16 %v4135
    %v5373 = vunpack.c.h.b16 %v4135
    %v5374 = vunpack.c.l.b16 %v4136
    %v5375 = vunpack.c.h.b16 %v4136
    %v5376 = vunpack.c.l.b16 %v4137
    %v5377 = vunpack.c.h.b16 %v4137
    %v5378 = vunpack.c.l.b16 %v4138
    %v5379 = vunpack.c.h.b16 %v4138
    %v5380 = vunpack.c.l.b16 %v4139
    %v5381 = vunpack.c.h.b16 %v4139
    %v5382 = vunpack.c.l.b16 %v4140
    %v5383 = vunpack.c.h.b16 %v4140
    %v5384 = vunpack.c.l.b16 %v4141
    %v5385 = vunpack.c.h.b16 %v4141
    %v5386 = vunpack.c.l.b16 %v4142
    %v5387 = vunpack.c.h.b16 %v4142
    %v5388 = vunpack.c.l.b16 %v4143
    %v5389 = vunpack.c.h.b16 %v4143
    %v5390 = vunpack.c.l.b16 %v4144
    %v5391 = vunpack.c.h.b16 %v4144
    %v5392 = vunpack.c.l.b16 %v4145
    %v5393 = vunpack.c.h.b16 %v4145
    %v5394 = vunpack.c.l.b16 %v4146
    %v5395 = vunpack.c.h.b16 %v4146
    %v5396 = vunpack.c.l.b16 %v4147
    %v5397 = vunpack.c.h.b16 %v4147
    %v5398 = vunpack.c.l.b16 %v4148
    %v5399 = vunpack.c.h.b16 %v4148
    %v5400 = vunpack.c.l.b16 %v4149
    %v5401 = vunpack.c.h.b16 %v4149
    %v5402 = vunpack.c.l.b16 %v4150
    %v5403 = vunpack.c.h.b16 %v4150
    %v5404 = vunpack.c.l.b16 %v4151
    %v5405 = vunpack.c.h.b16 %v4151
    %v5406 = vunpack.c.l.b16 %v4152
    %v5407 = vunpack.c.h.b16 %v4152
    %v5408 = vunpack.c.l.b16 %v4153
    %v5409 = vunpack.c.h.b16 %v4153
    %v5410 = vunpack.c.l.b16 %v4154
    %v5411 = vunpack.c.h.b16 %v4154
    %v5412 = vunpack.c.l.b16 %v4155
    %v5413 = vunpack.c.h.b16 %v4155
    %v5414 = vunpack.c.l.b16 %v4156
    %v5415 = vunpack.c.h.b16 %v4156
    %v5416 = vunpack.c.l.b16 %v4157
    %v5417 = vunpack.c.h.b16 %v4157
    %v5418 = vunpack.c.l.b16 %v4158
    %v5419 = vunpack.c.h.b16 %v4158
    %v5420 = vunpack.c.l.b16 %v4159
    %v5421 = vunpack.c.h.b16 %v4159
    %v5422 = vunpack.c.l.b16 %v4160
    %v5423 = vunpack.c.h.b16 %v4160
    %v5424 = vunpack.c.l.b16 %v4161
    %v5425 = vunpack.c.h.b16 %v4161
    %v5426 = vunpack.c.l.b16 %v4162
    %v5427 = vunpack.c.h.b16 %v4162
    %v5428 = vunpack.c.l.b16 %v4163
    %v5429 = vunpack.c.h.b16 %v4163
    %v5430 = vunpack.c.l.b16 %v4164
    %v5431 = vunpack.c.h.b16 %v4164
    %v5432 = vunpack.c.l.b16 %v4165
    %v5433 = vunpack.c.h.b16 %v4165
    %v5434 = vunpack.c.l.b16 %v4166
    %v5435 = vunpack.c.h.b16 %v4166
    %v5436 = vunpack.c.l.b16 %v4167
    %v5437 = vunpack.c.h.b16 %v4167
    %v5438 = vunpack.c.l.b16 %v4168
    %v5439 = vunpack.c.h.b16 %v4168
    %v5440 = vunpack.c.l.b16 %v4169
    %v5441 = vunpack.c.h.b16 %v4169
    %v5442 = vunpack.c.l.b16 %v4170
    %v5443 = vunpack.c.h.b16 %v4170
    %v5444 = vunpack.c.l.b16 %v4171
    %v5445 = vunpack.c.h.b16 %v4171
    %v5446 = vunpack.c.l.b16 %v4172
    %v5447 = vunpack.c.h.b16 %v4172
    %v5448 = vunpack.c.l.b16 %v4173
    %v5449 = vunpack.c.h.b16 %v4173
    %v5450 = vunpack.c.l.b16 %v4174
    %v5451 = vunpack.c.h.b16 %v4174
    %v5452 = vunpack.c.l.b16 %v4175
    %v5453 = vunpack.c.h.b16 %v4175
    %v5454 = vunpack.c.l.b16 %v4176
    %v5455 = vunpack.c.h.b16 %v4176
    %v5456 = vunpack.c.l.b16 %v4177
    %v5457 = vunpack.c.h.b16 %v4177
    %v5458 = vunpack.c.l.b16 %v4178
    %v5459 = vunpack.c.h.b16 %v4178
    %v5460 = vunpack.c.l.b16 %v4179
    %v5461 = vunpack.c.h.b16 %v4179
    %v5462 = vunpack.c.l.b16 %v4180
    %v5463 = vunpack.c.h.b16 %v4180
    %v5464 = vunpack.c.l.b16 %v4181
    %v5465 = vunpack.c.h.b16 %v4181
    %v5466 = vunpack.c.l.b16 %v4182
    %v5467 = vunpack.c.h.b16 %v4182
    %v5468 = vunpack.c.l.b16 %v4183
    %v5469 = vunpack.c.h.b16 %v4183
    %v5470 = vunpack.c.l.b16 %v4184
    %v5471 = vunpack.c.h.b16 %v4184
    %v5472 = vunpack.c.l.b16 %v4185
    %v5473 = vunpack.c.h.b16 %v4185
    %v5474 = vunpack.c.l.b16 %v4186
    %v5475 = vunpack.c.h.b16 %v4186
    %v5476 = vunpack.c.l.b16 %v4187
    %v5477 = vunpack.c.h.b16 %v4187
    %v5478 = vunpack.c.l.b16 %v4188
    %v5479 = vunpack.c.h.b16 %v4188
    %v5480 = vunpack.c.l.b16 %v4189
    %v5481 = vunpack.c.h.b16 %v4189
    %v5482 = vunpack.c.l.b16 %v4190
    %v5483 = vunpack.c.h.b16 %v4190
    %v5484 = vunpack.c.l.b16 %v4191
    %v5485 = vunpack.c.h.b16 %v4191
    %v5486 = vunpack.c.l.b16 %v4192
    %v5487 = vunpack.c.h.b16 %v4192
    %v5488 = vunpack.c.l.b16 %v4193
    %v5489 = vunpack.c.h.b16 %v4193
    %v5490 = vunpack.c.l.b16 %v4194
    %v5491 = vunpack.c.h.b16 %v4194
    %v5492 = vunpack.c.l.b16 %v4195
    %v5493 = vunpack.c.h.b16 %v4195
    %v5494 = vunpack.c.l.b16 %v4196
    %v5495 = vunpack.c.h.b16 %v4196
    %v5496 = vunpack.c.l.b16 %v4197
    %v5497 = vunpack.c.h.b16 %v4197
    %v5498 = vunpack.c.l.b16 %v4198
    %v5499 = vunpack.c.h.b16 %v4198
    %v5500 = vunpack.c.l.b16 %v4199
    %v5501 = vunpack.c.h.b16 %v4199
    %v5502 = vunpack.c.l.b16 %v4200
    %v5503 = vunpack.c.h.b16 %v4200
    %v5504 = vunpack.c.l.b16 %v4201
    %v5505 = vunpack.c.h.b16 %v4201
    %v5506 = vunpack.c.l.b16 %v4202
    %v5507 = vunpack.c.h.b16 %v4202
    %v5508 = vunpack.c.l.b16 %v4203
    %v5509 = vunpack.c.h.b16 %v4203
    %v5510 = vunpack.c.l.b16 %v4204
    %v5511 = vunpack.c.h.b16 %v4204
    %v5512 = vunpack.c.l.b16 %v4205
    %v5513 = vunpack.c.h.b16 %v4205
    %v5514 = vunpack.c.l.b16 %v4206
    %v5515 = vunpack.c.h.b16 %v4206
    %v5516 = vunpack.c.l.b16 %v4207
    %v5517 = vunpack.c.h.b16 %v4207
    %v5518 = vunpack.c.l.b16 %v4208
    %v5519 = vunpack.c.h.b16 %v4208
    %v5520 = vunpack.c.l.b16 %v4209
    %v5521 = vunpack.c.h.b16 %v4209
    %v5522 = vunpack.c.l.b16 %v4210
    %v5523 = vunpack.c.h.b16 %v4210
    %v5524 = vunpack.c.l.b16 %v4211
    %v5525 = vunpack.c.h.b16 %v4211
    %v5526 = vunpack.c.l.b16 %v4212
    %v5527 = vunpack.c.h.b16 %v4212
    %v5528 = vunpack.c.l.b16 %v4213
    %v5529 = vunpack.c.h.b16 %v4213
    %v5530 = vunpack.c.l.b16 %v4214
    %v5531 = vunpack.c.h.b16 %v4214
    %v5532 = vunpack.c.l.b16 %v4215
    %v5533 = vunpack.c.h.b16 %v4215
    %v5534 = vunpack.c.l.b16 %v4216
    %v5535 = vunpack.c.h.b16 %v4216
    %v5536 = vunpack.c.l.b16 %v4217
    %v5537 = vunpack.c.h.b16 %v4217
    %v5538 = vunpack.c.l.b16 %v4218
    %v5539 = vunpack.c.h.b16 %v4218
    %v5540 = vunpack.c.l.b16 %v4219
    %v5541 = vunpack.c.h.b16 %v4219
    %v5542 = vunpack.c.l.b16 %v4220
    %v5543 = vunpack.c.h.b16 %v4220
    %v5544 = vunpack.c.l.b16 %v4221
    %v5545 = vunpack.c.h.b16 %v4221
    %v5546 = vunpack.c.l.b16 %v4222
    %v5547 = vunpack.c.h.b16 %v4222
    %v5548 = vunpack.c.l.b16 %v4223
    %v5549 = vunpack.c.h.b16 %v4223
    %v5550 = vunpack.c.l.b16 %v4224
    %v5551 = vunpack.c.h.b16 %v4224
    %v5552 = vunpack.c.l.b16 %v4225
    %v5553 = vunpack.c.h.b16 %v4225
    %v5554 = vunpack.c.l.b16 %v4226
    %v5555 = vunpack.c.h.b16 %v4226
    %v5556 = vunpack.c.l.b16 %v4227
    %v5557 = vunpack.c.h.b16 %v4227
    %v5558 = vunpack.c.l.b16 %v4228
    %v5559 = vunpack.c.h.b16 %v4228
    %v5560 = vunpack.c.l.b16 %v4229
    %v5561 = vunpack.c.h.b16 %v4229
    %v5562 = vunpack.c.l.b16 %v4230
    %v5563 = vunpack.c.h.b16 %v4230
    %v5564 = vunpack.c.l.b16 %v4231
    %v5565 = vunpack.c.h.b16 %v4231
    %v5566 = vunpack.c.l.b16 %v4232
    %v5567 = vunpack.c.h.b16 %v4232
    %v5568 = vunpack.c.l.b16 %v4233
    %v5569 = vunpack.c.h.b16 %v4233
    %v5570 = vunpack.c.l.b16 %v4234
    %v5571 = vunpack.c.h.b16 %v4234
    %v5572 = vunpack.c.l.b16 %v4235
    %v5573 = vunpack.c.h.b16 %v4235
    %v5574 = vunpack.c.l.b16 %v4236
    %v5575 = vunpack.c.h.b16 %v4236
    %v5576 = vunpack.c.l.b16 %v4237
    %v5577 = vunpack.c.h.b16 %v4237
    %v5578 = vunpack.c.l.b16 %v4238
    %v5579 = vunpack.c.h.b16 %v4238
    %v5580 = vunpack.c.l.b16 %v4239
    %v5581 = vunpack.c.h.b16 %v4239
    %v5582 = vunpack.c.l.b16 %v4240
    %v5583 = vunpack.c.h.b16 %v4240
    %v5584 = vunpack.c.l.b16 %v4241
    %v5585 = vunpack.c.h.b16 %v4241
    %v5586 = vunpack.c.l.b16 %v4242
    %v5587 = vunpack.c.h.b16 %v4242
    %v5588 = vunpack.c.l.b16 %v4243
    %v5589 = vunpack.c.h.b16 %v4243
    %v5590 = vunpack.c.l.b16 %v4244
    %v5591 = vunpack.c.h.b16 %v4244
    %v5592 = vunpack.c.l.b16 %v4245
    %v5593 = vunpack.c.h.b16 %v4245
    %v5594 = vunpack.c.l.b16 %v4246
    %v5595 = vunpack.c.h.b16 %v4246
    %v5596 = vunpack.c.l.b16 %v4247
    %v5597 = vunpack.c.h.b16 %v4247
    %v5598 = vunpack.c.l.b16 %v4248
    %v5599 = vunpack.c.h.b16 %v4248
    %v5600 = vunpack.c.l.b16 %v4249
    %v5601 = vunpack.c.h.b16 %v4249
    %v5602 = vunpack.c.l.b16 %v4250
    %v5603 = vunpack.c.h.b16 %v4250
    %v5604 = vunpack.c.l.b16 %v4251
    %v5605 = vunpack.c.h.b16 %v4251
    %v5606 = vunpack.c.l.b16 %v4252
    %v5607 = vunpack.c.h.b16 %v4252
    %v5608 = vunpack.c.l.b16 %v4253
    %v5609 = vunpack.c.h.b16 %v4253
    %v5610 = vunpack.c.l.b16 %v4254
    %v5611 = vunpack.c.h.b16 %v4254
    %v5612 = vunpack.c.l.b16 %v4255
    %v5613 = vunpack.c.h.b16 %v4255
    %v5614 = vunpack.c.l.b16 %v4256
    %v5615 = vunpack.c.h.b16 %v4256
    %v5616 = vunpack.c.l.b16 %v4257
    %v5617 = vunpack.c.h.b16 %v4257
    %v5618 = vunpack.c.l.b16 %v4258
    %v5619 = vunpack.c.h.b16 %v4258
    %v5620 = vunpack.c.l.b16 %v4259
    %v5621 = vunpack.c.h.b16 %v4259
    %v5622 = vunpack.c.l.b16 %v4260
    %v5623 = vunpack.c.h.b16 %v4260
    %v5624 = vunpack.c.l.b16 %v4261
    %v5625 = vunpack.c.h.b16 %v4261
    %v5626 = vunpack.c.l.b16 %v4262
    %v5627 = vunpack.c.h.b16 %v4262
    %v5628 = vunpack.c.l.b16 %v4263
    %v5629 = vunpack.c.h.b16 %v4263
    %v5630 = vunpack.c.l.b16 %v4264
    %v5631 = vunpack.c.h.b16 %v4264
    %v5632 = vunpack.c.l.b16 %v4265
    %v5633 = vunpack.c.h.b16 %v4265
    %v5634 = vunpack.c.l.b16 %v4266
    %v5635 = vunpack.c.h.b16 %v4266
    %v5636 = vunpack.c.l.b16 %v4267
    %v5637 = vunpack.c.h.b16 %v4267
    %v5638 = vunpack.c.l.b16 %v4268
    %v5639 = vunpack.c.h.b16 %v4268
    %v5640 = vunpack.c.l.b16 %v4269
    %v5641 = vunpack.c.h.b16 %v4269
    %v5642 = vunpack.c.l.b16 %v4270
    %v5643 = vunpack.c.h.b16 %v4270
    %v5644 = vunpack.c.l.b16 %v4271
    %v5645 = vunpack.c.h.b16 %v4271
    %v5646 = vunpack.c.l.b16 %v4272
    %v5647 = vunpack.c.h.b16 %v4272
    %v5648 = vunpack.c.l.b16 %v4273
    %v5649 = vunpack.c.h.b16 %v4273
    %v5650 = vunpack.c.l.b16 %v4274
    %v5651 = vunpack.c.h.b16 %v4274
    %v5652 = vunpack.c.l.b16 %v4275
    %v5653 = vunpack.c.h.b16 %v4275
    %v5654 = vunpack.c.l.b16 %v4276
    %v5655 = vunpack.c.h.b16 %v4276
    %v5656 = vunpack.c.l.b16 %v4277
    %v5657 = vunpack.c.h.b16 %v4277
    %v5658 = vunpack.c.l.b16 %v4278
    %v5659 = vunpack.c.h.b16 %v4278
    %v5660 = vunpack.c.l.b16 %v4279
    %v5661 = vunpack.c.h.b16 %v4279
    %v5662 = vunpack.c.l.b16 %v4280
    %v5663 = vunpack.c.h.b16 %v4280
    %v5664 = vunpack.c.l.b16 %v4281
    %v5665 = vunpack.c.h.b16 %v4281
    %v5666 = vunpack.c.l.b16 %v4282
    %v5667 = vunpack.c.h.b16 %v4282
    %v5668 = vunpack.c.l.b16 %v4283
    %v5669 = vunpack.c.h.b16 %v4283
    %v5670 = vunpack.c.l.b16 %v4284
    %v5671 = vunpack.c.h.b16 %v4284
    %v5672 = vunpack.c.l.b16 %v4285
    %v5673 = vunpack.c.h.b16 %v4285
    %v5674 = vunpack.c.l.b16 %v4286
    %v5675 = vunpack.c.h.b16 %v4286
    %v5676 = vunpack.c.l.b16 %v4287
    %v5677 = vunpack.c.h.b16 %v4287
    %v5678 = vunpack.c.l.b16 %v4288
    %v5679 = vunpack.c.h.b16 %v4288
    %v5680 = vunpack.c.l.b16 %v4289
    %v5681 = vunpack.c.h.b16 %v4289
    %v5682 = vunpack.c.l.b16 %v4290
    %v5683 = vunpack.c.h.b16 %v4290
    %v5684 = vunpack.c.l.b16 %v4291
    %v5685 = vunpack.c.h.b16 %v4291
    %v5686 = vunpack.c.l.b16 %v4292
    %v5687 = vunpack.c.h.b16 %v4292
    %v5688 = vunpack.c.l.b16 %v4293
    %v5689 = vunpack.c.h.b16 %v4293
    %v5690 = vunpack.c.l.b16 %v4294
    %v5691 = vunpack.c.h.b16 %v4294
    %v5692 = vunpack.c.l.b16 %v4295
    %v5693 = vunpack.c.h.b16 %v4295
    %v5694 = vunpack.c.l.b16 %v4296
    %v5695 = vunpack.c.h.b16 %v4296
    %v5696 = vunpack.c.l.b16 %v4297
    %v5697 = vunpack.c.h.b16 %v4297
    %v5698 = vunpack.c.l.b16 %v4298
    %v5699 = vunpack.c.h.b16 %v4298
    %v5700 = vunpack.c.l.b16 %v4299
    %v5701 = vunpack.c.h.b16 %v4299
    %v5702 = vunpack.c.l.b16 %v4300
    %v5703 = vunpack.c.h.b16 %v4300
    %v5704 = vunpack.c.l.b16 %v4301
    %v5705 = vunpack.c.h.b16 %v4301
    %v5706 = vunpack.c.l.b16 %v4302
    %v5707 = vunpack.c.h.b16 %v4302
    %v5708 = vunpack.c.l.b16 %v4303
    %v5709 = vunpack.c.h.b16 %v4303
    %v5710 = vunpack.c.l.b16 %v4304
    %v5711 = vunpack.c.h.b16 %v4304
    %v5712 = vunpack.c.l.b16 %v4305
    %v5713 = vunpack.c.h.b16 %v4305
    %v5714 = vunpack.c.l.b16 %v4306
    %v5715 = vunpack.c.h.b16 %v4306
    %v5716 = vunpack.c.l.b16 %v4307
    %v5717 = vunpack.c.h.b16 %v4307
    %v5718 = vunpack.c.l.b16 %v4308
    %v5719 = vunpack.c.h.b16 %v4308
    %v5720 = vunpack.c.l.b16 %v4309
    %v5721 = vunpack.c.h.b16 %v4309
    %v5722 = vunpack.c.l.b16 %v4310
    %v5723 = vunpack.c.h.b16 %v4310
    %v5724 = vunpack.c.l.b16 %v4311
    %v5725 = vunpack.c.h.b16 %v4311
    %v5726 = vunpack.c.l.b16 %v4312
    %v5727 = vunpack.c.h.b16 %v4312
    %v5728 = vunpack.c.l.b16 %v4313
    %v5729 = vunpack.c.h.b16 %v4313
    %v5730 = vunpack.c.l.b16 %v4314
    %v5731 = vunpack.c.h.b16 %v4314
    %v5732 = vunpack.c.l.b16 %v4315
    %v5733 = vunpack.c.h.b16 %v4315
    %v5734 = vunpack.c.l.b16 %v4316
    %v5735 = vunpack.c.h.b16 %v4316
    %v5736 = vunpack.c.l.b16 %v4317
    %v5737 = vunpack.c.h.b16 %v4317
    %v5738 = vunpack.c.l.b16 %v4318
    %v5739 = vunpack.c.h.b16 %v4318
    %v5740 = vunpack.c.l.b16 %v4319
    %v5741 = vunpack.c.h.b16 %v4319
    %v5742 = vunpack.c.l.b16 %v4320
    %v5743 = vunpack.c.h.b16 %v4320
    %v5744 = vunpack.c.l.b16 %v4321
    %v5745 = vunpack.c.h.b16 %v4321
    %v5746 = vunpack.c.l.b16 %v4322
    %v5747 = vunpack.c.h.b16 %v4322
    %v5748 = vunpack.c.l.b16 %v4323
    %v5749 = vunpack.c.h.b16 %v4323
    %v5750 = vunpack.c.l.b16 %v4324
    %v5751 = vunpack.c.h.b16 %v4324
    %v5752 = vunpack.c.l.b16 %v4325
    %v5753 = vunpack.c.h.b16 %v4325
    %v5754 = vunpack.c.l.b16 %v4326
    %v5755 = vunpack.c.h.b16 %v4326
    %v5756 = vunpack.c.l.b16 %v4327
    %v5757 = vunpack.c.h.b16 %v4327
    %v5758 = vunpack.c.l.b16 %v4328
    %v5759 = vunpack.c.h.b16 %v4328
    %v5760 = vunpack.c.l.b16 %v4329
    %v5761 = vunpack.c.h.b16 %v4329
    %v5762 = vunpack.c.l.b16 %v4330
    %v5763 = vunpack.c.h.b16 %v4330
    %v5764 = vunpack.c.l.b16 %v4331
    %v5765 = vunpack.c.h.b16 %v4331
    %v5766 = vunpack.c.l.b16 %v4332
    %v5767 = vunpack.c.h.b16 %v4332
    %v5768 = vunpack.c.l.b16 %v4333
    %v5769 = vunpack.c.h.b16 %v4333
    %v5770 = vunpack.c.l.b16 %v4334
    %v5771 = vunpack.c.h.b16 %v4334
    %v5772 = vunpack.c.l.b16 %v4335
    %v5773 = vunpack.c.h.b16 %v4335
    %v5774 = vunpack.c.l.b16 %v4336
    %v5775 = vunpack.c.h.b16 %v4336
    %v5776 = vunpack.c.l.b16 %v4337
    %v5777 = vunpack.c.h.b16 %v4337
    %v5778 = vunpack.c.l.b16 %v4338
    %v5779 = vunpack.c.h.b16 %v4338
    %v5780 = vunpack.c.l.b16 %v4339
    %v5781 = vunpack.c.h.b16 %v4339
    %v5782 = vunpack.c.l.b16 %v4340
    %v5783 = vunpack.c.h.b16 %v4340
    %v5784 = vunpack.c.l.b16 %v4341
    %v5785 = vunpack.c.h.b16 %v4341
    %v5786 = vunpack.c.l.b16 %v4342
    %v5787 = vunpack.c.h.b16 %v4342
    %v5788 = vunpack.c.l.b16 %v4343
    %v5789 = vunpack.c.h.b16 %v4343
    %v5790 = vunpack.c.l.b16 %v4344
    %v5791 = vunpack.c.h.b16 %v4344
    %v5792 = vunpack.c.l.b16 %v4345
    %v5793 = vunpack.c.h.b16 %v4345
    %v5794 = vunpack.c.l.b16 %v4346
    %v5795 = vunpack.c.h.b16 %v4346
    %v5796 = vunpack.c.l.b16 %v4347
    %v5797 = vunpack.c.h.b16 %v4347
    %v5798 = vunpack.c.l.b16 %v4348
    %v5799 = vunpack.c.h.b16 %v4348
    %v5800 = vunpack.c.l.b16 %v4349
    %v5801 = vunpack.c.h.b16 %v4349
    %v5802 = vunpack.c.l.b16 %v4350
    %v5803 = vunpack.c.h.b16 %v4350
    %v5804 = vunpack.c.l.b16 %v4351
    %v5805 = vunpack.c.h.b16 %v4351
    %v5806 = vunpack.c.l.b16 %v4352
    %v5807 = vunpack.c.h.b16 %v4352
    %v5808 = vunpack.c.l.b16 %v4353
    %v5809 = vunpack.c.h.b16 %v4353
    %v5810 = vunpack.c.l.b16 %v4354
    %v5811 = vunpack.c.h.b16 %v4354
    %v5812 = vunpack.c.l.b16 %v4355
    %v5813 = vunpack.c.h.b16 %v4355
    %v5814 = vunpack.c.l.b16 %v4356
    %v5815 = vunpack.c.h.b16 %v4356
    %v5816 = vunpack.c.l.b16 %v4357
    %v5817 = vunpack.c.h.b16 %v4357
    %v5818 = vunpack.c.l.b16 %v4358
    %v5819 = vunpack.c.h.b16 %v4358
    %v5820 = vunpack.c.l.b16 %v4359
    %v5821 = vunpack.c.h.b16 %v4359
    %v5822 = vunpack.c.l.b16 %v4360
    %v5823 = vunpack.c.h.b16 %v4360
    %v5824 = vunpack.c.l.b16 %v4361
    %v5825 = vunpack.c.h.b16 %v4361
    %v5826 = vunpack.c.l.b16 %v4362
    %v5827 = vunpack.c.h.b16 %v4362
    %v5828 = vunpack.c.l.b16 %v4363
    %v5829 = vunpack.c.h.b16 %v4363
    %v5830 = vunpack.c.l.b16 %v4364
    %v5831 = vunpack.c.h.b16 %v4364
    %v5832 = vunpack.c.l.b16 %v4365
    %v5833 = vunpack.c.h.b16 %v4365
    %v5834 = vunpack.c.l.b16 %v4366
    %v5835 = vunpack.c.h.b16 %v4366
    %v5836 = vunpack.c.l.b16 %v4367
    %v5837 = vunpack.c.h.b16 %v4367
    %v5838 = vunpack.c.l.b16 %v4368
    %v5839 = vunpack.c.h.b16 %v4368
    %v5840 = vunpack.c.l.b16 %v4369
    %v5841 = vunpack.c.h.b16 %v4369
    %v5842 = vunpack.c.l.b16 %v4370
    %v5843 = vunpack.c.h.b16 %v4370
    %v5844 = vunpack.c.l.b16 %v4371
    %v5845 = vunpack.c.h.b16 %v4371
    %v5846 = vunpack.c.l.b16 %v4372
    %v5847 = vunpack.c.h.b16 %v4372
    %v5848 = vunpack.c.l.b16 %v4373
    %v5849 = vunpack.c.h.b16 %v4373
    %v5850 = vunpack.c.l.b16 %v4374
    %v5851 = vunpack.c.h.b16 %v4374
    %v5852 = vunpack.c.l.b16 %v4375
    %v5853 = vunpack.c.h.b16 %v4375
    %v5854 = vunpack.c.l.b16 %v4376
    %v5855 = vunpack.c.h.b16 %v4376
    %v5856 = vunpack.c.l.b16 %v4377
    %v5857 = vunpack.c.h.b16 %v4377
    %v5858 = vunpack.c.l.b16 %v4378
    %v5859 = vunpack.c.h.b16 %v4378
    %v5860 = vunpack.c.l.b16 %v4379
    %v5861 = vunpack.c.h.b16 %v4379
    %v5862 = vunpack.c.l.b16 %v4380
    %v5863 = vunpack.c.h.b16 %v4380
    %v5864 = vunpack.c.l.b16 %v4381
    %v5865 = vunpack.c.h.b16 %v4381
    %v5866 = vunpack.c.l.b16 %v4382
    %v5867 = vunpack.c.h.b16 %v4382
    %v5868 = vunpack.c.l.b16 %v4383
    %v5869 = vunpack.c.h.b16 %v4383
    %v5870 = vunpack.c.l.b16 %v4384
    %v5871 = vunpack.c.h.b16 %v4384
    %v5872 = vunpack.c.l.b16 %v4385
    %v5873 = vunpack.c.h.b16 %v4385
    %v5874 = vunpack.c.l.b16 %v4386
    %v5875 = vunpack.c.h.b16 %v4386
    %v5876 = vunpack.c.l.b16 %v4387
    %v5877 = vunpack.c.h.b16 %v4387
    %v5878 = vunpack.c.l.b16 %v4388
    %v5879 = vunpack.c.h.b16 %v4388
    %v5880 = vunpack.c.l.b16 %v4389
    %v5881 = vunpack.c.h.b16 %v4389
    %v5882 = vunpack.c.l.b16 %v4390
    %v5883 = vunpack.c.h.b16 %v4390
    %v5884 = vunpack.c.l.b16 %v4391
    %v5885 = vunpack.c.h.b16 %v4391
    %v5886 = vunpack.c.l.b16 %v4392
    %v5887 = vunpack.c.h.b16 %v4392
    %v5888 = vunpack.c.l.b16 %v4393
    %v5889 = vunpack.c.h.b16 %v4393
    %v5890 = vunpack.c.l.b16 %v4394
    %v5891 = vunpack.c.h.b16 %v4394
    %v5892 = vunpack.c.l.b16 %v4395
    %v5893 = vunpack.c.h.b16 %v4395
    %v5894 = vunpack.c.l.b16 %v4396
    %v5895 = vunpack.c.h.b16 %v4396
    %v5896 = vunpack.c.l.b16 %v4397
    %v5897 = vunpack.c.h.b16 %v4397
    %v5898 = vunpack.c.l.b16 %v4398
    %v5899 = vunpack.c.h.b16 %v4398
    %v5900 = vunpack.c.l.b16 %v4399
    %v5901 = vunpack.c.h.b16 %v4399
    %v5902 = vunpack.c.l.b16 %v4400
    %v5903 = vunpack.c.h.b16 %v4400
    %v5904 = vunpack.c.l.b16 %v4401
    %v5905 = vunpack.c.h.b16 %v4401
    %v5906 = vunpack.c.l.b16 %v4402
    %v5907 = vunpack.c.h.b16 %v4402
    %v5908 = vunpack.c.l.b16 %v4403
    %v5909 = vunpack.c.h.b16 %v4403
    %v5910 = vunpack.c.l.b16 %v4404
    %v5911 = vunpack.c.h.b16 %v4404
    %v5912 = vunpack.c.l.b16 %v4405
    %v5913 = vunpack.c.h.b16 %v4405
    %v5914 = vunpack.c.l.b16 %v4406
    %v5915 = vunpack.c.h.b16 %v4406
    %v5916 = vunpack.c.l.b16 %v4407
    %v5917 = vunpack.c.h.b16 %v4407
    %v5918 = vunpack.c.l.b16 %v4408
    %v5919 = vunpack.c.h.b16 %v4408
    %v5920 = vunpack.c.l.b16 %v4409
    %v5921 = vunpack.c.h.b16 %v4409
    %v5922 = vunpack.c.l.b16 %v4410
    %v5923 = vunpack.c.h.b16 %v4410
    %v5924 = vunpack.c.l.b16 %v4411
    %v5925 = vunpack.c.h.b16 %v4411
    %v5926 = vunpack.c.l.b16 %v4412
    %v5927 = vunpack.c.h.b16 %v4412
    %v5928 = vunpack.c.l.b16 %v4413
    %v5929 = vunpack.c.h.b16 %v4413
    %v5930 = vunpack.c.l.b16 %v4414
    %v5931 = vunpack.c.h.b16 %v4414
    %v5932 = vunpack.c.l.b16 %v4415
    %v5933 = vunpack.c.h.b16 %v4415
    %v5934 = vunpack.c.l.b16 %v4416
    %v5935 = vunpack.c.h.b16 %v4416
    %v5936 = vunpack.c.l.b16 %v4417
    %v5937 = vunpack.c.h.b16 %v4417
    %v5938 = vunpack.c.l.b16 %v4418
    %v5939 = vunpack.c.h.b16 %v4418
    %v5940 = vunpack.c.l.b16 %v4419
    %v5941 = vunpack.c.h.b16 %v4419
    %v5942 = vunpack.c.l.b16 %v4420
    %v5943 = vunpack.c.h.b16 %v4420
    %v5944 = vunpack.c.l.b16 %v4421
    %v5945 = vunpack.c.h.b16 %v4421
    %v5946 = vunpack.c.l.b16 %v4422
    %v5947 = vunpack.c.h.b16 %v4422
    %v5948 = vunpack.c.l.b16 %v4423
    %v5949 = vunpack.c.h.b16 %v4423
    %v5950 = vunpack.c.l.b16 %v4424
    %v5951 = vunpack.c.h.b16 %v4424
    %v5952 = vunpack.c.l.b16 %v4425
    %v5953 = vunpack.c.h.b16 %v4425
    %v5954 = vunpack.c.l.b16 %v4426
    %v5955 = vunpack.c.h.b16 %v4426
    %v5956 = vunpack.c.l.b16 %v4427
    %v5957 = vunpack.c.h.b16 %v4427
    %v5958 = vunpack.c.l.b16 %v4428
    %v5959 = vunpack.c.h.b16 %v4428
    %v5960 = vunpack.c.l.b16 %v4429
    %v5961 = vunpack.c.h.b16 %v4429
    %v5962 = vunpack.c.l.b16 %v4430
    %v5963 = vunpack.c.h.b16 %v4430
    %v5964 = vunpack.c.l.b16 %v4431
    %v5965 = vunpack.c.h.b16 %v4431
    %v5966 = vunpack.c.l.b16 %v4432
    %v5967 = vunpack.c.h.b16 %v4432
    %v5968 = vunpack.c.l.b16 %v4433
    %v5969 = vunpack.c.h.b16 %v4433
    %v5970 = vunpack.c.l.b16 %v4434
    %v5971 = vunpack.c.h.b16 %v4434
    %v5972 = vunpack.c.l.b16 %v4435
    %v5973 = vunpack.c.h.b16 %v4435
    %v5974 = vunpack.c.l.b16 %v4436
    %v5975 = vunpack.c.h.b16 %v4436
    %v5976 = vunpack.c.l.b16 %v4437
    %v5977 = vunpack.c.h.b16 %v4437
    %v5978 = vunpack.c.l.b16 %v4438
    %v5979 = vunpack.c.h.b16 %v4438
    %v5980 = vunpack.c.l.b16 %v4439
    %v5981 = vunpack.c.h.b16 %v4439
    %v5982 = vunpack.c.l.b16 %v4440
    %v5983 = vunpack.c.h.b16 %v4440
    %v5984 = vunpack.c.l.b16 %v4441
    %v5985 = vunpack.c.h.b16 %v4441
    %v5986 = vunpack.c.l.b16 %v4442
    %v5987 = vunpack.c.h.b16 %v4442
    %v5988 = vunpack.c.l.b16 %v4443
    %v5989 = vunpack.c.h.b16 %v4443
    %v5990 = vunpack.c.l.b16 %v4444
    %v5991 = vunpack.c.h.b16 %v4444
    %v5992 = vunpack.c.l.b16 %v4445
    %v5993 = vunpack.c.h.b16 %v4445
    %v5994 = vunpack.c.l.b16 %v4446
    %v5995 = vunpack.c.h.b16 %v4446
    %v5996 = vunpack.c.l.b16 %v4447
    %v5997 = vunpack.c.h.b16 %v4447
    %v5998 = vunpack.c.l.b16 %v4448
    %v5999 = vunpack.c.h.b16 %v4448
    %v6000 = vunpack.c.l.b16 %v4449
    %v6001 = vunpack.c.h.b16 %v4449
    %v6002 = vunpack.c.l.b16 %v4450
    %v6003 = vunpack.c.h.b16 %v4450
    %v6004 = vunpack.c.l.b16 %v4451
    %v6005 = vunpack.c.h.b16 %v4451
    %v6006 = vunpack.c.l.b16 %v4452
    %v6007 = vunpack.c.h.b16 %v4452
    %v6008 = vunpack.c.l.b16 %v4453
    %v6009 = vunpack.c.h.b16 %v4453
    %v6010 = vunpack.c.l.b16 %v4454
    %v6011 = vunpack.c.h.b16 %v4454
    %v6012 = vunpack.c.l.b16 %v4455
    %v6013 = vunpack.c.h.b16 %v4455
    %v6014 = vunpack.c.l.b16 %v4456
    %v6015 = vunpack.c.h.b16 %v4456
    %v6016 = vunpack.c.l.b16 %v4457
    %v6017 = vunpack.c.h.b16 %v4457
    %v6018 = vunpack.c.l.b16 %v4458
    %v6019 = vunpack.c.h.b16 %v4458
    %v6020 = vunpack.c.l.b16 %v4459
    %v6021 = vunpack.c.h.b16 %v4459
    %v6022 = vunpack.c.l.b16 %v4460
    %v6023 = vunpack.c.h.b16 %v4460
    %v6024 = vunpack.c.l.b16 %v4461
    %v6025 = vunpack.c.h.b16 %v4461
    %v6026 = vunpack.c.l.b16 %v4462
    %v6027 = vunpack.c.h.b16 %v4462
    %v6028 = vunpack.c.l.b16 %v4463
    %v6029 = vunpack.c.h.b16 %v4463
    %v6030 = vunpack.c.l.b16 %v4464
    %v6031 = vunpack.c.h.b16 %v4464
    %v6032 = vunpack.c.l.b16 %v4465
    %v6033 = vunpack.c.h.b16 %v4465
    %v6034 = vunpack.c.l.b16 %v4466
    %v6035 = vunpack.c.h.b16 %v4466
    %v6036 = vunpack.c.l.b16 %v4467
    %v6037 = vunpack.c.h.b16 %v4467
    %v6038 = vunpack.c.l.b16 %v4468
    %v6039 = vunpack.c.h.b16 %v4468
    %v6040 = vunpack.c.l.b16 %v4469
    %v6041 = vunpack.c.h.b16 %v4469
    %v6042 = vunpack.c.l.b16 %v4470
    %v6043 = vunpack.c.h.b16 %v4470
    %v6044 = vunpack.c.l.b16 %v4471
    %v6045 = vunpack.c.h.b16 %v4471
    %v6046 = vunpack.c.l.b16 %v4472
    %v6047 = vunpack.c.h.b16 %v4472
    %v6048 = vunpack.c.l.b16 %v4473
    %v6049 = vunpack.c.h.b16 %v4473
    %v6050 = vunpack.c.l.b16 %v4474
    %v6051 = vunpack.c.h.b16 %v4474
    %v6052 = vunpack.c.l.b16 %v4475
    %v6053 = vunpack.c.h.b16 %v4475
    %v6054 = vpack.c.b16 %v5038, %v5030
    %v6055 = vpack.c.b16 %v5039, %v5031
    %v6056 = vpack.c.b16 %v5040, %v5032
    %v6057 = vpack.c.b16 %v5041, %v5033
    %v6058 = vpack.c.b16 %v5042, %v5034
    %v6059 = vpack.c.b16 %v5043, %v5035
    %v6060 = vpack.c.b16 %v5044, %v5036
    %v6061 = vpack.c.b16 %v5045, %v5037
    %v6062 = vpack.c.b16 %v5054, %v5046
    %v6063 = vpack.c.b16 %v5055, %v5047
    %v6064 = vpack.c.b16 %v5056, %v5048
    %v6065 = vpack.c.b16 %v5057, %v5049
    %v6066 = vpack.c.b16 %v5058, %v5050
    %v6067 = vpack.c.b16 %v5059, %v5051
    %v6068 = vpack.c.b16 %v5060, %v5052
    %v6069 = vpack.c.b16 %v5061, %v5053
    %v6070 = vpack.c.b16 %v5070, %v5062
    %v6071 = vpack.c.b16 %v5071, %v5063
    %v6072 = vpack.c.b16 %v5072, %v5064
    %v6073 = vpack.c.b16 %v5073, %v5065
    %v6074 = vpack.c.b16 %v5074, %v5066
    %v6075 = vpack.c.b16 %v5075, %v5067
    %v6076 = vpack.c.b16 %v5076, %v5068
    %v6077 = vpack.c.b16 %v5077, %v5069
    %v6078 = vpack.c.b16 %v5086, %v5078
    %v6079 = vpack.c.b16 %v5087, %v5079
    %v6080 = vpack.c.b16 %v5088, %v5080
    %v6081 = vpack.c.b16 %v5089, %v5081
    %v6082 = vpack.c.b16 %v5090, %v5082
    %v6083 = vpack.c.b16 %v5091, %v5083
    %v6084 = vpack.c.b16 %v5092, %v5084
    %v6085 = vpack.c.b16 %v5093, %v5085
    %v6086 = vpack.c.b16 %v5102, %v5094
    %v6087 = vpack.c.b16 %v5103, %v5095
    %v6088 = vpack.c.b16 %v5104, %v5096
    %v6089 = vpack.c.b16 %v5105, %v5097
    %v6090 = vpack.c.b16 %v5106, %v5098
    %v6091 = vpack.c.b16 %v5107, %v5099
    %v6092 = vpack.c.b16 %v5108, %v5100
    %v6093 = vpack.c.b16 %v5109, %v5101
    %v6094 = vpack.c.b16 %v5118, %v5110
    %v6095 = vpack.c.b16 %v5119, %v5111
    %v6096 = vpack.c.b16 %v5120, %v5112
    %v6097 = vpack.c.b16 %v5121, %v5113
    %v6098 = vpack.c.b16 %v5122, %v5114
    %v6099 = vpack.c.b16 %v5123, %v5115
    %v6100 = vpack.c.b16 %v5124, %v5116
    %v6101 = vpack.c.b16 %v5125, %v5117
    %v6102 = vpack.c.b16 %v5134, %v5126
    %v6103 = vpack.c.b16 %v5135, %v5127
    %v6104 = vpack.c.b16 %v5136, %v5128
    %v6105 = vpack.c.b16 %v5137, %v5129
    %v6106 = vpack.c.b16 %v5138, %v5130
    %v6107 = vpack.c.b16 %v5139, %v5131
    %v6108 = vpack.c.b16 %v5140, %v5132
    %v6109 = vpack.c.b16 %v5141, %v5133
    %v6110 = vpack.c.b16 %v5150, %v5142
    %v6111 = vpack.c.b16 %v5151, %v5143
    %v6112 = vpack.c.b16 %v5152, %v5144
    %v6113 = vpack.c.b16 %v5153, %v5145
    %v6114 = vpack.c.b16 %v5154, %v5146
    %v6115 = vpack.c.b16 %v5155, %v5147
    %v6116 = vpack.c.b16 %v5156, %v5148
    %v6117 = vpack.c.b16 %v5157, %v5149
    %v6118 = vpack.c.b16 %v5166, %v5158
    %v6119 = vpack.c.b16 %v5167, %v5159
    %v6120 = vpack.c.b16 %v5168, %v5160
    %v6121 = vpack.c.b16 %v5169, %v5161
    %v6122 = vpack.c.b16 %v5170, %v5162
    %v6123 = vpack.c.b16 %v5171, %v5163
    %v6124 = vpack.c.b16 %v5172, %v5164
    %v6125 = vpack.c.b16 %v5173, %v5165
    %v6126 = vpack.c.b16 %v5182, %v5174
    %v6127 = vpack.c.b16 %v5183, %v5175
    %v6128 = vpack.c.b16 %v5184, %v5176
    %v6129 = vpack.c.b16 %v5185, %v5177
    %v6130 = vpack.c.b16 %v5186, %v5178
    %v6131 = vpack.c.b16 %v5187, %v5179
    %v6132 = vpack.c.b16 %v5188, %v5180
    %v6133 = vpack.c.b16 %v5189, %v5181
    %v6134 = vpack.c.b16 %v5198, %v5190
    %v6135 = vpack.c.b16 %v5199, %v5191
    %v6136 = vpack.c.b16 %v5200, %v5192
    %v6137 = vpack.c.b16 %v5201, %v5193
    %v6138 = vpack.c.b16 %v5202, %v5194
    %v6139 = vpack.c.b16 %v5203, %v5195
    %v6140 = vpack.c.b16 %v5204, %v5196
    %v6141 = vpack.c.b16 %v5205, %v5197
    %v6142 = vpack.c.b16 %v5214, %v5206
    %v6143 = vpack.c.b16 %v5215, %v5207
    %v6144 = vpack.c.b16 %v5216, %v5208
    %v6145 = vpack.c.b16 %v5217, %v5209
    %v6146 = vpack.c.b16 %v5218, %v5210
    %v6147 = vpack.c.b16 %v5219, %v5211
    %v6148 = vpack.c.b16 %v5220, %v5212
    %v6149 = vpack.c.b16 %v5221, %v5213
    %v6150 = vpack.c.b16 %v5230, %v5222
    %v6151 = vpack.c.b16 %v5231, %v5223
    %v6152 = vpack.c.b16 %v5232, %v5224
    %v6153 = vpack.c.b16 %v5233, %v5225
    %v6154 = vpack.c.b16 %v5234, %v5226
    %v6155 = vpack.c.b16 %v5235, %v5227
    %v6156 = vpack.c.b16 %v5236, %v5228
    %v6157 = vpack.c.b16 %v5237, %v5229
    %v6158 = vpack.c.b16 %v5246, %v5238
    %v6159 = vpack.c.b16 %v5247, %v5239
    %v6160 = vpack.c.b16 %v5248, %v5240
    %v6161 = vpack.c.b16 %v5249, %v5241
    %v6162 = vpack.c.b16 %v5250, %v5242
    %v6163 = vpack.c.b16 %v5251, %v5243
    %v6164 = vpack.c.b16 %v5252, %v5244
    %v6165 = vpack.c.b16 %v5253, %v5245
    %v6166 = vpack.c.b16 %v5262, %v5254
    %v6167 = vpack.c.b16 %v5263, %v5255
    %v6168 = vpack.c.b16 %v5264, %v5256
    %v6169 = vpack.c.b16 %v5265, %v5257
    %v6170 = vpack.c.b16 %v5266, %v5258
    %v6171 = vpack.c.b16 %v5267, %v5259
    %v6172 = vpack.c.b16 %v5268, %v5260
    %v6173 = vpack.c.b16 %v5269, %v5261
    %v6174 = vpack.c.b16 %v5278, %v5270
    %v6175 = vpack.c.b16 %v5279, %v5271
    %v6176 = vpack.c.b16 %v5280, %v5272
    %v6177 = vpack.c.b16 %v5281, %v5273
    %v6178 = vpack.c.b16 %v5282, %v5274
    %v6179 = vpack.c.b16 %v5283, %v5275
    %v6180 = vpack.c.b16 %v5284, %v5276
    %v6181 = vpack.c.b16 %v5285, %v5277
    %v6182 = vpack.c.b16 %v5294, %v5286
    %v6183 = vpack.c.b16 %v5295, %v5287
    %v6184 = vpack.c.b16 %v5296, %v5288
    %v6185 = vpack.c.b16 %v5297, %v5289
    %v6186 = vpack.c.b16 %v5298, %v5290
    %v6187 = vpack.c.b16 %v5299, %v5291
    %v6188 = vpack.c.b16 %v5300, %v5292
    %v6189 = vpack.c.b16 %v5301, %v5293
    %v6190 = vpack.c.b16 %v5310, %v5302
    %v6191 = vpack.c.b16 %v5311, %v5303
    %v6192 = vpack.c.b16 %v5312, %v5304
    %v6193 = vpack.c.b16 %v5313, %v5305
    %v6194 = vpack.c.b16 %v5314, %v5306
    %v6195 = vpack.c.b16 %v5315, %v5307
    %v6196 = vpack.c.b16 %v5316, %v5308
    %v6197 = vpack.c.b16 %v5317, %v5309
    %v6198 = vpack.c.b16 %v5326, %v5318
    %v6199 = vpack.c.b16 %v5327, %v5319
    %v6200 = vpack.c.b16 %v5328, %v5320
    %v6201 = vpack.c.b16 %v5329, %v5321
    %v6202 = vpack.c.b16 %v5330, %v5322
    %v6203 = vpack.c.b16 %v5331, %v5323
    %v6204 = vpack.c.b16 %v5332, %v5324
    %v6205 = vpack.c.b16 %v5333, %v5325
    %v6206 = vpack.c.b16 %v5342, %v5334
    %v6207 = vpack.c.b16 %v5343, %v5335
    %v6208 = vpack.c.b16 %v5344, %v5336
    %v6209 = vpack.c.b16 %v5345, %v5337
    %v6210 = vpack.c.b16 %v5346, %v5338
    %v6211 = vpack.c.b16 %v5347, %v5339
    %v6212 = vpack.c.b16 %v5348, %v5340
    %v6213 = vpack.c.b16 %v5349, %v5341
    %v6214 = vpack.c.b16 %v5358, %v5350
    %v6215 = vpack.c.b16 %v5359, %v5351
    %v6216 = vpack.c.b16 %v5360, %v5352
    %v6217 = vpack.c.b16 %v5361, %v5353
    %v6218 = vpack.c.b16 %v5362, %v5354
    %v6219 = vpack.c.b16 %v5363, %v5355
    %v6220 = vpack.c.b16 %v5364, %v5356
    %v6221 = vpack.c.b16 %v5365, %v5357
    %v6222 = vpack.c.b16 %v5374, %v5366
    %v6223 = vpack.c.b16 %v5375, %v5367
    %v6224 = vpack.c.b16 %v5376, %v5368
    %v6225 = vpack.c.b16 %v5377, %v5369
    %v6226 = vpack.c.b16 %v5378, %v5370
    %v6227 = vpack.c.b16 %v5379, %v5371
    %v6228 = vpack.c.b16 %v5380, %v5372
    %v6229 = vpack.c.b16 %v5381, %v5373
    %v6230 = vpack.c.b16 %v5390, %v5382
    %v6231 = vpack.c.b16 %v5391, %v5383
    %v6232 = vpack.c.b16 %v5392, %v5384
    %v6233 = vpack.c.b16 %v5393, %v5385
    %v6234 = vpack.c.b16 %v5394, %v5386
    %v6235 = vpack.c.b16 %v5395, %v5387
    %v6236 = vpack.c.b16 %v5396, %v5388
    %v6237 = vpack.c.b16 %v5397, %v5389
    %v6238 = vpack.c.b16 %v5406, %v5398
    %v6239 = vpack.c.b16 %v5407, %v5399
    %v6240 = vpack.c.b16 %v5408, %v5400
    %v6241 = vpack.c.b16 %v5409, %v5401
    %v6242 = vpack.c.b16 %v5410, %v5402
    %v6243 = vpack.c.b16 %v5411, %v5403
    %v6244 = vpack.c.b16 %v5412, %v5404
    %v6245 = vpack.c.b16 %v5413, %v5405
    %v6246 = vpack.c.b16 %v5422, %v5414
    %v6247 = vpack.c.b16 %v5423, %v5415
    %v6248 = vpack.c.b16 %v5424, %v5416
    %v6249 = vpack.c.b16 %v5425, %v5417
    %v6250 = vpack.c.b16 %v5426, %v5418
    %v6251 = vpack.c.b16 %v5427, %v5419
    %v6252 = vpack.c.b16 %v5428, %v5420
    %v6253 = vpack.c.b16 %v5429, %v5421
    %v6254 = vpack.c.b16 %v5438, %v5430
    %v6255 = vpack.c.b16 %v5439, %v5431
    %v6256 = vpack.c.b16 %v5440, %v5432
    %v6257 = vpack.c.b16 %v5441, %v5433
    %v6258 = vpack.c.b16 %v5442, %v5434
    %v6259 = vpack.c.b16 %v5443, %v5435
    %v6260 = vpack.c.b16 %v5444, %v5436
    %v6261 = vpack.c.b16 %v5445, %v5437
    %v6262 = vpack.c.b16 %v5454, %v5446
    %v6263 = vpack.c.b16 %v5455, %v5447
    %v6264 = vpack.c.b16 %v5456, %v5448
    %v6265 = vpack.c.b16 %v5457, %v5449
    %v6266 = vpack.c.b16 %v5458, %v5450
    %v6267 = vpack.c.b16 %v5459, %v5451
    %v6268 = vpack.c.b16 %v5460, %v5452
    %v6269 = vpack.c.b16 %v5461, %v5453
    %v6270 = vpack.c.b16 %v5470, %v5462
    %v6271 = vpack.c.b16 %v5471, %v5463
    %v6272 = vpack.c.b16 %v5472, %v5464
    %v6273 = vpack.c.b16 %v5473, %v5465
    %v6274 = vpack.c.b16 %v5474, %v5466
    %v6275 = vpack.c.b16 %v5475, %v5467
    %v6276 = vpack.c.b16 %v5476, %v5468
    %v6277 = vpack.c.b16 %v5477, %v5469
    %v6278 = vpack.c.b16 %v5486, %v5478
    %v6279 = vpack.c.b16 %v5487, %v5479
    %v6280 = vpack.c.b16 %v5488, %v5480
    %v6281 = vpack.c.b16 %v5489, %v5481
    %v6282 = vpack.c.b16 %v5490, %v5482
    %v6283 = vpack.c.b16 %v5491, %v5483
    %v6284 = vpack.c.b16 %v5492, %v5484
    %v6285 = vpack.c.b16 %v5493, %v5485
    %v6286 = vpack.c.b16 %v5502, %v5494
    %v6287 = vpack.c.b16 %v5503, %v5495
    %v6288 = vpack.c.b16 %v5504, %v5496
    %v6289 = vpack.c.b16 %v5505, %v5497
    %v6290 = vpack.c.b16 %v5506, %v5498
    %v6291 = vpack.c.b16 %v5507, %v5499
    %v6292 = vpack.c.b16 %v5508, %v5500
    %v6293 = vpack.c.b16 %v5509, %v5501
    %v6294 = vpack.c.b16 %v5518, %v5510
    %v6295 = vpack.c.b16 %v5519, %v5511
    %v6296 = vpack.c.b16 %v5520, %v5512
    %v6297 = vpack.c.b16 %v5521, %v5513
    %v6298 = vpack.c.b16 %v5522, %v5514
    %v6299 = vpack.c.b16 %v5523, %v5515
    %v6300 = vpack.c.b16 %v5524, %v5516
    %v6301 = vpack.c.b16 %v5525, %v5517
    %v6302 = vpack.c.b16 %v5534, %v5526
    %v6303 = vpack.c.b16 %v5535, %v5527
    %v6304 = vpack.c.b16 %v5536, %v5528
    %v6305 = vpack.c.b16 %v5537, %v5529
    %v6306 = vpack.c.b16 %v5538, %v5530
    %v6307 = vpack.c.b16 %v5539, %v5531
    %v6308 = vpack.c.b16 %v5540, %v5532
    %v6309 = vpack.c.b16 %v5541, %v5533
    %v6310 = vpack.c.b16 %v5550, %v5542
    %v6311 = vpack.c.b16 %v5551, %v5543
    %v6312 = vpack.c.b16 %v5552, %v5544
    %v6313 = vpack.c.b16 %v5553, %v5545
    %v6314 = vpack.c.b16 %v5554, %v5546
    %v6315 = vpack.c.b16 %v5555, %v5547
    %v6316 = vpack.c.b16 %v5556, %v5548
    %v6317 = vpack.c.b16 %v5557, %v5549
    %v6318 = vpack.c.b16 %v5566, %v5558
    %v6319 = vpack.c.b16 %v5567, %v5559
    %v6320 = vpack.c.b16 %v5568, %v5560
    %v6321 = vpack.c.b16 %v5569, %v5561
    %v6322 = vpack.c.b16 %v5570, %v5562
    %v6323 = vpack.c.b16 %v5571, %v5563
    %v6324 = vpack.c.b16 %v5572, %v5564
    %v6325 = vpack.c.b16 %v5573, %v5565
    %v6326 = vpack.c.b16 %v5582, %v5574
    %v6327 = vpack.c.b16 %v5583, %v5575
    %v6328 = vpack.c.b16 %v5584, %v5576
    %v6329 = vpack.c.b16 %v5585, %v5577
    %v6330 = vpack.c.b16 %v5586, %v5578
    %v6331 = vpack.c.b16 %v5587, %v5579
    %v6332 = vpack.c.b16 %v5588, %v5580
    %v6333 = vpack.c.b16 %v5589, %v5581
    %v6334 = vpack.c.b16 %v5598, %v5590
    %v6335 = vpack.c.b16 %v5599, %v5591
    %v6336 = vpack.c.b16 %v5600, %v5592
    %v6337 = vpack.c.b16 %v5601, %v5593
    %v6338 = vpack.c.b16 %v5602, %v5594
    %v6339 = vpack.c.b16 %v5603, %v5595
    %v6340 = vpack.c.b16 %v5604, %v5596
    %v6341 = vpack.c.b16 %v5605, %v5597
    %v6342 = vpack.c.b16 %v5614, %v5606
    %v6343 = vpack.c.b16 %v5615, %v5607
    %v6344 = vpack.c.b16 %v5616, %v5608
    %v6345 = vpack.c.b16 %v5617, %v5609
    %v6346 = vpack.c.b16 %v5618, %v5610
    %v6347 = vpack.c.b16 %v5619, %v5611
    %v6348 = vpack.c.b16 %v5620, %v5612
    %v6349 = vpack.c.b16 %v5621, %v5613
    %v6350 = vpack.c.b16 %v5630, %v5622
    %v6351 = vpack.c.b16 %v5631, %v5623
    %v6352 = vpack.c.b16 %v5632, %v5624
    %v6353 = vpack.c.b16 %v5633, %v5625
    %v6354 = vpack.c.b16 %v5634, %v5626
    %v6355 = vpack.c.b16 %v5635, %v5627
    %v6356 = vpack.c.b16 %v5636, %v5628
    %v6357 = vpack.c.b16 %v5637, %v5629
    %v6358 = vpack.c.b16 %v5646, %v5638
    %v6359 = vpack.c.b16 %v5647, %v5639
    %v6360 = vpack.c.b16 %v5648, %v5640
    %v6361 = vpack.c.b16 %v5649, %v5641
    %v6362 = vpack.c.b16 %v5650, %v5642
    %v6363 = vpack.c.b16 %v5651, %v5643
    %v6364 = vpack.c.b16 %v5652, %v5644
    %v6365 = vpack.c.b16 %v5653, %v5645
    %v6366 = vpack.c.b16 %v5662, %v5654
    %v6367 = vpack.c.b16 %v5663, %v5655
    %v6368 = vpack.c.b16 %v5664, %v5656
    %v6369 = vpack.c.b16 %v5665, %v5657
    %v6370 = vpack.c.b16 %v5666, %v5658
    %v6371 = vpack.c.b16 %v5667, %v5659
    %v6372 = vpack.c.b16 %v5668, %v5660
    %v6373 = vpack.c.b16 %v5669, %v5661
    %v6374 = vpack.c.b16 %v5678, %v5670
    %v6375 = vpack.c.b16 %v5679, %v5671
    %v6376 = vpack.c.b16 %v5680, %v5672
    %v6377 = vpack.c.b16 %v5681, %v5673
    %v6378 = vpack.c.b16 %v5682, %v5674
    %v6379 = vpack.c.b16 %v5683, %v5675
    %v6380 = vpack.c.b16 %v5684, %v5676
    %v6381 = vpack.c.b16 %v5685, %v5677
    %v6382 = vpack.c.b16 %v5694, %v5686
    %v6383 = vpack.c.b16 %v5695, %v5687
    %v6384 = vpack.c.b16 %v5696, %v5688
    %v6385 = vpack.c.b16 %v5697, %v5689
    %v6386 = vpack.c.b16 %v5698, %v5690
    %v6387 = vpack.c.b16 %v5699, %v5691
    %v6388 = vpack.c.b16 %v5700, %v5692
    %v6389 = vpack.c.b16 %v5701, %v5693
    %v6390 = vpack.c.b16 %v5710, %v5702
    %v6391 = vpack.c.b16 %v5711, %v5703
    %v6392 = vpack.c.b16 %v5712, %v5704
    %v6393 = vpack.c.b16 %v5713, %v5705
    %v6394 = vpack.c.b16 %v5714, %v5706
    %v6395 = vpack.c.b16 %v5715, %v5707
    %v6396 = vpack.c.b16 %v5716, %v5708
    %v6397 = vpack.c.b16 %v5717, %v5709
    %v6398 = vpack.c.b16 %v5726, %v5718
    %v6399 = vpack.c.b16 %v5727, %v5719
    %v6400 = vpack.c.b16 %v5728, %v5720
    %v6401 = vpack.c.b16 %v5729, %v5721
    %v6402 = vpack.c.b16 %v5730, %v5722
    %v6403 = vpack.c.b16 %v5731, %v5723
    %v6404 = vpack.c.b16 %v5732, %v5724
    %v6405 = vpack.c.b16 %v5733, %v5725
    %v6406 = vpack.c.b16 %v5742, %v5734
    %v6407 = vpack.c.b16 %v5743, %v5735
    %v6408 = vpack.c.b16 %v5744, %v5736
    %v6409 = vpack.c.b16 %v5745, %v5737
    %v6410 = vpack.c.b16 %v5746, %v5738
    %v6411 = vpack.c.b16 %v5747, %v5739
    %v6412 = vpack.c.b16 %v5748, %v5740
    %v6413 = vpack.c.b16 %v5749, %v5741
    %v6414 = vpack.c.b16 %v5758, %v5750
    %v6415 = vpack.c.b16 %v5759, %v5751
    %v6416 = vpack.c.b16 %v5760, %v5752
    %v6417 = vpack.c.b16 %v5761, %v5753
    %v6418 = vpack.c.b16 %v5762, %v5754
    %v6419 = vpack.c.b16 %v5763, %v5755
    %v6420 = vpack.c.b16 %v5764, %v5756
    %v6421 = vpack.c.b16 %v5765, %v5757
    %v6422 = vpack.c.b16 %v5774, %v5766
    %v6423 = vpack.c.b16 %v5775, %v5767
    %v6424 = vpack.c.b16 %v5776, %v5768
    %v6425 = vpack.c.b16 %v5777, %v5769
    %v6426 = vpack.c.b16 %v5778, %v5770
    %v6427 = vpack.c.b16 %v5779, %v5771
    %v6428 = vpack.c.b16 %v5780, %v5772
    %v6429 = vpack.c.b16 %v5781, %v5773
    %v6430 = vpack.c.b16 %v5790, %v5782
    %v6431 = vpack.c.b16 %v5791, %v5783
    %v6432 = vpack.c.b16 %v5792, %v5784
    %v6433 = vpack.c.b16 %v5793, %v5785
    %v6434 = vpack.c.b16 %v5794, %v5786
    %v6435 = vpack.c.b16 %v5795, %v5787
    %v6436 = vpack.c.b16 %v5796, %v5788
    %v6437 = vpack.c.b16 %v5797, %v5789
    %v6438 = vpack.c.b16 %v5806, %v5798
    %v6439 = vpack.c.b16 %v5807, %v5799
    %v6440 = vpack.c.b16 %v5808, %v5800
    %v6441 = vpack.c.b16 %v5809, %v5801
    %v6442 = vpack.c.b16 %v5810, %v5802
    %v6443 = vpack.c.b16 %v5811, %v5803
    %v6444 = vpack.c.b16 %v5812, %v5804
    %v6445 = vpack.c.b16 %v5813, %v5805
    %v6446 = vpack.c.b16 %v5822, %v5814
    %v6447 = vpack.c.b16 %v5823, %v5815
    %v6448 = vpack.c.b16 %v5824, %v5816
    %v6449 = vpack.c.b16 %v5825, %v5817
    %v6450 = vpack.c.b16 %v5826, %v5818
    %v6451 = vpack.c.b16 %v5827, %v5819
    %v6452 = vpack.c.b16 %v5828, %v5820
    %v6453 = vpack.c.b16 %v5829, %v5821
    %v6454 = vpack.c.b16 %v5838, %v5830
    %v6455 = vpack.c.b16 %v5839, %v5831
    %v6456 = vpack.c.b16 %v5840, %v5832
    %v6457 = vpack.c.b16 %v5841, %v5833
    %v6458 = vpack.c.b16 %v5842, %v5834
    %v6459 = vpack.c.b16 %v5843, %v5835
    %v6460 = vpack.c.b16 %v5844, %v5836
    %v6461 = vpack.c.b16 %v5845, %v5837
    %v6462 = vpack.c.b16 %v5854, %v5846
    %v6463 = vpack.c.b16 %v5855, %v5847
    %v6464 = vpack.c.b16 %v5856, %v5848
    %v6465 = vpack.c.b16 %v5857, %v5849
    %v6466 = vpack.c.b16 %v5858, %v5850
    %v6467 = vpack.c.b16 %v5859, %v5851
    %v6468 = vpack.c.b16 %v5860, %v5852
    %v6469 = vpack.c.b16 %v5861, %v5853
    %v6470 = vpack.c.b16 %v5870, %v5862
    %v6471 = vpack.c.b16 %v5871, %v5863
    %v6472 = vpack.c.b16 %v5872, %v5864
    %v6473 = vpack.c.b16 %v5873, %v5865
    %v6474 = vpack.c.b16 %v5874, %v5866
    %v6475 = vpack.c.b16 %v5875, %v5867
    %v6476 = vpack.c.b16 %v5876, %v5868
    %v6477 = vpack.c.b16 %v5877, %v5869
    %v6478 = vpack.c.b16 %v5886, %v5878
    %v6479 = vpack.c.b16 %v5887, %v5879
    %v6480 = vpack.c.b16 %v5888, %v5880
    %v6481 = vpack.c.b16 %v5889, %v5881
    %v6482 = vpack.c.b16 %v5890, %v5882
    %v6483 = vpack.c.b16 %v5891, %v5883
    %v6484 = vpack.c.b16 %v5892, %v5884
    %v6485 = vpack.c.b16 %v5893, %v5885
    %v6486 = vpack.c.b16 %v5902, %v5894
    %v6487 = vpack.c.b16 %v5903, %v5895
    %v6488 = vpack.c.b16 %v5904, %v5896
    %v6489 = vpack.c.b16 %v5905, %v5897
    %v6490 = vpack.c.b16 %v5906, %v5898
    %v6491 = vpack.c.b16 %v5907, %v5899
    %v6492 = vpack.c.b16 %v5908, %v5900
    %v6493 = vpack.c.b16 %v5909, %v5901
    %v6494 = vpack.c.b16 %v5918, %v5910
    %v6495 = vpack.c.b16 %v5919, %v5911
    %v6496 = vpack.c.b16 %v5920, %v5912
    %v6497 = vpack.c.b16 %v5921, %v5913
    %v6498 = vpack.c.b16 %v5922, %v5914
    %v6499 = vpack.c.b16 %v5923, %v5915
    %v6500 = vpack.c.b16 %v5924, %v5916
    %v6501 = vpack.c.b16 %v5925, %v5917
    %v6502 = vpack.c.b16 %v5934, %v5926
    %v6503 = vpack.c.b16 %v5935, %v5927
    %v6504 = vpack.c.b16 %v5936, %v5928
    %v6505 = vpack.c.b16 %v5937, %v5929
    %v6506 = vpack.c.b16 %v5938, %v5930
    %v6507 = vpack.c.b16 %v5939, %v5931
    %v6508 = vpack.c.b16 %v5940, %v5932
    %v6509 = vpack.c.b16 %v5941, %v5933
    %v6510 = vpack.c.b16 %v5950, %v5942
    %v6511 = vpack.c.b16 %v5951, %v5943
    %v6512 = vpack.c.b16 %v5952, %v5944
    %v6513 = vpack.c.b16 %v5953, %v5945
    %v6514 = vpack.c.b16 %v5954, %v5946
    %v6515 = vpack.c.b16 %v5955, %v5947
    %v6516 = vpack.c.b16 %v5956, %v5948
    %v6517 = vpack.c.b16 %v5957, %v5949
    %v6518 = vpack.c.b16 %v5966, %v5958
    %v6519 = vpack.c.b16 %v5967, %v5959
    %v6520 = vpack.c.b16 %v5968, %v5960
    %v6521 = vpack.c.b16 %v5969, %v5961
    %v6522 = vpack.c.b16 %v5970, %v5962
    %v6523 = vpack.c.b16 %v5971, %v5963
    %v6524 = vpack.c.b16 %v5972, %v5964
    %v6525 = vpack.c.b16 %v5973, %v5965
    %v6526 = vpack.c.b16 %v5982, %v5974
    %v6527 = vpack.c.b16 %v5983, %v5975
    %v6528 = vpack.c.b16 %v5984, %v5976
    %v6529 = vpack.c.b16 %v5985, %v5977
    %v6530 = vpack.c.b16 %v5986, %v5978
    %v6531 = vpack.c.b16 %v5987, %v5979
    %v6532 = vpack.c.b16 %v5988, %v5980
    %v6533 = vpack.c.b16 %v5989, %v5981
    %v6534 = vpack.c.b16 %v5998, %v5990
    %v6535 = vpack.c.b16 %v5999, %v5991
    %v6536 = vpack.c.b16 %v6000, %v5992
    %v6537 = vpack.c.b16 %v6001, %v5993
    %v6538 = vpack.c.b16 %v6002, %v5994
    %v6539 = vpack.c.b16 %v6003, %v5995
    %v6540 = vpack.c.b16 %v6004, %v5996
    %v6541 = vpack.c.b16 %v6005, %v5997
    %v6542 = vpack.c.b16 %v6014, %v6006
    %v6543 = vpack.c.b16 %v6015, %v6007
    %v6544 = vpack.c.b16 %v6016, %v6008
    %v6545 = vpack.c.b16 %v6017, %v6009
    %v6546 = vpack.c.b16 %v6018, %v6010
    %v6547 = vpack.c.b16 %v6019, %v6011
    %v6548 = vpack.c.b16 %v6020, %v6012
    %v6549 = vpack.c.b16 %v6021, %v6013
    %v6550 = vpack.c.b16 %v6030, %v6022
    %v6551 = vpack.c.b16 %v6031, %v6023
    %v6552 = vpack.c.b16 %v6032, %v6024
    %v6553 = vpack.c.b16 %v6033, %v6025
    %v6554 = vpack.c.b16 %v6034, %v6026
    %v6555 = vpack.c.b16 %v6035, %v6027
    %v6556 = vpack.c.b16 %v6036, %v6028
    %v6557 = vpack.c.b16 %v6037, %v6029
    %v6558 = vpack.c.b16 %v6046, %v6038
    %v6559 = vpack.c.b16 %v6047, %v6039
    %v6560 = vpack.c.b16 %v6048, %v6040
    %v6561 = vpack.c.b16 %v6049, %v6041
    %v6562 = vpack.c.b16 %v6050, %v6042
    %v6563 = vpack.c.b16 %v6051, %v6043
    %v6564 = vpack.c.b16 %v6052, %v6044
    %v6565 = vpack.c.b16 %v6053, %v6045
    %7078 = vmatprep.subr.bf16.mxu0 %v6055
    %7079 = vmatpush1.bf16.msra.mxu0 %v6054
    %7080 = vmatprep.subr.bf16.mxu0 %v6063
    %7081 = vmatpush1.bf16.msra.mxu0 %v6062
    %7082 = vmatprep.subr.bf16.mxu0 %v6071
    %7083 = vmatpush1.bf16.msra.mxu0 %v6070
    %7084 = vmatprep.subr.bf16.mxu0 %v6079
    %7085 = vmatpush1.bf16.msra.mxu0 %v6078
    %7086 = vmatprep.subr.bf16.mxu0 %v6087
    %7087 = vmatpush1.bf16.msra.mxu0 %v6086
    %7088 = vmatprep.subr.bf16.mxu0 %v6095
    %7089 = vmatpush1.bf16.msra.mxu0 %v6094
    %7090 = vmatprep.subr.bf16.mxu0 %v6103
    %7091 = vmatpush1.bf16.msra.mxu0 %v6102
    %7092 = vmatprep.subr.bf16.mxu0 %v6111
    %7093 = vmatpush1.bf16.msra.mxu0 %v6110
    %7094 = vmatprep.subr.bf16.mxu0 %v6119
    %7095 = vmatpush1.bf16.msra.mxu0 %v6118
    %7096 = vmatprep.subr.bf16.mxu0 %v6127
    %7097 = vmatpush1.bf16.msra.mxu0 %v6126
    %7098 = vmatprep.subr.bf16.mxu0 %v6135
    %7099 = vmatpush1.bf16.msra.mxu0 %v6134
    %7100 = vmatprep.subr.bf16.mxu0 %v6143
    %7101 = vmatpush1.bf16.msra.mxu0 %v6142
    %7102 = vmatprep.subr.bf16.mxu0 %v6151
    %7103 = vmatpush1.bf16.msra.mxu0 %v6150
    %7104 = vmatprep.subr.bf16.mxu0 %v6159
    %7105 = vmatpush1.bf16.msra.mxu0 %v6158
    %7106 = vmatprep.subr.bf16.mxu0 %v6167
    %7107 = vmatpush1.bf16.msra.mxu0 %v6166
    %7108 = vmatprep.subr.bf16.mxu0 %v6175
    %7109 = vmatpush1.bf16.msra.mxu0 %v6174
    %7110 = vmatprep.mubr.bf16.mxu0 %v3957
    %7111 = vmatmul.mubr.bf16.gmra.mrb[0].mxu0 %v3956
    %v7112 = vpop.f32.mrb[0].mxu0
    %v7113 = vadd.f32 %v4481, %v7112
    %v7114 = vpop.f32.mrb[0].mxu0
    %v7115 = vadd.f32 %v4485, %v7114
    %v7116 = vpop.f32.mrb[0].mxu0
    %v7117 = vpop.f32.mrb[0].mxu0
    %7118 = vdwg.mxu0
    %7119 = vmatprep.subr.bf16.mxu0 %v6183
    %7120 = vmatpush1.bf16.msra.mxu0 %v6182
    %7121 = vmatprep.subr.bf16.mxu0 %v6191
    %7122 = vmatpush1.bf16.msra.mxu0 %v6190
    %7123 = vmatprep.subr.bf16.mxu0 %v6199
    %7124 = vmatpush1.bf16.msra.mxu0 %v6198
    %7125 = vmatprep.subr.bf16.mxu0 %v6207
    %7126 = vmatpush1.bf16.msra.mxu0 %v6206
    %7127 = vmatprep.subr.bf16.mxu0 %v6215
    %7128 = vmatpush1.bf16.msra.mxu0 %v6214
    %7129 = vmatprep.subr.bf16.mxu0 %v6223
    %7130 = vmatpush1.bf16.msra.mxu0 %v6222
    %7131 = vmatprep.subr.bf16.mxu0 %v6231
    %7132 = vmatpush1.bf16.msra.mxu0 %v6230
    %7133 = vmatprep.subr.bf16.mxu0 %v6239
    %7134 = vmatpush1.bf16.msra.mxu0 %v6238
    %7135 = vmatprep.subr.bf16.mxu0 %v6247
    %7136 = vmatpush1.bf16.msra.mxu0 %v6246
    %7137 = vmatprep.subr.bf16.mxu0 %v6255
    %7138 = vmatpush1.bf16.msra.mxu0 %v6254
    %7139 = vmatprep.subr.bf16.mxu0 %v6263
    %7140 = vmatpush1.bf16.msra.mxu0 %v6262
    %7141 = vmatprep.subr.bf16.mxu0 %v6271
    %7142 = vmatpush1.bf16.msra.mxu0 %v6270
    %7143 = vmatprep.subr.bf16.mxu0 %v6279
    %7144 = vmatpush1.bf16.msra.mxu0 %v6278
    %7145 = vmatprep.subr.bf16.mxu0 %v6287
    %7146 = vmatpush1.bf16.msra.mxu0 %v6286
    %7147 = vmatprep.subr.bf16.mxu0 %v6295
    %7148 = vmatpush1.bf16.msra.mxu0 %v6294
    %7149 = vmatprep.subr.bf16.mxu0 %v6303
    %7150 = vmatpush1.bf16.msra.mxu0 %v6302
    %7151 = vmatprep.mubr.bf16.mxu0 %v3959
    %7152 = vmatmul.mubr.bf16.gmra.mrb[0].mxu0 %v3958
    %v7153 = vpop.f32.mrb[0].mxu0
    %v7154 = vadd.f32 %v7113, %v7153
    %v7155 = vpop.f32.mrb[0].mxu0
    %v7156 = vadd.f32 %v7115, %v7155
    %v7157 = vpop.f32.mrb[0].mxu0
    %v7158 = vpop.f32.mrb[0].mxu0
    %7159 = vdwg.mxu0
    %7160 = vmatprep.subr.bf16.mxu0 %v6311
    %7161 = vmatpush1.bf16.msra.mxu0 %v6310
    %7162 = vmatprep.subr.bf16.mxu0 %v6319
    %7163 = vmatpush1.bf16.msra.mxu0 %v6318
    %7164 = vmatprep.subr.bf16.mxu0 %v6327
    %7165 = vmatpush1.bf16.msra.mxu0 %v6326
    %7166 = vmatprep.subr.bf16.mxu0 %v6335
    %7167 = vmatpush1.bf16.msra.mxu0 %v6334
    %7168 = vmatprep.subr.bf16.mxu0 %v6343
    %7169 = vmatpush1.bf16.msra.mxu0 %v6342
    %7170 = vmatprep.subr.bf16.mxu0 %v6351
    %7171 = vmatpush1.bf16.msra.mxu0 %v6350
    %7172 = vmatprep.subr.bf16.mxu0 %v6359
    %7173 = vmatpush1.bf16.msra.mxu0 %v6358
    %7174 = vmatprep.subr.bf16.mxu0 %v6367
    %7175 = vmatpush1.bf16.msra.mxu0 %v6366
    %7176 = vmatprep.subr.bf16.mxu0 %v6375
    %7177 = vmatpush1.bf16.msra.mxu0 %v6374
    %7178 = vmatprep.subr.bf16.mxu0 %v6383
    %7179 = vmatpush1.bf16.msra.mxu0 %v6382
    %7180 = vmatprep.subr.bf16.mxu0 %v6391
    %7181 = vmatpush1.bf16.msra.mxu0 %v6390
    %7182 = vmatprep.subr.bf16.mxu0 %v6399
    %7183 = vmatpush1.bf16.msra.mxu0 %v6398
    %7184 = vmatprep.subr.bf16.mxu0 %v6407
    %7185 = vmatpush1.bf16.msra.mxu0 %v6406
    %7186 = vmatprep.subr.bf16.mxu0 %v6415
    %7187 = vmatpush1.bf16.msra.mxu0 %v6414
    %7188 = vmatprep.subr.bf16.mxu0 %v6423
    %7189 = vmatpush1.bf16.msra.mxu0 %v6422
    %7190 = vmatprep.subr.bf16.mxu0 %v6431
    %7191 = vmatpush1.bf16.msra.mxu0 %v6430
    %7192 = vmatprep.mubr.bf16.mxu0 %v3961
    %7193 = vmatmul.mubr.bf16.gmra.mrb[0].mxu0 %v3960
    %v7194 = vpop.f32.mrb[0].mxu0
    %v7195 = vadd.f32 %v7154, %v7194
    %v7196 = vpop.f32.mrb[0].mxu0
    %v7197 = vadd.f32 %v7156, %v7196
    %v7198 = vpop.f32.mrb[0].mxu0
    %v7199 = vpop.f32.mrb[0].mxu0
    %7200 = vdwg.mxu0
    %7201 = vmatprep.subr.bf16.mxu0 %v6439
    %7202 = vmatpush1.bf16.msra.mxu0 %v6438
    %7203 = vmatprep.subr.bf16.mxu0 %v6447
    %7204 = vmatpush1.bf16.msra.mxu0 %v6446
    %7205 = vmatprep.subr.bf16.mxu0 %v6455
    %7206 = vmatpush1.bf16.msra.mxu0 %v6454
    %7207 = vmatprep.subr.bf16.mxu0 %v6463
    %7208 = vmatpush1.bf16.msra.mxu0 %v6462
    %7209 = vmatprep.subr.bf16.mxu0 %v6471
    %7210 = vmatpush1.bf16.msra.mxu0 %v6470
    %7211 = vmatprep.subr.bf16.mxu0 %v6479
    %7212 = vmatpush1.bf16.msra.mxu0 %v6478
    %7213 = vmatprep.subr.bf16.mxu0 %v6487
    %7214 = vmatpush1.bf16.msra.mxu0 %v6486
    %7215 = vmatprep.subr.bf16.mxu0 %v6495
    %7216 = vmatpush1.bf16.msra.mxu0 %v6494
    %7217 = vmatprep.subr.bf16.mxu0 %v6503
    %7218 = vmatpush1.bf16.msra.mxu0 %v6502
    %7219 = vmatprep.subr.bf16.mxu0 %v6511
    %7220 = vmatpush1.bf16.msra.mxu0 %v6510
    %7221 = vmatprep.subr.bf16.mxu0 %v6519
    %7222 = vmatpush1.bf16.msra.mxu0 %v6518
    %7223 = vmatprep.subr.bf16.mxu0 %v6527
    %7224 = vmatpush1.bf16.msra.mxu0 %v6526
    %7225 = vmatprep.subr.bf16.mxu0 %v6535
    %7226 = vmatpush1.bf16.msra.mxu0 %v6534
    %7227 = vmatprep.subr.bf16.mxu0 %v6543
    %7228 = vmatpush1.bf16.msra.mxu0 %v6542
    %7229 = vmatprep.subr.bf16.mxu0 %v6551
    %7230 = vmatpush1.bf16.msra.mxu0 %v6550
    %7231 = vmatprep.subr.bf16.mxu0 %v6559
    %7232 = vmatpush1.bf16.msra.mxu0 %v6558
    %7233 = vmatprep.mubr.bf16.mxu0 %v3963
    %7234 = vmatmul.mubr.bf16.gmra.mrb[0].mxu0 %v3962
    %v7235 = vpop.f32.mrb[0].mxu0
    %v7236 = vadd.f32 %v7195, %v7235
    %v7237 = vpop.f32.mrb[0].mxu0
    %v7238 = vadd.f32 %v7197, %v7237
    %v7239 = vpop.f32.mrb[0].mxu0
    %v7240 = vpop.f32.mrb[0].mxu0
    %7241 = vdwg.mxu0
    %7242 = vmatprep.subr.bf16.mxu0 %v6057
    %7243 = vmatpush1.bf16.msra.mxu0 %v6056
    %7244 = vmatprep.subr.bf16.mxu0 %v6065
    %7245 = vmatpush1.bf16.msra.mxu0 %v6064
    %7246 = vmatprep.subr.bf16.mxu0 %v6073
    %7247 = vmatpush1.bf16.msra.mxu0 %v6072
    %7248 = vmatprep.subr.bf16.mxu0 %v6081
    %7249 = vmatpush1.bf16.msra.mxu0 %v6080
    %7250 = vmatprep.subr.bf16.mxu0 %v6089
    %7251 = vmatpush1.bf16.msra.mxu0 %v6088
    %7252 = vmatprep.subr.bf16.mxu0 %v6097
    %7253 = vmatpush1.bf16.msra.mxu0 %v6096
    %7254 = vmatprep.subr.bf16.mxu0 %v6105
    %7255 = vmatpush1.bf16.msra.mxu0 %v6104
    %7256 = vmatprep.subr.bf16.mxu0 %v6113
    %7257 = vmatpush1.bf16.msra.mxu0 %v6112
    %7258 = vmatprep.subr.bf16.mxu0 %v6121
    %7259 = vmatpush1.bf16.msra.mxu0 %v6120
    %7260 = vmatprep.subr.bf16.mxu0 %v6129
    %7261 = vmatpush1.bf16.msra.mxu0 %v6128
    %7262 = vmatprep.subr.bf16.mxu0 %v6137
    %7263 = vmatpush1.bf16.msra.mxu0 %v6136
    %7264 = vmatprep.subr.bf16.mxu0 %v6145
    %7265 = vmatpush1.bf16.msra.mxu0 %v6144
    %7266 = vmatprep.subr.bf16.mxu0 %v6153
    %7267 = vmatpush1.bf16.msra.mxu0 %v6152
    %7268 = vmatprep.subr.bf16.mxu0 %v6161
    %7269 = vmatpush1.bf16.msra.mxu0 %v6160
    %7270 = vmatprep.subr.bf16.mxu0 %v6169
    %7271 = vmatpush1.bf16.msra.mxu0 %v6168
    %7272 = vmatprep.subr.bf16.mxu0 %v6177
    %7273 = vmatpush1.bf16.msra.mxu0 %v6176
    %7274 = vmatprep.mubr.bf16.mxu0 %v3957
    %7275 = vmatmul.mubr.bf16.gmra.mrb[0].mxu0 %v3956
    %v7276 = vpop.f32.mrb[0].mxu0
    %v7277 = vadd.f32 %v4489, %v7276
    %v7278 = vpop.f32.mrb[0].mxu0
    %v7279 = vadd.f32 %v4493, %v7278
    %v7280 = vpop.f32.mrb[0].mxu0
    %v7281 = vpop.f32.mrb[0].mxu0
    %7282 = vdwg.mxu0
    %7283 = vmatprep.subr.bf16.mxu0 %v6185
    %7284 = vmatpush1.bf16.msra.mxu0 %v6184
    %7285 = vmatprep.subr.bf16.mxu0 %v6193
    %7286 = vmatpush1.bf16.msra.mxu0 %v6192
    %7287 = vmatprep.subr.bf16.mxu0 %v6201
    %7288 = vmatpush1.bf16.msra.mxu0 %v6200
    %7289 = vmatprep.subr.bf16.mxu0 %v6209
    %7290 = vmatpush1.bf16.msra.mxu0 %v6208
    %7291 = vmatprep.subr.bf16.mxu0 %v6217
    %7292 = vmatpush1.bf16.msra.mxu0 %v6216
    %7293 = vmatprep.subr.bf16.mxu0 %v6225
    %7294 = vmatpush1.bf16.msra.mxu0 %v6224
    %7295 = vmatprep.subr.bf16.mxu0 %v6233
    %7296 = vmatpush1.bf16.msra.mxu0 %v6232
    %7297 = vmatprep.subr.bf16.mxu0 %v6241
    %7298 = vmatpush1.bf16.msra.mxu0 %v6240
    %7299 = vmatprep.subr.bf16.mxu0 %v6249
    %7300 = vmatpush1.bf16.msra.mxu0 %v6248
    %7301 = vmatprep.subr.bf16.mxu0 %v6257
    %7302 = vmatpush1.bf16.msra.mxu0 %v6256
    %7303 = vmatprep.subr.bf16.mxu0 %v6265
    %7304 = vmatpush1.bf16.msra.mxu0 %v6264
    %7305 = vmatprep.subr.bf16.mxu0 %v6273
    %7306 = vmatpush1.bf16.msra.mxu0 %v6272
    %7307 = vmatprep.subr.bf16.mxu0 %v6281
    %7308 = vmatpush1.bf16.msra.mxu0 %v6280
    %7309 = vmatprep.subr.bf16.mxu0 %v6289
    %7310 = vmatpush1.bf16.msra.mxu0 %v6288
    %7311 = vmatprep.subr.bf16.mxu0 %v6297
    %7312 = vmatpush1.bf16.msra.mxu0 %v6296
    %7313 = vmatprep.subr.bf16.mxu0 %v6305
    %7314 = vmatpush1.bf16.msra.mxu0 %v6304
    %7315 = vmatprep.mubr.bf16.mxu0 %v3959
    %7316 = vmatmul.mubr.bf16.gmra.mrb[0].mxu0 %v3958
    %v7317 = vpop.f32.mrb[0].mxu0
    %v7318 = vadd.f32 %v7277, %v7317
    %v7319 = vpop.f32.mrb[0].mxu0
    %v7320 = vadd.f32 %v7279, %v7319
    %v7321 = vpop.f32.mrb[0].mxu0
    %v7322 = vpop.f32.mrb[0].mxu0
    %7323 = vdwg.mxu0
    %7324 = vmatprep.subr.bf16.mxu0 %v6313
    %7325 = vmatpush1.bf16.msra.mxu0 %v6312
    %7326 = vmatprep.subr.bf16.mxu0 %v6321
    %7327 = vmatpush1.bf16.msra.mxu0 %v6320
    %7328 = vmatprep.subr.bf16.mxu0 %v6329
    %7329 = vmatpush1.bf16.msra.mxu0 %v6328
    %7330 = vmatprep.subr.bf16.mxu0 %v6337
    %7331 = vmatpush1.bf16.msra.mxu0 %v6336
    %7332 = vmatprep.subr.bf16.mxu0 %v6345
    %7333 = vmatpush1.bf16.msra.mxu0 %v6344
    %7334 = vmatprep.subr.bf16.mxu0 %v6353
    %7335 = vmatpush1.bf16.msra.mxu0 %v6352
    %7336 = vmatprep.subr.bf16.mxu0 %v6361
    %7337 = vmatpush1.bf16.msra.mxu0 %v6360
    %7338 = vmatprep.subr.bf16.mxu0 %v6369
    %7339 = vmatpush1.bf16.msra.mxu0 %v6368
    %7340 = vmatprep.subr.bf16.mxu0 %v6377
    %7341 = vmatpush1.bf16.msra.mxu0 %v6376
    %7342 = vmatprep.subr.bf16.mxu0 %v6385
    %7343 = vmatpush1.bf16.msra.mxu0 %v6384
    %7344 = vmatprep.subr.bf16.mxu0 %v6393
    %7345 = vmatpush1.bf16.msra.mxu0 %v6392
    %7346 = vmatprep.subr.bf16.mxu0 %v6401
    %7347 = vmatpush1.bf16.msra.mxu0 %v6400
    %7348 = vmatprep.subr.bf16.mxu0 %v6409
    %7349 = vmatpush1.bf16.msra.mxu0 %v6408
    %7350 = vmatprep.subr.bf16.mxu0 %v6417
    %7351 = vmatpush1.bf16.msra.mxu0 %v6416
    %7352 = vmatprep.subr.bf16.mxu0 %v6425
    %7353 = vmatpush1.bf16.msra.mxu0 %v6424
    %7354 = vmatprep.subr.bf16.mxu0 %v6433
    %7355 = vmatpush1.bf16.msra.mxu0 %v6432
    %7356 = vmatprep.mubr.bf16.mxu0 %v3961
    %7357 = vmatmul.mubr.bf16.gmra.mrb[0].mxu0 %v3960
    %v7358 = vpop.f32.mrb[0].mxu0
    %v7359 = vadd.f32 %v7318, %v7358
    %v7360 = vpop.f32.mrb[0].mxu0
    %v7361 = vadd.f32 %v7320, %v7360
    %v7362 = vpop.f32.mrb[0].mxu0
    %v7363 = vpop.f32.mrb[0].mxu0
    %7364 = vdwg.mxu0
    %7365 = vmatprep.subr.bf16.mxu0 %v6441
    %7366 = vmatpush1.bf16.msra.mxu0 %v6440
    %7367 = vmatprep.subr.bf16.mxu0 %v6449
    %7368 = vmatpush1.bf16.msra.mxu0 %v6448
    %7369 = vmatprep.subr.bf16.mxu0 %v6457
    %7370 = vmatpush1.bf16.msra.mxu0 %v6456
    %7371 = vmatprep.subr.bf16.mxu0 %v6465
    %7372 = vmatpush1.bf16.msra.mxu0 %v6464
    %7373 = vmatprep.subr.bf16.mxu0 %v6473
    %7374 = vmatpush1.bf16.msra.mxu0 %v6472
    %7375 = vmatprep.subr.bf16.mxu0 %v6481
    %7376 = vmatpush1.bf16.msra.mxu0 %v6480
    %7377 = vmatprep.subr.bf16.mxu0 %v6489
    %7378 = vmatpush1.bf16.msra.mxu0 %v6488
    %7379 = vmatprep.subr.bf16.mxu0 %v6497
    %7380 = vmatpush1.bf16.msra.mxu0 %v6496
    %7381 = vmatprep.subr.bf16.mxu0 %v6505
    %7382 = vmatpush1.bf16.msra.mxu0 %v6504
    %7383 = vmatprep.subr.bf16.mxu0 %v6513
    %7384 = vmatpush1.bf16.msra.mxu0 %v6512
    %7385 = vmatprep.subr.bf16.mxu0 %v6521
    %7386 = vmatpush1.bf16.msra.mxu0 %v6520
    %7387 = vmatprep.subr.bf16.mxu0 %v6529
    %7388 = vmatpush1.bf16.msra.mxu0 %v6528
    %7389 = vmatprep.subr.bf16.mxu0 %v6537
    %7390 = vmatpush1.bf16.msra.mxu0 %v6536
    %7391 = vmatprep.subr.bf16.mxu0 %v6545
    %7392 = vmatpush1.bf16.msra.mxu0 %v6544
    %7393 = vmatprep.subr.bf16.mxu0 %v6553
    %7394 = vmatpush1.bf16.msra.mxu0 %v6552
    %7395 = vmatprep.subr.bf16.mxu0 %v6561
    %7396 = vmatpush1.bf16.msra.mxu0 %v6560
    %7397 = vmatprep.mubr.bf16.mxu0 %v3963
    %7398 = vmatmul.mubr.bf16.gmra.mrb[0].mxu0 %v3962
    %v7399 = vpop.f32.mrb[0].mxu0
    %v7400 = vadd.f32 %v7359, %v7399
    %v7401 = vpop.f32.mrb[0].mxu0
    %v7402 = vadd.f32 %v7361, %v7401
    %v7403 = vpop.f32.mrb[0].mxu0
    %v7404 = vpop.f32.mrb[0].mxu0
    %7405 = vdwg.mxu0
    %7406 = vmatprep.subr.bf16.mxu0 %v6059
    %7407 = vmatpush1.bf16.msra.mxu0 %v6058
    %7408 = vmatprep.subr.bf16.mxu0 %v6067
    %7409 = vmatpush1.bf16.msra.mxu0 %v6066
    %7410 = vmatprep.subr.bf16.mxu0 %v6075
    %7411 = vmatpush1.bf16.msra.mxu0 %v6074
    %7412 = vmatprep.subr.bf16.mxu0 %v6083
    %7413 = vmatpush1.bf16.msra.mxu0 %v6082
    %7414 = vmatprep.subr.bf16.mxu0 %v6091
    %7415 = vmatpush1.bf16.msra.mxu0 %v6090
    %7416 = vmatprep.subr.bf16.mxu0 %v6099
    %7417 = vmatpush1.bf16.msra.mxu0 %v6098
    %7418 = vmatprep.subr.bf16.mxu0 %v6107
    %7419 = vmatpush1.bf16.msra.mxu0 %v6106
    %7420 = vmatprep.subr.bf16.mxu0 %v6115
    %7421 = vmatpush1.bf16.msra.mxu0 %v6114
    %7422 = vmatprep.subr.bf16.mxu0 %v6123
    %7423 = vmatpush1.bf16.msra.mxu0 %v6122
    %7424 = vmatprep.subr.bf16.mxu0 %v6131
    %7425 = vmatpush1.bf16.msra.mxu0 %v6130
    %7426 = vmatprep.subr.bf16.mxu0 %v6139
    %7427 = vmatpush1.bf16.msra.mxu0 %v6138
    %7428 = vmatprep.subr.bf16.mxu0 %v6147
    %7429 = vmatpush1.bf16.msra.mxu0 %v6146
    %7430 = vmatprep.subr.bf16.mxu0 %v6155
    %7431 = vmatpush1.bf16.msra.mxu0 %v6154
    %7432 = vmatprep.subr.bf16.mxu0 %v6163
    %7433 = vmatpush1.bf16.msra.mxu0 %v6162
    %7434 = vmatprep.subr.bf16.mxu0 %v6171
    %7435 = vmatpush1.bf16.msra.mxu0 %v6170
    %7436 = vmatprep.subr.bf16.mxu0 %v6179
    %7437 = vmatpush1.bf16.msra.mxu0 %v6178
    %7438 = vmatprep.mubr.bf16.mxu0 %v3957
    %7439 = vmatmul.mubr.bf16.gmra.mrb[0].mxu0 %v3956
    %v7440 = vpop.f32.mrb[0].mxu0
    %v7441 = vadd.f32 %v4497, %v7440
    %v7442 = vpop.f32.mrb[0].mxu0
    %v7443 = vadd.f32 %v4501, %v7442
    %v7444 = vpop.f32.mrb[0].mxu0
    %v7445 = vpop.f32.mrb[0].mxu0
    %7446 = vdwg.mxu0
    %7447 = vmatprep.subr.bf16.mxu0 %v6187
    %7448 = vmatpush1.bf16.msra.mxu0 %v6186
    %7449 = vmatprep.subr.bf16.mxu0 %v6195
    %7450 = vmatpush1.bf16.msra.mxu0 %v6194
    %7451 = vmatprep.subr.bf16.mxu0 %v6203
    %7452 = vmatpush1.bf16.msra.mxu0 %v6202
    %7453 = vmatprep.subr.bf16.mxu0 %v6211
    %7454 = vmatpush1.bf16.msra.mxu0 %v6210
    %7455 = vmatprep.subr.bf16.mxu0 %v6219
    %7456 = vmatpush1.bf16.msra.mxu0 %v6218
    %7457 = vmatprep.subr.bf16.mxu0 %v6227
    %7458 = vmatpush1.bf16.msra.mxu0 %v6226
    %7459 = vmatprep.subr.bf16.mxu0 %v6235
    %7460 = vmatpush1.bf16.msra.mxu0 %v6234
    %7461 = vmatprep.subr.bf16.mxu0 %v6243
    %7462 = vmatpush1.bf16.msra.mxu0 %v6242
    %7463 = vmatprep.subr.bf16.mxu0 %v6251
    %7464 = vmatpush1.bf16.msra.mxu0 %v6250
    %7465 = vmatprep.subr.bf16.mxu0 %v6259
    %7466 = vmatpush1.bf16.msra.mxu0 %v6258
    %7467 = vmatprep.subr.bf16.mxu0 %v6267
    %7468 = vmatpush1.bf16.msra.mxu0 %v6266
    %7469 = vmatprep.subr.bf16.mxu0 %v6275
    %7470 = vmatpush1.bf16.msra.mxu0 %v6274
    %7471 = vmatprep.subr.bf16.mxu0 %v6283
    %7472 = vmatpush1.bf16.msra.mxu0 %v6282
    %7473 = vmatprep.subr.bf16.mxu0 %v6291
    %7474 = vmatpush1.bf16.msra.mxu0 %v6290
    %7475 = vmatprep.subr.bf16.mxu0 %v6299
    %7476 = vmatpush1.bf16.msra.mxu0 %v6298
    %7477 = vmatprep.subr.bf16.mxu0 %v6307
    %7478 = vmatpush1.bf16.msra.mxu0 %v6306
    %7479 = vmatprep.mubr.bf16.mxu0 %v3959
    %7480 = vmatmul.mubr.bf16.gmra.mrb[0].mxu0 %v3958
    %v7481 = vpop.f32.mrb[0].mxu0
    %v7482 = vadd.f32 %v7441, %v7481
    %v7483 = vpop.f32.mrb[0].mxu0
    %v7484 = vadd.f32 %v7443, %v7483
    %v7485 = vpop.f32.mrb[0].mxu0
    %v7486 = vpop.f32.mrb[0].mxu0
    %7487 = vdwg.mxu0
    %7488 = vmatprep.subr.bf16.mxu0 %v6315
    %7489 = vmatpush1.bf16.msra.mxu0 %v6314
    %7490 = vmatprep.subr.bf16.mxu0 %v6323
    %7491 = vmatpush1.bf16.msra.mxu0 %v6322
    %7492 = vmatprep.subr.bf16.mxu0 %v6331
    %7493 = vmatpush1.bf16.msra.mxu0 %v6330
    %7494 = vmatprep.subr.bf16.mxu0 %v6339
    %7495 = vmatpush1.bf16.msra.mxu0 %v6338
    %7496 = vmatprep.subr.bf16.mxu0 %v6347
    %7497 = vmatpush1.bf16.msra.mxu0 %v6346
    %7498 = vmatprep.subr.bf16.mxu0 %v6355
    %7499 = vmatpush1.bf16.msra.mxu0 %v6354
    %7500 = vmatprep.subr.bf16.mxu0 %v6363
    %7501 = vmatpush1.bf16.msra.mxu0 %v6362
    %7502 = vmatprep.subr.bf16.mxu0 %v6371
    %7503 = vmatpush1.bf16.msra.mxu0 %v6370
    %7504 = vmatprep.subr.bf16.mxu0 %v6379
    %7505 = vmatpush1.bf16.msra.mxu0 %v6378
    %7506 = vmatprep.subr.bf16.mxu0 %v6387
    %7507 = vmatpush1.bf16.msra.mxu0 %v6386
    %7508 = vmatprep.subr.bf16.mxu0 %v6395
    %7509 = vmatpush1.bf16.msra.mxu0 %v6394
    %7510 = vmatprep.subr.bf16.mxu0 %v6403
    %7511 = vmatpush1.bf16.msra.mxu0 %v6402
    %7512 = vmatprep.subr.bf16.mxu0 %v6411
    %7513 = vmatpush1.bf16.msra.mxu0 %v6410
    %7514 = vmatprep.subr.bf16.mxu0 %v6419
    %7515 = vmatpush1.bf16.msra.mxu0 %v6418
    %7516 = vmatprep.subr.bf16.mxu0 %v6427
    %7517 = vmatpush1.bf16.msra.mxu0 %v6426
    %7518 = vmatprep.subr.bf16.mxu0 %v6435
    %7519 = vmatpush1.bf16.msra.mxu0 %v6434
    %7520 = vmatprep.mubr.bf16.mxu0 %v3961
    %7521 = vmatmul.mubr.bf16.gmra.mrb[0].mxu0 %v3960
    %v7522 = vpop.f32.mrb[0].mxu0
    %v7523 = vadd.f32 %v7482, %v7522
    %v7524 = vpop.f32.mrb[0].mxu0
    %v7525 = vadd.f32 %v7484, %v7524
    %v7526 = vpop.f32.mrb[0].mxu0
    %v7527 = vpop.f32.mrb[0].mxu0
    %7528 = vdwg.mxu0
    %7529 = vmatprep.subr.bf16.mxu0 %v6443
    %7530 = vmatpush1.bf16.msra.mxu0 %v6442
    %7531 = vmatprep.subr.bf16.mxu0 %v6451
    %7532 = vmatpush1.bf16.msra.mxu0 %v6450
    %7533 = vmatprep.subr.bf16.mxu0 %v6459
    %7534 = vmatpush1.bf16.msra.mxu0 %v6458
    %7535 = vmatprep.subr.bf16.mxu0 %v6467
    %7536 = vmatpush1.bf16.msra.mxu0 %v6466
    %7537 = vmatprep.subr.bf16.mxu0 %v6475
    %7538 = vmatpush1.bf16.msra.mxu0 %v6474
    %7539 = vmatprep.subr.bf16.mxu0 %v6483
    %7540 = vmatpush1.bf16.msra.mxu0 %v6482
    %7541 = vmatprep.subr.bf16.mxu0 %v6491
    %7542 = vmatpush1.bf16.msra.mxu0 %v6490
    %7543 = vmatprep.subr.bf16.mxu0 %v6499
    %7544 = vmatpush1.bf16.msra.mxu0 %v6498
    %7545 = vmatprep.subr.bf16.mxu0 %v6507
    %7546 = vmatpush1.bf16.msra.mxu0 %v6506
    %7547 = vmatprep.subr.bf16.mxu0 %v6515
    %7548 = vmatpush1.bf16.msra.mxu0 %v6514
    %7549 = vmatprep.subr.bf16.mxu0 %v6523
    %7550 = vmatpush1.bf16.msra.mxu0 %v6522
    %7551 = vmatprep.subr.bf16.mxu0 %v6531
    %7552 = vmatpush1.bf16.msra.mxu0 %v6530
    %7553 = vmatprep.subr.bf16.mxu0 %v6539
    %7554 = vmatpush1.bf16.msra.mxu0 %v6538
    %7555 = vmatprep.subr.bf16.mxu0 %v6547
    %7556 = vmatpush1.bf16.msra.mxu0 %v6546
    %7557 = vmatprep.subr.bf16.mxu0 %v6555
    %7558 = vmatpush1.bf16.msra.mxu0 %v6554
    %7559 = vmatprep.subr.bf16.mxu0 %v6563
    %7560 = vmatpush1.bf16.msra.mxu0 %v6562
    %7561 = vmatprep.mubr.bf16.mxu0 %v3963
    %7562 = vmatmul.mubr.bf16.gmra.mrb[0].mxu0 %v3962
    %v7563 = vpop.f32.mrb[0].mxu0
    %v7564 = vadd.f32 %v7523, %v7563
    %v7565 = vpop.f32.mrb[0].mxu0
    %v7566 = vadd.f32 %v7525, %v7565
    %v7567 = vpop.f32.mrb[0].mxu0
    %v7568 = vpop.f32.mrb[0].mxu0
    %7569 = vdwg.mxu0
    %7570 = vmatprep.subr.bf16.mxu0 %v6061
    %7571 = vmatpush1.bf16.msra.mxu0 %v6060
    %7572 = vmatprep.subr.bf16.mxu0 %v6069
    %7573 = vmatpush1.bf16.msra.mxu0 %v6068
    %7574 = vmatprep.subr.bf16.mxu0 %v6077
    %7575 = vmatpush1.bf16.msra.mxu0 %v6076
    %7576 = vmatprep.subr.bf16.mxu0 %v6085
    %7577 = vmatpush1.bf16.msra.mxu0 %v6084
    %7578 = vmatprep.subr.bf16.mxu0 %v6093
    %7579 = vmatpush1.bf16.msra.mxu0 %v6092
    %7580 = vmatprep.subr.bf16.mxu0 %v6101
    %7581 = vmatpush1.bf16.msra.mxu0 %v6100
    %7582 = vmatprep.subr.bf16.mxu0 %v6109
    %7583 = vmatpush1.bf16.msra.mxu0 %v6108
    %7584 = vmatprep.subr.bf16.mxu0 %v6117
    %7585 = vmatpush1.bf16.msra.mxu0 %v6116
    %7586 = vmatprep.subr.bf16.mxu0 %v6125
    %7587 = vmatpush1.bf16.msra.mxu0 %v6124
    %7588 = vmatprep.subr.bf16.mxu0 %v6133
    %7589 = vmatpush1.bf16.msra.mxu0 %v6132
    %7590 = vmatprep.subr.bf16.mxu0 %v6141
    %7591 = vmatpush1.bf16.msra.mxu0 %v6140
    %7592 = vmatprep.subr.bf16.mxu0 %v6149
    %7593 = vmatpush1.bf16.msra.mxu0 %v6148
    %7594 = vmatprep.subr.bf16.mxu0 %v6157
    %7595 = vmatpush1.bf16.msra.mxu0 %v6156
    %7596 = vmatprep.subr.bf16.mxu0 %v6165
    %7597 = vmatpush1.bf16.msra.mxu0 %v6164
    %7598 = vmatprep.subr.bf16.mxu0 %v6173
    %7599 = vmatpush1.bf16.msra.mxu0 %v6172
    %7600 = vmatprep.subr.bf16.mxu0 %v6181
    %7601 = vmatpush1.bf16.msra.mxu0 %v6180
    %7602 = vmatprep.mubr.bf16.mxu0 %v3957
    %7603 = vmatmul.mubr.bf16.gmra.mrb[0].mxu0 %v3956
    %v7604 = vpop.f32.mrb[0].mxu0
    %v7605 = vadd.f32 %v4505, %v7604
    %v7606 = vpop.f32.mrb[0].mxu0
    %v7607 = vadd.f32 %v4509, %v7606
    %v7608 = vpop.f32.mrb[0].mxu0
    %v7609 = vpop.f32.mrb[0].mxu0
    %7610 = vdwg.mxu0
    %7611 = vmatprep.subr.bf16.mxu0 %v6189
    %7612 = vmatpush1.bf16.msra.mxu0 %v6188
    %7613 = vmatprep.subr.bf16.mxu0 %v6197
    %7614 = vmatpush1.bf16.msra.mxu0 %v6196
    %7615 = vmatprep.subr.bf16.mxu0 %v6205
    %7616 = vmatpush1.bf16.msra.mxu0 %v6204
    %7617 = vmatprep.subr.bf16.mxu0 %v6213
    %7618 = vmatpush1.bf16.msra.mxu0 %v6212
    %7619 = vmatprep.subr.bf16.mxu0 %v6221
    %7620 = vmatpush1.bf16.msra.mxu0 %v6220
    %7621 = vmatprep.subr.bf16.mxu0 %v6229
    %7622 = vmatpush1.bf16.msra.mxu0 %v6228
    %7623 = vmatprep.subr.bf16.mxu0 %v6237
    %7624 = vmatpush1.bf16.msra.mxu0 %v6236
    %7625 = vmatprep.subr.bf16.mxu0 %v6245
    %7626 = vmatpush1.bf16.msra.mxu0 %v6244
    %7627 = vmatprep.subr.bf16.mxu0 %v6253
    %7628 = vmatpush1.bf16.msra.mxu0 %v6252
    %7629 = vmatprep.subr.bf16.mxu0 %v6261
    %7630 = vmatpush1.bf16.msra.mxu0 %v6260
    %7631 = vmatprep.subr.bf16.mxu0 %v6269
    %7632 = vmatpush1.bf16.msra.mxu0 %v6268
    %7633 = vmatprep.subr.bf16.mxu0 %v6277
    %7634 = vmatpush1.bf16.msra.mxu0 %v6276
    %7635 = vmatprep.subr.bf16.mxu0 %v6285
    %7636 = vmatpush1.bf16.msra.mxu0 %v6284
    %7637 = vmatprep.subr.bf16.mxu0 %v6293
    %7638 = vmatpush1.bf16.msra.mxu0 %v6292
    %7639 = vmatprep.subr.bf16.mxu0 %v6301
    %7640 = vmatpush1.bf16.msra.mxu0 %v6300
    %7641 = vmatprep.subr.bf16.mxu0 %v6309
    %7642 = vmatpush1.bf16.msra.mxu0 %v6308
    %7643 = vmatprep.mubr.bf16.mxu0 %v3959
    %7644 = vmatmul.mubr.bf16.gmra.mrb[0].mxu0 %v3958
    %v7645 = vpop.f32.mrb[0].mxu0
    %v7646 = vadd.f32 %v7605, %v7645
    %v7647 = vpop.f32.mrb[0].mxu0
    %v7648 = vadd.f32 %v7607, %v7647
    %v7649 = vpop.f32.mrb[0].mxu0
    %v7650 = vpop.f32.mrb[0].mxu0
    %7651 = vdwg.mxu0
    %7652 = vmatprep.subr.bf16.mxu0 %v6317
    %7653 = vmatpush1.bf16.msra.mxu0 %v6316
    %7654 = vmatprep.subr.bf16.mxu0 %v6325
    %7655 = vmatpush1.bf16.msra.mxu0 %v6324
    %7656 = vmatprep.subr.bf16.mxu0 %v6333
    %7657 = vmatpush1.bf16.msra.mxu0 %v6332
    %7658 = vmatprep.subr.bf16.mxu0 %v6341
    %7659 = vmatpush1.bf16.msra.mxu0 %v6340
    %7660 = vmatprep.subr.bf16.mxu0 %v6349
    %7661 = vmatpush1.bf16.msra.mxu0 %v6348
    %7662 = vmatprep.subr.bf16.mxu0 %v6357
    %7663 = vmatpush1.bf16.msra.mxu0 %v6356
    %7664 = vmatprep.subr.bf16.mxu0 %v6365
    %7665 = vmatpush1.bf16.msra.mxu0 %v6364
    %7666 = vmatprep.subr.bf16.mxu0 %v6373
    %7667 = vmatpush1.bf16.msra.mxu0 %v6372
    %7668 = vmatprep.subr.bf16.mxu0 %v6381
    %7669 = vmatpush1.bf16.msra.mxu0 %v6380
    %7670 = vmatprep.subr.bf16.mxu0 %v6389
    %7671 = vmatpush1.bf16.msra.mxu0 %v6388
    %7672 = vmatprep.subr.bf16.mxu0 %v6397
    %7673 = vmatpush1.bf16.msra.mxu0 %v6396
    %7674 = vmatprep.subr.bf16.mxu0 %v6405
    %7675 = vmatpush1.bf16.msra.mxu0 %v6404
    %7676 = vmatprep.subr.bf16.mxu0 %v6413
    %7677 = vmatpush1.bf16.msra.mxu0 %v6412
    %7678 = vmatprep.subr.bf16.mxu0 %v6421
    %7679 = vmatpush1.bf16.msra.mxu0 %v6420
    %7680 = vmatprep.subr.bf16.mxu0 %v6429
    %7681 = vmatpush1.bf16.msra.mxu0 %v6428
    %7682 = vmatprep.subr.bf16.mxu0 %v6437
    %7683 = vmatpush1.bf16.msra.mxu0 %v6436
    %7684 = vmatprep.mubr.bf16.mxu0 %v3961
    %7685 = vmatmul.mubr.bf16.gmra.mrb[0].mxu0 %v3960
    %v7686 = vpop.f32.mrb[0].mxu0
    %v7687 = vadd.f32 %v7646, %v7686
    %v7688 = vpop.f32.mrb[0].mxu0
    %v7689 = vadd.f32 %v7648, %v7688
    %v7690 = vpop.f32.mrb[0].mxu0
    %v7691 = vpop.f32.mrb[0].mxu0
    %7692 = vdwg.mxu0
    %7693 = vmatprep.subr.bf16.mxu0 %v6445
    %7694 = vmatpush1.bf16.msra.mxu0 %v6444
    %7695 = vmatprep.subr.bf16.mxu0 %v6453
    %7696 = vmatpush1.bf16.msra.mxu0 %v6452
    %7697 = vmatprep.subr.bf16.mxu0 %v6461
    %7698 = vmatpush1.bf16.msra.mxu0 %v6460
    %7699 = vmatprep.subr.bf16.mxu0 %v6469
    %7700 = vmatpush1.bf16.msra.mxu0 %v6468
    %7701 = vmatprep.subr.bf16.mxu0 %v6477
    %7702 = vmatpush1.bf16.msra.mxu0 %v6476
    %7703 = vmatprep.subr.bf16.mxu0 %v6485
    %7704 = vmatpush1.bf16.msra.mxu0 %v6484
    %7705 = vmatprep.subr.bf16.mxu0 %v6493
    %7706 = vmatpush1.bf16.msra.mxu0 %v6492
    %7707 = vmatprep.subr.bf16.mxu0 %v6501
    %7708 = vmatpush1.bf16.msra.mxu0 %v6500
    %7709 = vmatprep.subr.bf16.mxu0 %v6509
    %7710 = vmatpush1.bf16.msra.mxu0 %v6508
    %7711 = vmatprep.subr.bf16.mxu0 %v6517
    %7712 = vmatpush1.bf16.msra.mxu0 %v6516
    %7713 = vmatprep.subr.bf16.mxu0 %v6525
    %7714 = vmatpush1.bf16.msra.mxu0 %v6524
    %7715 = vmatprep.subr.bf16.mxu0 %v6533
    %7716 = vmatpush1.bf16.msra.mxu0 %v6532
    %7717 = vmatprep.subr.bf16.mxu0 %v6541
    %7718 = vmatpush1.bf16.msra.mxu0 %v6540
    %7719 = vmatprep.subr.bf16.mxu0 %v6549
    %7720 = vmatpush1.bf16.msra.mxu0 %v6548
    %7721 = vmatprep.subr.bf16.mxu0 %v6557
    %7722 = vmatpush1.bf16.msra.mxu0 %v6556
    %7723 = vmatprep.subr.bf16.mxu0 %v6565
    %7724 = vmatpush1.bf16.msra.mxu0 %v6564
    %7725 = vmatprep.mubr.bf16.mxu0 %v3963
    %7726 = vmatmul.mubr.bf16.gmra.mrb[0].mxu0 %v3962
    %v7727 = vpop.f32.mrb[0].mxu0
    %v7728 = vadd.f32 %v7687, %v7727
    %v7729 = vpop.f32.mrb[0].mxu0
    %v7730 = vadd.f32 %v7689, %v7729
    %v7731 = vpop.f32.mrb[0].mxu0
    %v7732 = vpop.f32.mrb[0].mxu0
    %7733 = vdwg.mxu0
    %v7734 = vmax.f32 %v7236, 0.0
    %v7735 = vmax.f32 %v7238, 0.0
    %v7736 = vmax.f32 %v7400, 0.0
    %v7737 = vmax.f32 %v7402, 0.0
    %v7738 = vmax.f32 %v7564, 0.0
    %v7739 = vmax.f32 %v7566, 0.0
    %v7740 = vmax.f32 %v7728, 0.0
    %v7741 = vmax.f32 %v7730, 0.0
    %v7742 = vpack.c.bf16 %v7734, %v7734
    %v7743 = vpack.c.bf16 %v7735, %v7735
    %v7744 = vpack.c.bf16 %v7736, %v7736
    %v7745 = vpack.c.bf16 %v7737, %v7737
    %v7746 = vpack.c.bf16 %v7738, %v7738
    %v7747 = vpack.c.bf16 %v7739, %v7739
    %v7748 = vpack.c.bf16 %v7740, %v7740
    %v7749 = vpack.c.bf16 %v7741, %v7741
    %v7750 = vld [vmem:[#allocation10] sm:$0xff]
    %v7751 = vld [vmem:[#allocation10 + $0x8] sm:$0xff]
    %v7752 = vld [vmem:[#allocation10 + $0x10] sm:$0xff]
    %v7753 = vld [vmem:[#allocation10 + $0x18] sm:$0xff]
    %v7754 = vld [vmem:[#allocation10 + $0x20] sm:$0xff]
    %v7755 = vld [vmem:[#allocation10 + $0x28] sm:$0xff]
    %v7756 = vld [vmem:[#allocation10 + $0x30] sm:$0xff]
    %v7757 = vld [vmem:[#allocation10 + $0x38] sm:$0xff]
    %v7758 = vld [vmem:[#allocation10 + $0x40] sm:$0xff]
    %v7759 = vld [vmem:[#allocation10 + $0x48] sm:$0xff]
    %v7760 = vld [vmem:[#allocation10 + $0x50] sm:$0xff]
    %v7761 = vld [vmem:[#allocation10 + $0x58] sm:$0xff]
    %v7762 = vld [vmem:[#allocation10 + $0x60] sm:$0xff]
    %v7763 = vld [vmem:[#allocation10 + $0x68] sm:$0xff]
    %v7764 = vld [vmem:[#allocation10 + $0x70] sm:$0xff]
    %v7765 = vld [vmem:[#allocation10 + $0x78] sm:$0xff]
    %v7766 = vld [vmem:[#allocation10 + $0x80] sm:$0xff]
    %v7767 = vld [vmem:[#allocation10 + $0x88] sm:$0xff]
    %v7768 = vld [vmem:[#allocation10 + $0x90] sm:$0xff]
    %v7769 = vld [vmem:[#allocation10 + $0x98] sm:$0xff]
    %v7770 = vld [vmem:[#allocation10 + $0xa0] sm:$0xff]
    %v7771 = vld [vmem:[#allocation10 + $0xa8] sm:$0xff]
    %v7772 = vld [vmem:[#allocation10 + $0xb0] sm:$0xff]
    %v7773 = vld [vmem:[#allocation10 + $0xb8] sm:$0xff]
    %v7774 = vld [vmem:[#allocation10 + $0xc0] sm:$0xff]
    %v7775 = vld [vmem:[#allocation10 + $0xc8] sm:$0xff]
    %v7776 = vld [vmem:[#allocation10 + $0xd0] sm:$0xff]
    %v7777 = vld [vmem:[#allocation10 + $0xd8] sm:$0xff]
    %v7778 = vld [vmem:[#allocation10 + $0xe0] sm:$0xff]
    %v7779 = vld [vmem:[#allocation10 + $0xe8] sm:$0xff]
    %v7780 = vld [vmem:[#allocation10 + $0xf0] sm:$0xff]
    %v7781 = vld [vmem:[#allocation10 + $0xf8] sm:$0xff]
    %v7782 = vld [vmem:[#allocation10 + $0x100] sm:$0xff]
    %v7783 = vld [vmem:[#allocation10 + $0x108] sm:$0xff]
    %v7784 = vld [vmem:[#allocation10 + $0x110] sm:$0xff]
    %v7785 = vld [vmem:[#allocation10 + $0x118] sm:$0xff]
    %v7786 = vld [vmem:[#allocation10 + $0x120] sm:$0xff]
    %v7787 = vld [vmem:[#allocation10 + $0x128] sm:$0xff]
    %v7788 = vld [vmem:[#allocation10 + $0x130] sm:$0xff]
    %v7789 = vld [vmem:[#allocation10 + $0x138] sm:$0xff]
    %v7790 = vld [vmem:[#allocation10 + $0x140] sm:$0xff]
    %v7791 = vld [vmem:[#allocation10 + $0x148] sm:$0xff]
    %v7792 = vld [vmem:[#allocation10 + $0x150] sm:$0xff]
    %v7793 = vld [vmem:[#allocation10 + $0x158] sm:$0xff]
    %v7794 = vld [vmem:[#allocation10 + $0x160] sm:$0xff]
    %v7795 = vld [vmem:[#allocation10 + $0x168] sm:$0xff]
    %v7796 = vld [vmem:[#allocation10 + $0x170] sm:$0xff]
    %v7797 = vld [vmem:[#allocation10 + $0x178] sm:$0xff]
    %v7798 = vld [vmem:[#allocation10 + $0x180] sm:$0xff]
    %v7799 = vld [vmem:[#allocation10 + $0x188] sm:$0xff]
    %v7800 = vld [vmem:[#allocation10 + $0x190] sm:$0xff]
    %v7801 = vld [vmem:[#allocation10 + $0x198] sm:$0xff]
    %v7802 = vld [vmem:[#allocation10 + $0x1a0] sm:$0xff]
    %v7803 = vld [vmem:[#allocation10 + $0x1a8] sm:$0xff]
    %v7804 = vld [vmem:[#allocation10 + $0x1b0] sm:$0xff]
    %v7805 = vld [vmem:[#allocation10 + $0x1b8] sm:$0xff]
    %v7806 = vld [vmem:[#allocation10 + $0x1c0] sm:$0xff]
    %v7807 = vld [vmem:[#allocation10 + $0x1c8] sm:$0xff]
    %v7808 = vld [vmem:[#allocation10 + $0x1d0] sm:$0xff]
    %v7809 = vld [vmem:[#allocation10 + $0x1d8] sm:$0xff]
    %v7810 = vld [vmem:[#allocation10 + $0x1e0] sm:$0xff]
    %v7811 = vld [vmem:[#allocation10 + $0x1e8] sm:$0xff]
    %v7812 = vld [vmem:[#allocation10 + $0x1f0] sm:$0xff]
    %v7813 = vld [vmem:[#allocation10 + $0x1f8] sm:$0xff]
    %v7814 = vld [vmem:[#allocation10 + $0x200] sm:$0xff]
    %v7815 = vld [vmem:[#allocation10 + $0x208] sm:$0xff]
    %v7816 = vld [vmem:[#allocation10 + $0x210] sm:$0xff]
    %v7817 = vld [vmem:[#allocation10 + $0x218] sm:$0xff]
    %v7818 = vld [vmem:[#allocation10 + $0x220] sm:$0xff]
    %v7819 = vld [vmem:[#allocation10 + $0x228] sm:$0xff]
    %v7820 = vld [vmem:[#allocation10 + $0x230] sm:$0xff]
    %v7821 = vld [vmem:[#allocation10 + $0x238] sm:$0xff]
    %v7822 = vld [vmem:[#allocation10 + $0x240] sm:$0xff]
    %v7823 = vld [vmem:[#allocation10 + $0x248] sm:$0xff]
    %v7824 = vld [vmem:[#allocation10 + $0x250] sm:$0xff]
    %v7825 = vld [vmem:[#allocation10 + $0x258] sm:$0xff]
    %v7826 = vld [vmem:[#allocation10 + $0x260] sm:$0xff]
    %v7827 = vld [vmem:[#allocation10 + $0x268] sm:$0xff]
    %v7828 = vld [vmem:[#allocation10 + $0x270] sm:$0xff]
    %v7829 = vld [vmem:[#allocation10 + $0x278] sm:$0xff]
    %v7830 = vld [vmem:[#allocation10 + $0x280] sm:$0xff]
    %v7831 = vld [vmem:[#allocation10 + $0x288] sm:$0xff]
    %v7832 = vld [vmem:[#allocation10 + $0x290] sm:$0xff]
    %v7833 = vld [vmem:[#allocation10 + $0x298] sm:$0xff]
    %v7834 = vld [vmem:[#allocation10 + $0x2a0] sm:$0xff]
    %v7835 = vld [vmem:[#allocation10 + $0x2a8] sm:$0xff]
    %v7836 = vld [vmem:[#allocation10 + $0x2b0] sm:$0xff]
    %v7837 = vld [vmem:[#allocation10 + $0x2b8] sm:$0xff]
    %v7838 = vld [vmem:[#allocation10 + $0x2c0] sm:$0xff]
    %v7839 = vld [vmem:[#allocation10 + $0x2c8] sm:$0xff]
    %v7840 = vld [vmem:[#allocation10 + $0x2d0] sm:$0xff]
    %v7841 = vld [vmem:[#allocation10 + $0x2d8] sm:$0xff]
    %v7842 = vld [vmem:[#allocation10 + $0x2e0] sm:$0xff]
    %v7843 = vld [vmem:[#allocation10 + $0x2e8] sm:$0xff]
    %v7844 = vld [vmem:[#allocation10 + $0x2f0] sm:$0xff]
    %v7845 = vld [vmem:[#allocation10 + $0x2f8] sm:$0xff]
    %v7846 = vld [vmem:[#allocation10 + $0x300] sm:$0xff]
    %v7847 = vld [vmem:[#allocation10 + $0x308] sm:$0xff]
    %v7848 = vld [vmem:[#allocation10 + $0x310] sm:$0xff]
    %v7849 = vld [vmem:[#allocation10 + $0x318] sm:$0xff]
    %v7850 = vld [vmem:[#allocation10 + $0x320] sm:$0xff]
    %v7851 = vld [vmem:[#allocation10 + $0x328] sm:$0xff]
    %v7852 = vld [vmem:[#allocation10 + $0x330] sm:$0xff]
    %v7853 = vld [vmem:[#allocation10 + $0x338] sm:$0xff]
    %v7854 = vld [vmem:[#allocation10 + $0x340] sm:$0xff]
    %v7855 = vld [vmem:[#allocation10 + $0x348] sm:$0xff]
    %v7856 = vld [vmem:[#allocation10 + $0x350] sm:$0xff]
    %v7857 = vld [vmem:[#allocation10 + $0x358] sm:$0xff]
    %v7858 = vld [vmem:[#allocation10 + $0x360] sm:$0xff]
    %v7859 = vld [vmem:[#allocation10 + $0x368] sm:$0xff]
    %v7860 = vld [vmem:[#allocation10 + $0x370] sm:$0xff]
    %v7861 = vld [vmem:[#allocation10 + $0x378] sm:$0xff]
    %v7862 = vld [vmem:[#allocation10 + $0x380] sm:$0xff]
    %v7863 = vld [vmem:[#allocation10 + $0x388] sm:$0xff]
    %v7864 = vld [vmem:[#allocation10 + $0x390] sm:$0xff]
    %v7865 = vld [vmem:[#allocation10 + $0x398] sm:$0xff]
    %v7866 = vld [vmem:[#allocation10 + $0x3a0] sm:$0xff]
    %v7867 = vld [vmem:[#allocation10 + $0x3a8] sm:$0xff]
    %v7868 = vld [vmem:[#allocation10 + $0x3b0] sm:$0xff]
    %v7869 = vld [vmem:[#allocation10 + $0x3b8] sm:$0xff]
    %v7870 = vld [vmem:[#allocation10 + $0x3c0] sm:$0xff]
    %v7871 = vld [vmem:[#allocation10 + $0x3c8] sm:$0xff]
    %v7872 = vld [vmem:[#allocation10 + $0x3d0] sm:$0xff]
    %v7873 = vld [vmem:[#allocation10 + $0x3d8] sm:$0xff]
    %v7874 = vld [vmem:[#allocation10 + $0x3e0] sm:$0xff]
    %v7875 = vld [vmem:[#allocation10 + $0x3e8] sm:$0xff]
    %v7876 = vld [vmem:[#allocation10 + $0x3f0] sm:$0xff]
    %v7877 = vld [vmem:[#allocation10 + $0x3f8] sm:$0xff]
    %v7878 = vld [vmem:[#allocation10 + $0x400] sm:$0xff]
    %v7879 = vld [vmem:[#allocation10 + $0x408] sm:$0xff]
    %v7880 = vld [vmem:[#allocation10 + $0x410] sm:$0xff]
    %v7881 = vld [vmem:[#allocation10 + $0x418] sm:$0xff]
    %v7882 = vld [vmem:[#allocation10 + $0x420] sm:$0xff]
    %v7883 = vld [vmem:[#allocation10 + $0x428] sm:$0xff]
    %v7884 = vld [vmem:[#allocation10 + $0x430] sm:$0xff]
    %v7885 = vld [vmem:[#allocation10 + $0x438] sm:$0xff]
    %v7886 = vld [vmem:[#allocation10 + $0x440] sm:$0xff]
    %v7887 = vld [vmem:[#allocation10 + $0x448] sm:$0xff]
    %v7888 = vld [vmem:[#allocation10 + $0x450] sm:$0xff]
    %v7889 = vld [vmem:[#allocation10 + $0x458] sm:$0xff]
    %v7890 = vld [vmem:[#allocation10 + $0x460] sm:$0xff]
    %v7891 = vld [vmem:[#allocation10 + $0x468] sm:$0xff]
    %v7892 = vld [vmem:[#allocation10 + $0x470] sm:$0xff]
    %v7893 = vld [vmem:[#allocation10 + $0x478] sm:$0xff]
    %v7894 = vld [vmem:[#allocation10 + $0x480] sm:$0xff]
    %v7895 = vld [vmem:[#allocation10 + $0x488] sm:$0xff]
    %v7896 = vld [vmem:[#allocation10 + $0x490] sm:$0xff]
    %v7897 = vld [vmem:[#allocation10 + $0x498] sm:$0xff]
    %v7898 = vld [vmem:[#allocation10 + $0x4a0] sm:$0xff]
    %v7899 = vld [vmem:[#allocation10 + $0x4a8] sm:$0xff]
    %v7900 = vld [vmem:[#allocation10 + $0x4b0] sm:$0xff]
    %v7901 = vld [vmem:[#allocation10 + $0x4b8] sm:$0xff]
    %v7902 = vld [vmem:[#allocation10 + $0x4c0] sm:$0xff]
    %v7903 = vld [vmem:[#allocation10 + $0x4c8] sm:$0xff]
    %v7904 = vld [vmem:[#allocation10 + $0x4d0] sm:$0xff]
    %v7905 = vld [vmem:[#allocation10 + $0x4d8] sm:$0xff]
    %v7906 = vld [vmem:[#allocation10 + $0x4e0] sm:$0xff]
    %v7907 = vld [vmem:[#allocation10 + $0x4e8] sm:$0xff]
    %v7908 = vld [vmem:[#allocation10 + $0x4f0] sm:$0xff]
    %v7909 = vld [vmem:[#allocation10 + $0x4f8] sm:$0xff]
    %v7910 = vld [vmem:[#allocation10 + $0x500] sm:$0xff]
    %v7911 = vld [vmem:[#allocation10 + $0x508] sm:$0xff]
    %v7912 = vld [vmem:[#allocation10 + $0x510] sm:$0xff]
    %v7913 = vld [vmem:[#allocation10 + $0x518] sm:$0xff]
    %v7914 = vld [vmem:[#allocation10 + $0x520] sm:$0xff]
    %v7915 = vld [vmem:[#allocation10 + $0x528] sm:$0xff]
    %v7916 = vld [vmem:[#allocation10 + $0x530] sm:$0xff]
    %v7917 = vld [vmem:[#allocation10 + $0x538] sm:$0xff]
    %v7918 = vld [vmem:[#allocation10 + $0x540] sm:$0xff]
    %v7919 = vld [vmem:[#allocation10 + $0x548] sm:$0xff]
    %v7920 = vld [vmem:[#allocation10 + $0x550] sm:$0xff]
    %v7921 = vld [vmem:[#allocation10 + $0x558] sm:$0xff]
    %v7922 = vld [vmem:[#allocation10 + $0x560] sm:$0xff]
    %v7923 = vld [vmem:[#allocation10 + $0x568] sm:$0xff]
    %v7924 = vld [vmem:[#allocation10 + $0x570] sm:$0xff]
    %v7925 = vld [vmem:[#allocation10 + $0x578] sm:$0xff]
    %v7926 = vld [vmem:[#allocation10 + $0x580] sm:$0xff]
    %v7927 = vld [vmem:[#allocation10 + $0x588] sm:$0xff]
    %v7928 = vld [vmem:[#allocation10 + $0x590] sm:$0xff]
    %v7929 = vld [vmem:[#allocation10 + $0x598] sm:$0xff]
    %v7930 = vld [vmem:[#allocation10 + $0x5a0] sm:$0xff]
    %v7931 = vld [vmem:[#allocation10 + $0x5a8] sm:$0xff]
    %v7932 = vld [vmem:[#allocation10 + $0x5b0] sm:$0xff]
    %v7933 = vld [vmem:[#allocation10 + $0x5b8] sm:$0xff]
    %v7934 = vld [vmem:[#allocation10 + $0x5c0] sm:$0xff]
    %v7935 = vld [vmem:[#allocation10 + $0x5c8] sm:$0xff]
    %v7936 = vld [vmem:[#allocation10 + $0x5d0] sm:$0xff]
    %v7937 = vld [vmem:[#allocation10 + $0x5d8] sm:$0xff]
    %v7938 = vld [vmem:[#allocation10 + $0x5e0] sm:$0xff]
    %v7939 = vld [vmem:[#allocation10 + $0x5e8] sm:$0xff]
    %v7940 = vld [vmem:[#allocation10 + $0x5f0] sm:$0xff]
    %v7941 = vld [vmem:[#allocation10 + $0x5f8] sm:$0xff]
    %v7942 = vld [vmem:[#allocation10 + $0x600] sm:$0xff]
    %v7943 = vld [vmem:[#allocation10 + $0x608] sm:$0xff]
    %v7944 = vld [vmem:[#allocation10 + $0x610] sm:$0xff]
    %v7945 = vld [vmem:[#allocation10 + $0x618] sm:$0xff]
    %v7946 = vld [vmem:[#allocation10 + $0x620] sm:$0xff]
    %v7947 = vld [vmem:[#allocation10 + $0x628] sm:$0xff]
    %v7948 = vld [vmem:[#allocation10 + $0x630] sm:$0xff]
    %v7949 = vld [vmem:[#allocation10 + $0x638] sm:$0xff]
    %v7950 = vld [vmem:[#allocation10 + $0x640] sm:$0xff]
    %v7951 = vld [vmem:[#allocation10 + $0x648] sm:$0xff]
    %v7952 = vld [vmem:[#allocation10 + $0x650] sm:$0xff]
    %v7953 = vld [vmem:[#allocation10 + $0x658] sm:$0xff]
    %v7954 = vld [vmem:[#allocation10 + $0x660] sm:$0xff]
    %v7955 = vld [vmem:[#allocation10 + $0x668] sm:$0xff]
    %v7956 = vld [vmem:[#allocation10 + $0x670] sm:$0xff]
    %v7957 = vld [vmem:[#allocation10 + $0x678] sm:$0xff]
    %v7958 = vld [vmem:[#allocation10 + $0x680] sm:$0xff]
    %v7959 = vld [vmem:[#allocation10 + $0x688] sm:$0xff]
    %v7960 = vld [vmem:[#allocation10 + $0x690] sm:$0xff]
    %v7961 = vld [vmem:[#allocation10 + $0x698] sm:$0xff]
    %v7962 = vld [vmem:[#allocation10 + $0x6a0] sm:$0xff]
    %v7963 = vld [vmem:[#allocation10 + $0x6a8] sm:$0xff]
    %v7964 = vld [vmem:[#allocation10 + $0x6b0] sm:$0xff]
    %v7965 = vld [vmem:[#allocation10 + $0x6b8] sm:$0xff]
    %v7966 = vld [vmem:[#allocation10 + $0x6c0] sm:$0xff]
    %v7967 = vld [vmem:[#allocation10 + $0x6c8] sm:$0xff]
    %v7968 = vld [vmem:[#allocation10 + $0x6d0] sm:$0xff]
    %v7969 = vld [vmem:[#allocation10 + $0x6d8] sm:$0xff]
    %v7970 = vld [vmem:[#allocation10 + $0x6e0] sm:$0xff]
    %v7971 = vld [vmem:[#allocation10 + $0x6e8] sm:$0xff]
    %v7972 = vld [vmem:[#allocation10 + $0x6f0] sm:$0xff]
    %v7973 = vld [vmem:[#allocation10 + $0x6f8] sm:$0xff]
    %v7974 = vld [vmem:[#allocation10 + $0x700] sm:$0xff]
    %v7975 = vld [vmem:[#allocation10 + $0x708] sm:$0xff]
    %v7976 = vld [vmem:[#allocation10 + $0x710] sm:$0xff]
    %v7977 = vld [vmem:[#allocation10 + $0x718] sm:$0xff]
    %v7978 = vld [vmem:[#allocation10 + $0x720] sm:$0xff]
    %v7979 = vld [vmem:[#allocation10 + $0x728] sm:$0xff]
    %v7980 = vld [vmem:[#allocation10 + $0x730] sm:$0xff]
    %v7981 = vld [vmem:[#allocation10 + $0x738] sm:$0xff]
    %v7982 = vld [vmem:[#allocation10 + $0x740] sm:$0xff]
    %v7983 = vld [vmem:[#allocation10 + $0x748] sm:$0xff]
    %v7984 = vld [vmem:[#allocation10 + $0x750] sm:$0xff]
    %v7985 = vld [vmem:[#allocation10 + $0x758] sm:$0xff]
    %v7986 = vld [vmem:[#allocation10 + $0x760] sm:$0xff]
    %v7987 = vld [vmem:[#allocation10 + $0x768] sm:$0xff]
    %v7988 = vld [vmem:[#allocation10 + $0x770] sm:$0xff]
    %v7989 = vld [vmem:[#allocation10 + $0x778] sm:$0xff]
    %v7990 = vld [vmem:[#allocation10 + $0x780] sm:$0xff]
    %v7991 = vld [vmem:[#allocation10 + $0x788] sm:$0xff]
    %v7992 = vld [vmem:[#allocation10 + $0x790] sm:$0xff]
    %v7993 = vld [vmem:[#allocation10 + $0x798] sm:$0xff]
    %v7994 = vld [vmem:[#allocation10 + $0x7a0] sm:$0xff]
    %v7995 = vld [vmem:[#allocation10 + $0x7a8] sm:$0xff]
    %v7996 = vld [vmem:[#allocation10 + $0x7b0] sm:$0xff]
    %v7997 = vld [vmem:[#allocation10 + $0x7b8] sm:$0xff]
    %v7998 = vld [vmem:[#allocation10 + $0x7c0] sm:$0xff]
    %v7999 = vld [vmem:[#allocation10 + $0x7c8] sm:$0xff]
    %v8000 = vld [vmem:[#allocation10 + $0x7d0] sm:$0xff]
    %v8001 = vld [vmem:[#allocation10 + $0x7d8] sm:$0xff]
    %v8002 = vld [vmem:[#allocation10 + $0x7e0] sm:$0xff]
    %v8003 = vld [vmem:[#allocation10 + $0x7e8] sm:$0xff]
    %v8004 = vld [vmem:[#allocation10 + $0x7f0] sm:$0xff]
    %v8005 = vld [vmem:[#allocation10 + $0x7f8] sm:$0xff]
    %v8006 = vld [vmem:[#allocation10 + $0x800] sm:$0xff]
    %v8007 = vld [vmem:[#allocation10 + $0x808] sm:$0xff]
    %v8008 = vld [vmem:[#allocation10 + $0x810] sm:$0xff]
    %v8009 = vld [vmem:[#allocation10 + $0x818] sm:$0xff]
    %v8010 = vld [vmem:[#allocation10 + $0x820] sm:$0xff]
    %v8011 = vld [vmem:[#allocation10 + $0x828] sm:$0xff]
    %v8012 = vld [vmem:[#allocation10 + $0x830] sm:$0xff]
    %v8013 = vld [vmem:[#allocation10 + $0x838] sm:$0xff]
    %v8014 = vld [vmem:[#allocation10 + $0x840] sm:$0xff]
    %v8015 = vld [vmem:[#allocation10 + $0x848] sm:$0xff]
    %v8016 = vld [vmem:[#allocation10 + $0x850] sm:$0xff]
    %v8017 = vld [vmem:[#allocation10 + $0x858] sm:$0xff]
    %v8018 = vld [vmem:[#allocation10 + $0x860] sm:$0xff]
    %v8019 = vld [vmem:[#allocation10 + $0x868] sm:$0xff]
    %v8020 = vld [vmem:[#allocation10 + $0x870] sm:$0xff]
    %v8021 = vld [vmem:[#allocation10 + $0x878] sm:$0xff]
    %v8022 = vld [vmem:[#allocation10 + $0x880] sm:$0xff]
    %v8023 = vld [vmem:[#allocation10 + $0x888] sm:$0xff]
    %v8024 = vld [vmem:[#allocation10 + $0x890] sm:$0xff]
    %v8025 = vld [vmem:[#allocation10 + $0x898] sm:$0xff]
    %v8026 = vld [vmem:[#allocation10 + $0x8a0] sm:$0xff]
    %v8027 = vld [vmem:[#allocation10 + $0x8a8] sm:$0xff]
    %v8028 = vld [vmem:[#allocation10 + $0x8b0] sm:$0xff]
    %v8029 = vld [vmem:[#allocation10 + $0x8b8] sm:$0xff]
    %v8030 = vld [vmem:[#allocation10 + $0x8c0] sm:$0xff]
    %v8031 = vld [vmem:[#allocation10 + $0x8c8] sm:$0xff]
    %v8032 = vld [vmem:[#allocation10 + $0x8d0] sm:$0xff]
    %v8033 = vld [vmem:[#allocation10 + $0x8d8] sm:$0xff]
    %v8034 = vld [vmem:[#allocation10 + $0x8e0] sm:$0xff]
    %v8035 = vld [vmem:[#allocation10 + $0x8e8] sm:$0xff]
    %v8036 = vld [vmem:[#allocation10 + $0x8f0] sm:$0xff]
    %v8037 = vld [vmem:[#allocation10 + $0x8f8] sm:$0xff]
    %v8038 = vld [vmem:[#allocation10 + $0x900] sm:$0xff]
    %v8039 = vld [vmem:[#allocation10 + $0x908] sm:$0xff]
    %v8040 = vld [vmem:[#allocation10 + $0x910] sm:$0xff]
    %v8041 = vld [vmem:[#allocation10 + $0x918] sm:$0xff]
    %v8042 = vld [vmem:[#allocation10 + $0x920] sm:$0xff]
    %v8043 = vld [vmem:[#allocation10 + $0x928] sm:$0xff]
    %v8044 = vld [vmem:[#allocation10 + $0x930] sm:$0xff]
    %v8045 = vld [vmem:[#allocation10 + $0x938] sm:$0xff]
    %v8046 = vld [vmem:[#allocation10 + $0x940] sm:$0xff]
    %v8047 = vld [vmem:[#allocation10 + $0x948] sm:$0xff]
    %v8048 = vld [vmem:[#allocation10 + $0x950] sm:$0xff]
    %v8049 = vld [vmem:[#allocation10 + $0x958] sm:$0xff]
    %v8050 = vld [vmem:[#allocation10 + $0x960] sm:$0xff]
    %v8051 = vld [vmem:[#allocation10 + $0x968] sm:$0xff]
    %v8052 = vld [vmem:[#allocation10 + $0x970] sm:$0xff]
    %v8053 = vld [vmem:[#allocation10 + $0x978] sm:$0xff]
    %v8054 = vld [vmem:[#allocation10 + $0x980] sm:$0xff]
    %v8055 = vld [vmem:[#allocation10 + $0x988] sm:$0xff]
    %v8056 = vld [vmem:[#allocation10 + $0x990] sm:$0xff]
    %v8057 = vld [vmem:[#allocation10 + $0x998] sm:$0xff]
    %v8058 = vld [vmem:[#allocation10 + $0x9a0] sm:$0xff]
    %v8059 = vld [vmem:[#allocation10 + $0x9a8] sm:$0xff]
    %v8060 = vld [vmem:[#allocation10 + $0x9b0] sm:$0xff]
    %v8061 = vld [vmem:[#allocation10 + $0x9b8] sm:$0xff]
    %v8062 = vld [vmem:[#allocation10 + $0x9c0] sm:$0xff]
    %v8063 = vld [vmem:[#allocation10 + $0x9c8] sm:$0xff]
    %v8064 = vld [vmem:[#allocation10 + $0x9d0] sm:$0xff]
    %v8065 = vld [vmem:[#allocation10 + $0x9d8] sm:$0xff]
    %v8066 = vld [vmem:[#allocation10 + $0x9e0] sm:$0xff]
    %v8067 = vld [vmem:[#allocation10 + $0x9e8] sm:$0xff]
    %v8068 = vld [vmem:[#allocation10 + $0x9f0] sm:$0xff]
    %v8069 = vld [vmem:[#allocation10 + $0x9f8] sm:$0xff]
    %v8070 = vld [vmem:[#allocation10 + $0xa00] sm:$0xff]
    %v8071 = vld [vmem:[#allocation10 + $0xa08] sm:$0xff]
    %v8072 = vld [vmem:[#allocation10 + $0xa10] sm:$0xff]
    %v8073 = vld [vmem:[#allocation10 + $0xa18] sm:$0xff]
    %v8074 = vld [vmem:[#allocation10 + $0xa20] sm:$0xff]
    %v8075 = vld [vmem:[#allocation10 + $0xa28] sm:$0xff]
    %v8076 = vld [vmem:[#allocation10 + $0xa30] sm:$0xff]
    %v8077 = vld [vmem:[#allocation10 + $0xa38] sm:$0xff]
    %v8078 = vld [vmem:[#allocation10 + $0xa40] sm:$0xff]
    %v8079 = vld [vmem:[#allocation10 + $0xa48] sm:$0xff]
    %v8080 = vld [vmem:[#allocation10 + $0xa50] sm:$0xff]
    %v8081 = vld [vmem:[#allocation10 + $0xa58] sm:$0xff]
    %v8082 = vld [vmem:[#allocation10 + $0xa60] sm:$0xff]
    %v8083 = vld [vmem:[#allocation10 + $0xa68] sm:$0xff]
    %v8084 = vld [vmem:[#allocation10 + $0xa70] sm:$0xff]
    %v8085 = vld [vmem:[#allocation10 + $0xa78] sm:$0xff]
    %v8086 = vld [vmem:[#allocation10 + $0xa80] sm:$0xff]
    %v8087 = vld [vmem:[#allocation10 + $0xa88] sm:$0xff]
    %v8088 = vld [vmem:[#allocation10 + $0xa90] sm:$0xff]
    %v8089 = vld [vmem:[#allocation10 + $0xa98] sm:$0xff]
    %v8090 = vld [vmem:[#allocation10 + $0xaa0] sm:$0xff]
    %v8091 = vld [vmem:[#allocation10 + $0xaa8] sm:$0xff]
    %v8092 = vld [vmem:[#allocation10 + $0xab0] sm:$0xff]
    %v8093 = vld [vmem:[#allocation10 + $0xab8] sm:$0xff]
    %v8094 = vld [vmem:[#allocation10 + $0xac0] sm:$0xff]
    %v8095 = vld [vmem:[#allocation10 + $0xac8] sm:$0xff]
    %v8096 = vld [vmem:[#allocation10 + $0xad0] sm:$0xff]
    %v8097 = vld [vmem:[#allocation10 + $0xad8] sm:$0xff]
    %v8098 = vld [vmem:[#allocation10 + $0xae0] sm:$0xff]
    %v8099 = vld [vmem:[#allocation10 + $0xae8] sm:$0xff]
    %v8100 = vld [vmem:[#allocation10 + $0xaf0] sm:$0xff]
    %v8101 = vld [vmem:[#allocation10 + $0xaf8] sm:$0xff]
    %v8102 = vld [vmem:[#allocation10 + $0xb00] sm:$0xff]
    %v8103 = vld [vmem:[#allocation10 + $0xb08] sm:$0xff]
    %v8104 = vld [vmem:[#allocation10 + $0xb10] sm:$0xff]
    %v8105 = vld [vmem:[#allocation10 + $0xb18] sm:$0xff]
    %v8106 = vld [vmem:[#allocation10 + $0xb20] sm:$0xff]
    %v8107 = vld [vmem:[#allocation10 + $0xb28] sm:$0xff]
    %v8108 = vld [vmem:[#allocation10 + $0xb30] sm:$0xff]
    %v8109 = vld [vmem:[#allocation10 + $0xb38] sm:$0xff]
    %v8110 = vld [vmem:[#allocation10 + $0xb40] sm:$0xff]
    %v8111 = vld [vmem:[#allocation10 + $0xb48] sm:$0xff]
    %v8112 = vld [vmem:[#allocation10 + $0xb50] sm:$0xff]
    %v8113 = vld [vmem:[#allocation10 + $0xb58] sm:$0xff]
    %v8114 = vld [vmem:[#allocation10 + $0xb60] sm:$0xff]
    %v8115 = vld [vmem:[#allocation10 + $0xb68] sm:$0xff]
    %v8116 = vld [vmem:[#allocation10 + $0xb70] sm:$0xff]
    %v8117 = vld [vmem:[#allocation10 + $0xb78] sm:$0xff]
    %v8118 = vld [vmem:[#allocation10 + $0xb80] sm:$0xff]
    %v8119 = vld [vmem:[#allocation10 + $0xb88] sm:$0xff]
    %v8120 = vld [vmem:[#allocation10 + $0xb90] sm:$0xff]
    %v8121 = vld [vmem:[#allocation10 + $0xb98] sm:$0xff]
    %v8122 = vld [vmem:[#allocation10 + $0xba0] sm:$0xff]
    %v8123 = vld [vmem:[#allocation10 + $0xba8] sm:$0xff]
    %v8124 = vld [vmem:[#allocation10 + $0xbb0] sm:$0xff]
    %v8125 = vld [vmem:[#allocation10 + $0xbb8] sm:$0xff]
    %v8126 = vld [vmem:[#allocation10 + $0xbc0] sm:$0xff]
    %v8127 = vld [vmem:[#allocation10 + $0xbc8] sm:$0xff]
    %v8128 = vld [vmem:[#allocation10 + $0xbd0] sm:$0xff]
    %v8129 = vld [vmem:[#allocation10 + $0xbd8] sm:$0xff]
    %v8130 = vld [vmem:[#allocation10 + $0xbe0] sm:$0xff]
    %v8131 = vld [vmem:[#allocation10 + $0xbe8] sm:$0xff]
    %v8132 = vld [vmem:[#allocation10 + $0xbf0] sm:$0xff]
    %v8133 = vld [vmem:[#allocation10 + $0xbf8] sm:$0xff]
    %v8134 = vld [vmem:[#allocation10 + $0xc00] sm:$0xff]
    %v8135 = vld [vmem:[#allocation10 + $0xc08] sm:$0xff]
    %v8136 = vld [vmem:[#allocation10 + $0xc10] sm:$0xff]
    %v8137 = vld [vmem:[#allocation10 + $0xc18] sm:$0xff]
    %v8138 = vld [vmem:[#allocation10 + $0xc20] sm:$0xff]
    %v8139 = vld [vmem:[#allocation10 + $0xc28] sm:$0xff]
    %v8140 = vld [vmem:[#allocation10 + $0xc30] sm:$0xff]
    %v8141 = vld [vmem:[#allocation10 + $0xc38] sm:$0xff]
    %v8142 = vld [vmem:[#allocation10 + $0xc40] sm:$0xff]
    %v8143 = vld [vmem:[#allocation10 + $0xc48] sm:$0xff]
    %v8144 = vld [vmem:[#allocation10 + $0xc50] sm:$0xff]
    %v8145 = vld [vmem:[#allocation10 + $0xc58] sm:$0xff]
    %v8146 = vld [vmem:[#allocation10 + $0xc60] sm:$0xff]
    %v8147 = vld [vmem:[#allocation10 + $0xc68] sm:$0xff]
    %v8148 = vld [vmem:[#allocation10 + $0xc70] sm:$0xff]
    %v8149 = vld [vmem:[#allocation10 + $0xc78] sm:$0xff]
    %v8150 = vld [vmem:[#allocation10 + $0xc80] sm:$0xff]
    %v8151 = vld [vmem:[#allocation10 + $0xc88] sm:$0xff]
    %v8152 = vld [vmem:[#allocation10 + $0xc90] sm:$0xff]
    %v8153 = vld [vmem:[#allocation10 + $0xc98] sm:$0xff]
    %v8154 = vld [vmem:[#allocation10 + $0xca0] sm:$0xff]
    %v8155 = vld [vmem:[#allocation10 + $0xca8] sm:$0xff]
    %v8156 = vld [vmem:[#allocation10 + $0xcb0] sm:$0xff]
    %v8157 = vld [vmem:[#allocation10 + $0xcb8] sm:$0xff]
    %v8158 = vld [vmem:[#allocation10 + $0xcc0] sm:$0xff]
    %v8159 = vld [vmem:[#allocation10 + $0xcc8] sm:$0xff]
    %v8160 = vld [vmem:[#allocation10 + $0xcd0] sm:$0xff]
    %v8161 = vld [vmem:[#allocation10 + $0xcd8] sm:$0xff]
    %v8162 = vld [vmem:[#allocation10 + $0xce0] sm:$0xff]
    %v8163 = vld [vmem:[#allocation10 + $0xce8] sm:$0xff]
    %v8164 = vld [vmem:[#allocation10 + $0xcf0] sm:$0xff]
    %v8165 = vld [vmem:[#allocation10 + $0xcf8] sm:$0xff]
    %v8166 = vld [vmem:[#allocation10 + $0xd00] sm:$0xff]
    %v8167 = vld [vmem:[#allocation10 + $0xd08] sm:$0xff]
    %v8168 = vld [vmem:[#allocation10 + $0xd10] sm:$0xff]
    %v8169 = vld [vmem:[#allocation10 + $0xd18] sm:$0xff]
    %v8170 = vld [vmem:[#allocation10 + $0xd20] sm:$0xff]
    %v8171 = vld [vmem:[#allocation10 + $0xd28] sm:$0xff]
    %v8172 = vld [vmem:[#allocation10 + $0xd30] sm:$0xff]
    %v8173 = vld [vmem:[#allocation10 + $0xd38] sm:$0xff]
    %v8174 = vld [vmem:[#allocation10 + $0xd40] sm:$0xff]
    %v8175 = vld [vmem:[#allocation10 + $0xd48] sm:$0xff]
    %v8176 = vld [vmem:[#allocation10 + $0xd50] sm:$0xff]
    %v8177 = vld [vmem:[#allocation10 + $0xd58] sm:$0xff]
    %v8178 = vld [vmem:[#allocation10 + $0xd60] sm:$0xff]
    %v8179 = vld [vmem:[#allocation10 + $0xd68] sm:$0xff]
    %v8180 = vld [vmem:[#allocation10 + $0xd70] sm:$0xff]
    %v8181 = vld [vmem:[#allocation10 + $0xd78] sm:$0xff]
    %v8182 = vld [vmem:[#allocation10 + $0xd80] sm:$0xff]
    %v8183 = vld [vmem:[#allocation10 + $0xd88] sm:$0xff]
    %v8184 = vld [vmem:[#allocation10 + $0xd90] sm:$0xff]
    %v8185 = vld [vmem:[#allocation10 + $0xd98] sm:$0xff]
    %v8186 = vld [vmem:[#allocation10 + $0xda0] sm:$0xff]
    %v8187 = vld [vmem:[#allocation10 + $0xda8] sm:$0xff]
    %v8188 = vld [vmem:[#allocation10 + $0xdb0] sm:$0xff]
    %v8189 = vld [vmem:[#allocation10 + $0xdb8] sm:$0xff]
    %v8190 = vld [vmem:[#allocation10 + $0xdc0] sm:$0xff]
    %v8191 = vld [vmem:[#allocation10 + $0xdc8] sm:$0xff]
    %v8192 = vld [vmem:[#allocation10 + $0xdd0] sm:$0xff]
    %v8193 = vld [vmem:[#allocation10 + $0xdd8] sm:$0xff]
    %v8194 = vld [vmem:[#allocation10 + $0xde0] sm:$0xff]
    %v8195 = vld [vmem:[#allocation10 + $0xde8] sm:$0xff]
    %v8196 = vld [vmem:[#allocation10 + $0xdf0] sm:$0xff]
    %v8197 = vld [vmem:[#allocation10 + $0xdf8] sm:$0xff]
    %v8198 = vld [vmem:[#allocation10 + $0xe00] sm:$0xff]
    %v8199 = vld [vmem:[#allocation10 + $0xe08] sm:$0xff]
    %v8200 = vld [vmem:[#allocation10 + $0xe10] sm:$0xff]
    %v8201 = vld [vmem:[#allocation10 + $0xe18] sm:$0xff]
    %v8202 = vld [vmem:[#allocation10 + $0xe20] sm:$0xff]
    %v8203 = vld [vmem:[#allocation10 + $0xe28] sm:$0xff]
    %v8204 = vld [vmem:[#allocation10 + $0xe30] sm:$0xff]
    %v8205 = vld [vmem:[#allocation10 + $0xe38] sm:$0xff]
    %v8206 = vld [vmem:[#allocation10 + $0xe40] sm:$0xff]
    %v8207 = vld [vmem:[#allocation10 + $0xe48] sm:$0xff]
    %v8208 = vld [vmem:[#allocation10 + $0xe50] sm:$0xff]
    %v8209 = vld [vmem:[#allocation10 + $0xe58] sm:$0xff]
    %v8210 = vld [vmem:[#allocation10 + $0xe60] sm:$0xff]
    %v8211 = vld [vmem:[#allocation10 + $0xe68] sm:$0xff]
    %v8212 = vld [vmem:[#allocation10 + $0xe70] sm:$0xff]
    %v8213 = vld [vmem:[#allocation10 + $0xe78] sm:$0xff]
    %v8214 = vld [vmem:[#allocation10 + $0xe80] sm:$0xff]
    %v8215 = vld [vmem:[#allocation10 + $0xe88] sm:$0xff]
    %v8216 = vld [vmem:[#allocation10 + $0xe90] sm:$0xff]
    %v8217 = vld [vmem:[#allocation10 + $0xe98] sm:$0xff]
    %v8218 = vld [vmem:[#allocation10 + $0xea0] sm:$0xff]
    %v8219 = vld [vmem:[#allocation10 + $0xea8] sm:$0xff]
    %v8220 = vld [vmem:[#allocation10 + $0xeb0] sm:$0xff]
    %v8221 = vld [vmem:[#allocation10 + $0xeb8] sm:$0xff]
    %v8222 = vld [vmem:[#allocation10 + $0xec0] sm:$0xff]
    %v8223 = vld [vmem:[#allocation10 + $0xec8] sm:$0xff]
    %v8224 = vld [vmem:[#allocation10 + $0xed0] sm:$0xff]
    %v8225 = vld [vmem:[#allocation10 + $0xed8] sm:$0xff]
    %v8226 = vld [vmem:[#allocation10 + $0xee0] sm:$0xff]
    %v8227 = vld [vmem:[#allocation10 + $0xee8] sm:$0xff]
    %v8228 = vld [vmem:[#allocation10 + $0xef0] sm:$0xff]
    %v8229 = vld [vmem:[#allocation10 + $0xef8] sm:$0xff]
    %v8230 = vld [vmem:[#allocation10 + $0xf00] sm:$0xff]
    %v8231 = vld [vmem:[#allocation10 + $0xf08] sm:$0xff]
    %v8232 = vld [vmem:[#allocation10 + $0xf10] sm:$0xff]
    %v8233 = vld [vmem:[#allocation10 + $0xf18] sm:$0xff]
    %v8234 = vld [vmem:[#allocation10 + $0xf20] sm:$0xff]
    %v8235 = vld [vmem:[#allocation10 + $0xf28] sm:$0xff]
    %v8236 = vld [vmem:[#allocation10 + $0xf30] sm:$0xff]
    %v8237 = vld [vmem:[#allocation10 + $0xf38] sm:$0xff]
    %v8238 = vld [vmem:[#allocation10 + $0xf40] sm:$0xff]
    %v8239 = vld [vmem:[#allocation10 + $0xf48] sm:$0xff]
    %v8240 = vld [vmem:[#allocation10 + $0xf50] sm:$0xff]
    %v8241 = vld [vmem:[#allocation10 + $0xf58] sm:$0xff]
    %v8242 = vld [vmem:[#allocation10 + $0xf60] sm:$0xff]
    %v8243 = vld [vmem:[#allocation10 + $0xf68] sm:$0xff]
    %v8244 = vld [vmem:[#allocation10 + $0xf70] sm:$0xff]
    %v8245 = vld [vmem:[#allocation10 + $0xf78] sm:$0xff]
    %v8246 = vld [vmem:[#allocation10 + $0xf80] sm:$0xff]
    %v8247 = vld [vmem:[#allocation10 + $0xf88] sm:$0xff]
    %v8248 = vld [vmem:[#allocation10 + $0xf90] sm:$0xff]
    %v8249 = vld [vmem:[#allocation10 + $0xf98] sm:$0xff]
    %v8250 = vld [vmem:[#allocation10 + $0xfa0] sm:$0xff]
    %v8251 = vld [vmem:[#allocation10 + $0xfa8] sm:$0xff]
    %v8252 = vld [vmem:[#allocation10 + $0xfb0] sm:$0xff]
    %v8253 = vld [vmem:[#allocation10 + $0xfb8] sm:$0xff]
    %v8254 = vld [vmem:[#allocation10 + $0xfc0] sm:$0xff]
    %v8255 = vld [vmem:[#allocation10 + $0xfc8] sm:$0xff]
    %v8256 = vld [vmem:[#allocation10 + $0xfd0] sm:$0xff]
    %v8257 = vld [vmem:[#allocation10 + $0xfd8] sm:$0xff]
    %v8258 = vld [vmem:[#allocation10 + $0xfe0] sm:$0xff]
    %v8259 = vld [vmem:[#allocation10 + $0xfe8] sm:$0xff]
    %v8260 = vld [vmem:[#allocation10 + $0xff0] sm:$0xff]
    %v8261 = vld [vmem:[#allocation10 + $0xff8] sm:$0xff]
    %v8262 = vld [vmem:[#allocation11] sm:$0xff]
    %v8264 = vlaneseq
    %v8265 = vshrl.u32 %v8264, 7
    %v8266 = vsub.s32 0, %v8265
    %v8267 = vrot.slane %v8262, %v8266
    %v8268 = vlaneseq
    %v8269 = vshrl.u32 %v8268, 7
    %v8270 = vsub.s32 1, %v8269
    %v8271 = vrot.slane %v8262, %v8270
    %v8272 = vlaneseq
    %v8273 = vshrl.u32 %v8272, 7
    %v8274 = vsub.s32 2, %v8273
    %v8275 = vrot.slane %v8262, %v8274
    %v8276 = vlaneseq
    %v8277 = vshrl.u32 %v8276, 7
    %v8278 = vsub.s32 3, %v8277
    %v8279 = vrot.slane %v8262, %v8278
    %v8280 = vlaneseq
    %v8281 = vshrl.u32 %v8280, 7
    %v8282 = vsub.s32 4, %v8281
    %v8283 = vrot.slane %v8262, %v8282
    %v8284 = vlaneseq
    %v8285 = vshrl.u32 %v8284, 7
    %v8286 = vsub.s32 5, %v8285
    %v8287 = vrot.slane %v8262, %v8286
    %v8288 = vlaneseq
    %v8289 = vshrl.u32 %v8288, 7
    %v8290 = vsub.s32 6, %v8289
    %v8291 = vrot.slane %v8262, %v8290
    %v8292 = vlaneseq
    %v8293 = vshrl.u32 %v8292, 7
    %v8294 = vsub.s32 7, %v8293
    %v8295 = vrot.slane %v8262, %v8294
    %v8816 = vunpack.c.l.b16 %v7750
    %v8817 = vunpack.c.h.b16 %v7750
    %v8818 = vunpack.c.l.b16 %v7751
    %v8819 = vunpack.c.h.b16 %v7751
    %v8820 = vunpack.c.l.b16 %v7752
    %v8821 = vunpack.c.h.b16 %v7752
    %v8822 = vunpack.c.l.b16 %v7753
    %v8823 = vunpack.c.h.b16 %v7753
    %v8824 = vunpack.c.l.b16 %v7754
    %v8825 = vunpack.c.h.b16 %v7754
    %v8826 = vunpack.c.l.b16 %v7755
    %v8827 = vunpack.c.h.b16 %v7755
    %v8828 = vunpack.c.l.b16 %v7756
    %v8829 = vunpack.c.h.b16 %v7756
    %v8830 = vunpack.c.l.b16 %v7757
    %v8831 = vunpack.c.h.b16 %v7757
    %v8832 = vunpack.c.l.b16 %v7758
    %v8833 = vunpack.c.h.b16 %v7758
    %v8834 = vunpack.c.l.b16 %v7759
    %v8835 = vunpack.c.h.b16 %v7759
    %v8836 = vunpack.c.l.b16 %v7760
    %v8837 = vunpack.c.h.b16 %v7760
    %v8838 = vunpack.c.l.b16 %v7761
    %v8839 = vunpack.c.h.b16 %v7761
    %v8840 = vunpack.c.l.b16 %v7762
    %v8841 = vunpack.c.h.b16 %v7762
    %v8842 = vunpack.c.l.b16 %v7763
    %v8843 = vunpack.c.h.b16 %v7763
    %v8844 = vunpack.c.l.b16 %v7764
    %v8845 = vunpack.c.h.b16 %v7764
    %v8846 = vunpack.c.l.b16 %v7765
    %v8847 = vunpack.c.h.b16 %v7765
    %v8848 = vunpack.c.l.b16 %v7766
    %v8849 = vunpack.c.h.b16 %v7766
    %v8850 = vunpack.c.l.b16 %v7767
    %v8851 = vunpack.c.h.b16 %v7767
    %v8852 = vunpack.c.l.b16 %v7768
    %v8853 = vunpack.c.h.b16 %v7768
    %v8854 = vunpack.c.l.b16 %v7769
    %v8855 = vunpack.c.h.b16 %v7769
    %v8856 = vunpack.c.l.b16 %v7770
    %v8857 = vunpack.c.h.b16 %v7770
    %v8858 = vunpack.c.l.b16 %v7771
    %v8859 = vunpack.c.h.b16 %v7771
    %v8860 = vunpack.c.l.b16 %v7772
    %v8861 = vunpack.c.h.b16 %v7772
    %v8862 = vunpack.c.l.b16 %v7773
    %v8863 = vunpack.c.h.b16 %v7773
    %v8864 = vunpack.c.l.b16 %v7774
    %v8865 = vunpack.c.h.b16 %v7774
    %v8866 = vunpack.c.l.b16 %v7775
    %v8867 = vunpack.c.h.b16 %v7775
    %v8868 = vunpack.c.l.b16 %v7776
    %v8869 = vunpack.c.h.b16 %v7776
    %v8870 = vunpack.c.l.b16 %v7777
    %v8871 = vunpack.c.h.b16 %v7777
    %v8872 = vunpack.c.l.b16 %v7778
    %v8873 = vunpack.c.h.b16 %v7778
    %v8874 = vunpack.c.l.b16 %v7779
    %v8875 = vunpack.c.h.b16 %v7779
    %v8876 = vunpack.c.l.b16 %v7780
    %v8877 = vunpack.c.h.b16 %v7780
    %v8878 = vunpack.c.l.b16 %v7781
    %v8879 = vunpack.c.h.b16 %v7781
    %v8880 = vunpack.c.l.b16 %v7782
    %v8881 = vunpack.c.h.b16 %v7782
    %v8882 = vunpack.c.l.b16 %v7783
    %v8883 = vunpack.c.h.b16 %v7783
    %v8884 = vunpack.c.l.b16 %v7784
    %v8885 = vunpack.c.h.b16 %v7784
    %v8886 = vunpack.c.l.b16 %v7785
    %v8887 = vunpack.c.h.b16 %v7785
    %v8888 = vunpack.c.l.b16 %v7786
    %v8889 = vunpack.c.h.b16 %v7786
    %v8890 = vunpack.c.l.b16 %v7787
    %v8891 = vunpack.c.h.b16 %v7787
    %v8892 = vunpack.c.l.b16 %v7788
    %v8893 = vunpack.c.h.b16 %v7788
    %v8894 = vunpack.c.l.b16 %v7789
    %v8895 = vunpack.c.h.b16 %v7789
    %v8896 = vunpack.c.l.b16 %v7790
    %v8897 = vunpack.c.h.b16 %v7790
    %v8898 = vunpack.c.l.b16 %v7791
    %v8899 = vunpack.c.h.b16 %v7791
    %v8900 = vunpack.c.l.b16 %v7792
    %v8901 = vunpack.c.h.b16 %v7792
    %v8902 = vunpack.c.l.b16 %v7793
    %v8903 = vunpack.c.h.b16 %v7793
    %v8904 = vunpack.c.l.b16 %v7794
    %v8905 = vunpack.c.h.b16 %v7794
    %v8906 = vunpack.c.l.b16 %v7795
    %v8907 = vunpack.c.h.b16 %v7795
    %v8908 = vunpack.c.l.b16 %v7796
    %v8909 = vunpack.c.h.b16 %v7796
    %v8910 = vunpack.c.l.b16 %v7797
    %v8911 = vunpack.c.h.b16 %v7797
    %v8912 = vunpack.c.l.b16 %v7798
    %v8913 = vunpack.c.h.b16 %v7798
    %v8914 = vunpack.c.l.b16 %v7799
    %v8915 = vunpack.c.h.b16 %v7799
    %v8916 = vunpack.c.l.b16 %v7800
    %v8917 = vunpack.c.h.b16 %v7800
    %v8918 = vunpack.c.l.b16 %v7801
    %v8919 = vunpack.c.h.b16 %v7801
    %v8920 = vunpack.c.l.b16 %v7802
    %v8921 = vunpack.c.h.b16 %v7802
    %v8922 = vunpack.c.l.b16 %v7803
    %v8923 = vunpack.c.h.b16 %v7803
    %v8924 = vunpack.c.l.b16 %v7804
    %v8925 = vunpack.c.h.b16 %v7804
    %v8926 = vunpack.c.l.b16 %v7805
    %v8927 = vunpack.c.h.b16 %v7805
    %v8928 = vunpack.c.l.b16 %v7806
    %v8929 = vunpack.c.h.b16 %v7806
    %v8930 = vunpack.c.l.b16 %v7807
    %v8931 = vunpack.c.h.b16 %v7807
    %v8932 = vunpack.c.l.b16 %v7808
    %v8933 = vunpack.c.h.b16 %v7808
    %v8934 = vunpack.c.l.b16 %v7809
    %v8935 = vunpack.c.h.b16 %v7809
    %v8936 = vunpack.c.l.b16 %v7810
    %v8937 = vunpack.c.h.b16 %v7810
    %v8938 = vunpack.c.l.b16 %v7811
    %v8939 = vunpack.c.h.b16 %v7811
    %v8940 = vunpack.c.l.b16 %v7812
    %v8941 = vunpack.c.h.b16 %v7812
    %v8942 = vunpack.c.l.b16 %v7813
    %v8943 = vunpack.c.h.b16 %v7813
    %v8944 = vunpack.c.l.b16 %v7814
    %v8945 = vunpack.c.h.b16 %v7814
    %v8946 = vunpack.c.l.b16 %v7815
    %v8947 = vunpack.c.h.b16 %v7815
    %v8948 = vunpack.c.l.b16 %v7816
    %v8949 = vunpack.c.h.b16 %v7816
    %v8950 = vunpack.c.l.b16 %v7817
    %v8951 = vunpack.c.h.b16 %v7817
    %v8952 = vunpack.c.l.b16 %v7818
    %v8953 = vunpack.c.h.b16 %v7818
    %v8954 = vunpack.c.l.b16 %v7819
    %v8955 = vunpack.c.h.b16 %v7819
    %v8956 = vunpack.c.l.b16 %v7820
    %v8957 = vunpack.c.h.b16 %v7820
    %v8958 = vunpack.c.l.b16 %v7821
    %v8959 = vunpack.c.h.b16 %v7821
    %v8960 = vunpack.c.l.b16 %v7822
    %v8961 = vunpack.c.h.b16 %v7822
    %v8962 = vunpack.c.l.b16 %v7823
    %v8963 = vunpack.c.h.b16 %v7823
    %v8964 = vunpack.c.l.b16 %v7824
    %v8965 = vunpack.c.h.b16 %v7824
    %v8966 = vunpack.c.l.b16 %v7825
    %v8967 = vunpack.c.h.b16 %v7825
    %v8968 = vunpack.c.l.b16 %v7826
    %v8969 = vunpack.c.h.b16 %v7826
    %v8970 = vunpack.c.l.b16 %v7827
    %v8971 = vunpack.c.h.b16 %v7827
    %v8972 = vunpack.c.l.b16 %v7828
    %v8973 = vunpack.c.h.b16 %v7828
    %v8974 = vunpack.c.l.b16 %v7829
    %v8975 = vunpack.c.h.b16 %v7829
    %v8976 = vunpack.c.l.b16 %v7830
    %v8977 = vunpack.c.h.b16 %v7830
    %v8978 = vunpack.c.l.b16 %v7831
    %v8979 = vunpack.c.h.b16 %v7831
    %v8980 = vunpack.c.l.b16 %v7832
    %v8981 = vunpack.c.h.b16 %v7832
    %v8982 = vunpack.c.l.b16 %v7833
    %v8983 = vunpack.c.h.b16 %v7833
    %v8984 = vunpack.c.l.b16 %v7834
    %v8985 = vunpack.c.h.b16 %v7834
    %v8986 = vunpack.c.l.b16 %v7835
    %v8987 = vunpack.c.h.b16 %v7835
    %v8988 = vunpack.c.l.b16 %v7836
    %v8989 = vunpack.c.h.b16 %v7836
    %v8990 = vunpack.c.l.b16 %v7837
    %v8991 = vunpack.c.h.b16 %v7837
    %v8992 = vunpack.c.l.b16 %v7838
    %v8993 = vunpack.c.h.b16 %v7838
    %v8994 = vunpack.c.l.b16 %v7839
    %v8995 = vunpack.c.h.b16 %v7839
    %v8996 = vunpack.c.l.b16 %v7840
    %v8997 = vunpack.c.h.b16 %v7840
    %v8998 = vunpack.c.l.b16 %v7841
    %v8999 = vunpack.c.h.b16 %v7841
    %v9000 = vunpack.c.l.b16 %v7842
    %v9001 = vunpack.c.h.b16 %v7842
    %v9002 = vunpack.c.l.b16 %v7843
    %v9003 = vunpack.c.h.b16 %v7843
    %v9004 = vunpack.c.l.b16 %v7844
    %v9005 = vunpack.c.h.b16 %v7844
    %v9006 = vunpack.c.l.b16 %v7845
    %v9007 = vunpack.c.h.b16 %v7845
    %v9008 = vunpack.c.l.b16 %v7846
    %v9009 = vunpack.c.h.b16 %v7846
    %v9010 = vunpack.c.l.b16 %v7847
    %v9011 = vunpack.c.h.b16 %v7847
    %v9012 = vunpack.c.l.b16 %v7848
    %v9013 = vunpack.c.h.b16 %v7848
    %v9014 = vunpack.c.l.b16 %v7849
    %v9015 = vunpack.c.h.b16 %v7849
    %v9016 = vunpack.c.l.b16 %v7850
    %v9017 = vunpack.c.h.b16 %v7850
    %v9018 = vunpack.c.l.b16 %v7851
    %v9019 = vunpack.c.h.b16 %v7851
    %v9020 = vunpack.c.l.b16 %v7852
    %v9021 = vunpack.c.h.b16 %v7852
    %v9022 = vunpack.c.l.b16 %v7853
    %v9023 = vunpack.c.h.b16 %v7853
    %v9024 = vunpack.c.l.b16 %v7854
    %v9025 = vunpack.c.h.b16 %v7854
    %v9026 = vunpack.c.l.b16 %v7855
    %v9027 = vunpack.c.h.b16 %v7855
    %v9028 = vunpack.c.l.b16 %v7856
    %v9029 = vunpack.c.h.b16 %v7856
    %v9030 = vunpack.c.l.b16 %v7857
    %v9031 = vunpack.c.h.b16 %v7857
    %v9032 = vunpack.c.l.b16 %v7858
    %v9033 = vunpack.c.h.b16 %v7858
    %v9034 = vunpack.c.l.b16 %v7859
    %v9035 = vunpack.c.h.b16 %v7859
    %v9036 = vunpack.c.l.b16 %v7860
    %v9037 = vunpack.c.h.b16 %v7860
    %v9038 = vunpack.c.l.b16 %v7861
    %v9039 = vunpack.c.h.b16 %v7861
    %v9040 = vunpack.c.l.b16 %v7862
    %v9041 = vunpack.c.h.b16 %v7862
    %v9042 = vunpack.c.l.b16 %v7863
    %v9043 = vunpack.c.h.b16 %v7863
    %v9044 = vunpack.c.l.b16 %v7864
    %v9045 = vunpack.c.h.b16 %v7864
    %v9046 = vunpack.c.l.b16 %v7865
    %v9047 = vunpack.c.h.b16 %v7865
    %v9048 = vunpack.c.l.b16 %v7866
    %v9049 = vunpack.c.h.b16 %v7866
    %v9050 = vunpack.c.l.b16 %v7867
    %v9051 = vunpack.c.h.b16 %v7867
    %v9052 = vunpack.c.l.b16 %v7868
    %v9053 = vunpack.c.h.b16 %v7868
    %v9054 = vunpack.c.l.b16 %v7869
    %v9055 = vunpack.c.h.b16 %v7869
    %v9056 = vunpack.c.l.b16 %v7870
    %v9057 = vunpack.c.h.b16 %v7870
    %v9058 = vunpack.c.l.b16 %v7871
    %v9059 = vunpack.c.h.b16 %v7871
    %v9060 = vunpack.c.l.b16 %v7872
    %v9061 = vunpack.c.h.b16 %v7872
    %v9062 = vunpack.c.l.b16 %v7873
    %v9063 = vunpack.c.h.b16 %v7873
    %v9064 = vunpack.c.l.b16 %v7874
    %v9065 = vunpack.c.h.b16 %v7874
    %v9066 = vunpack.c.l.b16 %v7875
    %v9067 = vunpack.c.h.b16 %v7875
    %v9068 = vunpack.c.l.b16 %v7876
    %v9069 = vunpack.c.h.b16 %v7876
    %v9070 = vunpack.c.l.b16 %v7877
    %v9071 = vunpack.c.h.b16 %v7877
    %v9072 = vunpack.c.l.b16 %v7878
    %v9073 = vunpack.c.h.b16 %v7878
    %v9074 = vunpack.c.l.b16 %v7879
    %v9075 = vunpack.c.h.b16 %v7879
    %v9076 = vunpack.c.l.b16 %v7880
    %v9077 = vunpack.c.h.b16 %v7880
    %v9078 = vunpack.c.l.b16 %v7881
    %v9079 = vunpack.c.h.b16 %v7881
    %v9080 = vunpack.c.l.b16 %v7882
    %v9081 = vunpack.c.h.b16 %v7882
    %v9082 = vunpack.c.l.b16 %v7883
    %v9083 = vunpack.c.h.b16 %v7883
    %v9084 = vunpack.c.l.b16 %v7884
    %v9085 = vunpack.c.h.b16 %v7884
    %v9086 = vunpack.c.l.b16 %v7885
    %v9087 = vunpack.c.h.b16 %v7885
    %v9088 = vunpack.c.l.b16 %v7886
    %v9089 = vunpack.c.h.b16 %v7886
    %v9090 = vunpack.c.l.b16 %v7887
    %v9091 = vunpack.c.h.b16 %v7887
    %v9092 = vunpack.c.l.b16 %v7888
    %v9093 = vunpack.c.h.b16 %v7888
    %v9094 = vunpack.c.l.b16 %v7889
    %v9095 = vunpack.c.h.b16 %v7889
    %v9096 = vunpack.c.l.b16 %v7890
    %v9097 = vunpack.c.h.b16 %v7890
    %v9098 = vunpack.c.l.b16 %v7891
    %v9099 = vunpack.c.h.b16 %v7891
    %v9100 = vunpack.c.l.b16 %v7892
    %v9101 = vunpack.c.h.b16 %v7892
    %v9102 = vunpack.c.l.b16 %v7893
    %v9103 = vunpack.c.h.b16 %v7893
    %v9104 = vunpack.c.l.b16 %v7894
    %v9105 = vunpack.c.h.b16 %v7894
    %v9106 = vunpack.c.l.b16 %v7895
    %v9107 = vunpack.c.h.b16 %v7895
    %v9108 = vunpack.c.l.b16 %v7896
    %v9109 = vunpack.c.h.b16 %v7896
    %v9110 = vunpack.c.l.b16 %v7897
    %v9111 = vunpack.c.h.b16 %v7897
    %v9112 = vunpack.c.l.b16 %v7898
    %v9113 = vunpack.c.h.b16 %v7898
    %v9114 = vunpack.c.l.b16 %v7899
    %v9115 = vunpack.c.h.b16 %v7899
    %v9116 = vunpack.c.l.b16 %v7900
    %v9117 = vunpack.c.h.b16 %v7900
    %v9118 = vunpack.c.l.b16 %v7901
    %v9119 = vunpack.c.h.b16 %v7901
    %v9120 = vunpack.c.l.b16 %v7902
    %v9121 = vunpack.c.h.b16 %v7902
    %v9122 = vunpack.c.l.b16 %v7903
    %v9123 = vunpack.c.h.b16 %v7903
    %v9124 = vunpack.c.l.b16 %v7904
    %v9125 = vunpack.c.h.b16 %v7904
    %v9126 = vunpack.c.l.b16 %v7905
    %v9127 = vunpack.c.h.b16 %v7905
    %v9128 = vunpack.c.l.b16 %v7906
    %v9129 = vunpack.c.h.b16 %v7906
    %v9130 = vunpack.c.l.b16 %v7907
    %v9131 = vunpack.c.h.b16 %v7907
    %v9132 = vunpack.c.l.b16 %v7908
    %v9133 = vunpack.c.h.b16 %v7908
    %v9134 = vunpack.c.l.b16 %v7909
    %v9135 = vunpack.c.h.b16 %v7909
    %v9136 = vunpack.c.l.b16 %v7910
    %v9137 = vunpack.c.h.b16 %v7910
    %v9138 = vunpack.c.l.b16 %v7911
    %v9139 = vunpack.c.h.b16 %v7911
    %v9140 = vunpack.c.l.b16 %v7912
    %v9141 = vunpack.c.h.b16 %v7912
    %v9142 = vunpack.c.l.b16 %v7913
    %v9143 = vunpack.c.h.b16 %v7913
    %v9144 = vunpack.c.l.b16 %v7914
    %v9145 = vunpack.c.h.b16 %v7914
    %v9146 = vunpack.c.l.b16 %v7915
    %v9147 = vunpack.c.h.b16 %v7915
    %v9148 = vunpack.c.l.b16 %v7916
    %v9149 = vunpack.c.h.b16 %v7916
    %v9150 = vunpack.c.l.b16 %v7917
    %v9151 = vunpack.c.h.b16 %v7917
    %v9152 = vunpack.c.l.b16 %v7918
    %v9153 = vunpack.c.h.b16 %v7918
    %v9154 = vunpack.c.l.b16 %v7919
    %v9155 = vunpack.c.h.b16 %v7919
    %v9156 = vunpack.c.l.b16 %v7920
    %v9157 = vunpack.c.h.b16 %v7920
    %v9158 = vunpack.c.l.b16 %v7921
    %v9159 = vunpack.c.h.b16 %v7921
    %v9160 = vunpack.c.l.b16 %v7922
    %v9161 = vunpack.c.h.b16 %v7922
    %v9162 = vunpack.c.l.b16 %v7923
    %v9163 = vunpack.c.h.b16 %v7923
    %v9164 = vunpack.c.l.b16 %v7924
    %v9165 = vunpack.c.h.b16 %v7924
    %v9166 = vunpack.c.l.b16 %v7925
    %v9167 = vunpack.c.h.b16 %v7925
    %v9168 = vunpack.c.l.b16 %v7926
    %v9169 = vunpack.c.h.b16 %v7926
    %v9170 = vunpack.c.l.b16 %v7927
    %v9171 = vunpack.c.h.b16 %v7927
    %v9172 = vunpack.c.l.b16 %v7928
    %v9173 = vunpack.c.h.b16 %v7928
    %v9174 = vunpack.c.l.b16 %v7929
    %v9175 = vunpack.c.h.b16 %v7929
    %v9176 = vunpack.c.l.b16 %v7930
    %v9177 = vunpack.c.h.b16 %v7930
    %v9178 = vunpack.c.l.b16 %v7931
    %v9179 = vunpack.c.h.b16 %v7931
    %v9180 = vunpack.c.l.b16 %v7932
    %v9181 = vunpack.c.h.b16 %v7932
    %v9182 = vunpack.c.l.b16 %v7933
    %v9183 = vunpack.c.h.b16 %v7933
    %v9184 = vunpack.c.l.b16 %v7934
    %v9185 = vunpack.c.h.b16 %v7934
    %v9186 = vunpack.c.l.b16 %v7935
    %v9187 = vunpack.c.h.b16 %v7935
    %v9188 = vunpack.c.l.b16 %v7936
    %v9189 = vunpack.c.h.b16 %v7936
    %v9190 = vunpack.c.l.b16 %v7937
    %v9191 = vunpack.c.h.b16 %v7937
    %v9192 = vunpack.c.l.b16 %v7938
    %v9193 = vunpack.c.h.b16 %v7938
    %v9194 = vunpack.c.l.b16 %v7939
    %v9195 = vunpack.c.h.b16 %v7939
    %v9196 = vunpack.c.l.b16 %v7940
    %v9197 = vunpack.c.h.b16 %v7940
    %v9198 = vunpack.c.l.b16 %v7941
    %v9199 = vunpack.c.h.b16 %v7941
    %v9200 = vunpack.c.l.b16 %v7942
    %v9201 = vunpack.c.h.b16 %v7942
    %v9202 = vunpack.c.l.b16 %v7943
    %v9203 = vunpack.c.h.b16 %v7943
    %v9204 = vunpack.c.l.b16 %v7944
    %v9205 = vunpack.c.h.b16 %v7944
    %v9206 = vunpack.c.l.b16 %v7945
    %v9207 = vunpack.c.h.b16 %v7945
    %v9208 = vunpack.c.l.b16 %v7946
    %v9209 = vunpack.c.h.b16 %v7946
    %v9210 = vunpack.c.l.b16 %v7947
    %v9211 = vunpack.c.h.b16 %v7947
    %v9212 = vunpack.c.l.b16 %v7948
    %v9213 = vunpack.c.h.b16 %v7948
    %v9214 = vunpack.c.l.b16 %v7949
    %v9215 = vunpack.c.h.b16 %v7949
    %v9216 = vunpack.c.l.b16 %v7950
    %v9217 = vunpack.c.h.b16 %v7950
    %v9218 = vunpack.c.l.b16 %v7951
    %v9219 = vunpack.c.h.b16 %v7951
    %v9220 = vunpack.c.l.b16 %v7952
    %v9221 = vunpack.c.h.b16 %v7952
    %v9222 = vunpack.c.l.b16 %v7953
    %v9223 = vunpack.c.h.b16 %v7953
    %v9224 = vunpack.c.l.b16 %v7954
    %v9225 = vunpack.c.h.b16 %v7954
    %v9226 = vunpack.c.l.b16 %v7955
    %v9227 = vunpack.c.h.b16 %v7955
    %v9228 = vunpack.c.l.b16 %v7956
    %v9229 = vunpack.c.h.b16 %v7956
    %v9230 = vunpack.c.l.b16 %v7957
    %v9231 = vunpack.c.h.b16 %v7957
    %v9232 = vunpack.c.l.b16 %v7958
    %v9233 = vunpack.c.h.b16 %v7958
    %v9234 = vunpack.c.l.b16 %v7959
    %v9235 = vunpack.c.h.b16 %v7959
    %v9236 = vunpack.c.l.b16 %v7960
    %v9237 = vunpack.c.h.b16 %v7960
    %v9238 = vunpack.c.l.b16 %v7961
    %v9239 = vunpack.c.h.b16 %v7961
    %v9240 = vunpack.c.l.b16 %v7962
    %v9241 = vunpack.c.h.b16 %v7962
    %v9242 = vunpack.c.l.b16 %v7963
    %v9243 = vunpack.c.h.b16 %v7963
    %v9244 = vunpack.c.l.b16 %v7964
    %v9245 = vunpack.c.h.b16 %v7964
    %v9246 = vunpack.c.l.b16 %v7965
    %v9247 = vunpack.c.h.b16 %v7965
    %v9248 = vunpack.c.l.b16 %v7966
    %v9249 = vunpack.c.h.b16 %v7966
    %v9250 = vunpack.c.l.b16 %v7967
    %v9251 = vunpack.c.h.b16 %v7967
    %v9252 = vunpack.c.l.b16 %v7968
    %v9253 = vunpack.c.h.b16 %v7968
    %v9254 = vunpack.c.l.b16 %v7969
    %v9255 = vunpack.c.h.b16 %v7969
    %v9256 = vunpack.c.l.b16 %v7970
    %v9257 = vunpack.c.h.b16 %v7970
    %v9258 = vunpack.c.l.b16 %v7971
    %v9259 = vunpack.c.h.b16 %v7971
    %v9260 = vunpack.c.l.b16 %v7972
    %v9261 = vunpack.c.h.b16 %v7972
    %v9262 = vunpack.c.l.b16 %v7973
    %v9263 = vunpack.c.h.b16 %v7973
    %v9264 = vunpack.c.l.b16 %v7974
    %v9265 = vunpack.c.h.b16 %v7974
    %v9266 = vunpack.c.l.b16 %v7975
    %v9267 = vunpack.c.h.b16 %v7975
    %v9268 = vunpack.c.l.b16 %v7976
    %v9269 = vunpack.c.h.b16 %v7976
    %v9270 = vunpack.c.l.b16 %v7977
    %v9271 = vunpack.c.h.b16 %v7977
    %v9272 = vunpack.c.l.b16 %v7978
    %v9273 = vunpack.c.h.b16 %v7978
    %v9274 = vunpack.c.l.b16 %v7979
    %v9275 = vunpack.c.h.b16 %v7979
    %v9276 = vunpack.c.l.b16 %v7980
    %v9277 = vunpack.c.h.b16 %v7980
    %v9278 = vunpack.c.l.b16 %v7981
    %v9279 = vunpack.c.h.b16 %v7981
    %v9280 = vunpack.c.l.b16 %v7982
    %v9281 = vunpack.c.h.b16 %v7982
    %v9282 = vunpack.c.l.b16 %v7983
    %v9283 = vunpack.c.h.b16 %v7983
    %v9284 = vunpack.c.l.b16 %v7984
    %v9285 = vunpack.c.h.b16 %v7984
    %v9286 = vunpack.c.l.b16 %v7985
    %v9287 = vunpack.c.h.b16 %v7985
    %v9288 = vunpack.c.l.b16 %v7986
    %v9289 = vunpack.c.h.b16 %v7986
    %v9290 = vunpack.c.l.b16 %v7987
    %v9291 = vunpack.c.h.b16 %v7987
    %v9292 = vunpack.c.l.b16 %v7988
    %v9293 = vunpack.c.h.b16 %v7988
    %v9294 = vunpack.c.l.b16 %v7989
    %v9295 = vunpack.c.h.b16 %v7989
    %v9296 = vunpack.c.l.b16 %v7990
    %v9297 = vunpack.c.h.b16 %v7990
    %v9298 = vunpack.c.l.b16 %v7991
    %v9299 = vunpack.c.h.b16 %v7991
    %v9300 = vunpack.c.l.b16 %v7992
    %v9301 = vunpack.c.h.b16 %v7992
    %v9302 = vunpack.c.l.b16 %v7993
    %v9303 = vunpack.c.h.b16 %v7993
    %v9304 = vunpack.c.l.b16 %v7994
    %v9305 = vunpack.c.h.b16 %v7994
    %v9306 = vunpack.c.l.b16 %v7995
    %v9307 = vunpack.c.h.b16 %v7995
    %v9308 = vunpack.c.l.b16 %v7996
    %v9309 = vunpack.c.h.b16 %v7996
    %v9310 = vunpack.c.l.b16 %v7997
    %v9311 = vunpack.c.h.b16 %v7997
    %v9312 = vunpack.c.l.b16 %v7998
    %v9313 = vunpack.c.h.b16 %v7998
    %v9314 = vunpack.c.l.b16 %v7999
    %v9315 = vunpack.c.h.b16 %v7999
    %v9316 = vunpack.c.l.b16 %v8000
    %v9317 = vunpack.c.h.b16 %v8000
    %v9318 = vunpack.c.l.b16 %v8001
    %v9319 = vunpack.c.h.b16 %v8001
    %v9320 = vunpack.c.l.b16 %v8002
    %v9321 = vunpack.c.h.b16 %v8002
    %v9322 = vunpack.c.l.b16 %v8003
    %v9323 = vunpack.c.h.b16 %v8003
    %v9324 = vunpack.c.l.b16 %v8004
    %v9325 = vunpack.c.h.b16 %v8004
    %v9326 = vunpack.c.l.b16 %v8005
    %v9327 = vunpack.c.h.b16 %v8005
    %v9328 = vunpack.c.l.b16 %v8006
    %v9329 = vunpack.c.h.b16 %v8006
    %v9330 = vunpack.c.l.b16 %v8007
    %v9331 = vunpack.c.h.b16 %v8007
    %v9332 = vunpack.c.l.b16 %v8008
    %v9333 = vunpack.c.h.b16 %v8008
    %v9334 = vunpack.c.l.b16 %v8009
    %v9335 = vunpack.c.h.b16 %v8009
    %v9336 = vunpack.c.l.b16 %v8010
    %v9337 = vunpack.c.h.b16 %v8010
    %v9338 = vunpack.c.l.b16 %v8011
    %v9339 = vunpack.c.h.b16 %v8011
    %v9340 = vunpack.c.l.b16 %v8012
    %v9341 = vunpack.c.h.b16 %v8012
    %v9342 = vunpack.c.l.b16 %v8013
    %v9343 = vunpack.c.h.b16 %v8013
    %v9344 = vunpack.c.l.b16 %v8014
    %v9345 = vunpack.c.h.b16 %v8014
    %v9346 = vunpack.c.l.b16 %v8015
    %v9347 = vunpack.c.h.b16 %v8015
    %v9348 = vunpack.c.l.b16 %v8016
    %v9349 = vunpack.c.h.b16 %v8016
    %v9350 = vunpack.c.l.b16 %v8017
    %v9351 = vunpack.c.h.b16 %v8017
    %v9352 = vunpack.c.l.b16 %v8018
    %v9353 = vunpack.c.h.b16 %v8018
    %v9354 = vunpack.c.l.b16 %v8019
    %v9355 = vunpack.c.h.b16 %v8019
    %v9356 = vunpack.c.l.b16 %v8020
    %v9357 = vunpack.c.h.b16 %v8020
    %v9358 = vunpack.c.l.b16 %v8021
    %v9359 = vunpack.c.h.b16 %v8021
    %v9360 = vunpack.c.l.b16 %v8022
    %v9361 = vunpack.c.h.b16 %v8022
    %v9362 = vunpack.c.l.b16 %v8023
    %v9363 = vunpack.c.h.b16 %v8023
    %v9364 = vunpack.c.l.b16 %v8024
    %v9365 = vunpack.c.h.b16 %v8024
    %v9366 = vunpack.c.l.b16 %v8025
    %v9367 = vunpack.c.h.b16 %v8025
    %v9368 = vunpack.c.l.b16 %v8026
    %v9369 = vunpack.c.h.b16 %v8026
    %v9370 = vunpack.c.l.b16 %v8027
    %v9371 = vunpack.c.h.b16 %v8027
    %v9372 = vunpack.c.l.b16 %v8028
    %v9373 = vunpack.c.h.b16 %v8028
    %v9374 = vunpack.c.l.b16 %v8029
    %v9375 = vunpack.c.h.b16 %v8029
    %v9376 = vunpack.c.l.b16 %v8030
    %v9377 = vunpack.c.h.b16 %v8030
    %v9378 = vunpack.c.l.b16 %v8031
    %v9379 = vunpack.c.h.b16 %v8031
    %v9380 = vunpack.c.l.b16 %v8032
    %v9381 = vunpack.c.h.b16 %v8032
    %v9382 = vunpack.c.l.b16 %v8033
    %v9383 = vunpack.c.h.b16 %v8033
    %v9384 = vunpack.c.l.b16 %v8034
    %v9385 = vunpack.c.h.b16 %v8034
    %v9386 = vunpack.c.l.b16 %v8035
    %v9387 = vunpack.c.h.b16 %v8035
    %v9388 = vunpack.c.l.b16 %v8036
    %v9389 = vunpack.c.h.b16 %v8036
    %v9390 = vunpack.c.l.b16 %v8037
    %v9391 = vunpack.c.h.b16 %v8037
    %v9392 = vunpack.c.l.b16 %v8038
    %v9393 = vunpack.c.h.b16 %v8038
    %v9394 = vunpack.c.l.b16 %v8039
    %v9395 = vunpack.c.h.b16 %v8039
    %v9396 = vunpack.c.l.b16 %v8040
    %v9397 = vunpack.c.h.b16 %v8040
    %v9398 = vunpack.c.l.b16 %v8041
    %v9399 = vunpack.c.h.b16 %v8041
    %v9400 = vunpack.c.l.b16 %v8042
    %v9401 = vunpack.c.h.b16 %v8042
    %v9402 = vunpack.c.l.b16 %v8043
    %v9403 = vunpack.c.h.b16 %v8043
    %v9404 = vunpack.c.l.b16 %v8044
    %v9405 = vunpack.c.h.b16 %v8044
    %v9406 = vunpack.c.l.b16 %v8045
    %v9407 = vunpack.c.h.b16 %v8045
    %v9408 = vunpack.c.l.b16 %v8046
    %v9409 = vunpack.c.h.b16 %v8046
    %v9410 = vunpack.c.l.b16 %v8047
    %v9411 = vunpack.c.h.b16 %v8047
    %v9412 = vunpack.c.l.b16 %v8048
    %v9413 = vunpack.c.h.b16 %v8048
    %v9414 = vunpack.c.l.b16 %v8049
    %v9415 = vunpack.c.h.b16 %v8049
    %v9416 = vunpack.c.l.b16 %v8050
    %v9417 = vunpack.c.h.b16 %v8050
    %v9418 = vunpack.c.l.b16 %v8051
    %v9419 = vunpack.c.h.b16 %v8051
    %v9420 = vunpack.c.l.b16 %v8052
    %v9421 = vunpack.c.h.b16 %v8052
    %v9422 = vunpack.c.l.b16 %v8053
    %v9423 = vunpack.c.h.b16 %v8053
    %v9424 = vunpack.c.l.b16 %v8054
    %v9425 = vunpack.c.h.b16 %v8054
    %v9426 = vunpack.c.l.b16 %v8055
    %v9427 = vunpack.c.h.b16 %v8055
    %v9428 = vunpack.c.l.b16 %v8056
    %v9429 = vunpack.c.h.b16 %v8056
    %v9430 = vunpack.c.l.b16 %v8057
    %v9431 = vunpack.c.h.b16 %v8057
    %v9432 = vunpack.c.l.b16 %v8058
    %v9433 = vunpack.c.h.b16 %v8058
    %v9434 = vunpack.c.l.b16 %v8059
    %v9435 = vunpack.c.h.b16 %v8059
    %v9436 = vunpack.c.l.b16 %v8060
    %v9437 = vunpack.c.h.b16 %v8060
    %v9438 = vunpack.c.l.b16 %v8061
    %v9439 = vunpack.c.h.b16 %v8061
    %v9440 = vunpack.c.l.b16 %v8062
    %v9441 = vunpack.c.h.b16 %v8062
    %v9442 = vunpack.c.l.b16 %v8063
    %v9443 = vunpack.c.h.b16 %v8063
    %v9444 = vunpack.c.l.b16 %v8064
    %v9445 = vunpack.c.h.b16 %v8064
    %v9446 = vunpack.c.l.b16 %v8065
    %v9447 = vunpack.c.h.b16 %v8065
    %v9448 = vunpack.c.l.b16 %v8066
    %v9449 = vunpack.c.h.b16 %v8066
    %v9450 = vunpack.c.l.b16 %v8067
    %v9451 = vunpack.c.h.b16 %v8067
    %v9452 = vunpack.c.l.b16 %v8068
    %v9453 = vunpack.c.h.b16 %v8068
    %v9454 = vunpack.c.l.b16 %v8069
    %v9455 = vunpack.c.h.b16 %v8069
    %v9456 = vunpack.c.l.b16 %v8070
    %v9457 = vunpack.c.h.b16 %v8070
    %v9458 = vunpack.c.l.b16 %v8071
    %v9459 = vunpack.c.h.b16 %v8071
    %v9460 = vunpack.c.l.b16 %v8072
    %v9461 = vunpack.c.h.b16 %v8072
    %v9462 = vunpack.c.l.b16 %v8073
    %v9463 = vunpack.c.h.b16 %v8073
    %v9464 = vunpack.c.l.b16 %v8074
    %v9465 = vunpack.c.h.b16 %v8074
    %v9466 = vunpack.c.l.b16 %v8075
    %v9467 = vunpack.c.h.b16 %v8075
    %v9468 = vunpack.c.l.b16 %v8076
    %v9469 = vunpack.c.h.b16 %v8076
    %v9470 = vunpack.c.l.b16 %v8077
    %v9471 = vunpack.c.h.b16 %v8077
    %v9472 = vunpack.c.l.b16 %v8078
    %v9473 = vunpack.c.h.b16 %v8078
    %v9474 = vunpack.c.l.b16 %v8079
    %v9475 = vunpack.c.h.b16 %v8079
    %v9476 = vunpack.c.l.b16 %v8080
    %v9477 = vunpack.c.h.b16 %v8080
    %v9478 = vunpack.c.l.b16 %v8081
    %v9479 = vunpack.c.h.b16 %v8081
    %v9480 = vunpack.c.l.b16 %v8082
    %v9481 = vunpack.c.h.b16 %v8082
    %v9482 = vunpack.c.l.b16 %v8083
    %v9483 = vunpack.c.h.b16 %v8083
    %v9484 = vunpack.c.l.b16 %v8084
    %v9485 = vunpack.c.h.b16 %v8084
    %v9486 = vunpack.c.l.b16 %v8085
    %v9487 = vunpack.c.h.b16 %v8085
    %v9488 = vunpack.c.l.b16 %v8086
    %v9489 = vunpack.c.h.b16 %v8086
    %v9490 = vunpack.c.l.b16 %v8087
    %v9491 = vunpack.c.h.b16 %v8087
    %v9492 = vunpack.c.l.b16 %v8088
    %v9493 = vunpack.c.h.b16 %v8088
    %v9494 = vunpack.c.l.b16 %v8089
    %v9495 = vunpack.c.h.b16 %v8089
    %v9496 = vunpack.c.l.b16 %v8090
    %v9497 = vunpack.c.h.b16 %v8090
    %v9498 = vunpack.c.l.b16 %v8091
    %v9499 = vunpack.c.h.b16 %v8091
    %v9500 = vunpack.c.l.b16 %v8092
    %v9501 = vunpack.c.h.b16 %v8092
    %v9502 = vunpack.c.l.b16 %v8093
    %v9503 = vunpack.c.h.b16 %v8093
    %v9504 = vunpack.c.l.b16 %v8094
    %v9505 = vunpack.c.h.b16 %v8094
    %v9506 = vunpack.c.l.b16 %v8095
    %v9507 = vunpack.c.h.b16 %v8095
    %v9508 = vunpack.c.l.b16 %v8096
    %v9509 = vunpack.c.h.b16 %v8096
    %v9510 = vunpack.c.l.b16 %v8097
    %v9511 = vunpack.c.h.b16 %v8097
    %v9512 = vunpack.c.l.b16 %v8098
    %v9513 = vunpack.c.h.b16 %v8098
    %v9514 = vunpack.c.l.b16 %v8099
    %v9515 = vunpack.c.h.b16 %v8099
    %v9516 = vunpack.c.l.b16 %v8100
    %v9517 = vunpack.c.h.b16 %v8100
    %v9518 = vunpack.c.l.b16 %v8101
    %v9519 = vunpack.c.h.b16 %v8101
    %v9520 = vunpack.c.l.b16 %v8102
    %v9521 = vunpack.c.h.b16 %v8102
    %v9522 = vunpack.c.l.b16 %v8103
    %v9523 = vunpack.c.h.b16 %v8103
    %v9524 = vunpack.c.l.b16 %v8104
    %v9525 = vunpack.c.h.b16 %v8104
    %v9526 = vunpack.c.l.b16 %v8105
    %v9527 = vunpack.c.h.b16 %v8105
    %v9528 = vunpack.c.l.b16 %v8106
    %v9529 = vunpack.c.h.b16 %v8106
    %v9530 = vunpack.c.l.b16 %v8107
    %v9531 = vunpack.c.h.b16 %v8107
    %v9532 = vunpack.c.l.b16 %v8108
    %v9533 = vunpack.c.h.b16 %v8108
    %v9534 = vunpack.c.l.b16 %v8109
    %v9535 = vunpack.c.h.b16 %v8109
    %v9536 = vunpack.c.l.b16 %v8110
    %v9537 = vunpack.c.h.b16 %v8110
    %v9538 = vunpack.c.l.b16 %v8111
    %v9539 = vunpack.c.h.b16 %v8111
    %v9540 = vunpack.c.l.b16 %v8112
    %v9541 = vunpack.c.h.b16 %v8112
    %v9542 = vunpack.c.l.b16 %v8113
    %v9543 = vunpack.c.h.b16 %v8113
    %v9544 = vunpack.c.l.b16 %v8114
    %v9545 = vunpack.c.h.b16 %v8114
    %v9546 = vunpack.c.l.b16 %v8115
    %v9547 = vunpack.c.h.b16 %v8115
    %v9548 = vunpack.c.l.b16 %v8116
    %v9549 = vunpack.c.h.b16 %v8116
    %v9550 = vunpack.c.l.b16 %v8117
    %v9551 = vunpack.c.h.b16 %v8117
    %v9552 = vunpack.c.l.b16 %v8118
    %v9553 = vunpack.c.h.b16 %v8118
    %v9554 = vunpack.c.l.b16 %v8119
    %v9555 = vunpack.c.h.b16 %v8119
    %v9556 = vunpack.c.l.b16 %v8120
    %v9557 = vunpack.c.h.b16 %v8120
    %v9558 = vunpack.c.l.b16 %v8121
    %v9559 = vunpack.c.h.b16 %v8121
    %v9560 = vunpack.c.l.b16 %v8122
    %v9561 = vunpack.c.h.b16 %v8122
    %v9562 = vunpack.c.l.b16 %v8123
    %v9563 = vunpack.c.h.b16 %v8123
    %v9564 = vunpack.c.l.b16 %v8124
    %v9565 = vunpack.c.h.b16 %v8124
    %v9566 = vunpack.c.l.b16 %v8125
    %v9567 = vunpack.c.h.b16 %v8125
    %v9568 = vunpack.c.l.b16 %v8126
    %v9569 = vunpack.c.h.b16 %v8126
    %v9570 = vunpack.c.l.b16 %v8127
    %v9571 = vunpack.c.h.b16 %v8127
    %v9572 = vunpack.c.l.b16 %v8128
    %v9573 = vunpack.c.h.b16 %v8128
    %v9574 = vunpack.c.l.b16 %v8129
    %v9575 = vunpack.c.h.b16 %v8129
    %v9576 = vunpack.c.l.b16 %v8130
    %v9577 = vunpack.c.h.b16 %v8130
    %v9578 = vunpack.c.l.b16 %v8131
    %v9579 = vunpack.c.h.b16 %v8131
    %v9580 = vunpack.c.l.b16 %v8132
    %v9581 = vunpack.c.h.b16 %v8132
    %v9582 = vunpack.c.l.b16 %v8133
    %v9583 = vunpack.c.h.b16 %v8133
    %v9584 = vunpack.c.l.b16 %v8134
    %v9585 = vunpack.c.h.b16 %v8134
    %v9586 = vunpack.c.l.b16 %v8135
    %v9587 = vunpack.c.h.b16 %v8135
    %v9588 = vunpack.c.l.b16 %v8136
    %v9589 = vunpack.c.h.b16 %v8136
    %v9590 = vunpack.c.l.b16 %v8137
    %v9591 = vunpack.c.h.b16 %v8137
    %v9592 = vunpack.c.l.b16 %v8138
    %v9593 = vunpack.c.h.b16 %v8138
    %v9594 = vunpack.c.l.b16 %v8139
    %v9595 = vunpack.c.h.b16 %v8139
    %v9596 = vunpack.c.l.b16 %v8140
    %v9597 = vunpack.c.h.b16 %v8140
    %v9598 = vunpack.c.l.b16 %v8141
    %v9599 = vunpack.c.h.b16 %v8141
    %v9600 = vunpack.c.l.b16 %v8142
    %v9601 = vunpack.c.h.b16 %v8142
    %v9602 = vunpack.c.l.b16 %v8143
    %v9603 = vunpack.c.h.b16 %v8143
    %v9604 = vunpack.c.l.b16 %v8144
    %v9605 = vunpack.c.h.b16 %v8144
    %v9606 = vunpack.c.l.b16 %v8145
    %v9607 = vunpack.c.h.b16 %v8145
    %v9608 = vunpack.c.l.b16 %v8146
    %v9609 = vunpack.c.h.b16 %v8146
    %v9610 = vunpack.c.l.b16 %v8147
    %v9611 = vunpack.c.h.b16 %v8147
    %v9612 = vunpack.c.l.b16 %v8148
    %v9613 = vunpack.c.h.b16 %v8148
    %v9614 = vunpack.c.l.b16 %v8149
    %v9615 = vunpack.c.h.b16 %v8149
    %v9616 = vunpack.c.l.b16 %v8150
    %v9617 = vunpack.c.h.b16 %v8150
    %v9618 = vunpack.c.l.b16 %v8151
    %v9619 = vunpack.c.h.b16 %v8151
    %v9620 = vunpack.c.l.b16 %v8152
    %v9621 = vunpack.c.h.b16 %v8152
    %v9622 = vunpack.c.l.b16 %v8153
    %v9623 = vunpack.c.h.b16 %v8153
    %v9624 = vunpack.c.l.b16 %v8154
    %v9625 = vunpack.c.h.b16 %v8154
    %v9626 = vunpack.c.l.b16 %v8155
    %v9627 = vunpack.c.h.b16 %v8155
    %v9628 = vunpack.c.l.b16 %v8156
    %v9629 = vunpack.c.h.b16 %v8156
    %v9630 = vunpack.c.l.b16 %v8157
    %v9631 = vunpack.c.h.b16 %v8157
    %v9632 = vunpack.c.l.b16 %v8158
    %v9633 = vunpack.c.h.b16 %v8158
    %v9634 = vunpack.c.l.b16 %v8159
    %v9635 = vunpack.c.h.b16 %v8159
    %v9636 = vunpack.c.l.b16 %v8160
    %v9637 = vunpack.c.h.b16 %v8160
    %v9638 = vunpack.c.l.b16 %v8161
    %v9639 = vunpack.c.h.b16 %v8161
    %v9640 = vunpack.c.l.b16 %v8162
    %v9641 = vunpack.c.h.b16 %v8162
    %v9642 = vunpack.c.l.b16 %v8163
    %v9643 = vunpack.c.h.b16 %v8163
    %v9644 = vunpack.c.l.b16 %v8164
    %v9645 = vunpack.c.h.b16 %v8164
    %v9646 = vunpack.c.l.b16 %v8165
    %v9647 = vunpack.c.h.b16 %v8165
    %v9648 = vunpack.c.l.b16 %v8166
    %v9649 = vunpack.c.h.b16 %v8166
    %v9650 = vunpack.c.l.b16 %v8167
    %v9651 = vunpack.c.h.b16 %v8167
    %v9652 = vunpack.c.l.b16 %v8168
    %v9653 = vunpack.c.h.b16 %v8168
    %v9654 = vunpack.c.l.b16 %v8169
    %v9655 = vunpack.c.h.b16 %v8169
    %v9656 = vunpack.c.l.b16 %v8170
    %v9657 = vunpack.c.h.b16 %v8170
    %v9658 = vunpack.c.l.b16 %v8171
    %v9659 = vunpack.c.h.b16 %v8171
    %v9660 = vunpack.c.l.b16 %v8172
    %v9661 = vunpack.c.h.b16 %v8172
    %v9662 = vunpack.c.l.b16 %v8173
    %v9663 = vunpack.c.h.b16 %v8173
    %v9664 = vunpack.c.l.b16 %v8174
    %v9665 = vunpack.c.h.b16 %v8174
    %v9666 = vunpack.c.l.b16 %v8175
    %v9667 = vunpack.c.h.b16 %v8175
    %v9668 = vunpack.c.l.b16 %v8176
    %v9669 = vunpack.c.h.b16 %v8176
    %v9670 = vunpack.c.l.b16 %v8177
    %v9671 = vunpack.c.h.b16 %v8177
    %v9672 = vunpack.c.l.b16 %v8178
    %v9673 = vunpack.c.h.b16 %v8178
    %v9674 = vunpack.c.l.b16 %v8179
    %v9675 = vunpack.c.h.b16 %v8179
    %v9676 = vunpack.c.l.b16 %v8180
    %v9677 = vunpack.c.h.b16 %v8180
    %v9678 = vunpack.c.l.b16 %v8181
    %v9679 = vunpack.c.h.b16 %v8181
    %v9680 = vunpack.c.l.b16 %v8182
    %v9681 = vunpack.c.h.b16 %v8182
    %v9682 = vunpack.c.l.b16 %v8183
    %v9683 = vunpack.c.h.b16 %v8183
    %v9684 = vunpack.c.l.b16 %v8184
    %v9685 = vunpack.c.h.b16 %v8184
    %v9686 = vunpack.c.l.b16 %v8185
    %v9687 = vunpack.c.h.b16 %v8185
    %v9688 = vunpack.c.l.b16 %v8186
    %v9689 = vunpack.c.h.b16 %v8186
    %v9690 = vunpack.c.l.b16 %v8187
    %v9691 = vunpack.c.h.b16 %v8187
    %v9692 = vunpack.c.l.b16 %v8188
    %v9693 = vunpack.c.h.b16 %v8188
    %v9694 = vunpack.c.l.b16 %v8189
    %v9695 = vunpack.c.h.b16 %v8189
    %v9696 = vunpack.c.l.b16 %v8190
    %v9697 = vunpack.c.h.b16 %v8190
    %v9698 = vunpack.c.l.b16 %v8191
    %v9699 = vunpack.c.h.b16 %v8191
    %v9700 = vunpack.c.l.b16 %v8192
    %v9701 = vunpack.c.h.b16 %v8192
    %v9702 = vunpack.c.l.b16 %v8193
    %v9703 = vunpack.c.h.b16 %v8193
    %v9704 = vunpack.c.l.b16 %v8194
    %v9705 = vunpack.c.h.b16 %v8194
    %v9706 = vunpack.c.l.b16 %v8195
    %v9707 = vunpack.c.h.b16 %v8195
    %v9708 = vunpack.c.l.b16 %v8196
    %v9709 = vunpack.c.h.b16 %v8196
    %v9710 = vunpack.c.l.b16 %v8197
    %v9711 = vunpack.c.h.b16 %v8197
    %v9712 = vunpack.c.l.b16 %v8198
    %v9713 = vunpack.c.h.b16 %v8198
    %v9714 = vunpack.c.l.b16 %v8199
    %v9715 = vunpack.c.h.b16 %v8199
    %v9716 = vunpack.c.l.b16 %v8200
    %v9717 = vunpack.c.h.b16 %v8200
    %v9718 = vunpack.c.l.b16 %v8201
    %v9719 = vunpack.c.h.b16 %v8201
    %v9720 = vunpack.c.l.b16 %v8202
    %v9721 = vunpack.c.h.b16 %v8202
    %v9722 = vunpack.c.l.b16 %v8203
    %v9723 = vunpack.c.h.b16 %v8203
    %v9724 = vunpack.c.l.b16 %v8204
    %v9725 = vunpack.c.h.b16 %v8204
    %v9726 = vunpack.c.l.b16 %v8205
    %v9727 = vunpack.c.h.b16 %v8205
    %v9728 = vunpack.c.l.b16 %v8206
    %v9729 = vunpack.c.h.b16 %v8206
    %v9730 = vunpack.c.l.b16 %v8207
    %v9731 = vunpack.c.h.b16 %v8207
    %v9732 = vunpack.c.l.b16 %v8208
    %v9733 = vunpack.c.h.b16 %v8208
    %v9734 = vunpack.c.l.b16 %v8209
    %v9735 = vunpack.c.h.b16 %v8209
    %v9736 = vunpack.c.l.b16 %v8210
    %v9737 = vunpack.c.h.b16 %v8210
    %v9738 = vunpack.c.l.b16 %v8211
    %v9739 = vunpack.c.h.b16 %v8211
    %v9740 = vunpack.c.l.b16 %v8212
    %v9741 = vunpack.c.h.b16 %v8212
    %v9742 = vunpack.c.l.b16 %v8213
    %v9743 = vunpack.c.h.b16 %v8213
    %v9744 = vunpack.c.l.b16 %v8214
    %v9745 = vunpack.c.h.b16 %v8214
    %v9746 = vunpack.c.l.b16 %v8215
    %v9747 = vunpack.c.h.b16 %v8215
    %v9748 = vunpack.c.l.b16 %v8216
    %v9749 = vunpack.c.h.b16 %v8216
    %v9750 = vunpack.c.l.b16 %v8217
    %v9751 = vunpack.c.h.b16 %v8217
    %v9752 = vunpack.c.l.b16 %v8218
    %v9753 = vunpack.c.h.b16 %v8218
    %v9754 = vunpack.c.l.b16 %v8219
    %v9755 = vunpack.c.h.b16 %v8219
    %v9756 = vunpack.c.l.b16 %v8220
    %v9757 = vunpack.c.h.b16 %v8220
    %v9758 = vunpack.c.l.b16 %v8221
    %v9759 = vunpack.c.h.b16 %v8221
    %v9760 = vunpack.c.l.b16 %v8222
    %v9761 = vunpack.c.h.b16 %v8222
    %v9762 = vunpack.c.l.b16 %v8223
    %v9763 = vunpack.c.h.b16 %v8223
    %v9764 = vunpack.c.l.b16 %v8224
    %v9765 = vunpack.c.h.b16 %v8224
    %v9766 = vunpack.c.l.b16 %v8225
    %v9767 = vunpack.c.h.b16 %v8225
    %v9768 = vunpack.c.l.b16 %v8226
    %v9769 = vunpack.c.h.b16 %v8226
    %v9770 = vunpack.c.l.b16 %v8227
    %v9771 = vunpack.c.h.b16 %v8227
    %v9772 = vunpack.c.l.b16 %v8228
    %v9773 = vunpack.c.h.b16 %v8228
    %v9774 = vunpack.c.l.b16 %v8229
    %v9775 = vunpack.c.h.b16 %v8229
    %v9776 = vunpack.c.l.b16 %v8230
    %v9777 = vunpack.c.h.b16 %v8230
    %v9778 = vunpack.c.l.b16 %v8231
    %v9779 = vunpack.c.h.b16 %v8231
    %v9780 = vunpack.c.l.b16 %v8232
    %v9781 = vunpack.c.h.b16 %v8232
    %v9782 = vunpack.c.l.b16 %v8233
    %v9783 = vunpack.c.h.b16 %v8233
    %v9784 = vunpack.c.l.b16 %v8234
    %v9785 = vunpack.c.h.b16 %v8234
    %v9786 = vunpack.c.l.b16 %v8235
    %v9787 = vunpack.c.h.b16 %v8235
    %v9788 = vunpack.c.l.b16 %v8236
    %v9789 = vunpack.c.h.b16 %v8236
    %v9790 = vunpack.c.l.b16 %v8237
    %v9791 = vunpack.c.h.b16 %v8237
    %v9792 = vunpack.c.l.b16 %v8238
    %v9793 = vunpack.c.h.b16 %v8238
    %v9794 = vunpack.c.l.b16 %v8239
    %v9795 = vunpack.c.h.b16 %v8239
    %v9796 = vunpack.c.l.b16 %v8240
    %v9797 = vunpack.c.h.b16 %v8240
    %v9798 = vunpack.c.l.b16 %v8241
    %v9799 = vunpack.c.h.b16 %v8241
    %v9800 = vunpack.c.l.b16 %v8242
    %v9801 = vunpack.c.h.b16 %v8242
    %v9802 = vunpack.c.l.b16 %v8243
    %v9803 = vunpack.c.h.b16 %v8243
    %v9804 = vunpack.c.l.b16 %v8244
    %v9805 = vunpack.c.h.b16 %v8244
    %v9806 = vunpack.c.l.b16 %v8245
    %v9807 = vunpack.c.h.b16 %v8245
    %v9808 = vunpack.c.l.b16 %v8246
    %v9809 = vunpack.c.h.b16 %v8246
    %v9810 = vunpack.c.l.b16 %v8247
    %v9811 = vunpack.c.h.b16 %v8247
    %v9812 = vunpack.c.l.b16 %v8248
    %v9813 = vunpack.c.h.b16 %v8248
    %v9814 = vunpack.c.l.b16 %v8249
    %v9815 = vunpack.c.h.b16 %v8249
    %v9816 = vunpack.c.l.b16 %v8250
    %v9817 = vunpack.c.h.b16 %v8250
    %v9818 = vunpack.c.l.b16 %v8251
    %v9819 = vunpack.c.h.b16 %v8251
    %v9820 = vunpack.c.l.b16 %v8252
    %v9821 = vunpack.c.h.b16 %v8252
    %v9822 = vunpack.c.l.b16 %v8253
    %v9823 = vunpack.c.h.b16 %v8253
    %v9824 = vunpack.c.l.b16 %v8254
    %v9825 = vunpack.c.h.b16 %v8254
    %v9826 = vunpack.c.l.b16 %v8255
    %v9827 = vunpack.c.h.b16 %v8255
    %v9828 = vunpack.c.l.b16 %v8256
    %v9829 = vunpack.c.h.b16 %v8256
    %v9830 = vunpack.c.l.b16 %v8257
    %v9831 = vunpack.c.h.b16 %v8257
    %v9832 = vunpack.c.l.b16 %v8258
    %v9833 = vunpack.c.h.b16 %v8258
    %v9834 = vunpack.c.l.b16 %v8259
    %v9835 = vunpack.c.h.b16 %v8259
    %v9836 = vunpack.c.l.b16 %v8260
    %v9837 = vunpack.c.h.b16 %v8260
    %v9838 = vunpack.c.l.b16 %v8261
    %v9839 = vunpack.c.h.b16 %v8261
    %v9840 = vpack.c.b16 %v8824, %v8816
    %v9841 = vpack.c.b16 %v8825, %v8817
    %v9842 = vpack.c.b16 %v8826, %v8818
    %v9843 = vpack.c.b16 %v8827, %v8819
    %v9844 = vpack.c.b16 %v8828, %v8820
    %v9845 = vpack.c.b16 %v8829, %v8821
    %v9846 = vpack.c.b16 %v8830, %v8822
    %v9847 = vpack.c.b16 %v8831, %v8823
    %v9848 = vpack.c.b16 %v8840, %v8832
    %v9849 = vpack.c.b16 %v8841, %v8833
    %v9850 = vpack.c.b16 %v8842, %v8834
    %v9851 = vpack.c.b16 %v8843, %v8835
    %v9852 = vpack.c.b16 %v8844, %v8836
    %v9853 = vpack.c.b16 %v8845, %v8837
    %v9854 = vpack.c.b16 %v8846, %v8838
    %v9855 = vpack.c.b16 %v8847, %v8839
    %v9856 = vpack.c.b16 %v8856, %v8848
    %v9857 = vpack.c.b16 %v8857, %v8849
    %v9858 = vpack.c.b16 %v8858, %v8850
    %v9859 = vpack.c.b16 %v8859, %v8851
    %v9860 = vpack.c.b16 %v8860, %v8852
    %v9861 = vpack.c.b16 %v8861, %v8853
    %v9862 = vpack.c.b16 %v8862, %v8854
    %v9863 = vpack.c.b16 %v8863, %v8855
    %v9864 = vpack.c.b16 %v8872, %v8864
    %v9865 = vpack.c.b16 %v8873, %v8865
    %v9866 = vpack.c.b16 %v8874, %v8866
    %v9867 = vpack.c.b16 %v8875, %v8867
    %v9868 = vpack.c.b16 %v8876, %v8868
    %v9869 = vpack.c.b16 %v8877, %v8869
    %v9870 = vpack.c.b16 %v8878, %v8870
    %v9871 = vpack.c.b16 %v8879, %v8871
    %v9872 = vpack.c.b16 %v8888, %v8880
    %v9873 = vpack.c.b16 %v8889, %v8881
    %v9874 = vpack.c.b16 %v8890, %v8882
    %v9875 = vpack.c.b16 %v8891, %v8883
    %v9876 = vpack.c.b16 %v8892, %v8884
    %v9877 = vpack.c.b16 %v8893, %v8885
    %v9878 = vpack.c.b16 %v8894, %v8886
    %v9879 = vpack.c.b16 %v8895, %v8887
    %v9880 = vpack.c.b16 %v8904, %v8896
    %v9881 = vpack.c.b16 %v8905, %v8897
    %v9882 = vpack.c.b16 %v8906, %v8898
    %v9883 = vpack.c.b16 %v8907, %v8899
    %v9884 = vpack.c.b16 %v8908, %v8900
    %v9885 = vpack.c.b16 %v8909, %v8901
    %v9886 = vpack.c.b16 %v8910, %v8902
    %v9887 = vpack.c.b16 %v8911, %v8903
    %v9888 = vpack.c.b16 %v8920, %v8912
    %v9889 = vpack.c.b16 %v8921, %v8913
    %v9890 = vpack.c.b16 %v8922, %v8914
    %v9891 = vpack.c.b16 %v8923, %v8915
    %v9892 = vpack.c.b16 %v8924, %v8916
    %v9893 = vpack.c.b16 %v8925, %v8917
    %v9894 = vpack.c.b16 %v8926, %v8918
    %v9895 = vpack.c.b16 %v8927, %v8919
    %v9896 = vpack.c.b16 %v8936, %v8928
    %v9897 = vpack.c.b16 %v8937, %v8929
    %v9898 = vpack.c.b16 %v8938, %v8930
    %v9899 = vpack.c.b16 %v8939, %v8931
    %v9900 = vpack.c.b16 %v8940, %v8932
    %v9901 = vpack.c.b16 %v8941, %v8933
    %v9902 = vpack.c.b16 %v8942, %v8934
    %v9903 = vpack.c.b16 %v8943, %v8935
    %v9904 = vpack.c.b16 %v8952, %v8944
    %v9905 = vpack.c.b16 %v8953, %v8945
    %v9906 = vpack.c.b16 %v8954, %v8946
    %v9907 = vpack.c.b16 %v8955, %v8947
    %v9908 = vpack.c.b16 %v8956, %v8948
    %v9909 = vpack.c.b16 %v8957, %v8949
    %v9910 = vpack.c.b16 %v8958, %v8950
    %v9911 = vpack.c.b16 %v8959, %v8951
    %v9912 = vpack.c.b16 %v8968, %v8960
    %v9913 = vpack.c.b16 %v8969, %v8961
    %v9914 = vpack.c.b16 %v8970, %v8962
    %v9915 = vpack.c.b16 %v8971, %v8963
    %v9916 = vpack.c.b16 %v8972, %v8964
    %v9917 = vpack.c.b16 %v8973, %v8965
    %v9918 = vpack.c.b16 %v8974, %v8966
    %v9919 = vpack.c.b16 %v8975, %v8967
    %v9920 = vpack.c.b16 %v8984, %v8976
    %v9921 = vpack.c.b16 %v8985, %v8977
    %v9922 = vpack.c.b16 %v8986, %v8978
    %v9923 = vpack.c.b16 %v8987, %v8979
    %v9924 = vpack.c.b16 %v8988, %v8980
    %v9925 = vpack.c.b16 %v8989, %v8981
    %v9926 = vpack.c.b16 %v8990, %v8982
    %v9927 = vpack.c.b16 %v8991, %v8983
    %v9928 = vpack.c.b16 %v9000, %v8992
    %v9929 = vpack.c.b16 %v9001, %v8993
    %v9930 = vpack.c.b16 %v9002, %v8994
    %v9931 = vpack.c.b16 %v9003, %v8995
    %v9932 = vpack.c.b16 %v9004, %v8996
    %v9933 = vpack.c.b16 %v9005, %v8997
    %v9934 = vpack.c.b16 %v9006, %v8998
    %v9935 = vpack.c.b16 %v9007, %v8999
    %v9936 = vpack.c.b16 %v9016, %v9008
    %v9937 = vpack.c.b16 %v9017, %v9009
    %v9938 = vpack.c.b16 %v9018, %v9010
    %v9939 = vpack.c.b16 %v9019, %v9011
    %v9940 = vpack.c.b16 %v9020, %v9012
    %v9941 = vpack.c.b16 %v9021, %v9013
    %v9942 = vpack.c.b16 %v9022, %v9014
    %v9943 = vpack.c.b16 %v9023, %v9015
    %v9944 = vpack.c.b16 %v9032, %v9024
    %v9945 = vpack.c.b16 %v9033, %v9025
    %v9946 = vpack.c.b16 %v9034, %v9026
    %v9947 = vpack.c.b16 %v9035, %v9027
    %v9948 = vpack.c.b16 %v9036, %v9028
    %v9949 = vpack.c.b16 %v9037, %v9029
    %v9950 = vpack.c.b16 %v9038, %v9030
    %v9951 = vpack.c.b16 %v9039, %v9031
    %v9952 = vpack.c.b16 %v9048, %v9040
    %v9953 = vpack.c.b16 %v9049, %v9041
    %v9954 = vpack.c.b16 %v9050, %v9042
    %v9955 = vpack.c.b16 %v9051, %v9043
    %v9956 = vpack.c.b16 %v9052, %v9044
    %v9957 = vpack.c.b16 %v9053, %v9045
    %v9958 = vpack.c.b16 %v9054, %v9046
    %v9959 = vpack.c.b16 %v9055, %v9047
    %v9960 = vpack.c.b16 %v9064, %v9056
    %v9961 = vpack.c.b16 %v9065, %v9057
    %v9962 = vpack.c.b16 %v9066, %v9058
    %v9963 = vpack.c.b16 %v9067, %v9059
    %v9964 = vpack.c.b16 %v9068, %v9060
    %v9965 = vpack.c.b16 %v9069, %v9061
    %v9966 = vpack.c.b16 %v9070, %v9062
    %v9967 = vpack.c.b16 %v9071, %v9063
    %v9968 = vpack.c.b16 %v9080, %v9072
    %v9969 = vpack.c.b16 %v9081, %v9073
    %v9970 = vpack.c.b16 %v9082, %v9074
    %v9971 = vpack.c.b16 %v9083, %v9075
    %v9972 = vpack.c.b16 %v9084, %v9076
    %v9973 = vpack.c.b16 %v9085, %v9077
    %v9974 = vpack.c.b16 %v9086, %v9078
    %v9975 = vpack.c.b16 %v9087, %v9079
    %v9976 = vpack.c.b16 %v9096, %v9088
    %v9977 = vpack.c.b16 %v9097, %v9089
    %v9978 = vpack.c.b16 %v9098, %v9090
    %v9979 = vpack.c.b16 %v9099, %v9091
    %v9980 = vpack.c.b16 %v9100, %v9092
    %v9981 = vpack.c.b16 %v9101, %v9093
    %v9982 = vpack.c.b16 %v9102, %v9094
    %v9983 = vpack.c.b16 %v9103, %v9095
    %v9984 = vpack.c.b16 %v9112, %v9104
    %v9985 = vpack.c.b16 %v9113, %v9105
    %v9986 = vpack.c.b16 %v9114, %v9106
    %v9987 = vpack.c.b16 %v9115, %v9107
    %v9988 = vpack.c.b16 %v9116, %v9108
    %v9989 = vpack.c.b16 %v9117, %v9109
    %v9990 = vpack.c.b16 %v9118, %v9110
    %v9991 = vpack.c.b16 %v9119, %v9111
    %v9992 = vpack.c.b16 %v9128, %v9120
    %v9993 = vpack.c.b16 %v9129, %v9121
    %v9994 = vpack.c.b16 %v9130, %v9122
    %v9995 = vpack.c.b16 %v9131, %v9123
    %v9996 = vpack.c.b16 %v9132, %v9124
    %v9997 = vpack.c.b16 %v9133, %v9125
    %v9998 = vpack.c.b16 %v9134, %v9126
    %v9999 = vpack.c.b16 %v9135, %v9127
    %v10000 = vpack.c.b16 %v9144, %v9136
    %v10001 = vpack.c.b16 %v9145, %v9137
    %v10002 = vpack.c.b16 %v9146, %v9138
    %v10003 = vpack.c.b16 %v9147, %v9139
    %v10004 = vpack.c.b16 %v9148, %v9140
    %v10005 = vpack.c.b16 %v9149, %v9141
    %v10006 = vpack.c.b16 %v9150, %v9142
    %v10007 = vpack.c.b16 %v9151, %v9143
    %v10008 = vpack.c.b16 %v9160, %v9152
    %v10009 = vpack.c.b16 %v9161, %v9153
    %v10010 = vpack.c.b16 %v9162, %v9154
    %v10011 = vpack.c.b16 %v9163, %v9155
    %v10012 = vpack.c.b16 %v9164, %v9156
    %v10013 = vpack.c.b16 %v9165, %v9157
    %v10014 = vpack.c.b16 %v9166, %v9158
    %v10015 = vpack.c.b16 %v9167, %v9159
    %v10016 = vpack.c.b16 %v9176, %v9168
    %v10017 = vpack.c.b16 %v9177, %v9169
    %v10018 = vpack.c.b16 %v9178, %v9170
    %v10019 = vpack.c.b16 %v9179, %v9171
    %v10020 = vpack.c.b16 %v9180, %v9172
    %v10021 = vpack.c.b16 %v9181, %v9173
    %v10022 = vpack.c.b16 %v9182, %v9174
    %v10023 = vpack.c.b16 %v9183, %v9175
    %v10024 = vpack.c.b16 %v9192, %v9184
    %v10025 = vpack.c.b16 %v9193, %v9185
    %v10026 = vpack.c.b16 %v9194, %v9186
    %v10027 = vpack.c.b16 %v9195, %v9187
    %v10028 = vpack.c.b16 %v9196, %v9188
    %v10029 = vpack.c.b16 %v9197, %v9189
    %v10030 = vpack.c.b16 %v9198, %v9190
    %v10031 = vpack.c.b16 %v9199, %v9191
    %v10032 = vpack.c.b16 %v9208, %v9200
    %v10033 = vpack.c.b16 %v9209, %v9201
    %v10034 = vpack.c.b16 %v9210, %v9202
    %v10035 = vpack.c.b16 %v9211, %v9203
    %v10036 = vpack.c.b16 %v9212, %v9204
    %v10037 = vpack.c.b16 %v9213, %v9205
    %v10038 = vpack.c.b16 %v9214, %v9206
    %v10039 = vpack.c.b16 %v9215, %v9207
    %v10040 = vpack.c.b16 %v9224, %v9216
    %v10041 = vpack.c.b16 %v9225, %v9217
    %v10042 = vpack.c.b16 %v9226, %v9218
    %v10043 = vpack.c.b16 %v9227, %v9219
    %v10044 = vpack.c.b16 %v9228, %v9220
    %v10045 = vpack.c.b16 %v9229, %v9221
    %v10046 = vpack.c.b16 %v9230, %v9222
    %v10047 = vpack.c.b16 %v9231, %v9223
    %v10048 = vpack.c.b16 %v9240, %v9232
    %v10049 = vpack.c.b16 %v9241, %v9233
    %v10050 = vpack.c.b16 %v9242, %v9234
    %v10051 = vpack.c.b16 %v9243, %v9235
    %v10052 = vpack.c.b16 %v9244, %v9236
    %v10053 = vpack.c.b16 %v9245, %v9237
    %v10054 = vpack.c.b16 %v9246, %v9238
    %v10055 = vpack.c.b16 %v9247, %v9239
    %v10056 = vpack.c.b16 %v9256, %v9248
    %v10057 = vpack.c.b16 %v9257, %v9249
    %v10058 = vpack.c.b16 %v9258, %v9250
    %v10059 = vpack.c.b16 %v9259, %v9251
    %v10060 = vpack.c.b16 %v9260, %v9252
    %v10061 = vpack.c.b16 %v9261, %v9253
    %v10062 = vpack.c.b16 %v9262, %v9254
    %v10063 = vpack.c.b16 %v9263, %v9255
    %v10064 = vpack.c.b16 %v9272, %v9264
    %v10065 = vpack.c.b16 %v9273, %v9265
    %v10066 = vpack.c.b16 %v9274, %v9266
    %v10067 = vpack.c.b16 %v9275, %v9267
    %v10068 = vpack.c.b16 %v9276, %v9268
    %v10069 = vpack.c.b16 %v9277, %v9269
    %v10070 = vpack.c.b16 %v9278, %v9270
    %v10071 = vpack.c.b16 %v9279, %v9271
    %v10072 = vpack.c.b16 %v9288, %v9280
    %v10073 = vpack.c.b16 %v9289, %v9281
    %v10074 = vpack.c.b16 %v9290, %v9282
    %v10075 = vpack.c.b16 %v9291, %v9283
    %v10076 = vpack.c.b16 %v9292, %v9284
    %v10077 = vpack.c.b16 %v9293, %v9285
    %v10078 = vpack.c.b16 %v9294, %v9286
    %v10079 = vpack.c.b16 %v9295, %v9287
    %v10080 = vpack.c.b16 %v9304, %v9296
    %v10081 = vpack.c.b16 %v9305, %v9297
    %v10082 = vpack.c.b16 %v9306, %v9298
    %v10083 = vpack.c.b16 %v9307, %v9299
    %v10084 = vpack.c.b16 %v9308, %v9300
    %v10085 = vpack.c.b16 %v9309, %v9301
    %v10086 = vpack.c.b16 %v9310, %v9302
    %v10087 = vpack.c.b16 %v9311, %v9303
    %v10088 = vpack.c.b16 %v9320, %v9312
    %v10089 = vpack.c.b16 %v9321, %v9313
    %v10090 = vpack.c.b16 %v9322, %v9314
    %v10091 = vpack.c.b16 %v9323, %v9315
    %v10092 = vpack.c.b16 %v9324, %v9316
    %v10093 = vpack.c.b16 %v9325, %v9317
    %v10094 = vpack.c.b16 %v9326, %v9318
    %v10095 = vpack.c.b16 %v9327, %v9319
    %v10096 = vpack.c.b16 %v9336, %v9328
    %v10097 = vpack.c.b16 %v9337, %v9329
    %v10098 = vpack.c.b16 %v9338, %v9330
    %v10099 = vpack.c.b16 %v9339, %v9331
    %v10100 = vpack.c.b16 %v9340, %v9332
    %v10101 = vpack.c.b16 %v9341, %v9333
    %v10102 = vpack.c.b16 %v9342, %v9334
    %v10103 = vpack.c.b16 %v9343, %v9335
    %v10104 = vpack.c.b16 %v9352, %v9344
    %v10105 = vpack.c.b16 %v9353, %v9345
    %v10106 = vpack.c.b16 %v9354, %v9346
    %v10107 = vpack.c.b16 %v9355, %v9347
    %v10108 = vpack.c.b16 %v9356, %v9348
    %v10109 = vpack.c.b16 %v9357, %v9349
    %v10110 = vpack.c.b16 %v9358, %v9350
    %v10111 = vpack.c.b16 %v9359, %v9351
    %v10112 = vpack.c.b16 %v9368, %v9360
    %v10113 = vpack.c.b16 %v9369, %v9361
    %v10114 = vpack.c.b16 %v9370, %v9362
    %v10115 = vpack.c.b16 %v9371, %v9363
    %v10116 = vpack.c.b16 %v9372, %v9364
    %v10117 = vpack.c.b16 %v9373, %v9365
    %v10118 = vpack.c.b16 %v9374, %v9366
    %v10119 = vpack.c.b16 %v9375, %v9367
    %v10120 = vpack.c.b16 %v9384, %v9376
    %v10121 = vpack.c.b16 %v9385, %v9377
    %v10122 = vpack.c.b16 %v9386, %v9378
    %v10123 = vpack.c.b16 %v9387, %v9379
    %v10124 = vpack.c.b16 %v9388, %v9380
    %v10125 = vpack.c.b16 %v9389, %v9381
    %v10126 = vpack.c.b16 %v9390, %v9382
    %v10127 = vpack.c.b16 %v9391, %v9383
    %v10128 = vpack.c.b16 %v9400, %v9392
    %v10129 = vpack.c.b16 %v9401, %v9393
    %v10130 = vpack.c.b16 %v9402, %v9394
    %v10131 = vpack.c.b16 %v9403, %v9395
    %v10132 = vpack.c.b16 %v9404, %v9396
    %v10133 = vpack.c.b16 %v9405, %v9397
    %v10134 = vpack.c.b16 %v9406, %v9398
    %v10135 = vpack.c.b16 %v9407, %v9399
    %v10136 = vpack.c.b16 %v9416, %v9408
    %v10137 = vpack.c.b16 %v9417, %v9409
    %v10138 = vpack.c.b16 %v9418, %v9410
    %v10139 = vpack.c.b16 %v9419, %v9411
    %v10140 = vpack.c.b16 %v9420, %v9412
    %v10141 = vpack.c.b16 %v9421, %v9413
    %v10142 = vpack.c.b16 %v9422, %v9414
    %v10143 = vpack.c.b16 %v9423, %v9415
    %v10144 = vpack.c.b16 %v9432, %v9424
    %v10145 = vpack.c.b16 %v9433, %v9425
    %v10146 = vpack.c.b16 %v9434, %v9426
    %v10147 = vpack.c.b16 %v9435, %v9427
    %v10148 = vpack.c.b16 %v9436, %v9428
    %v10149 = vpack.c.b16 %v9437, %v9429
    %v10150 = vpack.c.b16 %v9438, %v9430
    %v10151 = vpack.c.b16 %v9439, %v9431
    %v10152 = vpack.c.b16 %v9448, %v9440
    %v10153 = vpack.c.b16 %v9449, %v9441
    %v10154 = vpack.c.b16 %v9450, %v9442
    %v10155 = vpack.c.b16 %v9451, %v9443
    %v10156 = vpack.c.b16 %v9452, %v9444
    %v10157 = vpack.c.b16 %v9453, %v9445
    %v10158 = vpack.c.b16 %v9454, %v9446
    %v10159 = vpack.c.b16 %v9455, %v9447
    %v10160 = vpack.c.b16 %v9464, %v9456
    %v10161 = vpack.c.b16 %v9465, %v9457
    %v10162 = vpack.c.b16 %v9466, %v9458
    %v10163 = vpack.c.b16 %v9467, %v9459
    %v10164 = vpack.c.b16 %v9468, %v9460
    %v10165 = vpack.c.b16 %v9469, %v9461
    %v10166 = vpack.c.b16 %v9470, %v9462
    %v10167 = vpack.c.b16 %v9471, %v9463
    %v10168 = vpack.c.b16 %v9480, %v9472
    %v10169 = vpack.c.b16 %v9481, %v9473
    %v10170 = vpack.c.b16 %v9482, %v9474
    %v10171 = vpack.c.b16 %v9483, %v9475
    %v10172 = vpack.c.b16 %v9484, %v9476
    %v10173 = vpack.c.b16 %v9485, %v9477
    %v10174 = vpack.c.b16 %v9486, %v9478
    %v10175 = vpack.c.b16 %v9487, %v9479
    %v10176 = vpack.c.b16 %v9496, %v9488
    %v10177 = vpack.c.b16 %v9497, %v9489
    %v10178 = vpack.c.b16 %v9498, %v9490
    %v10179 = vpack.c.b16 %v9499, %v9491
    %v10180 = vpack.c.b16 %v9500, %v9492
    %v10181 = vpack.c.b16 %v9501, %v9493
    %v10182 = vpack.c.b16 %v9502, %v9494
    %v10183 = vpack.c.b16 %v9503, %v9495
    %v10184 = vpack.c.b16 %v9512, %v9504
    %v10185 = vpack.c.b16 %v9513, %v9505
    %v10186 = vpack.c.b16 %v9514, %v9506
    %v10187 = vpack.c.b16 %v9515, %v9507
    %v10188 = vpack.c.b16 %v9516, %v9508
    %v10189 = vpack.c.b16 %v9517, %v9509
    %v10190 = vpack.c.b16 %v9518, %v9510
    %v10191 = vpack.c.b16 %v9519, %v9511
    %v10192 = vpack.c.b16 %v9528, %v9520
    %v10193 = vpack.c.b16 %v9529, %v9521
    %v10194 = vpack.c.b16 %v9530, %v9522
    %v10195 = vpack.c.b16 %v9531, %v9523
    %v10196 = vpack.c.b16 %v9532, %v9524
    %v10197 = vpack.c.b16 %v9533, %v9525
    %v10198 = vpack.c.b16 %v9534, %v9526
    %v10199 = vpack.c.b16 %v9535, %v9527
    %v10200 = vpack.c.b16 %v9544, %v9536
    %v10201 = vpack.c.b16 %v9545, %v9537
    %v10202 = vpack.c.b16 %v9546, %v9538
    %v10203 = vpack.c.b16 %v9547, %v9539
    %v10204 = vpack.c.b16 %v9548, %v9540
    %v10205 = vpack.c.b16 %v9549, %v9541
    %v10206 = vpack.c.b16 %v9550, %v9542
    %v10207 = vpack.c.b16 %v9551, %v9543
    %v10208 = vpack.c.b16 %v9560, %v9552
    %v10209 = vpack.c.b16 %v9561, %v9553
    %v10210 = vpack.c.b16 %v9562, %v9554
    %v10211 = vpack.c.b16 %v9563, %v9555
    %v10212 = vpack.c.b16 %v9564, %v9556
    %v10213 = vpack.c.b16 %v9565, %v9557
    %v10214 = vpack.c.b16 %v9566, %v9558
    %v10215 = vpack.c.b16 %v9567, %v9559
    %v10216 = vpack.c.b16 %v9576, %v9568
    %v10217 = vpack.c.b16 %v9577, %v9569
    %v10218 = vpack.c.b16 %v9578, %v9570
    %v10219 = vpack.c.b16 %v9579, %v9571
    %v10220 = vpack.c.b16 %v9580, %v9572
    %v10221 = vpack.c.b16 %v9581, %v9573
    %v10222 = vpack.c.b16 %v9582, %v9574
    %v10223 = vpack.c.b16 %v9583, %v9575
    %v10224 = vpack.c.b16 %v9592, %v9584
    %v10225 = vpack.c.b16 %v9593, %v9585
    %v10226 = vpack.c.b16 %v9594, %v9586
    %v10227 = vpack.c.b16 %v9595, %v9587
    %v10228 = vpack.c.b16 %v9596, %v9588
    %v10229 = vpack.c.b16 %v9597, %v9589
    %v10230 = vpack.c.b16 %v9598, %v9590
    %v10231 = vpack.c.b16 %v9599, %v9591
    %v10232 = vpack.c.b16 %v9608, %v9600
    %v10233 = vpack.c.b16 %v9609, %v9601
    %v10234 = vpack.c.b16 %v9610, %v9602
    %v10235 = vpack.c.b16 %v9611, %v9603
    %v10236 = vpack.c.b16 %v9612, %v9604
    %v10237 = vpack.c.b16 %v9613, %v9605
    %v10238 = vpack.c.b16 %v9614, %v9606
    %v10239 = vpack.c.b16 %v9615, %v9607
    %v10240 = vpack.c.b16 %v9624, %v9616
    %v10241 = vpack.c.b16 %v9625, %v9617
    %v10242 = vpack.c.b16 %v9626, %v9618
    %v10243 = vpack.c.b16 %v9627, %v9619
    %v10244 = vpack.c.b16 %v9628, %v9620
    %v10245 = vpack.c.b16 %v9629, %v9621
    %v10246 = vpack.c.b16 %v9630, %v9622
    %v10247 = vpack.c.b16 %v9631, %v9623
    %v10248 = vpack.c.b16 %v9640, %v9632
    %v10249 = vpack.c.b16 %v9641, %v9633
    %v10250 = vpack.c.b16 %v9642, %v9634
    %v10251 = vpack.c.b16 %v9643, %v9635
    %v10252 = vpack.c.b16 %v9644, %v9636
    %v10253 = vpack.c.b16 %v9645, %v9637
    %v10254 = vpack.c.b16 %v9646, %v9638
    %v10255 = vpack.c.b16 %v9647, %v9639
    %v10256 = vpack.c.b16 %v9656, %v9648
    %v10257 = vpack.c.b16 %v9657, %v9649
    %v10258 = vpack.c.b16 %v9658, %v9650
    %v10259 = vpack.c.b16 %v9659, %v9651
    %v10260 = vpack.c.b16 %v9660, %v9652
    %v10261 = vpack.c.b16 %v9661, %v9653
    %v10262 = vpack.c.b16 %v9662, %v9654
    %v10263 = vpack.c.b16 %v9663, %v9655
    %v10264 = vpack.c.b16 %v9672, %v9664
    %v10265 = vpack.c.b16 %v9673, %v9665
    %v10266 = vpack.c.b16 %v9674, %v9666
    %v10267 = vpack.c.b16 %v9675, %v9667
    %v10268 = vpack.c.b16 %v9676, %v9668
    %v10269 = vpack.c.b16 %v9677, %v9669
    %v10270 = vpack.c.b16 %v9678, %v9670
    %v10271 = vpack.c.b16 %v9679, %v9671
    %v10272 = vpack.c.b16 %v9688, %v9680
    %v10273 = vpack.c.b16 %v9689, %v9681
    %v10274 = vpack.c.b16 %v9690, %v9682
    %v10275 = vpack.c.b16 %v9691, %v9683
    %v10276 = vpack.c.b16 %v9692, %v9684
    %v10277 = vpack.c.b16 %v9693, %v9685
    %v10278 = vpack.c.b16 %v9694, %v9686
    %v10279 = vpack.c.b16 %v9695, %v9687
    %v10280 = vpack.c.b16 %v9704, %v9696
    %v10281 = vpack.c.b16 %v9705, %v9697
    %v10282 = vpack.c.b16 %v9706, %v9698
    %v10283 = vpack.c.b16 %v9707, %v9699
    %v10284 = vpack.c.b16 %v9708, %v9700
    %v10285 = vpack.c.b16 %v9709, %v9701
    %v10286 = vpack.c.b16 %v9710, %v9702
    %v10287 = vpack.c.b16 %v9711, %v9703
    %v10288 = vpack.c.b16 %v9720, %v9712
    %v10289 = vpack.c.b16 %v9721, %v9713
    %v10290 = vpack.c.b16 %v9722, %v9714
    %v10291 = vpack.c.b16 %v9723, %v9715
    %v10292 = vpack.c.b16 %v9724, %v9716
    %v10293 = vpack.c.b16 %v9725, %v9717
    %v10294 = vpack.c.b16 %v9726, %v9718
    %v10295 = vpack.c.b16 %v9727, %v9719
    %v10296 = vpack.c.b16 %v9736, %v9728
    %v10297 = vpack.c.b16 %v9737, %v9729
    %v10298 = vpack.c.b16 %v9738, %v9730
    %v10299 = vpack.c.b16 %v9739, %v9731
    %v10300 = vpack.c.b16 %v9740, %v9732
    %v10301 = vpack.c.b16 %v9741, %v9733
    %v10302 = vpack.c.b16 %v9742, %v9734
    %v10303 = vpack.c.b16 %v9743, %v9735
    %v10304 = vpack.c.b16 %v9752, %v9744
    %v10305 = vpack.c.b16 %v9753, %v9745
    %v10306 = vpack.c.b16 %v9754, %v9746
    %v10307 = vpack.c.b16 %v9755, %v9747
    %v10308 = vpack.c.b16 %v9756, %v9748
    %v10309 = vpack.c.b16 %v9757, %v9749
    %v10310 = vpack.c.b16 %v9758, %v9750
    %v10311 = vpack.c.b16 %v9759, %v9751
    %v10312 = vpack.c.b16 %v9768, %v9760
    %v10313 = vpack.c.b16 %v9769, %v9761
    %v10314 = vpack.c.b16 %v9770, %v9762
    %v10315 = vpack.c.b16 %v9771, %v9763
    %v10316 = vpack.c.b16 %v9772, %v9764
    %v10317 = vpack.c.b16 %v9773, %v9765
    %v10318 = vpack.c.b16 %v9774, %v9766
    %v10319 = vpack.c.b16 %v9775, %v9767
    %v10320 = vpack.c.b16 %v9784, %v9776
    %v10321 = vpack.c.b16 %v9785, %v9777
    %v10322 = vpack.c.b16 %v9786, %v9778
    %v10323 = vpack.c.b16 %v9787, %v9779
    %v10324 = vpack.c.b16 %v9788, %v9780
    %v10325 = vpack.c.b16 %v9789, %v9781
    %v10326 = vpack.c.b16 %v9790, %v9782
    %v10327 = vpack.c.b16 %v9791, %v9783
    %v10328 = vpack.c.b16 %v9800, %v9792
    %v10329 = vpack.c.b16 %v9801, %v9793
    %v10330 = vpack.c.b16 %v9802, %v9794
    %v10331 = vpack.c.b16 %v9803, %v9795
    %v10332 = vpack.c.b16 %v9804, %v9796
    %v10333 = vpack.c.b16 %v9805, %v9797
    %v10334 = vpack.c.b16 %v9806, %v9798
    %v10335 = vpack.c.b16 %v9807, %v9799
    %v10336 = vpack.c.b16 %v9816, %v9808
    %v10337 = vpack.c.b16 %v9817, %v9809
    %v10338 = vpack.c.b16 %v9818, %v9810
    %v10339 = vpack.c.b16 %v9819, %v9811
    %v10340 = vpack.c.b16 %v9820, %v9812
    %v10341 = vpack.c.b16 %v9821, %v9813
    %v10342 = vpack.c.b16 %v9822, %v9814
    %v10343 = vpack.c.b16 %v9823, %v9815
    %v10344 = vpack.c.b16 %v9832, %v9824
    %v10345 = vpack.c.b16 %v9833, %v9825
    %v10346 = vpack.c.b16 %v9834, %v9826
    %v10347 = vpack.c.b16 %v9835, %v9827
    %v10348 = vpack.c.b16 %v9836, %v9828
    %v10349 = vpack.c.b16 %v9837, %v9829
    %v10350 = vpack.c.b16 %v9838, %v9830
    %v10351 = vpack.c.b16 %v9839, %v9831
    %10864 = vmatprep.subr.bf16.mxu0 %v9841
    %10865 = vmatpush1.bf16.msra.mxu0 %v9840
    %10866 = vmatprep.subr.bf16.mxu0 %v9849
    %10867 = vmatpush1.bf16.msra.mxu0 %v9848
    %10868 = vmatprep.subr.bf16.mxu0 %v9857
    %10869 = vmatpush1.bf16.msra.mxu0 %v9856
    %10870 = vmatprep.subr.bf16.mxu0 %v9865
    %10871 = vmatpush1.bf16.msra.mxu0 %v9864
    %10872 = vmatprep.subr.bf16.mxu0 %v9873
    %10873 = vmatpush1.bf16.msra.mxu0 %v9872
    %10874 = vmatprep.subr.bf16.mxu0 %v9881
    %10875 = vmatpush1.bf16.msra.mxu0 %v9880
    %10876 = vmatprep.subr.bf16.mxu0 %v9889
    %10877 = vmatpush1.bf16.msra.mxu0 %v9888
    %10878 = vmatprep.subr.bf16.mxu0 %v9897
    %10879 = vmatpush1.bf16.msra.mxu0 %v9896
    %10880 = vmatprep.subr.bf16.mxu0 %v9905
    %10881 = vmatpush1.bf16.msra.mxu0 %v9904
    %10882 = vmatprep.subr.bf16.mxu0 %v9913
    %10883 = vmatpush1.bf16.msra.mxu0 %v9912
    %10884 = vmatprep.subr.bf16.mxu0 %v9921
    %10885 = vmatpush1.bf16.msra.mxu0 %v9920
    %10886 = vmatprep.subr.bf16.mxu0 %v9929
    %10887 = vmatpush1.bf16.msra.mxu0 %v9928
    %10888 = vmatprep.subr.bf16.mxu0 %v9937
    %10889 = vmatpush1.bf16.msra.mxu0 %v9936
    %10890 = vmatprep.subr.bf16.mxu0 %v9945
    %10891 = vmatpush1.bf16.msra.mxu0 %v9944
    %10892 = vmatprep.subr.bf16.mxu0 %v9953
    %10893 = vmatpush1.bf16.msra.mxu0 %v9952
    %10894 = vmatprep.subr.bf16.mxu0 %v9961
    %10895 = vmatpush1.bf16.msra.mxu0 %v9960
    %10896 = vmatprep.mubr.bf16.mxu0 %v7743
    %10897 = vmatmul.mubr.bf16.gmra.mrb[0].mxu0 %v7742
    %v10898 = vpop.f32.mrb[0].mxu0
    %v10899 = vadd.f32 %v8267, %v10898
    %v10900 = vpop.f32.mrb[0].mxu0
    %v10901 = vadd.f32 %v8271, %v10900
    %v10902 = vpop.f32.mrb[0].mxu0
    %v10903 = vpop.f32.mrb[0].mxu0
    %10904 = vdwg.mxu0
    %10905 = vmatprep.subr.bf16.mxu0 %v9969
    %10906 = vmatpush1.bf16.msra.mxu0 %v9968
    %10907 = vmatprep.subr.bf16.mxu0 %v9977
    %10908 = vmatpush1.bf16.msra.mxu0 %v9976
    %10909 = vmatprep.subr.bf16.mxu0 %v9985
    %10910 = vmatpush1.bf16.msra.mxu0 %v9984
    %10911 = vmatprep.subr.bf16.mxu0 %v9993
    %10912 = vmatpush1.bf16.msra.mxu0 %v9992
    %10913 = vmatprep.subr.bf16.mxu0 %v10001
    %10914 = vmatpush1.bf16.msra.mxu0 %v10000
    %10915 = vmatprep.subr.bf16.mxu0 %v10009
    %10916 = vmatpush1.bf16.msra.mxu0 %v10008
    %10917 = vmatprep.subr.bf16.mxu0 %v10017
    %10918 = vmatpush1.bf16.msra.mxu0 %v10016
    %10919 = vmatprep.subr.bf16.mxu0 %v10025
    %10920 = vmatpush1.bf16.msra.mxu0 %v10024
    %10921 = vmatprep.subr.bf16.mxu0 %v10033
    %10922 = vmatpush1.bf16.msra.mxu0 %v10032
    %10923 = vmatprep.subr.bf16.mxu0 %v10041
    %10924 = vmatpush1.bf16.msra.mxu0 %v10040
    %10925 = vmatprep.subr.bf16.mxu0 %v10049
    %10926 = vmatpush1.bf16.msra.mxu0 %v10048
    %10927 = vmatprep.subr.bf16.mxu0 %v10057
    %10928 = vmatpush1.bf16.msra.mxu0 %v10056
    %10929 = vmatprep.subr.bf16.mxu0 %v10065
    %10930 = vmatpush1.bf16.msra.mxu0 %v10064
    %10931 = vmatprep.subr.bf16.mxu0 %v10073
    %10932 = vmatpush1.bf16.msra.mxu0 %v10072
    %10933 = vmatprep.subr.bf16.mxu0 %v10081
    %10934 = vmatpush1.bf16.msra.mxu0 %v10080
    %10935 = vmatprep.subr.bf16.mxu0 %v10089
    %10936 = vmatpush1.bf16.msra.mxu0 %v10088
    %10937 = vmatprep.mubr.bf16.mxu0 %v7745
    %10938 = vmatmul.mubr.bf16.gmra.mrb[0].mxu0 %v7744
    %v10939 = vpop.f32.mrb[0].mxu0
    %v10940 = vadd.f32 %v10899, %v10939
    %v10941 = vpop.f32.mrb[0].mxu0
    %v10942 = vadd.f32 %v10901, %v10941
    %v10943 = vpop.f32.mrb[0].mxu0
    %v10944 = vpop.f32.mrb[0].mxu0
    %10945 = vdwg.mxu0
    %10946 = vmatprep.subr.bf16.mxu0 %v10097
    %10947 = vmatpush1.bf16.msra.mxu0 %v10096
    %10948 = vmatprep.subr.bf16.mxu0 %v10105
    %10949 = vmatpush1.bf16.msra.mxu0 %v10104
    %10950 = vmatprep.subr.bf16.mxu0 %v10113
    %10951 = vmatpush1.bf16.msra.mxu0 %v10112
    %10952 = vmatprep.subr.bf16.mxu0 %v10121
    %10953 = vmatpush1.bf16.msra.mxu0 %v10120
    %10954 = vmatprep.subr.bf16.mxu0 %v10129
    %10955 = vmatpush1.bf16.msra.mxu0 %v10128
    %10956 = vmatprep.subr.bf16.mxu0 %v10137
    %10957 = vmatpush1.bf16.msra.mxu0 %v10136
    %10958 = vmatprep.subr.bf16.mxu0 %v10145
    %10959 = vmatpush1.bf16.msra.mxu0 %v10144
    %10960 = vmatprep.subr.bf16.mxu0 %v10153
    %10961 = vmatpush1.bf16.msra.mxu0 %v10152
    %10962 = vmatprep.subr.bf16.mxu0 %v10161
    %10963 = vmatpush1.bf16.msra.mxu0 %v10160
    %10964 = vmatprep.subr.bf16.mxu0 %v10169
    %10965 = vmatpush1.bf16.msra.mxu0 %v10168
    %10966 = vmatprep.subr.bf16.mxu0 %v10177
    %10967 = vmatpush1.bf16.msra.mxu0 %v10176
    %10968 = vmatprep.subr.bf16.mxu0 %v10185
    %10969 = vmatpush1.bf16.msra.mxu0 %v10184
    %10970 = vmatprep.subr.bf16.mxu0 %v10193
    %10971 = vmatpush1.bf16.msra.mxu0 %v10192
    %10972 = vmatprep.subr.bf16.mxu0 %v10201
    %10973 = vmatpush1.bf16.msra.mxu0 %v10200
    %10974 = vmatprep.subr.bf16.mxu0 %v10209
    %10975 = vmatpush1.bf16.msra.mxu0 %v10208
    %10976 = vmatprep.subr.bf16.mxu0 %v10217
    %10977 = vmatpush1.bf16.msra.mxu0 %v10216
    %10978 = vmatprep.mubr.bf16.mxu0 %v7747
    %10979 = vmatmul.mubr.bf16.gmra.mrb[0].mxu0 %v7746
    %v10980 = vpop.f32.mrb[0].mxu0
    %v10981 = vadd.f32 %v10940, %v10980
    %v10982 = vpop.f32.mrb[0].mxu0
    %v10983 = vadd.f32 %v10942, %v10982
    %v10984 = vpop.f32.mrb[0].mxu0
    %v10985 = vpop.f32.mrb[0].mxu0
    %10986 = vdwg.mxu0
    %10987 = vmatprep.subr.bf16.mxu0 %v10225
    %10988 = vmatpush1.bf16.msra.mxu0 %v10224
    %10989 = vmatprep.subr.bf16.mxu0 %v10233
    %10990 = vmatpush1.bf16.msra.mxu0 %v10232
    %10991 = vmatprep.subr.bf16.mxu0 %v10241
    %10992 = vmatpush1.bf16.msra.mxu0 %v10240
    %10993 = vmatprep.subr.bf16.mxu0 %v10249
    %10994 = vmatpush1.bf16.msra.mxu0 %v10248
    %10995 = vmatprep.subr.bf16.mxu0 %v10257
    %10996 = vmatpush1.bf16.msra.mxu0 %v10256
    %10997 = vmatprep.subr.bf16.mxu0 %v10265
    %10998 = vmatpush1.bf16.msra.mxu0 %v10264
    %10999 = vmatprep.subr.bf16.mxu0 %v10273
    %11000 = vmatpush1.bf16.msra.mxu0 %v10272
    %11001 = vmatprep.subr.bf16.mxu0 %v10281
    %11002 = vmatpush1.bf16.msra.mxu0 %v10280
    %11003 = vmatprep.subr.bf16.mxu0 %v10289
    %11004 = vmatpush1.bf16.msra.mxu0 %v10288
    %11005 = vmatprep.subr.bf16.mxu0 %v10297
    %11006 = vmatpush1.bf16.msra.mxu0 %v10296
    %11007 = vmatprep.subr.bf16.mxu0 %v10305
    %11008 = vmatpush1.bf16.msra.mxu0 %v10304
    %11009 = vmatprep.subr.bf16.mxu0 %v10313
    %11010 = vmatpush1.bf16.msra.mxu0 %v10312
    %11011 = vmatprep.subr.bf16.mxu0 %v10321
    %11012 = vmatpush1.bf16.msra.mxu0 %v10320
    %11013 = vmatprep.subr.bf16.mxu0 %v10329
    %11014 = vmatpush1.bf16.msra.mxu0 %v10328
    %11015 = vmatprep.subr.bf16.mxu0 %v10337
    %11016 = vmatpush1.bf16.msra.mxu0 %v10336
    %11017 = vmatprep.subr.bf16.mxu0 %v10345
    %11018 = vmatpush1.bf16.msra.mxu0 %v10344
    %11019 = vmatprep.mubr.bf16.mxu0 %v7749
    %11020 = vmatmul.mubr.bf16.gmra.mrb[0].mxu0 %v7748
    %v11021 = vpop.f32.mrb[0].mxu0
    %v11022 = vadd.f32 %v10981, %v11021
    %v11023 = vpop.f32.mrb[0].mxu0
    %v11024 = vadd.f32 %v10983, %v11023
    %v11025 = vpop.f32.mrb[0].mxu0
    %v11026 = vpop.f32.mrb[0].mxu0
    %11027 = vdwg.mxu0
    %11028 = vmatprep.subr.bf16.mxu0 %v9843
    %11029 = vmatpush1.bf16.msra.mxu0 %v9842
    %11030 = vmatprep.subr.bf16.mxu0 %v9851
    %11031 = vmatpush1.bf16.msra.mxu0 %v9850
    %11032 = vmatprep.subr.bf16.mxu0 %v9859
    %11033 = vmatpush1.bf16.msra.mxu0 %v9858
    %11034 = vmatprep.subr.bf16.mxu0 %v9867
    %11035 = vmatpush1.bf16.msra.mxu0 %v9866
    %11036 = vmatprep.subr.bf16.mxu0 %v9875
    %11037 = vmatpush1.bf16.msra.mxu0 %v9874
    %11038 = vmatprep.subr.bf16.mxu0 %v9883
    %11039 = vmatpush1.bf16.msra.mxu0 %v9882
    %11040 = vmatprep.subr.bf16.mxu0 %v9891
    %11041 = vmatpush1.bf16.msra.mxu0 %v9890
    %11042 = vmatprep.subr.bf16.mxu0 %v9899
    %11043 = vmatpush1.bf16.msra.mxu0 %v9898
    %11044 = vmatprep.subr.bf16.mxu0 %v9907
    %11045 = vmatpush1.bf16.msra.mxu0 %v9906
    %11046 = vmatprep.subr.bf16.mxu0 %v9915
    %11047 = vmatpush1.bf16.msra.mxu0 %v9914
    %11048 = vmatprep.subr.bf16.mxu0 %v9923
    %11049 = vmatpush1.bf16.msra.mxu0 %v9922
    %11050 = vmatprep.subr.bf16.mxu0 %v9931
    %11051 = vmatpush1.bf16.msra.mxu0 %v9930
    %11052 = vmatprep.subr.bf16.mxu0 %v9939
    %11053 = vmatpush1.bf16.msra.mxu0 %v9938
    %11054 = vmatprep.subr.bf16.mxu0 %v9947
    %11055 = vmatpush1.bf16.msra.mxu0 %v9946
    %11056 = vmatprep.subr.bf16.mxu0 %v9955
    %11057 = vmatpush1.bf16.msra.mxu0 %v9954
    %11058 = vmatprep.subr.bf16.mxu0 %v9963
    %11059 = vmatpush1.bf16.msra.mxu0 %v9962
    %11060 = vmatprep.mubr.bf16.mxu0 %v7743
    %11061 = vmatmul.mubr.bf16.gmra.mrb[0].mxu0 %v7742
    %v11062 = vpop.f32.mrb[0].mxu0
    %v11063 = vadd.f32 %v8275, %v11062
    %v11064 = vpop.f32.mrb[0].mxu0
    %v11065 = vadd.f32 %v8279, %v11064
    %v11066 = vpop.f32.mrb[0].mxu0
    %v11067 = vpop.f32.mrb[0].mxu0
    %11068 = vdwg.mxu0
    %11069 = vmatprep.subr.bf16.mxu0 %v9971
    %11070 = vmatpush1.bf16.msra.mxu0 %v9970
    %11071 = vmatprep.subr.bf16.mxu0 %v9979
    %11072 = vmatpush1.bf16.msra.mxu0 %v9978
    %11073 = vmatprep.subr.bf16.mxu0 %v9987
    %11074 = vmatpush1.bf16.msra.mxu0 %v9986
    %11075 = vmatprep.subr.bf16.mxu0 %v9995
    %11076 = vmatpush1.bf16.msra.mxu0 %v9994
    %11077 = vmatprep.subr.bf16.mxu0 %v10003
    %11078 = vmatpush1.bf16.msra.mxu0 %v10002
    %11079 = vmatprep.subr.bf16.mxu0 %v10011
    %11080 = vmatpush1.bf16.msra.mxu0 %v10010
    %11081 = vmatprep.subr.bf16.mxu0 %v10019
    %11082 = vmatpush1.bf16.msra.mxu0 %v10018
    %11083 = vmatprep.subr.bf16.mxu0 %v10027
    %11084 = vmatpush1.bf16.msra.mxu0 %v10026
    %11085 = vmatprep.subr.bf16.mxu0 %v10035
    %11086 = vmatpush1.bf16.msra.mxu0 %v10034
    %11087 = vmatprep.subr.bf16.mxu0 %v10043
    %11088 = vmatpush1.bf16.msra.mxu0 %v10042
    %11089 = vmatprep.subr.bf16.mxu0 %v10051
    %11090 = vmatpush1.bf16.msra.mxu0 %v10050
    %11091 = vmatprep.subr.bf16.mxu0 %v10059
    %11092 = vmatpush1.bf16.msra.mxu0 %v10058
    %11093 = vmatprep.subr.bf16.mxu0 %v10067
    %11094 = vmatpush1.bf16.msra.mxu0 %v10066
    %11095 = vmatprep.subr.bf16.mxu0 %v10075
    %11096 = vmatpush1.bf16.msra.mxu0 %v10074
    %11097 = vmatprep.subr.bf16.mxu0 %v10083
    %11098 = vmatpush1.bf16.msra.mxu0 %v10082
    %11099 = vmatprep.subr.bf16.mxu0 %v10091
    %11100 = vmatpush1.bf16.msra.mxu0 %v10090
    %11101 = vmatprep.mubr.bf16.mxu0 %v7745
    %11102 = vmatmul.mubr.bf16.gmra.mrb[0].mxu0 %v7744
    %v11103 = vpop.f32.mrb[0].mxu0
    %v11104 = vadd.f32 %v11063, %v11103
    %v11105 = vpop.f32.mrb[0].mxu0
    %v11106 = vadd.f32 %v11065, %v11105
    %v11107 = vpop.f32.mrb[0].mxu0
    %v11108 = vpop.f32.mrb[0].mxu0
    %11109 = vdwg.mxu0
    %11110 = vmatprep.subr.bf16.mxu0 %v10099
    %11111 = vmatpush1.bf16.msra.mxu0 %v10098
    %11112 = vmatprep.subr.bf16.mxu0 %v10107
    %11113 = vmatpush1.bf16.msra.mxu0 %v10106
    %11114 = vmatprep.subr.bf16.mxu0 %v10115
    %11115 = vmatpush1.bf16.msra.mxu0 %v10114
    %11116 = vmatprep.subr.bf16.mxu0 %v10123
    %11117 = vmatpush1.bf16.msra.mxu0 %v10122
    %11118 = vmatprep.subr.bf16.mxu0 %v10131
    %11119 = vmatpush1.bf16.msra.mxu0 %v10130
    %11120 = vmatprep.subr.bf16.mxu0 %v10139
    %11121 = vmatpush1.bf16.msra.mxu0 %v10138
    %11122 = vmatprep.subr.bf16.mxu0 %v10147
    %11123 = vmatpush1.bf16.msra.mxu0 %v10146
    %11124 = vmatprep.subr.bf16.mxu0 %v10155
    %11125 = vmatpush1.bf16.msra.mxu0 %v10154
    %11126 = vmatprep.subr.bf16.mxu0 %v10163
    %11127 = vmatpush1.bf16.msra.mxu0 %v10162
    %11128 = vmatprep.subr.bf16.mxu0 %v10171
    %11129 = vmatpush1.bf16.msra.mxu0 %v10170
    %11130 = vmatprep.subr.bf16.mxu0 %v10179
    %11131 = vmatpush1.bf16.msra.mxu0 %v10178
    %11132 = vmatprep.subr.bf16.mxu0 %v10187
    %11133 = vmatpush1.bf16.msra.mxu0 %v10186
    %11134 = vmatprep.subr.bf16.mxu0 %v10195
    %11135 = vmatpush1.bf16.msra.mxu0 %v10194
    %11136 = vmatprep.subr.bf16.mxu0 %v10203
    %11137 = vmatpush1.bf16.msra.mxu0 %v10202
    %11138 = vmatprep.subr.bf16.mxu0 %v10211
    %11139 = vmatpush1.bf16.msra.mxu0 %v10210
    %11140 = vmatprep.subr.bf16.mxu0 %v10219
    %11141 = vmatpush1.bf16.msra.mxu0 %v10218
    %11142 = vmatprep.mubr.bf16.mxu0 %v7747
    %11143 = vmatmul.mubr.bf16.gmra.mrb[0].mxu0 %v7746
    %v11144 = vpop.f32.mrb[0].mxu0
    %v11145 = vadd.f32 %v11104, %v11144
    %v11146 = vpop.f32.mrb[0].mxu0
    %v11147 = vadd.f32 %v11106, %v11146
    %v11148 = vpop.f32.mrb[0].mxu0
    %v11149 = vpop.f32.mrb[0].mxu0
    %11150 = vdwg.mxu0
    %11151 = vmatprep.subr.bf16.mxu0 %v10227
    %11152 = vmatpush1.bf16.msra.mxu0 %v10226
    %11153 = vmatprep.subr.bf16.mxu0 %v10235
    %11154 = vmatpush1.bf16.msra.mxu0 %v10234
    %11155 = vmatprep.subr.bf16.mxu0 %v10243
    %11156 = vmatpush1.bf16.msra.mxu0 %v10242
    %11157 = vmatprep.subr.bf16.mxu0 %v10251
    %11158 = vmatpush1.bf16.msra.mxu0 %v10250
    %11159 = vmatprep.subr.bf16.mxu0 %v10259
    %11160 = vmatpush1.bf16.msra.mxu0 %v10258
    %11161 = vmatprep.subr.bf16.mxu0 %v10267
    %11162 = vmatpush1.bf16.msra.mxu0 %v10266
    %11163 = vmatprep.subr.bf16.mxu0 %v10275
    %11164 = vmatpush1.bf16.msra.mxu0 %v10274
    %11165 = vmatprep.subr.bf16.mxu0 %v10283
    %11166 = vmatpush1.bf16.msra.mxu0 %v10282
    %11167 = vmatprep.subr.bf16.mxu0 %v10291
    %11168 = vmatpush1.bf16.msra.mxu0 %v10290
    %11169 = vmatprep.subr.bf16.mxu0 %v10299
    %11170 = vmatpush1.bf16.msra.mxu0 %v10298
    %11171 = vmatprep.subr.bf16.mxu0 %v10307
    %11172 = vmatpush1.bf16.msra.mxu0 %v10306
    %11173 = vmatprep.subr.bf16.mxu0 %v10315
    %11174 = vmatpush1.bf16.msra.mxu0 %v10314
    %11175 = vmatprep.subr.bf16.mxu0 %v10323
    %11176 = vmatpush1.bf16.msra.mxu0 %v10322
    %11177 = vmatprep.subr.bf16.mxu0 %v10331
    %11178 = vmatpush1.bf16.msra.mxu0 %v10330
    %11179 = vmatprep.subr.bf16.mxu0 %v10339
    %11180 = vmatpush1.bf16.msra.mxu0 %v10338
    %11181 = vmatprep.subr.bf16.mxu0 %v10347
    %11182 = vmatpush1.bf16.msra.mxu0 %v10346
    %11183 = vmatprep.mubr.bf16.mxu0 %v7749
    %11184 = vmatmul.mubr.bf16.gmra.mrb[0].mxu0 %v7748
    %v11185 = vpop.f32.mrb[0].mxu0
    %v11186 = vadd.f32 %v11145, %v11185
    %v11187 = vpop.f32.mrb[0].mxu0
    %v11188 = vadd.f32 %v11147, %v11187
    %v11189 = vpop.f32.mrb[0].mxu0
    %v11190 = vpop.f32.mrb[0].mxu0
    %11191 = vdwg.mxu0
    %11192 = vmatprep.subr.bf16.mxu0 %v9845
    %11193 = vmatpush1.bf16.msra.mxu0 %v9844
    %11194 = vmatprep.subr.bf16.mxu0 %v9853
    %11195 = vmatpush1.bf16.msra.mxu0 %v9852
    %11196 = vmatprep.subr.bf16.mxu0 %v9861
    %11197 = vmatpush1.bf16.msra.mxu0 %v9860
    %11198 = vmatprep.subr.bf16.mxu0 %v9869
    %11199 = vmatpush1.bf16.msra.mxu0 %v9868
    %11200 = vmatprep.subr.bf16.mxu0 %v9877
    %11201 = vmatpush1.bf16.msra.mxu0 %v9876
    %11202 = vmatprep.subr.bf16.mxu0 %v9885
    %11203 = vmatpush1.bf16.msra.mxu0 %v9884
    %11204 = vmatprep.subr.bf16.mxu0 %v9893
    %11205 = vmatpush1.bf16.msra.mxu0 %v9892
    %11206 = vmatprep.subr.bf16.mxu0 %v9901
    %11207 = vmatpush1.bf16.msra.mxu0 %v9900
    %11208 = vmatprep.subr.bf16.mxu0 %v9909
    %11209 = vmatpush1.bf16.msra.mxu0 %v9908
    %11210 = vmatprep.subr.bf16.mxu0 %v9917
    %11211 = vmatpush1.bf16.msra.mxu0 %v9916
    %11212 = vmatprep.subr.bf16.mxu0 %v9925
    %11213 = vmatpush1.bf16.msra.mxu0 %v9924
    %11214 = vmatprep.subr.bf16.mxu0 %v9933
    %11215 = vmatpush1.bf16.msra.mxu0 %v9932
    %11216 = vmatprep.subr.bf16.mxu0 %v9941
    %11217 = vmatpush1.bf16.msra.mxu0 %v9940
    %11218 = vmatprep.subr.bf16.mxu0 %v9949
    %11219 = vmatpush1.bf16.msra.mxu0 %v9948
    %11220 = vmatprep.subr.bf16.mxu0 %v9957
    %11221 = vmatpush1.bf16.msra.mxu0 %v9956
    %11222 = vmatprep.subr.bf16.mxu0 %v9965
    %11223 = vmatpush1.bf16.msra.mxu0 %v9964
    %11224 = vmatprep.mubr.bf16.mxu0 %v7743
    %11225 = vmatmul.mubr.bf16.gmra.mrb[0].mxu0 %v7742
    %v11226 = vpop.f32.mrb[0].mxu0
    %v11227 = vadd.f32 %v8283, %v11226
    %v11228 = vpop.f32.mrb[0].mxu0
    %v11229 = vadd.f32 %v8287, %v11228
    %v11230 = vpop.f32.mrb[0].mxu0
    %v11231 = vpop.f32.mrb[0].mxu0
    %11232 = vdwg.mxu0
    %11233 = vmatprep.subr.bf16.mxu0 %v9973
    %11234 = vmatpush1.bf16.msra.mxu0 %v9972
    %11235 = vmatprep.subr.bf16.mxu0 %v9981
    %11236 = vmatpush1.bf16.msra.mxu0 %v9980
    %11237 = vmatprep.subr.bf16.mxu0 %v9989
    %11238 = vmatpush1.bf16.msra.mxu0 %v9988
    %11239 = vmatprep.subr.bf16.mxu0 %v9997
    %11240 = vmatpush1.bf16.msra.mxu0 %v9996
    %11241 = vmatprep.subr.bf16.mxu0 %v10005
    %11242 = vmatpush1.bf16.msra.mxu0 %v10004
    %11243 = vmatprep.subr.bf16.mxu0 %v10013
    %11244 = vmatpush1.bf16.msra.mxu0 %v10012
    %11245 = vmatprep.subr.bf16.mxu0 %v10021
    %11246 = vmatpush1.bf16.msra.mxu0 %v10020
    %11247 = vmatprep.subr.bf16.mxu0 %v10029
    %11248 = vmatpush1.bf16.msra.mxu0 %v10028
    %11249 = vmatprep.subr.bf16.mxu0 %v10037
    %11250 = vmatpush1.bf16.msra.mxu0 %v10036
    %11251 = vmatprep.subr.bf16.mxu0 %v10045
    %11252 = vmatpush1.bf16.msra.mxu0 %v10044
    %11253 = vmatprep.subr.bf16.mxu0 %v10053
    %11254 = vmatpush1.bf16.msra.mxu0 %v10052
    %11255 = vmatprep.subr.bf16.mxu0 %v10061
    %11256 = vmatpush1.bf16.msra.mxu0 %v10060
    %11257 = vmatprep.subr.bf16.mxu0 %v10069
    %11258 = vmatpush1.bf16.msra.mxu0 %v10068
    %11259 = vmatprep.subr.bf16.mxu0 %v10077
    %11260 = vmatpush1.bf16.msra.mxu0 %v10076
    %11261 = vmatprep.subr.bf16.mxu0 %v10085
    %11262 = vmatpush1.bf16.msra.mxu0 %v10084
    %11263 = vmatprep.subr.bf16.mxu0 %v10093
    %11264 = vmatpush1.bf16.msra.mxu0 %v10092
    %11265 = vmatprep.mubr.bf16.mxu0 %v7745
    %11266 = vmatmul.mubr.bf16.gmra.mrb[0].mxu0 %v7744
    %v11267 = vpop.f32.mrb[0].mxu0
    %v11268 = vadd.f32 %v11227, %v11267
    %v11269 = vpop.f32.mrb[0].mxu0
    %v11270 = vadd.f32 %v11229, %v11269
    %v11271 = vpop.f32.mrb[0].mxu0
    %v11272 = vpop.f32.mrb[0].mxu0
    %11273 = vdwg.mxu0
    %11274 = vmatprep.subr.bf16.mxu0 %v10101
    %11275 = vmatpush1.bf16.msra.mxu0 %v10100
    %11276 = vmatprep.subr.bf16.mxu0 %v10109
    %11277 = vmatpush1.bf16.msra.mxu0 %v10108
    %11278 = vmatprep.subr.bf16.mxu0 %v10117
    %11279 = vmatpush1.bf16.msra.mxu0 %v10116
    %11280 = vmatprep.subr.bf16.mxu0 %v10125
    %11281 = vmatpush1.bf16.msra.mxu0 %v10124
    %11282 = vmatprep.subr.bf16.mxu0 %v10133
    %11283 = vmatpush1.bf16.msra.mxu0 %v10132
    %11284 = vmatprep.subr.bf16.mxu0 %v10141
    %11285 = vmatpush1.bf16.msra.mxu0 %v10140
    %11286 = vmatprep.subr.bf16.mxu0 %v10149
    %11287 = vmatpush1.bf16.msra.mxu0 %v10148
    %11288 = vmatprep.subr.bf16.mxu0 %v10157
    %11289 = vmatpush1.bf16.msra.mxu0 %v10156
    %11290 = vmatprep.subr.bf16.mxu0 %v10165
    %11291 = vmatpush1.bf16.msra.mxu0 %v10164
    %11292 = vmatprep.subr.bf16.mxu0 %v10173
    %11293 = vmatpush1.bf16.msra.mxu0 %v10172
    %11294 = vmatprep.subr.bf16.mxu0 %v10181
    %11295 = vmatpush1.bf16.msra.mxu0 %v10180
    %11296 = vmatprep.subr.bf16.mxu0 %v10189
    %11297 = vmatpush1.bf16.msra.mxu0 %v10188
    %11298 = vmatprep.subr.bf16.mxu0 %v10197
    %11299 = vmatpush1.bf16.msra.mxu0 %v10196
    %11300 = vmatprep.subr.bf16.mxu0 %v10205
    %11301 = vmatpush1.bf16.msra.mxu0 %v10204
    %11302 = vmatprep.subr.bf16.mxu0 %v10213
    %11303 = vmatpush1.bf16.msra.mxu0 %v10212
    %11304 = vmatprep.subr.bf16.mxu0 %v10221
    %11305 = vmatpush1.bf16.msra.mxu0 %v10220
    %11306 = vmatprep.mubr.bf16.mxu0 %v7747
    %11307 = vmatmul.mubr.bf16.gmra.mrb[0].mxu0 %v7746
    %v11308 = vpop.f32.mrb[0].mxu0
    %v11309 = vadd.f32 %v11268, %v11308
    %v11310 = vpop.f32.mrb[0].mxu0
    %v11311 = vadd.f32 %v11270, %v11310
    %v11312 = vpop.f32.mrb[0].mxu0
    %v11313 = vpop.f32.mrb[0].mxu0
    %11314 = vdwg.mxu0
    %11315 = vmatprep.subr.bf16.mxu0 %v10229
    %11316 = vmatpush1.bf16.msra.mxu0 %v10228
    %11317 = vmatprep.subr.bf16.mxu0 %v10237
    %11318 = vmatpush1.bf16.msra.mxu0 %v10236
    %11319 = vmatprep.subr.bf16.mxu0 %v10245
    %11320 = vmatpush1.bf16.msra.mxu0 %v10244
    %11321 = vmatprep.subr.bf16.mxu0 %v10253
    %11322 = vmatpush1.bf16.msra.mxu0 %v10252
    %11323 = vmatprep.subr.bf16.mxu0 %v10261
    %11324 = vmatpush1.bf16.msra.mxu0 %v10260
    %11325 = vmatprep.subr.bf16.mxu0 %v10269
    %11326 = vmatpush1.bf16.msra.mxu0 %v10268
    %11327 = vmatprep.subr.bf16.mxu0 %v10277
    %11328 = vmatpush1.bf16.msra.mxu0 %v10276
    %11329 = vmatprep.subr.bf16.mxu0 %v10285
    %11330 = vmatpush1.bf16.msra.mxu0 %v10284
    %11331 = vmatprep.subr.bf16.mxu0 %v10293
    %11332 = vmatpush1.bf16.msra.mxu0 %v10292
    %11333 = vmatprep.subr.bf16.mxu0 %v10301
    %11334 = vmatpush1.bf16.msra.mxu0 %v10300
    %11335 = vmatprep.subr.bf16.mxu0 %v10309
    %11336 = vmatpush1.bf16.msra.mxu0 %v10308
    %11337 = vmatprep.subr.bf16.mxu0 %v10317
    %11338 = vmatpush1.bf16.msra.mxu0 %v10316
    %11339 = vmatprep.subr.bf16.mxu0 %v10325
    %11340 = vmatpush1.bf16.msra.mxu0 %v10324
    %11341 = vmatprep.subr.bf16.mxu0 %v10333
    %11342 = vmatpush1.bf16.msra.mxu0 %v10332
    %11343 = vmatprep.subr.bf16.mxu0 %v10341
    %11344 = vmatpush1.bf16.msra.mxu0 %v10340
    %11345 = vmatprep.subr.bf16.mxu0 %v10349
    %11346 = vmatpush1.bf16.msra.mxu0 %v10348
    %11347 = vmatprep.mubr.bf16.mxu0 %v7749
    %11348 = vmatmul.mubr.bf16.gmra.mrb[0].mxu0 %v7748
    %v11349 = vpop.f32.mrb[0].mxu0
    %v11350 = vadd.f32 %v11309, %v11349
    %v11351 = vpop.f32.mrb[0].mxu0
    %v11352 = vadd.f32 %v11311, %v11351
    %v11353 = vpop.f32.mrb[0].mxu0
    %v11354 = vpop.f32.mrb[0].mxu0
    %11355 = vdwg.mxu0
    %11356 = vmatprep.subr.bf16.mxu0 %v9847
    %11357 = vmatpush1.bf16.msra.mxu0 %v9846
    %11358 = vmatprep.subr.bf16.mxu0 %v9855
    %11359 = vmatpush1.bf16.msra.mxu0 %v9854
    %11360 = vmatprep.subr.bf16.mxu0 %v9863
    %11361 = vmatpush1.bf16.msra.mxu0 %v9862
    %11362 = vmatprep.subr.bf16.mxu0 %v9871
    %11363 = vmatpush1.bf16.msra.mxu0 %v9870
    %11364 = vmatprep.subr.bf16.mxu0 %v9879
    %11365 = vmatpush1.bf16.msra.mxu0 %v9878
    %11366 = vmatprep.subr.bf16.mxu0 %v9887
    %11367 = vmatpush1.bf16.msra.mxu0 %v9886
    %11368 = vmatprep.subr.bf16.mxu0 %v9895
    %11369 = vmatpush1.bf16.msra.mxu0 %v9894
    %11370 = vmatprep.subr.bf16.mxu0 %v9903
    %11371 = vmatpush1.bf16.msra.mxu0 %v9902
    %11372 = vmatprep.subr.bf16.mxu0 %v9911
    %11373 = vmatpush1.bf16.msra.mxu0 %v9910
    %11374 = vmatprep.subr.bf16.mxu0 %v9919
    %11375 = vmatpush1.bf16.msra.mxu0 %v9918
    %11376 = vmatprep.subr.bf16.mxu0 %v9927
    %11377 = vmatpush1.bf16.msra.mxu0 %v9926
    %11378 = vmatprep.subr.bf16.mxu0 %v9935
    %11379 = vmatpush1.bf16.msra.mxu0 %v9934
    %11380 = vmatprep.subr.bf16.mxu0 %v9943
    %11381 = vmatpush1.bf16.msra.mxu0 %v9942
    %11382 = vmatprep.subr.bf16.mxu0 %v9951
    %11383 = vmatpush1.bf16.msra.mxu0 %v9950
    %11384 = vmatprep.subr.bf16.mxu0 %v9959
    %11385 = vmatpush1.bf16.msra.mxu0 %v9958
    %11386 = vmatprep.subr.bf16.mxu0 %v9967
    %11387 = vmatpush1.bf16.msra.mxu0 %v9966
    %11388 = vmatprep.mubr.bf16.mxu0 %v7743
    %11389 = vmatmul.mubr.bf16.gmra.mrb[0].mxu0 %v7742
    %v11390 = vpop.f32.mrb[0].mxu0
    %v11391 = vadd.f32 %v8291, %v11390
    %v11392 = vpop.f32.mrb[0].mxu0
    %v11393 = vadd.f32 %v8295, %v11392
    %v11394 = vpop.f32.mrb[0].mxu0
    %v11395 = vpop.f32.mrb[0].mxu0
    %11396 = vdwg.mxu0
    %11397 = vmatprep.subr.bf16.mxu0 %v9975
    %11398 = vmatpush1.bf16.msra.mxu0 %v9974
    %11399 = vmatprep.subr.bf16.mxu0 %v9983
    %11400 = vmatpush1.bf16.msra.mxu0 %v9982
    %11401 = vmatprep.subr.bf16.mxu0 %v9991
    %11402 = vmatpush1.bf16.msra.mxu0 %v9990
    %11403 = vmatprep.subr.bf16.mxu0 %v9999
    %11404 = vmatpush1.bf16.msra.mxu0 %v9998
    %11405 = vmatprep.subr.bf16.mxu0 %v10007
    %11406 = vmatpush1.bf16.msra.mxu0 %v10006
    %11407 = vmatprep.subr.bf16.mxu0 %v10015
    %11408 = vmatpush1.bf16.msra.mxu0 %v10014
    %11409 = vmatprep.subr.bf16.mxu0 %v10023
    %11410 = vmatpush1.bf16.msra.mxu0 %v10022
    %11411 = vmatprep.subr.bf16.mxu0 %v10031
    %11412 = vmatpush1.bf16.msra.mxu0 %v10030
    %11413 = vmatprep.subr.bf16.mxu0 %v10039
    %11414 = vmatpush1.bf16.msra.mxu0 %v10038
    %11415 = vmatprep.subr.bf16.mxu0 %v10047
    %11416 = vmatpush1.bf16.msra.mxu0 %v10046
    %11417 = vmatprep.subr.bf16.mxu0 %v10055
    %11418 = vmatpush1.bf16.msra.mxu0 %v10054
    %11419 = vmatprep.subr.bf16.mxu0 %v10063
    %11420 = vmatpush1.bf16.msra.mxu0 %v10062
    %11421 = vmatprep.subr.bf16.mxu0 %v10071
    %11422 = vmatpush1.bf16.msra.mxu0 %v10070
    %11423 = vmatprep.subr.bf16.mxu0 %v10079
    %11424 = vmatpush1.bf16.msra.mxu0 %v10078
    %11425 = vmatprep.subr.bf16.mxu0 %v10087
    %11426 = vmatpush1.bf16.msra.mxu0 %v10086
    %11427 = vmatprep.subr.bf16.mxu0 %v10095
    %11428 = vmatpush1.bf16.msra.mxu0 %v10094
    %11429 = vmatprep.mubr.bf16.mxu0 %v7745
    %11430 = vmatmul.mubr.bf16.gmra.mrb[0].mxu0 %v7744
    %v11431 = vpop.f32.mrb[0].mxu0
    %v11432 = vadd.f32 %v11391, %v11431
    %v11433 = vpop.f32.mrb[0].mxu0
    %v11434 = vadd.f32 %v11393, %v11433
    %v11435 = vpop.f32.mrb[0].mxu0
    %v11436 = vpop.f32.mrb[0].mxu0
    %11437 = vdwg.mxu0
    %11438 = vmatprep.subr.bf16.mxu0 %v10103
    %11439 = vmatpush1.bf16.msra.mxu0 %v10102
    %11440 = vmatprep.subr.bf16.mxu0 %v10111
    %11441 = vmatpush1.bf16.msra.mxu0 %v10110
    %11442 = vmatprep.subr.bf16.mxu0 %v10119
    %11443 = vmatpush1.bf16.msra.mxu0 %v10118
    %11444 = vmatprep.subr.bf16.mxu0 %v10127
    %11445 = vmatpush1.bf16.msra.mxu0 %v10126
    %11446 = vmatprep.subr.bf16.mxu0 %v10135
    %11447 = vmatpush1.bf16.msra.mxu0 %v10134
    %11448 = vmatprep.subr.bf16.mxu0 %v10143
    %11449 = vmatpush1.bf16.msra.mxu0 %v10142
    %11450 = vmatprep.subr.bf16.mxu0 %v10151
    %11451 = vmatpush1.bf16.msra.mxu0 %v10150
    %11452 = vmatprep.subr.bf16.mxu0 %v10159
    %11453 = vmatpush1.bf16.msra.mxu0 %v10158
    %11454 = vmatprep.subr.bf16.mxu0 %v10167
    %11455 = vmatpush1.bf16.msra.mxu0 %v10166
    %11456 = vmatprep.subr.bf16.mxu0 %v10175
    %11457 = vmatpush1.bf16.msra.mxu0 %v10174
    %11458 = vmatprep.subr.bf16.mxu0 %v10183
    %11459 = vmatpush1.bf16.msra.mxu0 %v10182
    %11460 = vmatprep.subr.bf16.mxu0 %v10191
    %11461 = vmatpush1.bf16.msra.mxu0 %v10190
    %11462 = vmatprep.subr.bf16.mxu0 %v10199
    %11463 = vmatpush1.bf16.msra.mxu0 %v10198
    %11464 = vmatprep.subr.bf16.mxu0 %v10207
    %11465 = vmatpush1.bf16.msra.mxu0 %v10206
    %11466 = vmatprep.subr.bf16.mxu0 %v10215
    %11467 = vmatpush1.bf16.msra.mxu0 %v10214
    %11468 = vmatprep.subr.bf16.mxu0 %v10223
    %11469 = vmatpush1.bf16.msra.mxu0 %v10222
    %11470 = vmatprep.mubr.bf16.mxu0 %v7747
    %11471 = vmatmul.mubr.bf16.gmra.mrb[0].mxu0 %v7746
    %v11472 = vpop.f32.mrb[0].mxu0
    %v11473 = vadd.f32 %v11432, %v11472
    %v11474 = vpop.f32.mrb[0].mxu0
    %v11475 = vadd.f32 %v11434, %v11474
    %v11476 = vpop.f32.mrb[0].mxu0
    %v11477 = vpop.f32.mrb[0].mxu0
    %11478 = vdwg.mxu0
    %11479 = vmatprep.subr.bf16.mxu0 %v10231
    %11480 = vmatpush1.bf16.msra.mxu0 %v10230
    %11481 = vmatprep.subr.bf16.mxu0 %v10239
    %11482 = vmatpush1.bf16.msra.mxu0 %v10238
    %11483 = vmatprep.subr.bf16.mxu0 %v10247
    %11484 = vmatpush1.bf16.msra.mxu0 %v10246
    %11485 = vmatprep.subr.bf16.mxu0 %v10255
    %11486 = vmatpush1.bf16.msra.mxu0 %v10254
    %11487 = vmatprep.subr.bf16.mxu0 %v10263
    %11488 = vmatpush1.bf16.msra.mxu0 %v10262
    %11489 = vmatprep.subr.bf16.mxu0 %v10271
    %11490 = vmatpush1.bf16.msra.mxu0 %v10270
    %11491 = vmatprep.subr.bf16.mxu0 %v10279
    %11492 = vmatpush1.bf16.msra.mxu0 %v10278
    %11493 = vmatprep.subr.bf16.mxu0 %v10287
    %11494 = vmatpush1.bf16.msra.mxu0 %v10286
    %11495 = vmatprep.subr.bf16.mxu0 %v10295
    %11496 = vmatpush1.bf16.msra.mxu0 %v10294
    %11497 = vmatprep.subr.bf16.mxu0 %v10303
    %11498 = vmatpush1.bf16.msra.mxu0 %v10302
    %11499 = vmatprep.subr.bf16.mxu0 %v10311
    %11500 = vmatpush1.bf16.msra.mxu0 %v10310
    %11501 = vmatprep.subr.bf16.mxu0 %v10319
    %11502 = vmatpush1.bf16.msra.mxu0 %v10318
    %11503 = vmatprep.subr.bf16.mxu0 %v10327
    %11504 = vmatpush1.bf16.msra.mxu0 %v10326
    %11505 = vmatprep.subr.bf16.mxu0 %v10335
    %11506 = vmatpush1.bf16.msra.mxu0 %v10334
    %11507 = vmatprep.subr.bf16.mxu0 %v10343
    %11508 = vmatpush1.bf16.msra.mxu0 %v10342
    %11509 = vmatprep.subr.bf16.mxu0 %v10351
    %11510 = vmatpush1.bf16.msra.mxu0 %v10350
    %11511 = vmatprep.mubr.bf16.mxu0 %v7749
    %11512 = vmatmul.mubr.bf16.gmra.mrb[0].mxu0 %v7748
    %v11513 = vpop.f32.mrb[0].mxu0
    %v11514 = vadd.f32 %v11473, %v11513
    %v11515 = vpop.f32.mrb[0].mxu0
    %v11516 = vadd.f32 %v11475, %v11515
    %v11517 = vpop.f32.mrb[0].mxu0
    %v11518 = vpop.f32.mrb[0].mxu0
    %11519 = vdwg.mxu0
    %v11520 = vld [vmem:[%s7] sm:$0xff]
    %v11521 = vld [vmem:[%s7 + $0x8] sm:$0xff]
    %v11522 = vld [vmem:[%s7 + $0x10] sm:$0xff]
    %v11523 = vld [vmem:[%s7 + $0x18] sm:$0xff]
    %v11524 = vunpack.c.l.bf16 %v11520
    %v11525 = vunpack.c.h.bf16 %v11520
    %v11526 = vunpack.c.l.bf16 %v11521
    %v11527 = vunpack.c.h.bf16 %v11521
    %v11528 = vunpack.c.l.bf16 %v11522
    %v11529 = vunpack.c.h.bf16 %v11522
    %v11530 = vunpack.c.l.bf16 %v11523
    %v11531 = vunpack.c.h.bf16 %v11523
    %v11532 = vmul.f32 %v11022, %v11524
    %v11533 = vmul.f32 %v11024, %v11525
    %v11534 = vmul.f32 %v11186, %v11526
    %v11535 = vmul.f32 %v11188, %v11527
    %v11536 = vmul.f32 %v11350, %v11528
    %v11537 = vmul.f32 %v11352, %v11529
    %v11538 = vmul.f32 %v11514, %v11530
    %v11539 = vmul.f32 %v11516, %v11531
    %11540 = vst [vmem:[#allocation13] sm:$0xff] %v11532
    %11541 = vst [vmem:[#allocation13 + $0x8] sm:$0xff] %v11533
    %11542 = vst [vmem:[#allocation13 + $0x10] sm:$0xff] %v11534
    %11543 = vst [vmem:[#allocation13 + $0x18] sm:$0xff] %v11535
    %11544 = vst [vmem:[#allocation13 + $0x20] sm:$0xff] %v11536
    %11545 = vst [vmem:[#allocation13 + $0x28] sm:$0xff] %v11537
    %11546 = vst [vmem:[#allocation13 + $0x30] sm:$0xff] %v11538
    %11547 = vst [vmem:[#allocation13 + $0x38] sm:$0xff] %v11539
    // Predicated region
    $region58: #{mlp_forward.1} parent=1 // pred_check
      _
    $region59: #{mlp_forward.1} parent=1 // pred_check_branch
      %11549 = sbr.rel (0) target = $region61
    $region60: #{mlp_forward.1} parent=1 // pred_region
      %s11551 = ssub.s32 1024, 1024
      %11552 = vsyncadd [#allocation4], %s11551
      %s11554 = sshll.u32 [#allocation13], 4
      %s11555 = int_to_ptr.vmem [resolvable:$true] %s11554
      %11557 = dma.vmem_to_hbm [thread:$0]  %s11555, 1024, %s8, [#allocation4]
    $region61: #{mlp_forward.1} parent=1 // pred_fallthru
      _
    // Predicated region
    $region62: #{mlp_forward.1} parent=1 // pred_check
      _
    $region63: #{mlp_forward.1} parent=1 // pred_check_branch
      %11559 = sbr.rel (0) target = $region65
    $region64: #{mlp_forward.1} parent=1 // pred_region
      %11560 = dma.done [#allocation4], 1024
    $region65: #{mlp_forward.1} parent=1 // pred_fallthru
      _
    %11561 = vsyncpa [#allocation3], 1
    %11562 = vsyncpa [#allocation6], 1
    %11563 = vsyncpa [#allocation9], 1
    %11564 = vsyncpa [#allocation12], 1
    %11565 = vsyncpa [#allocation4], 1

</llo_original>
